<compile_context>
chip_gen: v7x
topology: tpu7x:2x2x1
jax: 0.10.0
libtpu: 0.0.40
codegen_flags: <defaults>
</compile_context>

<pallas_src>
import numpy as np
import jax
import jax.numpy as jnp
from jax import lax
from jax.experimental import pallas as pl
from jax.experimental.pallas import tpu as pltpu

# ---------------- config (small, consistent with the module) ----------------
DIM = 32           # dim
H_RES = 8          # input_resolution[0]
W_RES = 8          # input_resolution[1]
DEPTH = 2          # depth (block 0: shift=0, block 1: shift=window//2)
NUM_HEADS = 4      # num_heads
WINDOW = 4         # window_size
MLP_RATIO = 4.0
LN_EPS = 1e-5
BATCH = 2
NEG_INF = -1e30    # structural "different window" -> exp underflows to exactly 0
VROWS = 8          # packed LN/bias rows per block in the `vecs` slab


# --------------------------- shared math helpers ------------------------------
def _ln(x, g, b):
    # torch.nn.LayerNorm: biased variance, eps inside the sqrt
    mu = jnp.mean(x, axis=-1, keepdims=True)
    var = jnp.mean((x - mu) ** 2, axis=-1, keepdims=True)
    return (x - mu) * lax.rsqrt(var + LN_EPS) * g + b


def _gelu_exact(x):
    # nn.GELU default (exact erf form)
    return 0.5 * x * (1.0 + lax.erf(x * 0.7071067811865476))


# ------------------------------ fused kernel ---------------------------------
def make_layer_kernel(depth, batch, num_heads, dim, hidden, seq_len):
    hd = dim // num_heads

    def kernel(x_ref, vecs_ref, wqkv_ref, wprojh_ref, abias_ref,
               w1_ref, w2_ref, o_ref):
        f32 = jnp.float32
        x = x_ref[...].astype(f32)                              # (B*L, C)

        for d in range(depth):
            r = d * VROWS
            g1 = vecs_ref[r + 0:r + 1, 0:dim]
            be1 = vecs_ref[r + 1:r + 2, 0:dim]
            g2 = vecs_ref[r + 2:r + 3, 0:dim]
            be2 = vecs_ref[r + 3:r + 4, 0:dim]
            bqkv = vecs_ref[r + 4:r + 5, 0:3 * dim]
            bproj = vecs_ref[r + 5:r + 6, 0:dim]
            bm1 = vecs_ref[r + 6:r + 7, 0:hidden]
            bm2 = vecs_ref[r + 7:r + 8, 0:dim]

            # ---- norm1 + fused QKV (one 128-row MXU matmul, scale pre-folded)
            xn = _ln(x, g1, be1)
            qkv = jnp.dot(xn, wqkv_ref[d],
                          preferred_element_type=f32) + bqkv    # (B*L, 3C)

            # ---- head split: columns are head-major [q|k|v] per head, so one
            #      slice per (batch, head), one stack, three narrow lane slices.
            st = jnp.stack(
                [qkv[b * seq_len:(b + 1) * seq_len,
                     h * 3 * hd:(h + 1) * 3 * hd]
                 for b in range(batch) for h in range(num_heads)],
                axis=0)                                         # (B*nh, L, 3hd)
            q = st[:, :, 0:hd]
            k = st[:, :, hd:2 * hd]
            v = st[:, :, 2 * hd:3 * hd]

            # ---- scores + additive bias (windowing / shift mask / rel-pos
            #      bias all folded in; bf16 bias upcast so the add stays f32)
            s = jnp.einsum('gnd,gmd->gnm', q, k,
                           preferred_element_type=f32)          # (B*nh, L, L)
            s = s + abias_ref[d].astype(f32)
            s = s - jnp.max(s, axis=-1, keepdims=True)
            e = jnp.exp(s)
            p = e / jnp.sum(e, axis=-1, keepdims=True)          # exact division
            o = jnp.einsum('gnm,gmd->gnd', p, v,
                           preferred_element_type=f32)          # (B*nh, L, hd)

            # ---- merge heads directly into the output projection
            wph = wprojh_ref[d]                                 # (nh, hd, C)
            ys = []
            for b in range(batch):
                ob = o[b * num_heads:(b + 1) * num_heads]       # (nh, L, hd)
                yb = jnp.einsum('hnd,hdc->hnc', ob, wph,
                                preferred_element_type=f32)     # (nh, L, C)
                ys.append(jnp.sum(yb, axis=0))                  # (L, C)
            x = x + (jnp.concatenate(ys, axis=0) + bproj)       # residual

            # ---- norm2 + MLP (128-row matmuls, exact-erf GELU)
            xn2 = _ln(x, g2, be2)
            h1 = jnp.dot(xn2, w1_ref[d], preferred_element_type=f32) + bm1
            h1 = _gelu_exact(h1)
            x = x + (jnp.dot(h1, w2_ref[d], preferred_element_type=f32) + bm2)

        o_ref[...] = x.astype(o_ref.dtype)

    return kernel


# --------------------- host-side precompute (pack time) ----------------------
def full_attn_bias_np(rel_table, H, W, ws, shift, num_heads):
    """Additive attention bias (num_heads, L, L) in ORIGINAL token order that
    encodes: cyclic shift + window partition (structural masking), Swin
    relative-position bias, and the shifted-window -100 mask."""
    L = H * W
    hh, ww = np.meshgrid(np.arange(H), np.arange(W), indexing="ij")
    hh = hh.reshape(-1)
    ww = ww.reshape(-1)
    # position of each original token in the cyclically shifted image
    a = (hh - shift) % H
    b = (ww - shift) % W
    win = (a // ws) * (W // ws) + (b // ws)            # window id (shifted frame)
    pa = a % ws                                        # intra-window row
    pb = b % ws                                        # intra-window col
    # Swin relative-position index (query i, key j)
    rel_idx = (pa[:, None] - pa[None, :] + ws - 1) * (2 * ws - 1) \
              + (pb[:, None] - pb[None, :] + ws - 1)   # (L, L)
    same = win[:, None] == win[None, :]
    if shift > 0:
        img = np.zeros((H, W), np.float32)             # region labels (shifted frame)
        sl = (slice(0, -ws), slice(-ws, -shift), slice(-shift, None))
        cnt = 0
        for hs in sl:
            for wsl in sl:
                img[hs, wsl] = cnt
                cnt += 1
        reg = img[a, b]
        smask = np.where(reg[:, None] != reg[None, :],
                         np.float32(-100.0), np.float32(0.0))
    else:
        smask = np.zeros((L, L), np.float32)
    bias = rel_table[rel_idx.reshape(-1)].reshape(L, L, num_heads).transpose(2, 0, 1)
    out = np.where(same[None, :, :], bias + smask[None, :, :], np.float32(NEG_INF))
    return out.astype(np.float32)


def init_block_params(key, dim, hidden, num_heads, ws, shift, H, W):
    """Standard (torch-layout) per-block parameters, random for the demo."""
    ks = jax.random.split(key, 12)
    f32 = jnp.float32

    def rnd(k, shape, s=0.02):
        return jax.random.normal(k, shape, f32) * s

    rel_table = np.asarray(rnd(ks[0], ((2 * ws - 1) ** 2, num_heads)))
    abias = full_attn_bias_np(rel_table, H, W, ws, shift, num_heads)
    return dict(
        ln1_g=1.0 + rnd(ks[1], (dim,)), ln1_b=rnd(ks[2], (dim,)),
        ln2_g=1.0 + rnd(ks[3], (dim,)), ln2_b=rnd(ks[4], (dim,)),
        wqkv=rnd(ks[5], (dim, 3 * dim)), bqkv=rnd(ks[6], (3 * dim,)),
        wproj=rnd(ks[7], (dim, dim)), bproj=rnd(ks[8], (dim,)),
        w1=rnd(ks[9], (dim, hidden)), b1=rnd(ks[10], (hidden,)),
        w2=rnd(ks[11], (hidden, dim)), b2=jnp.zeros((dim,), f32),
        abias=jnp.asarray(abias),                     # (nh, L, L) f32
    )


def pack_params(blocks, dim, hidden, num_heads, batch):
    """Pack all per-block parameters into 6 kernel inputs:
       vecs   (depth*8, 128)       : LN gammas/betas + all bias vectors (padded rows)
       wqkv   (depth, C, 3C)       : head-major columns, qk scale folded into Q
       wprojh (depth, nh, hd, C)   : output projection split per head
       abias  (depth, B*nh, L, L)  : additive attention bias, bf16
       w1     (depth, C, hidden), w2 (depth, hidden, C)
    """
    hd = dim // num_heads
    scale = hd ** (-0.5)
    vec_w = max(128, ((max(hidden, 3 * dim) + 127) // 128) * 128)

    # head-major column permutation: new col (h, t, e) <- old col t*dim + h*hd + e
    perm = np.concatenate([
        np.concatenate([t * dim + h * hd + np.arange(hd) for t in range(3)])
        for h in range(num_heads)])

    def row(v):
        r = np.zeros((vec_w,), np.float32)
        v = np.asarray(v, np.float32).reshape(-1)
        r[:v.shape[0]] = v
        return r

    vec_rows, wqkv_l, wprojh_l, abias_l, w1_l, w2_l = [], [], [], [], [], []
    for p in blocks:
        wqkv = np.array(p["wqkv"], np.float32)
        bqkv = np.array(p["bqkv"], np.float32)
        wqkv[:, :dim] *= scale                 # fold qk scale into Q projection
        bqkv[:dim] *= scale
        wqkv = wqkv[:, perm]
        bqkv = bqkv[perm]

        vec_rows += [row(p["ln1_g"]), row(p["ln1_b"]),
                     row(p["ln2_g"]), row(p["ln2_b"]),
                     row(bqkv), row(p["bproj"]), row(p["b1"]), row(p["b2"])]
        wqkv_l.append(wqkv)
        wprojh_l.append(np.array(p["wproj"], np.float32).reshape(num_heads, hd, dim))
        ab = np.array(p["abias"], np.float32)                        # (nh, L, L)
        abias_l.append(np.broadcast_to(ab[None], (batch,) + ab.shape)
                       .reshape(batch * num_heads, ab.shape[1], ab.shape[2]).copy())
        w1_l.append(np.array(p["w1"], np.float32))
        w2_l.append(np.array(p["w2"], np.float32))

    return dict(
        vecs=jnp.asarray(np.stack(vec_rows)),
        wqkv=jnp.asarray(np.stack(wqkv_l)),
        wprojh=jnp.asarray(np.stack(wprojh_l)),
        abias=jnp.asarray(np.stack(abias_l)).astype(jnp.bfloat16),
        w1=jnp.asarray(np.stack(w1_l)),
        w2=jnp.asarray(np.stack(w2_l)),
    )


# --------------------------------- wrapper -----------------------------------
def basic_layer(x, packed):
    B, L, C = x.shape
    depth = int(packed["wqkv"].shape[0])
    num_heads = int(packed["wprojh"].shape[1])
    hidden = int(packed["w1"].shape[-1])

    xr = x.reshape(B * L, C)
    vecs, wqkv, wprojh, abias, w1, w2 = (packed["vecs"], packed["wqkv"],
                                         packed["wprojh"], packed["abias"],
                                         packed["w1"], packed["w2"])

    kernel = make_layer_kernel(depth=depth, batch=B, num_heads=num_heads,
                               dim=C, hidden=hidden, seq_len=L)

    out = pl.pallas_call(
        kernel,
        out_shape=jax.ShapeDtypeStruct((B * L, C), x.dtype),
        grid=(1,),                      # single step: merged batch, no per-step overhead
        in_specs=[
            pl.BlockSpec((B * L, C), lambda i: (0, 0)),
            pl.BlockSpec(vecs.shape, lambda i: (0, 0)),
            pl.BlockSpec(wqkv.shape, lambda i: (0, 0, 0)),
            pl.BlockSpec(wprojh.shape, lambda i: (0, 0, 0, 0)),
            pl.BlockSpec(abias.shape, lambda i: (0, 0, 0, 0)),
            pl.BlockSpec(w1.shape, lambda i: (0, 0, 0)),
            pl.BlockSpec(w2.shape, lambda i: (0, 0, 0)),
        ],
        out_specs=pl.BlockSpec((B * L, C), lambda i: (0, 0)),
        compiler_params=pltpu.CompilerParams(dimension_semantics=("arbitrary",)),
    )(xr, vecs, wqkv, wprojh, abias, w1, w2)
    return out.reshape(B, L, C)


# --------------------------- pure-JAX reference -------------------------------
def reference_forward(x, blocks, num_heads):
    """Same math as the module (dense-bias formulation), standard params."""
    B, L, C = x.shape
    hd = C // num_heads
    scale = hd ** (-0.5)
    for p in blocks:
        xn = _ln(x, p["ln1_g"], p["ln1_b"])
        qkv = xn @ p["wqkv"] + p["bqkv"]                         # (B, L, 3C)
        qkv = qkv.reshape(B, L, 3, num_heads, hd)
        q = jnp.transpose(qkv[:, :, 0], (0, 2, 1, 3)) * scale    # (B, nh, L, hd)
        k = jnp.transpose(qkv[:, :, 1], (0, 2, 1, 3))
        v = jnp.transpose(qkv[:, :, 2], (0, 2, 1, 3))
        s = jnp.einsum("bhnd,bhmd->bhnm", q, k) + p["abias"][None]
        s = s - jnp.max(s, axis=-1, keepdims=True)
        e = jnp.exp(s)
        a = e / jnp.sum(e, axis=-1, keepdims=True)
        o = jnp.einsum("bhnm,bhmd->bhnd", a, v)
        o = jnp.transpose(o, (0, 2, 1, 3)).reshape(B, L, C)
        x = x + (o @ p["wproj"] + p["bproj"])
        xn2 = _ln(x, p["ln2_g"], p["ln2_b"])
        h1 = _gelu_exact(xn2 @ p["w1"] + p["b1"])
        x = x + (h1 @ p["w2"] + p["b2"])
    return x


# --------------------------------- main ---------------------------------------
if __name__ == "__main__":
    key = jax.random.PRNGKey(0)
    # window_size / shift adjustment, same rule as SwinTransformerBlock.__init__
    ws = WINDOW if min(H_RES, W_RES) > WINDOW else min(H_RES, W_RES)
    hidden = int(DIM * MLP_RATIO)

    blocks = []
    for i in range(DEPTH):
        shift = 0 if i % 2 == 0 else ws // 2
        if min(H_RES, W_RES) <= WINDOW:
            shift = 0
        blocks.append(init_block_params(jax.random.fold_in(key, i),
                                        DIM, hidden, NUM_HEADS, ws, shift,
                                        H_RES, W_RES))

    packed = pack_params(blocks, DIM, hidden, NUM_HEADS, BATCH)

    x = jax.random.normal(jax.random.fold_in(key, 123),
                          (BATCH, H_RES * W_RES, DIM), jnp.float32)

    y = basic_layer(x, packed)
    jax.block_until_ready(y)

    y_ref = reference_forward(x, blocks, NUM_HEADS)
    assert y.shape == (BATCH, H_RES * W_RES, DIM)
    assert bool(jnp.all(jnp.isfinite(y)))
    err = float(jnp.max(jnp.abs(y - y_ref)))
    assert err < 3e-3, f"kernel vs reference mismatch: max abs err {err}"
    print("KERNEL_OK")
</pallas_src>

<mosaic_0001>
module attributes {stable_mosaic.version = 11 : i64} {
  func.func @kernel(%arg0: i32, %arg1: memref<128x32xf32, #tpu.memory_space<vmem>>, %arg2: memref<16x128xf32, #tpu.memory_space<vmem>>, %arg3: memref<2x32x96xf32, #tpu.memory_space<vmem>>, %arg4: memref<2x4x8x32xf32, #tpu.memory_space<vmem>>, %arg5: memref<2x8x64x64xbf16, #tpu.memory_space<vmem>>, %arg6: memref<2x32x128xf32, #tpu.memory_space<vmem>>, %arg7: memref<2x128x32xf32, #tpu.memory_space<vmem>>, %arg8: memref<128x32xf32, #tpu.memory_space<vmem>>) attributes {dimension_semantics = [#tpu.dimension_semantics<arbitrary>], iteration_bounds = array<i64: 1>, scalar_prefetch = 0 : i64, scratch_operands = 0 : i64, tpu.core_type = #tpu.core_type<tc>, window_params = [{pipeline_mode = #tpu.pipeline_mode<synchronous>, transform_indices = @transform_0, window_bounds = array<i64: 128, 32>}, {pipeline_mode = #tpu.pipeline_mode<synchronous>, transform_indices = @transform_1, window_bounds = array<i64: 16, 128>}, {pipeline_mode = #tpu.pipeline_mode<synchronous>, transform_indices = @transform_2, window_bounds = array<i64: 2, 32, 96>}, {pipeline_mode = #tpu.pipeline_mode<synchronous>, transform_indices = @transform_3, window_bounds = array<i64: 2, 4, 8, 32>}, {pipeline_mode = #tpu.pipeline_mode<synchronous>, transform_indices = @transform_4, window_bounds = array<i64: 2, 8, 64, 64>}, {pipeline_mode = #tpu.pipeline_mode<synchronous>, transform_indices = @transform_5, window_bounds = array<i64: 2, 32, 128>}, {pipeline_mode = #tpu.pipeline_mode<synchronous>, transform_indices = @transform_6, window_bounds = array<i64: 2, 128, 32>}, {pipeline_mode = #tpu.pipeline_mode<synchronous>, transform_indices = @transform_7, window_bounds = array<i64: 128, 32>}]} {
    %c0 = arith.constant 0 : index
    %c0_0 = arith.constant 0 : index
    %0 = vector.load %arg1[%c0, %c0_0] : memref<128x32xf32, #tpu.memory_space<vmem>>, vector<128x32xf32>
    %c0_1 = arith.constant 0 : index
    %c0_2 = arith.constant 0 : index
    %1 = vector.load %arg2[%c0_1, %c0_2] : memref<16x128xf32, #tpu.memory_space<vmem>>, vector<1x32xf32>
    %c1 = arith.constant 1 : index
    %c0_3 = arith.constant 0 : index
    %2 = vector.load %arg2[%c1, %c0_3] : memref<16x128xf32, #tpu.memory_space<vmem>>, vector<1x32xf32>
    %c2 = arith.constant 2 : index
    %c0_4 = arith.constant 0 : index
    %3 = vector.load %arg2[%c2, %c0_4] : memref<16x128xf32, #tpu.memory_space<vmem>>, vector<1x32xf32>
    %c3 = arith.constant 3 : index
    %c0_5 = arith.constant 0 : index
    %4 = vector.load %arg2[%c3, %c0_5] : memref<16x128xf32, #tpu.memory_space<vmem>>, vector<1x32xf32>
    %c4 = arith.constant 4 : index
    %c0_6 = arith.constant 0 : index
    %5 = vector.load %arg2[%c4, %c0_6] : memref<16x128xf32, #tpu.memory_space<vmem>>, vector<1x96xf32>
    %c5 = arith.constant 5 : index
    %c0_7 = arith.constant 0 : index
    %6 = vector.load %arg2[%c5, %c0_7] : memref<16x128xf32, #tpu.memory_space<vmem>>, vector<1x32xf32>
    %c6 = arith.constant 6 : index
    %c0_8 = arith.constant 0 : index
    %7 = vector.load %arg2[%c6, %c0_8] : memref<16x128xf32, #tpu.memory_space<vmem>>, vector<1x128xf32>
    %c7 = arith.constant 7 : index
    %c0_9 = arith.constant 0 : index
    %8 = vector.load %arg2[%c7, %c0_9] : memref<16x128xf32, #tpu.memory_space<vmem>>, vector<1x32xf32>
    %cst = arith.constant dense<0.000000e+00> : vector<128xf32>
    %9 = vector.multi_reduction <add>, %0, %cst [1] : vector<128x32xf32> to vector<128xf32>
    %10 = vector.shape_cast %9 : vector<128xf32> to vector<128x1xf32>
    %cst_10 = arith.constant 3.200000e+01 : f32
    %11 = vector.broadcast %cst_10 : f32 to vector<128x1xf32>
    %12 = arith.divf %10, %11 : vector<128x1xf32>
    %13 = vector.broadcast %12 : vector<128x1xf32> to vector<128x32xf32>
    %14 = arith.subf %0, %13 : vector<128x32xf32>
    %15 = arith.mulf %14, %14 : vector<128x32xf32>
    %cst_11 = arith.constant dense<0.000000e+00> : vector<128xf32>
    %16 = vector.multi_reduction <add>, %15, %cst_11 [1] : vector<128x32xf32> to vector<128xf32>
    %17 = vector.shape_cast %16 : vector<128xf32> to vector<128x1xf32>
    %cst_12 = arith.constant 3.200000e+01 : f32
    %18 = vector.broadcast %cst_12 : f32 to vector<128x1xf32>
    %19 = arith.divf %17, %18 : vector<128x1xf32>
    %20 = vector.broadcast %12 : vector<128x1xf32> to vector<128x32xf32>
    %21 = arith.subf %0, %20 : vector<128x32xf32>
    %cst_13 = arith.constant 9.99999974E-6 : f32
    %22 = vector.broadcast %cst_13 : f32 to vector<128x1xf32>
    %23 = arith.addf %19, %22 : vector<128x1xf32>
    %24 = math.rsqrt %23 : vector<128x1xf32>
    %25 = vector.broadcast %24 : vector<128x1xf32> to vector<128x32xf32>
    %26 = arith.mulf %21, %25 : vector<128x32xf32>
    %27 = vector.broadcast %1 : vector<1x32xf32> to vector<128x32xf32>
    %28 = arith.mulf %26, %27 : vector<128x32xf32>
    %29 = vector.broadcast %2 : vector<1x32xf32> to vector<128x32xf32>
    %30 = arith.addf %28, %29 : vector<128x32xf32>
    %c0_14 = arith.constant 0 : index
    %c0_15 = arith.constant 0 : index
    %c0_16 = arith.constant 0 : index
    %31 = vector.load %arg3[%c0_14, %c0_15, %c0_16] : memref<2x32x96xf32, #tpu.memory_space<vmem>>, vector<1x32x96xf32>
    %32 = vector.shape_cast %31 : vector<1x32x96xf32> to vector<32x96xf32>
    %cst_17 = arith.constant dense<0.000000e+00> : vector<128x96xf32>
    %33 = tpu.matmul %30, %32, %cst_17 {dimension_numbers = #tpu.dot_dimension_numbers<[1], [0], [0], [1], [0, 0, 1, 1], [], []>} : vector<128x32xf32>, vector<32x96xf32>, vector<128x96xf32> -> vector<128x96xf32>
    %34 = vector.broadcast %5 : vector<1x96xf32> to vector<128x96xf32>
    %35 = arith.addf %33, %34 : vector<128x96xf32>
    %36 = vector.extract_strided_slice %35 {offsets = [0, 0], sizes = [64, 24], strides = [1, 1]} : vector<128x96xf32> to vector<64x24xf32>
    %37 = vector.extract_strided_slice %35 {offsets = [0, 24], sizes = [64, 24], strides = [1, 1]} : vector<128x96xf32> to vector<64x24xf32>
    %38 = vector.extract_strided_slice %35 {offsets = [0, 48], sizes = [64, 24], strides = [1, 1]} : vector<128x96xf32> to vector<64x24xf32>
    %39 = vector.extract_strided_slice %35 {offsets = [0, 72], sizes = [64, 24], strides = [1, 1]} : vector<128x96xf32> to vector<64x24xf32>
    %40 = vector.extract_strided_slice %35 {offsets = [64, 0], sizes = [64, 24], strides = [1, 1]} : vector<128x96xf32> to vector<64x24xf32>
    %41 = vector.extract_strided_slice %35 {offsets = [64, 24], sizes = [64, 24], strides = [1, 1]} : vector<128x96xf32> to vector<64x24xf32>
    %42 = vector.extract_strided_slice %35 {offsets = [64, 48], sizes = [64, 24], strides = [1, 1]} : vector<128x96xf32> to vector<64x24xf32>
    %43 = vector.extract_strided_slice %35 {offsets = [64, 72], sizes = [64, 24], strides = [1, 1]} : vector<128x96xf32> to vector<64x24xf32>
    %44 = vector.shape_cast %36 : vector<64x24xf32> to vector<1x64x24xf32>
    %45 = vector.shape_cast %37 : vector<64x24xf32> to vector<1x64x24xf32>
    %46 = vector.shape_cast %38 : vector<64x24xf32> to vector<1x64x24xf32>
    %47 = vector.shape_cast %39 : vector<64x24xf32> to vector<1x64x24xf32>
    %48 = vector.shape_cast %40 : vector<64x24xf32> to vector<1x64x24xf32>
    %49 = vector.shape_cast %41 : vector<64x24xf32> to vector<1x64x24xf32>
    %50 = vector.shape_cast %42 : vector<64x24xf32> to vector<1x64x24xf32>
    %51 = vector.shape_cast %43 : vector<64x24xf32> to vector<1x64x24xf32>
    %52 = tpu.concatenate %44, %45, %46, %47, %48, %49, %50, %51 in 0 : vector<1x64x24xf32>, vector<1x64x24xf32>, vector<1x64x24xf32>, vector<1x64x24xf32>, vector<1x64x24xf32>, vector<1x64x24xf32>, vector<1x64x24xf32>, vector<1x64x24xf32> -> vector<8x64x24xf32>
    %53 = vector.extract_strided_slice %52 {offsets = [0, 0, 0], sizes = [8, 64, 8], strides = [1, 1, 1]} : vector<8x64x24xf32> to vector<8x64x8xf32>
    %54 = vector.extract_strided_slice %52 {offsets = [0, 0, 8], sizes = [8, 64, 8], strides = [1, 1, 1]} : vector<8x64x24xf32> to vector<8x64x8xf32>
    %55 = vector.extract_strided_slice %52 {offsets = [0, 0, 16], sizes = [8, 64, 8], strides = [1, 1, 1]} : vector<8x64x24xf32> to vector<8x64x8xf32>
    "tpu.trace_start"() <{level = 10 : i32, message = "gnd,gmd->gnm"}> : () -> ()
    %cst_18 = arith.constant dense<0.000000e+00> : vector<8x64x64xf32>
    %56 = tpu.matmul %53, %54, %cst_18 {dimension_numbers = #tpu.dot_dimension_numbers<[2], [2], [1], [1], [0, 0, 0, 1, 1, 1], [0], [0]>} : vector<8x64x8xf32>, vector<8x64x8xf32>, vector<8x64x64xf32> -> vector<8x64x64xf32>
    "tpu.trace_stop"() : () -> ()
    %c0_19 = arith.constant 0 : index
    %c0_20 = arith.constant 0 : index
    %c0_21 = arith.constant 0 : index
    %c0_22 = arith.constant 0 : index
    %57 = vector.load %arg5[%c0_19, %c0_20, %c0_21, %c0_22] : memref<2x8x64x64xbf16, #tpu.memory_space<vmem>>, vector<1x8x64x64xbf16>
    %58 = vector.shape_cast %57 : vector<1x8x64x64xbf16> to vector<8x64x64xbf16>
    %59 = arith.extf %58 : vector<8x64x64xbf16> to vector<8x64x64xf32>
    %60 = arith.addf %56, %59 : vector<8x64x64xf32>
    %cst_23 = arith.constant dense<0xFF800000> : vector<8x64xf32>
    %61 = vector.multi_reduction <maximumf>, %60, %cst_23 [2] : vector<8x64x64xf32> to vector<8x64xf32>
    %62 = vector.shape_cast %61 : vector<8x64xf32> to vector<8x64x1xf32>
    %63 = vector.broadcast %62 : vector<8x64x1xf32> to vector<8x64x64xf32>
    %64 = arith.subf %60, %63 : vector<8x64x64xf32>
    %65 = math.exp %64 : vector<8x64x64xf32>
    %cst_24 = arith.constant dense<0.000000e+00> : vector<8x64xf32>
    %66 = vector.multi_reduction <add>, %65, %cst_24 [2] : vector<8x64x64xf32> to vector<8x64xf32>
    %67 = vector.shape_cast %66 : vector<8x64xf32> to vector<8x64x1xf32>
    %68 = vector.broadcast %67 : vector<8x64x1xf32> to vector<8x64x64xf32>
    %69 = arith.divf %65, %68 : vector<8x64x64xf32>
    "tpu.trace_start"() <{level = 10 : i32, message = "gnm,gmd->gnd"}> : () -> ()
    %cst_25 = arith.constant dense<0.000000e+00> : vector<8x64x8xf32>
    %70 = tpu.matmul %69, %55, %cst_25 {dimension_numbers = #tpu.dot_dimension_numbers<[2], [1], [1], [2], [0, 0, 0, 1, 1, 2], [0], [0]>} : vector<8x64x64xf32>, vector<8x64x8xf32>, vector<8x64x8xf32> -> vector<8x64x8xf32>
    "tpu.trace_stop"() : () -> ()
    %c0_26 = arith.constant 0 : index
    %c0_27 = arith.constant 0 : index
    %c0_28 = arith.constant 0 : index
    %c0_29 = arith.constant 0 : index
    %71 = vector.load %arg4[%c0_26, %c0_27, %c0_28, %c0_29] : memref<2x4x8x32xf32, #tpu.memory_space<vmem>>, vector<1x4x8x32xf32>
    %72 = vector.shape_cast %71 : vector<1x4x8x32xf32> to vector<4x8x32xf32>
    %73 = vector.extract_strided_slice %70 {offsets = [0, 0, 0], sizes = [4, 64, 8], strides = [1, 1, 1]} : vector<8x64x8xf32> to vector<4x64x8xf32>
    "tpu.trace_start"() <{level = 10 : i32, message = "hnd,hdc->hnc"}> : () -> ()
    %cst_30 = arith.constant dense<0.000000e+00> : vector<4x64x32xf32>
    %74 = tpu.matmul %73, %72, %cst_30 {dimension_numbers = #tpu.dot_dimension_numbers<[2], [1], [1], [2], [0, 0, 0, 1, 1, 2], [0], [0]>} : vector<4x64x8xf32>, vector<4x8x32xf32>, vector<4x64x32xf32> -> vector<4x64x32xf32>
    "tpu.trace_stop"() : () -> ()
    %cst_31 = arith.constant dense<0.000000e+00> : vector<64x32xf32>
    %75 = vector.multi_reduction <add>, %74, %cst_31 [0] : vector<4x64x32xf32> to vector<64x32xf32>
    %76 = vector.extract_strided_slice %70 {offsets = [4, 0, 0], sizes = [4, 64, 8], strides = [1, 1, 1]} : vector<8x64x8xf32> to vector<4x64x8xf32>
    "tpu.trace_start"() <{level = 10 : i32, message = "hnd,hdc->hnc"}> : () -> ()
    %cst_32 = arith.constant dense<0.000000e+00> : vector<4x64x32xf32>
    %77 = tpu.matmul %76, %72, %cst_32 {dimension_numbers = #tpu.dot_dimension_numbers<[2], [1], [1], [2], [0, 0, 0, 1, 1, 2], [0], [0]>} : vector<4x64x8xf32>, vector<4x8x32xf32>, vector<4x64x32xf32> -> vector<4x64x32xf32>
    "tpu.trace_stop"() : () -> ()
    %cst_33 = arith.constant dense<0.000000e+00> : vector<64x32xf32>
    %78 = vector.multi_reduction <add>, %77, %cst_33 [0] : vector<4x64x32xf32> to vector<64x32xf32>
    %79 = tpu.concatenate %75, %78 in 0 : vector<64x32xf32>, vector<64x32xf32> -> vector<128x32xf32>
    %80 = vector.broadcast %6 : vector<1x32xf32> to vector<128x32xf32>
    %81 = arith.addf %79, %80 : vector<128x32xf32>
    %82 = arith.addf %0, %81 : vector<128x32xf32>
    %cst_34 = arith.constant dense<0.000000e+00> : vector<128xf32>
    %83 = vector.multi_reduction <add>, %82, %cst_34 [1] : vector<128x32xf32> to vector<128xf32>
    %84 = vector.shape_cast %83 : vector<128xf32> to vector<128x1xf32>
    %cst_35 = arith.constant 3.200000e+01 : f32
    %85 = vector.broadcast %cst_35 : f32 to vector<128x1xf32>
    %86 = arith.divf %84, %85 : vector<128x1xf32>
    %87 = vector.broadcast %86 : vector<128x1xf32> to vector<128x32xf32>
    %88 = arith.subf %82, %87 : vector<128x32xf32>
    %89 = arith.mulf %88, %88 : vector<128x32xf32>
    %cst_36 = arith.constant dense<0.000000e+00> : vector<128xf32>
    %90 = vector.multi_reduction <add>, %89, %cst_36 [1] : vector<128x32xf32> to vector<128xf32>
    %91 = vector.shape_cast %90 : vector<128xf32> to vector<128x1xf32>
    %cst_37 = arith.constant 3.200000e+01 : f32
    %92 = vector.broadcast %cst_37 : f32 to vector<128x1xf32>
    %93 = arith.divf %91, %92 : vector<128x1xf32>
    %94 = vector.broadcast %86 : vector<128x1xf32> to vector<128x32xf32>
    %95 = arith.subf %82, %94 : vector<128x32xf32>
    %cst_38 = arith.constant 9.99999974E-6 : f32
    %96 = vector.broadcast %cst_38 : f32 to vector<128x1xf32>
    %97 = arith.addf %93, %96 : vector<128x1xf32>
    %98 = math.rsqrt %97 : vector<128x1xf32>
    %99 = vector.broadcast %98 : vector<128x1xf32> to vector<128x32xf32>
    %100 = arith.mulf %95, %99 : vector<128x32xf32>
    %101 = vector.broadcast %3 : vector<1x32xf32> to vector<128x32xf32>
    %102 = arith.mulf %100, %101 : vector<128x32xf32>
    %103 = vector.broadcast %4 : vector<1x32xf32> to vector<128x32xf32>
    %104 = arith.addf %102, %103 : vector<128x32xf32>
    %c0_39 = arith.constant 0 : index
    %c0_40 = arith.constant 0 : index
    %c0_41 = arith.constant 0 : index
    %105 = vector.load %arg6[%c0_39, %c0_40, %c0_41] : memref<2x32x128xf32, #tpu.memory_space<vmem>>, vector<1x32x128xf32>
    %106 = vector.shape_cast %105 : vector<1x32x128xf32> to vector<32x128xf32>
    %cst_42 = arith.constant dense<0.000000e+00> : vector<128x128xf32>
    %107 = tpu.matmul %104, %106, %cst_42 {dimension_numbers = #tpu.dot_dimension_numbers<[1], [0], [0], [1], [0, 0, 1, 1], [], []>} : vector<128x32xf32>, vector<32x128xf32>, vector<128x128xf32> -> vector<128x128xf32>
    %108 = vector.broadcast %7 : vector<1x128xf32> to vector<128x128xf32>
    %109 = arith.addf %107, %108 : vector<128x128xf32>
    %cst_43 = arith.constant 5.000000e-01 : f32
    %110 = vector.broadcast %cst_43 : f32 to vector<128x128xf32>
    %111 = arith.mulf %110, %109 : vector<128x128xf32>
    %cst_44 = arith.constant 0.707106769 : f32
    %112 = vector.broadcast %cst_44 : f32 to vector<128x128xf32>
    %113 = arith.mulf %109, %112 : vector<128x128xf32>
    %114 = math.erf %113 : vector<128x128xf32>
    %cst_45 = arith.constant 1.000000e+00 : f32
    %115 = vector.broadcast %cst_45 : f32 to vector<128x128xf32>
    %116 = arith.addf %115, %114 : vector<128x128xf32>
    %117 = arith.mulf %111, %116 : vector<128x128xf32>
    %c0_46 = arith.constant 0 : index
    %c0_47 = arith.constant 0 : index
    %c0_48 = arith.constant 0 : index
    %118 = vector.load %arg7[%c0_46, %c0_47, %c0_48] : memref<2x128x32xf32, #tpu.memory_space<vmem>>, vector<1x128x32xf32>
    %119 = vector.shape_cast %118 : vector<1x128x32xf32> to vector<128x32xf32>
    %cst_49 = arith.constant dense<0.000000e+00> : vector<128x32xf32>
    %120 = tpu.matmul %117, %119, %cst_49 {dimension_numbers = #tpu.dot_dimension_numbers<[1], [0], [0], [1], [0, 0, 1, 1], [], []>} : vector<128x128xf32>, vector<128x32xf32>, vector<128x32xf32> -> vector<128x32xf32>
    %121 = vector.broadcast %8 : vector<1x32xf32> to vector<128x32xf32>
    %122 = arith.addf %120, %121 : vector<128x32xf32>
    %123 = arith.addf %82, %122 : vector<128x32xf32>
    %c8 = arith.constant 8 : index
    %c0_50 = arith.constant 0 : index
    %124 = vector.load %arg2[%c8, %c0_50] : memref<16x128xf32, #tpu.memory_space<vmem>>, vector<1x32xf32>
    %c9 = arith.constant 9 : index
    %c0_51 = arith.constant 0 : index
    %125 = vector.load %arg2[%c9, %c0_51] : memref<16x128xf32, #tpu.memory_space<vmem>>, vector<1x32xf32>
    %c10 = arith.constant 10 : index
    %c0_52 = arith.constant 0 : index
    %126 = vector.load %arg2[%c10, %c0_52] : memref<16x128xf32, #tpu.memory_space<vmem>>, vector<1x32xf32>
    %c11 = arith.constant 11 : index
    %c0_53 = arith.constant 0 : index
    %127 = vector.load %arg2[%c11, %c0_53] : memref<16x128xf32, #tpu.memory_space<vmem>>, vector<1x32xf32>
    %c12 = arith.constant 12 : index
    %c0_54 = arith.constant 0 : index
    %128 = vector.load %arg2[%c12, %c0_54] : memref<16x128xf32, #tpu.memory_space<vmem>>, vector<1x96xf32>
    %c13 = arith.constant 13 : index
    %c0_55 = arith.constant 0 : index
    %129 = vector.load %arg2[%c13, %c0_55] : memref<16x128xf32, #tpu.memory_space<vmem>>, vector<1x32xf32>
    %c14 = arith.constant 14 : index
    %c0_56 = arith.constant 0 : index
    %130 = vector.load %arg2[%c14, %c0_56] : memref<16x128xf32, #tpu.memory_space<vmem>>, vector<1x128xf32>
    %c15 = arith.constant 15 : index
    %c0_57 = arith.constant 0 : index
    %131 = vector.load %arg2[%c15, %c0_57] : memref<16x128xf32, #tpu.memory_space<vmem>>, vector<1x32xf32>
    %cst_58 = arith.constant dense<0.000000e+00> : vector<128xf32>
    %132 = vector.multi_reduction <add>, %123, %cst_58 [1] : vector<128x32xf32> to vector<128xf32>
    %133 = vector.shape_cast %132 : vector<128xf32> to vector<128x1xf32>
    %cst_59 = arith.constant 3.200000e+01 : f32
    %134 = vector.broadcast %cst_59 : f32 to vector<128x1xf32>
    %135 = arith.divf %133, %134 : vector<128x1xf32>
    %136 = vector.broadcast %135 : vector<128x1xf32> to vector<128x32xf32>
    %137 = arith.subf %123, %136 : vector<128x32xf32>
    %138 = arith.mulf %137, %137 : vector<128x32xf32>
    %cst_60 = arith.constant dense<0.000000e+00> : vector<128xf32>
    %139 = vector.multi_reduction <add>, %138, %cst_60 [1] : vector<128x32xf32> to vector<128xf32>
    %140 = vector.shape_cast %139 : vector<128xf32> to vector<128x1xf32>
    %cst_61 = arith.constant 3.200000e+01 : f32
    %141 = vector.broadcast %cst_61 : f32 to vector<128x1xf32>
    %142 = arith.divf %140, %141 : vector<128x1xf32>
    %143 = vector.broadcast %135 : vector<128x1xf32> to vector<128x32xf32>
    %144 = arith.subf %123, %143 : vector<128x32xf32>
    %cst_62 = arith.constant 9.99999974E-6 : f32
    %145 = vector.broadcast %cst_62 : f32 to vector<128x1xf32>
    %146 = arith.addf %142, %145 : vector<128x1xf32>
    %147 = math.rsqrt %146 : vector<128x1xf32>
    %148 = vector.broadcast %147 : vector<128x1xf32> to vector<128x32xf32>
    %149 = arith.mulf %144, %148 : vector<128x32xf32>
    %150 = vector.broadcast %124 : vector<1x32xf32> to vector<128x32xf32>
    %151 = arith.mulf %149, %150 : vector<128x32xf32>
    %152 = vector.broadcast %125 : vector<1x32xf32> to vector<128x32xf32>
    %153 = arith.addf %151, %152 : vector<128x32xf32>
    %c1_63 = arith.constant 1 : index
    %c0_64 = arith.constant 0 : index
    %c0_65 = arith.constant 0 : index
    %154 = vector.load %arg3[%c1_63, %c0_64, %c0_65] : memref<2x32x96xf32, #tpu.memory_space<vmem>>, vector<1x32x96xf32>
    %155 = vector.shape_cast %154 : vector<1x32x96xf32> to vector<32x96xf32>
    %cst_66 = arith.constant dense<0.000000e+00> : vector<128x96xf32>
    %156 = tpu.matmul %153, %155, %cst_66 {dimension_numbers = #tpu.dot_dimension_numbers<[1], [0], [0], [1], [0, 0, 1, 1], [], []>} : vector<128x32xf32>, vector<32x96xf32>, vector<128x96xf32> -> vector<128x96xf32>
    %157 = vector.broadcast %128 : vector<1x96xf32> to vector<128x96xf32>
    %158 = arith.addf %156, %157 : vector<128x96xf32>
    %159 = vector.extract_strided_slice %158 {offsets = [0, 0], sizes = [64, 24], strides = [1, 1]} : vector<128x96xf32> to vector<64x24xf32>
    %160 = vector.extract_strided_slice %158 {offsets = [0, 24], sizes = [64, 24], strides = [1, 1]} : vector<128x96xf32> to vector<64x24xf32>
    %161 = vector.extract_strided_slice %158 {offsets = [0, 48], sizes = [64, 24], strides = [1, 1]} : vector<128x96xf32> to vector<64x24xf32>
    %162 = vector.extract_strided_slice %158 {offsets = [0, 72], sizes = [64, 24], strides = [1, 1]} : vector<128x96xf32> to vector<64x24xf32>
    %163 = vector.extract_strided_slice %158 {offsets = [64, 0], sizes = [64, 24], strides = [1, 1]} : vector<128x96xf32> to vector<64x24xf32>
    %164 = vector.extract_strided_slice %158 {offsets = [64, 24], sizes = [64, 24], strides = [1, 1]} : vector<128x96xf32> to vector<64x24xf32>
    %165 = vector.extract_strided_slice %158 {offsets = [64, 48], sizes = [64, 24], strides = [1, 1]} : vector<128x96xf32> to vector<64x24xf32>
    %166 = vector.extract_strided_slice %158 {offsets = [64, 72], sizes = [64, 24], strides = [1, 1]} : vector<128x96xf32> to vector<64x24xf32>
    %167 = vector.shape_cast %159 : vector<64x24xf32> to vector<1x64x24xf32>
    %168 = vector.shape_cast %160 : vector<64x24xf32> to vector<1x64x24xf32>
    %169 = vector.shape_cast %161 : vector<64x24xf32> to vector<1x64x24xf32>
    %170 = vector.shape_cast %162 : vector<64x24xf32> to vector<1x64x24xf32>
    %171 = vector.shape_cast %163 : vector<64x24xf32> to vector<1x64x24xf32>
    %172 = vector.shape_cast %164 : vector<64x24xf32> to vector<1x64x24xf32>
    %173 = vector.shape_cast %165 : vector<64x24xf32> to vector<1x64x24xf32>
    %174 = vector.shape_cast %166 : vector<64x24xf32> to vector<1x64x24xf32>
    %175 = tpu.concatenate %167, %168, %169, %170, %171, %172, %173, %174 in 0 : vector<1x64x24xf32>, vector<1x64x24xf32>, vector<1x64x24xf32>, vector<1x64x24xf32>, vector<1x64x24xf32>, vector<1x64x24xf32>, vector<1x64x24xf32>, vector<1x64x24xf32> -> vector<8x64x24xf32>
    %176 = vector.extract_strided_slice %175 {offsets = [0, 0, 0], sizes = [8, 64, 8], strides = [1, 1, 1]} : vector<8x64x24xf32> to vector<8x64x8xf32>
    %177 = vector.extract_strided_slice %175 {offsets = [0, 0, 8], sizes = [8, 64, 8], strides = [1, 1, 1]} : vector<8x64x24xf32> to vector<8x64x8xf32>
    %178 = vector.extract_strided_slice %175 {offsets = [0, 0, 16], sizes = [8, 64, 8], strides = [1, 1, 1]} : vector<8x64x24xf32> to vector<8x64x8xf32>
    "tpu.trace_start"() <{level = 10 : i32, message = "gnd,gmd->gnm"}> : () -> ()
    %cst_67 = arith.constant dense<0.000000e+00> : vector<8x64x64xf32>
    %179 = tpu.matmul %176, %177, %cst_67 {dimension_numbers = #tpu.dot_dimension_numbers<[2], [2], [1], [1], [0, 0, 0, 1, 1, 1], [0], [0]>} : vector<8x64x8xf32>, vector<8x64x8xf32>, vector<8x64x64xf32> -> vector<8x64x64xf32>
    "tpu.trace_stop"() : () -> ()
    %c1_68 = arith.constant 1 : index
    %c0_69 = arith.constant 0 : index
    %c0_70 = arith.constant 0 : index
    %c0_71 = arith.constant 0 : index
    %180 = vector.load %arg5[%c1_68, %c0_69, %c0_70, %c0_71] : memref<2x8x64x64xbf16, #tpu.memory_space<vmem>>, vector<1x8x64x64xbf16>
    %181 = vector.shape_cast %180 : vector<1x8x64x64xbf16> to vector<8x64x64xbf16>
    %182 = arith.extf %181 : vector<8x64x64xbf16> to vector<8x64x64xf32>
    %183 = arith.addf %179, %182 : vector<8x64x64xf32>
    %cst_72 = arith.constant dense<0xFF800000> : vector<8x64xf32>
    %184 = vector.multi_reduction <maximumf>, %183, %cst_72 [2] : vector<8x64x64xf32> to vector<8x64xf32>
    %185 = vector.shape_cast %184 : vector<8x64xf32> to vector<8x64x1xf32>
    %186 = vector.broadcast %185 : vector<8x64x1xf32> to vector<8x64x64xf32>
    %187 = arith.subf %183, %186 : vector<8x64x64xf32>
    %188 = math.exp %187 : vector<8x64x64xf32>
    %cst_73 = arith.constant dense<0.000000e+00> : vector<8x64xf32>
    %189 = vector.multi_reduction <add>, %188, %cst_73 [2] : vector<8x64x64xf32> to vector<8x64xf32>
    %190 = vector.shape_cast %189 : vector<8x64xf32> to vector<8x64x1xf32>
    %191 = vector.broadcast %190 : vector<8x64x1xf32> to vector<8x64x64xf32>
    %192 = arith.divf %188, %191 : vector<8x64x64xf32>
    "tpu.trace_start"() <{level = 10 : i32, message = "gnm,gmd->gnd"}> : () -> ()
    %cst_74 = arith.constant dense<0.000000e+00> : vector<8x64x8xf32>
    %193 = tpu.matmul %192, %178, %cst_74 {dimension_numbers = #tpu.dot_dimension_numbers<[2], [1], [1], [2], [0, 0, 0, 1, 1, 2], [0], [0]>} : vector<8x64x64xf32>, vector<8x64x8xf32>, vector<8x64x8xf32> -> vector<8x64x8xf32>
    "tpu.trace_stop"() : () -> ()
    %c1_75 = arith.constant 1 : index
    %c0_76 = arith.constant 0 : index
    %c0_77 = arith.constant 0 : index
    %c0_78 = arith.constant 0 : index
    %194 = vector.load %arg4[%c1_75, %c0_76, %c0_77, %c0_78] : memref<2x4x8x32xf32, #tpu.memory_space<vmem>>, vector<1x4x8x32xf32>
    %195 = vector.shape_cast %194 : vector<1x4x8x32xf32> to vector<4x8x32xf32>
    %196 = vector.extract_strided_slice %193 {offsets = [0, 0, 0], sizes = [4, 64, 8], strides = [1, 1, 1]} : vector<8x64x8xf32> to vector<4x64x8xf32>
    "tpu.trace_start"() <{level = 10 : i32, message = "hnd,hdc->hnc"}> : () -> ()
    %cst_79 = arith.constant dense<0.000000e+00> : vector<4x64x32xf32>
    %197 = tpu.matmul %196, %195, %cst_79 {dimension_numbers = #tpu.dot_dimension_numbers<[2], [1], [1], [2], [0, 0, 0, 1, 1, 2], [0], [0]>} : vector<4x64x8xf32>, vector<4x8x32xf32>, vector<4x64x32xf32> -> vector<4x64x32xf32>
    "tpu.trace_stop"() : () -> ()
    %cst_80 = arith.constant dense<0.000000e+00> : vector<64x32xf32>
    %198 = vector.multi_reduction <add>, %197, %cst_80 [0] : vector<4x64x32xf32> to vector<64x32xf32>
    %199 = vector.extract_strided_slice %193 {offsets = [4, 0, 0], sizes = [4, 64, 8], strides = [1, 1, 1]} : vector<8x64x8xf32> to vector<4x64x8xf32>
    "tpu.trace_start"() <{level = 10 : i32, message = "hnd,hdc->hnc"}> : () -> ()
    %cst_81 = arith.constant dense<0.000000e+00> : vector<4x64x32xf32>
    %200 = tpu.matmul %199, %195, %cst_81 {dimension_numbers = #tpu.dot_dimension_numbers<[2], [1], [1], [2], [0, 0, 0, 1, 1, 2], [0], [0]>} : vector<4x64x8xf32>, vector<4x8x32xf32>, vector<4x64x32xf32> -> vector<4x64x32xf32>
    "tpu.trace_stop"() : () -> ()
    %cst_82 = arith.constant dense<0.000000e+00> : vector<64x32xf32>
    %201 = vector.multi_reduction <add>, %200, %cst_82 [0] : vector<4x64x32xf32> to vector<64x32xf32>
    %202 = tpu.concatenate %198, %201 in 0 : vector<64x32xf32>, vector<64x32xf32> -> vector<128x32xf32>
    %203 = vector.broadcast %129 : vector<1x32xf32> to vector<128x32xf32>
    %204 = arith.addf %202, %203 : vector<128x32xf32>
    %205 = arith.addf %123, %204 : vector<128x32xf32>
    %cst_83 = arith.constant dense<0.000000e+00> : vector<128xf32>
    %206 = vector.multi_reduction <add>, %205, %cst_83 [1] : vector<128x32xf32> to vector<128xf32>
    %207 = vector.shape_cast %206 : vector<128xf32> to vector<128x1xf32>
    %cst_84 = arith.constant 3.200000e+01 : f32
    %208 = vector.broadcast %cst_84 : f32 to vector<128x1xf32>
    %209 = arith.divf %207, %208 : vector<128x1xf32>
    %210 = vector.broadcast %209 : vector<128x1xf32> to vector<128x32xf32>
    %211 = arith.subf %205, %210 : vector<128x32xf32>
    %212 = arith.mulf %211, %211 : vector<128x32xf32>
    %cst_85 = arith.constant dense<0.000000e+00> : vector<128xf32>
    %213 = vector.multi_reduction <add>, %212, %cst_85 [1] : vector<128x32xf32> to vector<128xf32>
    %214 = vector.shape_cast %213 : vector<128xf32> to vector<128x1xf32>
    %cst_86 = arith.constant 3.200000e+01 : f32
    %215 = vector.broadcast %cst_86 : f32 to vector<128x1xf32>
    %216 = arith.divf %214, %215 : vector<128x1xf32>
    %217 = vector.broadcast %209 : vector<128x1xf32> to vector<128x32xf32>
    %218 = arith.subf %205, %217 : vector<128x32xf32>
    %cst_87 = arith.constant 9.99999974E-6 : f32
    %219 = vector.broadcast %cst_87 : f32 to vector<128x1xf32>
    %220 = arith.addf %216, %219 : vector<128x1xf32>
    %221 = math.rsqrt %220 : vector<128x1xf32>
    %222 = vector.broadcast %221 : vector<128x1xf32> to vector<128x32xf32>
    %223 = arith.mulf %218, %222 : vector<128x32xf32>
    %224 = vector.broadcast %126 : vector<1x32xf32> to vector<128x32xf32>
    %225 = arith.mulf %223, %224 : vector<128x32xf32>
    %226 = vector.broadcast %127 : vector<1x32xf32> to vector<128x32xf32>
    %227 = arith.addf %225, %226 : vector<128x32xf32>
    %c1_88 = arith.constant 1 : index
    %c0_89 = arith.constant 0 : index
    %c0_90 = arith.constant 0 : index
    %228 = vector.load %arg6[%c1_88, %c0_89, %c0_90] : memref<2x32x128xf32, #tpu.memory_space<vmem>>, vector<1x32x128xf32>
    %229 = vector.shape_cast %228 : vector<1x32x128xf32> to vector<32x128xf32>
    %cst_91 = arith.constant dense<0.000000e+00> : vector<128x128xf32>
    %230 = tpu.matmul %227, %229, %cst_91 {dimension_numbers = #tpu.dot_dimension_numbers<[1], [0], [0], [1], [0, 0, 1, 1], [], []>} : vector<128x32xf32>, vector<32x128xf32>, vector<128x128xf32> -> vector<128x128xf32>
    %231 = vector.broadcast %130 : vector<1x128xf32> to vector<128x128xf32>
    %232 = arith.addf %230, %231 : vector<128x128xf32>
    %cst_92 = arith.constant 5.000000e-01 : f32
    %233 = vector.broadcast %cst_92 : f32 to vector<128x128xf32>
    %234 = arith.mulf %233, %232 : vector<128x128xf32>
    %cst_93 = arith.constant 0.707106769 : f32
    %235 = vector.broadcast %cst_93 : f32 to vector<128x128xf32>
    %236 = arith.mulf %232, %235 : vector<128x128xf32>
    %237 = math.erf %236 : vector<128x128xf32>
    %cst_94 = arith.constant 1.000000e+00 : f32
    %238 = vector.broadcast %cst_94 : f32 to vector<128x128xf32>
    %239 = arith.addf %238, %237 : vector<128x128xf32>
    %240 = arith.mulf %234, %239 : vector<128x128xf32>
    %c1_95 = arith.constant 1 : index
    %c0_96 = arith.constant 0 : index
    %c0_97 = arith.constant 0 : index
    %241 = vector.load %arg7[%c1_95, %c0_96, %c0_97] : memref<2x128x32xf32, #tpu.memory_space<vmem>>, vector<1x128x32xf32>
    %242 = vector.shape_cast %241 : vector<1x128x32xf32> to vector<128x32xf32>
    %cst_98 = arith.constant dense<0.000000e+00> : vector<128x32xf32>
    %243 = tpu.matmul %240, %242, %cst_98 {dimension_numbers = #tpu.dot_dimension_numbers<[1], [0], [0], [1], [0, 0, 1, 1], [], []>} : vector<128x128xf32>, vector<128x32xf32>, vector<128x32xf32> -> vector<128x32xf32>
    %244 = vector.broadcast %131 : vector<1x32xf32> to vector<128x32xf32>
    %245 = arith.addf %243, %244 : vector<128x32xf32>
    %246 = arith.addf %205, %245 : vector<128x32xf32>
    %c0_99 = arith.constant 0 : index
    %c0_100 = arith.constant 0 : index
    %247 = vector.load %arg8[%c0_99, %c0_100] : memref<128x32xf32, #tpu.memory_space<vmem>>, vector<128x32xf32>
    tpu.vector_store %arg8[%c0_99, %c0_100], %246 {strides = array<i32>} : memref<128x32xf32, #tpu.memory_space<vmem>>, vector<128x32xf32>,
    return
  }
  func.func @transform_0(%arg0: i32) -> (i32, i32) {
    %c0_i32 = arith.constant 0 : i32
    %c0_i32_0 = arith.constant 0 : i32
    %c0_i32_1 = arith.constant 0 : i32
    return %c0_i32, %c0_i32_0 : i32, i32
  }
  func.func @transform_1(%arg0: i32) -> (i32, i32) {
    %c0_i32 = arith.constant 0 : i32
    %c0_i32_0 = arith.constant 0 : i32
    %c0_i32_1 = arith.constant 0 : i32
    return %c0_i32, %c0_i32_0 : i32, i32
  }
  func.func @transform_2(%arg0: i32) -> (i32, i32, i32) {
    %c0_i32 = arith.constant 0 : i32
    %c0_i32_0 = arith.constant 0 : i32
    %c0_i32_1 = arith.constant 0 : i32
    %c0_i32_2 = arith.constant 0 : i32
    return %c0_i32, %c0_i32_0, %c0_i32_1 : i32, i32, i32
  }
  func.func @transform_3(%arg0: i32) -> (i32, i32, i32, i32) {
    %c0_i32 = arith.constant 0 : i32
    %c0_i32_0 = arith.constant 0 : i32
    %c0_i32_1 = arith.constant 0 : i32
    %c0_i32_2 = arith.constant 0 : i32
    %c0_i32_3 = arith.constant 0 : i32
    return %c0_i32, %c0_i32_0, %c0_i32_1, %c0_i32_2 : i32, i32, i32, i32
  }
  func.func @transform_4(%arg0: i32) -> (i32, i32, i32, i32) {
    %c0_i32 = arith.constant 0 : i32
    %c0_i32_0 = arith.constant 0 : i32
    %c0_i32_1 = arith.constant 0 : i32
    %c0_i32_2 = arith.constant 0 : i32
    %c0_i32_3 = arith.constant 0 : i32
    return %c0_i32, %c0_i32_0, %c0_i32_1, %c0_i32_2 : i32, i32, i32, i32
  }
  func.func @transform_5(%arg0: i32) -> (i32, i32, i32) {
    %c0_i32 = arith.constant 0 : i32
    %c0_i32_0 = arith.constant 0 : i32
    %c0_i32_1 = arith.constant 0 : i32
    %c0_i32_2 = arith.constant 0 : i32
    return %c0_i32, %c0_i32_0, %c0_i32_1 : i32, i32, i32
  }
  func.func @transform_6(%arg0: i32) -> (i32, i32, i32) {
    %c0_i32 = arith.constant 0 : i32
    %c0_i32_0 = arith.constant 0 : i32
    %c0_i32_1 = arith.constant 0 : i32
    %c0_i32_2 = arith.constant 0 : i32
    return %c0_i32, %c0_i32_0, %c0_i32_1 : i32, i32, i32
  }
  func.func @transform_7(%arg0: i32) -> (i32, i32) {
    %c0_i32 = arith.constant 0 : i32
    %c0_i32_0 = arith.constant 0 : i32
    %c0_i32_1 = arith.constant 0 : i32
    return %c0_i32, %c0_i32_0 : i32, i32
  }
}

</mosaic_0001>

<llo_original>
// kernel: tpu_custom_call.1
$region0: #{tpu_custom_call.1}
  #allocation0 [shape = 'u32[]', space=smem, size = 0x4, offset = 0x4, fixed_abs, tag = 'smem constant byte address 0x4 - core index']
  #allocation1 [shape = 'u32[144,128]{1,0:T(1,128)}', space=vmem, size = 0x12000, scoped, tag = 'internal scratch']
  %s0 = inlined_call_operand.vmem [shape: f32[128,32], index: 0, kind: input, shape index: {}]
  %s1 = inlined_call_operand.vmem [shape: f32[16,128], index: 1, kind: input, shape index: {}]
  %s2 = inlined_call_operand.vmem [shape: f32[2,32,96], index: 2, kind: input, shape index: {}]
  %s3 = inlined_call_operand.vmem [shape: f32[2,4,8,32], index: 3, kind: input, shape index: {}]
  %s4 = inlined_call_operand.hbm [shape: bf16[2,8,64,64], index: 4, kind: input, shape index: {}]
  %s5 = inlined_call_operand.vmem [shape: f32[2,32,128], index: 5, kind: input, shape index: {}]
  %s6 = inlined_call_operand.vmem [shape: f32[2,128,32], index: 6, kind: input, shape index: {}]
  %s7 = inlined_call_operand.vmem [shape: f32[128,32], index: 7, kind: output, shape index: {}]
  %s8 = sld [smem:[#allocation0]]
  $region42: #{tpu_custom_call.1} parent=0
    _
  %s10 = ssub.s32 1, %s8
  %s11 = scalar_select 0, %s10, %s8
  $region1: #{tpu_custom_call.1} parent=0
    #allocation2 [shape = 'u8[262144]{0}', space=vmem, size = 0x40000, scoped, tag = 'input window, operand 4, single buffered']
    #allocation3 [shape = 's32[1]{0}', space=sflag, size = 0x4, scoped, tag = 'scoped memory for tpu_custom_call.1']
    %12 = vsyncpa [#allocation3], 0
    // Predicated region
    $region2: #{tpu_custom_call.1} parent=1 // pred_check
      _
    $region3: #{tpu_custom_call.1} parent=1 // pred_check_branch
      %14 = sbr.rel (0) target = $region5
    $region4: #{tpu_custom_call.1} parent=1 // pred_region
      _
    $region5: #{tpu_custom_call.1} parent=1 // pred_fallthru
      _
    // Predicated region
    $region6: #{tpu_custom_call.1} parent=1 // pred_check
      _
    $region7: #{tpu_custom_call.1} parent=1 // pred_check_branch
      %16 = sbr.rel (0) target = $region9
    $region8: #{tpu_custom_call.1} parent=1 // pred_region
      _
    $region9: #{tpu_custom_call.1} parent=1 // pred_fallthru
      _
    // Predicated region
    $region10: #{tpu_custom_call.1} parent=1 // pred_check
      _
    $region11: #{tpu_custom_call.1} parent=1 // pred_check_branch
      %18 = sbr.rel (0) target = $region13
    $region12: #{tpu_custom_call.1} parent=1 // pred_region
      _
    $region13: #{tpu_custom_call.1} parent=1 // pred_fallthru
      _
    // Predicated region
    $region14: #{tpu_custom_call.1} parent=1 // pred_check
      _
    $region15: #{tpu_custom_call.1} parent=1 // pred_check_branch
      %20 = sbr.rel (0) target = $region17
    $region16: #{tpu_custom_call.1} parent=1 // pred_region
      _
    $region17: #{tpu_custom_call.1} parent=1 // pred_fallthru
      _
    // Predicated region
    $region18: #{tpu_custom_call.1} parent=1 // pred_check
      _
    $region19: #{tpu_custom_call.1} parent=1 // pred_check_branch
      %22 = sbr.rel (0) target = $region21
    $region20: #{tpu_custom_call.1} parent=1 // pred_region
      %s24 = ssub.s32 8192, 8192
      %25 = vsyncadd [#allocation3], %s24
      %s26 = sshll.u32 [#allocation2], 4
      %s27 = int_to_ptr.vmem [resolvable:$true] %s26
      %32 = dma.hbm_to_vmem [thread:$0]  %s4, 8192, %s27, [#allocation3], 64, 64, 4
    $region21: #{tpu_custom_call.1} parent=1 // pred_fallthru
      _
    // Predicated region
    $region22: #{tpu_custom_call.1} parent=1 // pred_check
      _
    $region23: #{tpu_custom_call.1} parent=1 // pred_check_branch
      %34 = sbr.rel (0) target = $region25
    $region24: #{tpu_custom_call.1} parent=1 // pred_region
      _
    $region25: #{tpu_custom_call.1} parent=1 // pred_fallthru
      _
    // Predicated region
    $region26: #{tpu_custom_call.1} parent=1 // pred_check
      _
    $region27: #{tpu_custom_call.1} parent=1 // pred_check_branch
      %36 = sbr.rel (0) target = $region29
    $region28: #{tpu_custom_call.1} parent=1 // pred_region
      _
    $region29: #{tpu_custom_call.1} parent=1 // pred_fallthru
      _
    // Predicated region
    $region30: #{tpu_custom_call.1} parent=1 // pred_check
      _
    $region31: #{tpu_custom_call.1} parent=1 // pred_check_branch
      %38 = sbr.rel (0) target = $region33
    $region32: #{tpu_custom_call.1} parent=1 // pred_region
      %39 = dma.done [#allocation3], 8192
    $region33: #{tpu_custom_call.1} parent=1 // pred_fallthru
      _
    %v40 = vld [vmem:[%s0] sm:$0xff]
    %v41 = vld [vmem:[%s0 + $0x8] sm:$0xff]
    %v42 = vld [vmem:[%s0 + $0x10] sm:$0xff]
    %v43 = vld [vmem:[%s0 + $0x18] sm:$0xff]
    %v44 = vld [vmem:[%s0 + $0x20] sm:$0xff]
    %v45 = vld [vmem:[%s0 + $0x28] sm:$0xff]
    %v46 = vld [vmem:[%s0 + $0x30] sm:$0xff]
    %v47 = vld [vmem:[%s0 + $0x38] sm:$0xff]
    %v48 = vld [vmem:[%s0 + $0x40] sm:$0xff]
    %v49 = vld [vmem:[%s0 + $0x48] sm:$0xff]
    %v50 = vld [vmem:[%s0 + $0x50] sm:$0xff]
    %v51 = vld [vmem:[%s0 + $0x58] sm:$0xff]
    %v52 = vld [vmem:[%s0 + $0x60] sm:$0xff]
    %v53 = vld [vmem:[%s0 + $0x68] sm:$0xff]
    %v54 = vld [vmem:[%s0 + $0x70] sm:$0xff]
    %v55 = vld [vmem:[%s0 + $0x78] sm:$0xff]
    %v56 = vld [vmem:[%s1] sm:$0x1]
    %v57 = vld [vmem:[%s1 + $0x1] sm:$0x1]
    %v58 = vld [vmem:[%s1 + $0x2] sm:$0x1]
    %v59 = vld [vmem:[%s1 + $0x3] sm:$0x1]
    %v60 = vld [vmem:[%s1 + $0x4] sm:$0x1]
    %v61 = vld [vmem:[%s1 + $0x5] sm:$0x1]
    %v62 = vld [vmem:[%s1 + $0x6] sm:$0x1]
    %v63 = vld [vmem:[%s1 + $0x7] sm:$0x1]
    %vm64 = vcmask 261120
    %v65 = vsel %vm64, %v40, 0.0
    %66 = vadd.xlane.f32.xlu0 %v65
    %v67 = vpop.xlane.xlu0 %66
    %v68 = vsel %vm64, %v41, 0.0
    %69 = vadd.xlane.f32.xlu0 %v68
    %v70 = vpop.xlane.xlu0 %69
    %v71 = vsel %vm64, %v42, 0.0
    %72 = vadd.xlane.f32.xlu0 %v71
    %v73 = vpop.xlane.xlu0 %72
    %v74 = vsel %vm64, %v43, 0.0
    %75 = vadd.xlane.f32.xlu0 %v74
    %v76 = vpop.xlane.xlu0 %75
    %v77 = vsel %vm64, %v44, 0.0
    %78 = vadd.xlane.f32.xlu0 %v77
    %v79 = vpop.xlane.xlu0 %78
    %v80 = vsel %vm64, %v45, 0.0
    %81 = vadd.xlane.f32.xlu0 %v80
    %v82 = vpop.xlane.xlu0 %81
    %v83 = vsel %vm64, %v46, 0.0
    %84 = vadd.xlane.f32.xlu0 %v83
    %v85 = vpop.xlane.xlu0 %84
    %v86 = vsel %vm64, %v47, 0.0
    %87 = vadd.xlane.f32.xlu0 %v86
    %v88 = vpop.xlane.xlu0 %87
    %v89 = vsel %vm64, %v48, 0.0
    %90 = vadd.xlane.f32.xlu0 %v89
    %v91 = vpop.xlane.xlu0 %90
    %v92 = vsel %vm64, %v49, 0.0
    %93 = vadd.xlane.f32.xlu0 %v92
    %v94 = vpop.xlane.xlu0 %93
    %v95 = vsel %vm64, %v50, 0.0
    %96 = vadd.xlane.f32.xlu0 %v95
    %v97 = vpop.xlane.xlu0 %96
    %v98 = vsel %vm64, %v51, 0.0
    %99 = vadd.xlane.f32.xlu0 %v98
    %v100 = vpop.xlane.xlu0 %99
    %v101 = vsel %vm64, %v52, 0.0
    %102 = vadd.xlane.f32.xlu0 %v101
    %v103 = vpop.xlane.xlu0 %102
    %v104 = vsel %vm64, %v53, 0.0
    %105 = vadd.xlane.f32.xlu0 %v104
    %v106 = vpop.xlane.xlu0 %105
    %v107 = vsel %vm64, %v54, 0.0
    %108 = vadd.xlane.f32.xlu0 %v107
    %v109 = vpop.xlane.xlu0 %108
    %v110 = vsel %vm64, %v55, 0.0
    %111 = vadd.xlane.f32.xlu0 %v110
    %v112 = vpop.xlane.xlu0 %111
    %v113 = vrcp.pop 32.0
    %v114 = vmul.f32 %v67, %v113
    %v115 = vmul.f32 %v70, %v113
    %v116 = vmul.f32 %v73, %v113
    %v117 = vmul.f32 %v76, %v113
    %v118 = vmul.f32 %v79, %v113
    %v119 = vmul.f32 %v82, %v113
    %v120 = vmul.f32 %v85, %v113
    %v121 = vmul.f32 %v88, %v113
    %v122 = vmul.f32 %v91, %v113
    %v123 = vmul.f32 %v94, %v113
    %v124 = vmul.f32 %v97, %v113
    %v125 = vmul.f32 %v100, %v113
    %v126 = vmul.f32 %v103, %v113
    %v127 = vmul.f32 %v106, %v113
    %v128 = vmul.f32 %v109, %v113
    %v129 = vmul.f32 %v112, %v113
    %v130 = vsub.f32 %v40, %v114
    %v131 = vsub.f32 %v41, %v115
    %v132 = vsub.f32 %v42, %v116
    %v133 = vsub.f32 %v43, %v117
    %v134 = vsub.f32 %v44, %v118
    %v135 = vsub.f32 %v45, %v119
    %v136 = vsub.f32 %v46, %v120
    %v137 = vsub.f32 %v47, %v121
    %v138 = vsub.f32 %v48, %v122
    %v139 = vsub.f32 %v49, %v123
    %v140 = vsub.f32 %v50, %v124
    %v141 = vsub.f32 %v51, %v125
    %v142 = vsub.f32 %v52, %v126
    %v143 = vsub.f32 %v53, %v127
    %v144 = vsub.f32 %v54, %v128
    %v145 = vsub.f32 %v55, %v129
    %v146 = vmul.f32 %v130, %v130
    %v147 = vmul.f32 %v131, %v131
    %v148 = vmul.f32 %v132, %v132
    %v149 = vmul.f32 %v133, %v133
    %v150 = vmul.f32 %v134, %v134
    %v151 = vmul.f32 %v135, %v135
    %v152 = vmul.f32 %v136, %v136
    %v153 = vmul.f32 %v137, %v137
    %v154 = vmul.f32 %v138, %v138
    %v155 = vmul.f32 %v139, %v139
    %v156 = vmul.f32 %v140, %v140
    %v157 = vmul.f32 %v141, %v141
    %v158 = vmul.f32 %v142, %v142
    %v159 = vmul.f32 %v143, %v143
    %v160 = vmul.f32 %v144, %v144
    %v161 = vmul.f32 %v145, %v145
    %v162 = vsel %vm64, %v146, 0.0
    %163 = vadd.xlane.f32.xlu0 %v162
    %v164 = vpop.xlane.xlu0 %163
    %v165 = vsel %vm64, %v147, 0.0
    %166 = vadd.xlane.f32.xlu0 %v165
    %v167 = vpop.xlane.xlu0 %166
    %v168 = vsel %vm64, %v148, 0.0
    %169 = vadd.xlane.f32.xlu0 %v168
    %v170 = vpop.xlane.xlu0 %169
    %v171 = vsel %vm64, %v149, 0.0
    %172 = vadd.xlane.f32.xlu0 %v171
    %v173 = vpop.xlane.xlu0 %172
    %v174 = vsel %vm64, %v150, 0.0
    %175 = vadd.xlane.f32.xlu0 %v174
    %v176 = vpop.xlane.xlu0 %175
    %v177 = vsel %vm64, %v151, 0.0
    %178 = vadd.xlane.f32.xlu0 %v177
    %v179 = vpop.xlane.xlu0 %178
    %v180 = vsel %vm64, %v152, 0.0
    %181 = vadd.xlane.f32.xlu0 %v180
    %v182 = vpop.xlane.xlu0 %181
    %v183 = vsel %vm64, %v153, 0.0
    %184 = vadd.xlane.f32.xlu0 %v183
    %v185 = vpop.xlane.xlu0 %184
    %v186 = vsel %vm64, %v154, 0.0
    %187 = vadd.xlane.f32.xlu0 %v186
    %v188 = vpop.xlane.xlu0 %187
    %v189 = vsel %vm64, %v155, 0.0
    %190 = vadd.xlane.f32.xlu0 %v189
    %v191 = vpop.xlane.xlu0 %190
    %v192 = vsel %vm64, %v156, 0.0
    %193 = vadd.xlane.f32.xlu0 %v192
    %v194 = vpop.xlane.xlu0 %193
    %v195 = vsel %vm64, %v157, 0.0
    %196 = vadd.xlane.f32.xlu0 %v195
    %v197 = vpop.xlane.xlu0 %196
    %v198 = vsel %vm64, %v158, 0.0
    %199 = vadd.xlane.f32.xlu0 %v198
    %v200 = vpop.xlane.xlu0 %199
    %v201 = vsel %vm64, %v159, 0.0
    %202 = vadd.xlane.f32.xlu0 %v201
    %v203 = vpop.xlane.xlu0 %202
    %v204 = vsel %vm64, %v160, 0.0
    %205 = vadd.xlane.f32.xlu0 %v204
    %v206 = vpop.xlane.xlu0 %205
    %v207 = vsel %vm64, %v161, 0.0
    %208 = vadd.xlane.f32.xlu0 %v207
    %v209 = vpop.xlane.xlu0 %208
    %v210 = vmul.f32 %v164, %v113
    %v211 = vmul.f32 %v167, %v113
    %v212 = vmul.f32 %v170, %v113
    %v213 = vmul.f32 %v173, %v113
    %v214 = vmul.f32 %v176, %v113
    %v215 = vmul.f32 %v179, %v113
    %v216 = vmul.f32 %v182, %v113
    %v217 = vmul.f32 %v185, %v113
    %v218 = vmul.f32 %v188, %v113
    %v219 = vmul.f32 %v191, %v113
    %v220 = vmul.f32 %v194, %v113
    %v221 = vmul.f32 %v197, %v113
    %v222 = vmul.f32 %v200, %v113
    %v223 = vmul.f32 %v203, %v113
    %v224 = vmul.f32 %v206, %v113
    %v225 = vmul.f32 %v209, %v113
    %v226 = vadd.f32 %v210, 1e-05
    %v227 = vadd.f32 %v211, 1e-05
    %v228 = vadd.f32 %v212, 1e-05
    %v229 = vadd.f32 %v213, 1e-05
    %v230 = vadd.f32 %v214, 1e-05
    %v231 = vadd.f32 %v215, 1e-05
    %v232 = vadd.f32 %v216, 1e-05
    %v233 = vadd.f32 %v217, 1e-05
    %v234 = vadd.f32 %v218, 1e-05
    %v235 = vadd.f32 %v219, 1e-05
    %v236 = vadd.f32 %v220, 1e-05
    %v237 = vadd.f32 %v221, 1e-05
    %v238 = vadd.f32 %v222, 1e-05
    %v239 = vadd.f32 %v223, 1e-05
    %v240 = vadd.f32 %v224, 1e-05
    %v241 = vadd.f32 %v225, 1e-05
    %v242 = vrsqrt.pop %v226
    %v243 = vrsqrt.pop %v227
    %v244 = vrsqrt.pop %v228
    %v245 = vrsqrt.pop %v229
    %v246 = vrsqrt.pop %v230
    %v247 = vrsqrt.pop %v231
    %v248 = vrsqrt.pop %v232
    %v249 = vrsqrt.pop %v233
    %v250 = vrsqrt.pop %v234
    %v251 = vrsqrt.pop %v235
    %v252 = vrsqrt.pop %v236
    %v253 = vrsqrt.pop %v237
    %v254 = vrsqrt.pop %v238
    %v255 = vrsqrt.pop %v239
    %v256 = vrsqrt.pop %v240
    %v257 = vrsqrt.pop %v241
    %v258 = vmul.f32 %v130, %v242
    %v259 = vmul.f32 %v131, %v243
    %v260 = vmul.f32 %v132, %v244
    %v261 = vmul.f32 %v133, %v245
    %v262 = vmul.f32 %v134, %v246
    %v263 = vmul.f32 %v135, %v247
    %v264 = vmul.f32 %v136, %v248
    %v265 = vmul.f32 %v137, %v249
    %v266 = vmul.f32 %v138, %v250
    %v267 = vmul.f32 %v139, %v251
    %v268 = vmul.f32 %v140, %v252
    %v269 = vmul.f32 %v141, %v253
    %v270 = vmul.f32 %v142, %v254
    %v271 = vmul.f32 %v143, %v255
    %v272 = vmul.f32 %v144, %v256
    %v273 = vmul.f32 %v145, %v257
    %v274 = vlaneseq
    %v275 = vshrl.u32 %v274, 7
    %v276 = vsub.s32 0, %v275
    %v277 = vrot.slane %v56, %v276
    %v278 = vmul.f32 %v258, %v277
    %v279 = vmul.f32 %v259, %v277
    %v280 = vmul.f32 %v260, %v277
    %v281 = vmul.f32 %v261, %v277
    %v282 = vmul.f32 %v262, %v277
    %v283 = vmul.f32 %v263, %v277
    %v284 = vmul.f32 %v264, %v277
    %v285 = vmul.f32 %v265, %v277
    %v286 = vmul.f32 %v266, %v277
    %v287 = vmul.f32 %v267, %v277
    %v288 = vmul.f32 %v268, %v277
    %v289 = vmul.f32 %v269, %v277
    %v290 = vmul.f32 %v270, %v277
    %v291 = vmul.f32 %v271, %v277
    %v292 = vmul.f32 %v272, %v277
    %v293 = vmul.f32 %v273, %v277
    %v294 = vlaneseq
    %v295 = vshrl.u32 %v294, 7
    %v296 = vsub.s32 0, %v295
    %v297 = vrot.slane %v57, %v296
    %v298 = vadd.f32 %v278, %v297
    %v299 = vadd.f32 %v279, %v297
    %v300 = vadd.f32 %v280, %v297
    %v301 = vadd.f32 %v281, %v297
    %v302 = vadd.f32 %v282, %v297
    %v303 = vadd.f32 %v283, %v297
    %v304 = vadd.f32 %v284, %v297
    %v305 = vadd.f32 %v285, %v297
    %v306 = vadd.f32 %v286, %v297
    %v307 = vadd.f32 %v287, %v297
    %v308 = vadd.f32 %v288, %v297
    %v309 = vadd.f32 %v289, %v297
    %v310 = vadd.f32 %v290, %v297
    %v311 = vadd.f32 %v291, %v297
    %v312 = vadd.f32 %v292, %v297
    %v313 = vadd.f32 %v293, %v297
    %v314 = vld [vmem:[%s2] sm:$0xff]
    %v315 = vld [vmem:[%s2 + $0x8] sm:$0xff]
    %v316 = vld [vmem:[%s2 + $0x10] sm:$0xff]
    %v317 = vld [vmem:[%s2 + $0x18] sm:$0xff]
    %v318 = vlaneseq
    %v319 = vshrl.u32 %v318, 7
    %v320 = vsub.s32 0, %v319
    %v321 = vrot.slane %v60, %v320
    %v323 = vsel %vm64, %v298, 0
    %v326 = vsel %vm64, %v299, 0
    %v329 = vsel %vm64, %v300, 0
    %v332 = vsel %vm64, %v301, 0
    %v335 = vsel %vm64, %v302, 0
    %v338 = vsel %vm64, %v303, 0
    %v341 = vsel %vm64, %v304, 0
    %v344 = vsel %vm64, %v305, 0
    %v347 = vsel %vm64, %v306, 0
    %v350 = vsel %vm64, %v307, 0
    %v353 = vsel %vm64, %v308, 0
    %v356 = vsel %vm64, %v309, 0
    %v359 = vsel %vm64, %v310, 0
    %v362 = vsel %vm64, %v311, 0
    %v365 = vsel %vm64, %v312, 0
    %v368 = vsel %vm64, %v313, 0
    %370 = vmatprep.subr.mxu0 0.0
    %371 = vmatpush1.msra.mxu0 %v314
    %372 = vmatprep.subr.mxu0 0.0
    %373 = vmatpush1.msra.mxu0 %v315
    %374 = vmatprep.subr.mxu0 0.0
    %375 = vmatpush1.msra.mxu0 %v316
    %376 = vmatprep.subr.mxu0 0.0
    %377 = vmatpush1.msra.mxu0 %v317
    %378 = vmatprep.subr.mxu0 0.0
    %379 = vmatpush1.msra.mxu0 0.0
    %380 = vmatprep.subr.mxu0 0.0
    %381 = vmatpush1.msra.mxu0 0.0
    %382 = vmatprep.subr.mxu0 0.0
    %383 = vmatpush1.msra.mxu0 0.0
    %384 = vmatprep.subr.mxu0 0.0
    %385 = vmatpush1.msra.mxu0 0.0
    %386 = vmatprep.subr.mxu0 0.0
    %387 = vmatpush1.msra.mxu0 0.0
    %388 = vmatprep.subr.mxu0 0.0
    %389 = vmatpush1.msra.mxu0 0.0
    %390 = vmatprep.subr.mxu0 0.0
    %391 = vmatpush1.msra.mxu0 0.0
    %392 = vmatprep.subr.mxu0 0.0
    %393 = vmatpush1.msra.mxu0 0.0
    %394 = vmatprep.subr.mxu0 0.0
    %395 = vmatpush1.msra.mxu0 0.0
    %396 = vmatprep.subr.mxu0 0.0
    %397 = vmatpush1.msra.mxu0 0.0
    %398 = vmatprep.subr.mxu0 0.0
    %399 = vmatpush1.msra.mxu0 0.0
    %400 = vmatprep.subr.mxu0 0.0
    %401 = vmatpush1.msra.mxu0 0.0
    %402 = vmatprep.subr.mxu0 0.0
    %403 = vmatpush1.msra.mxu0 0.0
    %404 = vmatprep.subr.mxu0 0.0
    %405 = vmatpush1.msra.mxu0 0.0
    %406 = vmatprep.subr.mxu0 0.0
    %407 = vmatpush1.msra.mxu0 0.0
    %408 = vmatprep.subr.mxu0 0.0
    %409 = vmatpush1.msra.mxu0 0.0
    %410 = vmatprep.subr.mxu0 0.0
    %411 = vmatpush1.msra.mxu0 0.0
    %412 = vmatprep.subr.mxu0 0.0
    %413 = vmatpush1.msra.mxu0 0.0
    %414 = vmatprep.subr.mxu0 0.0
    %415 = vmatpush1.msra.mxu0 0.0
    %416 = vmatprep.subr.mxu0 0.0
    %417 = vmatpush1.msra.mxu0 0.0
    %418 = vmatprep.subr.mxu0 0.0
    %419 = vmatpush1.msra.mxu0 0.0
    %420 = vmatprep.subr.mxu0 0.0
    %421 = vmatpush1.msra.mxu0 0.0
    %422 = vmatprep.subr.mxu0 0.0
    %423 = vmatpush1.msra.mxu0 0.0
    %424 = vmatprep.subr.mxu0 0.0
    %425 = vmatpush1.msra.mxu0 0.0
    %426 = vmatprep.subr.mxu0 0.0
    %427 = vmatpush1.msra.mxu0 0.0
    %428 = vmatprep.subr.mxu0 0.0
    %429 = vmatpush1.msra.mxu0 0.0
    %430 = vmatprep.subr.mxu0 0.0
    %431 = vmatpush1.msra.mxu0 0.0
    %432 = vmatprep.subr.mxu0 0.0
    %433 = vmatpush1.msra.mxu0 0.0
    %434 = vmatprep.mubr.f32.mxu0 0.0
    %435 = vmatmul.mubr.f32.gmra.mrb[0].mxu0 %v323
    %v436 = vpop.f32.mrb[0].mxu0
    %v437 = vadd.f32 %v321, %v436
    %v438 = vpop.f32.mrb[0].mxu0
    %439 = vmatprep.mubr.f32.mxu0 0.0
    %440 = vmatmul.mubr.f32.gmra.mrb[0].mxu0 %v326
    %v441 = vpop.f32.mrb[0].mxu0
    %v442 = vadd.f32 %v321, %v441
    %v443 = vpop.f32.mrb[0].mxu0
    %444 = vmatprep.mubr.f32.mxu0 0.0
    %445 = vmatmul.mubr.f32.gmra.mrb[0].mxu0 %v329
    %v446 = vpop.f32.mrb[0].mxu0
    %v447 = vadd.f32 %v321, %v446
    %v448 = vpop.f32.mrb[0].mxu0
    %449 = vmatprep.mubr.f32.mxu0 0.0
    %450 = vmatmul.mubr.f32.gmra.mrb[0].mxu0 %v332
    %v451 = vpop.f32.mrb[0].mxu0
    %v452 = vadd.f32 %v321, %v451
    %v453 = vpop.f32.mrb[0].mxu0
    %454 = vmatprep.mubr.f32.mxu0 0.0
    %455 = vmatmul.mubr.f32.gmra.mrb[0].mxu0 %v335
    %v456 = vpop.f32.mrb[0].mxu0
    %v457 = vadd.f32 %v321, %v456
    %v458 = vpop.f32.mrb[0].mxu0
    %459 = vmatprep.mubr.f32.mxu0 0.0
    %460 = vmatmul.mubr.f32.gmra.mrb[0].mxu0 %v338
    %v461 = vpop.f32.mrb[0].mxu0
    %v462 = vadd.f32 %v321, %v461
    %v463 = vpop.f32.mrb[0].mxu0
    %464 = vmatprep.mubr.f32.mxu0 0.0
    %465 = vmatmul.mubr.f32.gmra.mrb[0].mxu0 %v341
    %v466 = vpop.f32.mrb[0].mxu0
    %v467 = vadd.f32 %v321, %v466
    %v468 = vpop.f32.mrb[0].mxu0
    %469 = vmatprep.mubr.f32.mxu0 0.0
    %470 = vmatmul.mubr.f32.gmra.mrb[0].mxu0 %v344
    %v471 = vpop.f32.mrb[0].mxu0
    %v472 = vadd.f32 %v321, %v471
    %v473 = vpop.f32.mrb[0].mxu0
    %474 = vmatprep.mubr.f32.mxu0 0.0
    %475 = vmatmul.mubr.f32.gmra.mrb[0].mxu0 %v347
    %v476 = vpop.f32.mrb[0].mxu0
    %v477 = vadd.f32 %v321, %v476
    %v478 = vpop.f32.mrb[0].mxu0
    %479 = vmatprep.mubr.f32.mxu0 0.0
    %480 = vmatmul.mubr.f32.gmra.mrb[0].mxu0 %v350
    %v481 = vpop.f32.mrb[0].mxu0
    %v482 = vadd.f32 %v321, %v481
    %v483 = vpop.f32.mrb[0].mxu0
    %484 = vmatprep.mubr.f32.mxu0 0.0
    %485 = vmatmul.mubr.f32.gmra.mrb[0].mxu0 %v353
    %v486 = vpop.f32.mrb[0].mxu0
    %v487 = vadd.f32 %v321, %v486
    %v488 = vpop.f32.mrb[0].mxu0
    %489 = vmatprep.mubr.f32.mxu0 0.0
    %490 = vmatmul.mubr.f32.gmra.mrb[0].mxu0 %v356
    %v491 = vpop.f32.mrb[0].mxu0
    %v492 = vadd.f32 %v321, %v491
    %v493 = vpop.f32.mrb[0].mxu0
    %494 = vmatprep.mubr.f32.mxu0 0.0
    %495 = vmatmul.mubr.f32.gmra.mrb[0].mxu0 %v359
    %v496 = vpop.f32.mrb[0].mxu0
    %v497 = vadd.f32 %v321, %v496
    %v498 = vpop.f32.mrb[0].mxu0
    %499 = vmatprep.mubr.f32.mxu0 0.0
    %500 = vmatmul.mubr.f32.gmra.mrb[0].mxu0 %v362
    %v501 = vpop.f32.mrb[0].mxu0
    %v502 = vadd.f32 %v321, %v501
    %v503 = vpop.f32.mrb[0].mxu0
    %504 = vmatprep.mubr.f32.mxu0 0.0
    %505 = vmatmul.mubr.f32.gmra.mrb[0].mxu0 %v365
    %v506 = vpop.f32.mrb[0].mxu0
    %v507 = vadd.f32 %v321, %v506
    %v508 = vpop.f32.mrb[0].mxu0
    %509 = vmatprep.mubr.f32.mxu0 0.0
    %510 = vmatmul.mubr.f32.gmra.mrb[0].mxu0 %v368
    %v511 = vpop.f32.mrb[0].mxu0
    %v512 = vadd.f32 %v321, %v511
    %v513 = vpop.f32.mrb[0].mxu0
    %514 = vdwg.mxu0
    %523 = vrot.lane.b32.xlu0 %v437, 104
    %v524 = vpop.permute.xlu0 %523
    %525 = vrot.lane.b32.xlu0 %v442, 104
    %v526 = vpop.permute.xlu0 %525
    %527 = vrot.lane.b32.xlu0 %v447, 104
    %v528 = vpop.permute.xlu0 %527
    %529 = vrot.lane.b32.xlu0 %v452, 104
    %v530 = vpop.permute.xlu0 %529
    %531 = vrot.lane.b32.xlu0 %v457, 104
    %v532 = vpop.permute.xlu0 %531
    %533 = vrot.lane.b32.xlu0 %v462, 104
    %v534 = vpop.permute.xlu0 %533
    %535 = vrot.lane.b32.xlu0 %v467, 104
    %v536 = vpop.permute.xlu0 %535
    %537 = vrot.lane.b32.xlu0 %v472, 104
    %v538 = vpop.permute.xlu0 %537
    %539 = vrot.lane.b32.xlu0 %v437, 80
    %v540 = vpop.permute.xlu0 %539
    %541 = vrot.lane.b32.xlu0 %v442, 80
    %v542 = vpop.permute.xlu0 %541
    %543 = vrot.lane.b32.xlu0 %v447, 80
    %v544 = vpop.permute.xlu0 %543
    %545 = vrot.lane.b32.xlu0 %v452, 80
    %v546 = vpop.permute.xlu0 %545
    %547 = vrot.lane.b32.xlu0 %v457, 80
    %v548 = vpop.permute.xlu0 %547
    %549 = vrot.lane.b32.xlu0 %v462, 80
    %v550 = vpop.permute.xlu0 %549
    %551 = vrot.lane.b32.xlu0 %v467, 80
    %v552 = vpop.permute.xlu0 %551
    %553 = vrot.lane.b32.xlu0 %v472, 80
    %v554 = vpop.permute.xlu0 %553
    %555 = vrot.lane.b32.xlu0 %v437, 56
    %v556 = vpop.permute.xlu0 %555
    %557 = vrot.lane.b32.xlu0 %v442, 56
    %v558 = vpop.permute.xlu0 %557
    %559 = vrot.lane.b32.xlu0 %v447, 56
    %v560 = vpop.permute.xlu0 %559
    %561 = vrot.lane.b32.xlu0 %v452, 56
    %v562 = vpop.permute.xlu0 %561
    %563 = vrot.lane.b32.xlu0 %v457, 56
    %v564 = vpop.permute.xlu0 %563
    %565 = vrot.lane.b32.xlu0 %v462, 56
    %v566 = vpop.permute.xlu0 %565
    %567 = vrot.lane.b32.xlu0 %v467, 56
    %v568 = vpop.permute.xlu0 %567
    %569 = vrot.lane.b32.xlu0 %v472, 56
    %v570 = vpop.permute.xlu0 %569
    %579 = vrot.lane.b32.xlu0 %v477, 104
    %v580 = vpop.permute.xlu0 %579
    %581 = vrot.lane.b32.xlu0 %v482, 104
    %v582 = vpop.permute.xlu0 %581
    %583 = vrot.lane.b32.xlu0 %v487, 104
    %v584 = vpop.permute.xlu0 %583
    %585 = vrot.lane.b32.xlu0 %v492, 104
    %v586 = vpop.permute.xlu0 %585
    %587 = vrot.lane.b32.xlu0 %v497, 104
    %v588 = vpop.permute.xlu0 %587
    %589 = vrot.lane.b32.xlu0 %v502, 104
    %v590 = vpop.permute.xlu0 %589
    %591 = vrot.lane.b32.xlu0 %v507, 104
    %v592 = vpop.permute.xlu0 %591
    %593 = vrot.lane.b32.xlu0 %v512, 104
    %v594 = vpop.permute.xlu0 %593
    %595 = vrot.lane.b32.xlu0 %v477, 80
    %v596 = vpop.permute.xlu0 %595
    %597 = vrot.lane.b32.xlu0 %v482, 80
    %v598 = vpop.permute.xlu0 %597
    %599 = vrot.lane.b32.xlu0 %v487, 80
    %v600 = vpop.permute.xlu0 %599
    %601 = vrot.lane.b32.xlu0 %v492, 80
    %v602 = vpop.permute.xlu0 %601
    %603 = vrot.lane.b32.xlu0 %v497, 80
    %v604 = vpop.permute.xlu0 %603
    %605 = vrot.lane.b32.xlu0 %v502, 80
    %v606 = vpop.permute.xlu0 %605
    %607 = vrot.lane.b32.xlu0 %v507, 80
    %v608 = vpop.permute.xlu0 %607
    %609 = vrot.lane.b32.xlu0 %v512, 80
    %v610 = vpop.permute.xlu0 %609
    %611 = vrot.lane.b32.xlu0 %v477, 56
    %v612 = vpop.permute.xlu0 %611
    %613 = vrot.lane.b32.xlu0 %v482, 56
    %v614 = vpop.permute.xlu0 %613
    %615 = vrot.lane.b32.xlu0 %v487, 56
    %v616 = vpop.permute.xlu0 %615
    %617 = vrot.lane.b32.xlu0 %v492, 56
    %v618 = vpop.permute.xlu0 %617
    %619 = vrot.lane.b32.xlu0 %v497, 56
    %v620 = vpop.permute.xlu0 %619
    %621 = vrot.lane.b32.xlu0 %v502, 56
    %v622 = vpop.permute.xlu0 %621
    %623 = vrot.lane.b32.xlu0 %v507, 56
    %v624 = vpop.permute.xlu0 %623
    %625 = vrot.lane.b32.xlu0 %v512, 56
    %v626 = vpop.permute.xlu0 %625
    %v627 = vld [vmem:[#allocation2] sm:$0xf]
    %v628 = vld [vmem:[#allocation2 + $0x4] sm:$0xf]
    %v629 = vld [vmem:[#allocation2 + $0x8] sm:$0xf]
    %v630 = vld [vmem:[#allocation2 + $0xc] sm:$0xf]
    %v631 = vld [vmem:[#allocation2 + $0x10] sm:$0xf]
    %v632 = vld [vmem:[#allocation2 + $0x14] sm:$0xf]
    %v633 = vld [vmem:[#allocation2 + $0x18] sm:$0xf]
    %v634 = vld [vmem:[#allocation2 + $0x1c] sm:$0xf]
    %v635 = vld [vmem:[#allocation2 + $0x20] sm:$0xf]
    %v636 = vld [vmem:[#allocation2 + $0x24] sm:$0xf]
    %v637 = vld [vmem:[#allocation2 + $0x28] sm:$0xf]
    %v638 = vld [vmem:[#allocation2 + $0x2c] sm:$0xf]
    %v639 = vld [vmem:[#allocation2 + $0x30] sm:$0xf]
    %v640 = vld [vmem:[#allocation2 + $0x34] sm:$0xf]
    %v641 = vld [vmem:[#allocation2 + $0x38] sm:$0xf]
    %v642 = vld [vmem:[#allocation2 + $0x3c] sm:$0xf]
    %v643 = vld [vmem:[#allocation2 + $0x40] sm:$0xf]
    %v644 = vld [vmem:[#allocation2 + $0x44] sm:$0xf]
    %v645 = vld [vmem:[#allocation2 + $0x48] sm:$0xf]
    %v646 = vld [vmem:[#allocation2 + $0x4c] sm:$0xf]
    %v647 = vld [vmem:[#allocation2 + $0x50] sm:$0xf]
    %v648 = vld [vmem:[#allocation2 + $0x54] sm:$0xf]
    %v649 = vld [vmem:[#allocation2 + $0x58] sm:$0xf]
    %v650 = vld [vmem:[#allocation2 + $0x5c] sm:$0xf]
    %v651 = vld [vmem:[#allocation2 + $0x60] sm:$0xf]
    %v652 = vld [vmem:[#allocation2 + $0x64] sm:$0xf]
    %v653 = vld [vmem:[#allocation2 + $0x68] sm:$0xf]
    %v654 = vld [vmem:[#allocation2 + $0x6c] sm:$0xf]
    %v655 = vld [vmem:[#allocation2 + $0x70] sm:$0xf]
    %v656 = vld [vmem:[#allocation2 + $0x74] sm:$0xf]
    %v657 = vld [vmem:[#allocation2 + $0x78] sm:$0xf]
    %v658 = vld [vmem:[#allocation2 + $0x7c] sm:$0xf]
    %v659 = vld [vmem:[#allocation2 + $0x80] sm:$0xf]
    %v660 = vld [vmem:[#allocation2 + $0x84] sm:$0xf]
    %v661 = vld [vmem:[#allocation2 + $0x88] sm:$0xf]
    %v662 = vld [vmem:[#allocation2 + $0x8c] sm:$0xf]
    %v663 = vld [vmem:[#allocation2 + $0x90] sm:$0xf]
    %v664 = vld [vmem:[#allocation2 + $0x94] sm:$0xf]
    %v665 = vld [vmem:[#allocation2 + $0x98] sm:$0xf]
    %v666 = vld [vmem:[#allocation2 + $0x9c] sm:$0xf]
    %v667 = vld [vmem:[#allocation2 + $0xa0] sm:$0xf]
    %v668 = vld [vmem:[#allocation2 + $0xa4] sm:$0xf]
    %v669 = vld [vmem:[#allocation2 + $0xa8] sm:$0xf]
    %v670 = vld [vmem:[#allocation2 + $0xac] sm:$0xf]
    %v671 = vld [vmem:[#allocation2 + $0xb0] sm:$0xf]
    %v672 = vld [vmem:[#allocation2 + $0xb4] sm:$0xf]
    %v673 = vld [vmem:[#allocation2 + $0xb8] sm:$0xf]
    %v674 = vld [vmem:[#allocation2 + $0xbc] sm:$0xf]
    %v675 = vld [vmem:[#allocation2 + $0xc0] sm:$0xf]
    %v676 = vld [vmem:[#allocation2 + $0xc4] sm:$0xf]
    %v677 = vld [vmem:[#allocation2 + $0xc8] sm:$0xf]
    %v678 = vld [vmem:[#allocation2 + $0xcc] sm:$0xf]
    %v679 = vld [vmem:[#allocation2 + $0xd0] sm:$0xf]
    %v680 = vld [vmem:[#allocation2 + $0xd4] sm:$0xf]
    %v681 = vld [vmem:[#allocation2 + $0xd8] sm:$0xf]
    %v682 = vld [vmem:[#allocation2 + $0xdc] sm:$0xf]
    %v683 = vld [vmem:[#allocation2 + $0xe0] sm:$0xf]
    %v684 = vld [vmem:[#allocation2 + $0xe4] sm:$0xf]
    %v685 = vld [vmem:[#allocation2 + $0xe8] sm:$0xf]
    %v686 = vld [vmem:[#allocation2 + $0xec] sm:$0xf]
    %v687 = vld [vmem:[#allocation2 + $0xf0] sm:$0xf]
    %v688 = vld [vmem:[#allocation2 + $0xf4] sm:$0xf]
    %v689 = vld [vmem:[#allocation2 + $0xf8] sm:$0xf]
    %v690 = vld [vmem:[#allocation2 + $0xfc] sm:$0xf]
    %v691 = vunpack.c.l.bf16 %v627
    %v692 = vunpack.c.l.bf16 %v628
    %v693 = vunpack.c.l.bf16 %v629
    %v694 = vunpack.c.l.bf16 %v630
    %v695 = vunpack.c.l.bf16 %v631
    %v696 = vunpack.c.l.bf16 %v632
    %v697 = vunpack.c.l.bf16 %v633
    %v698 = vunpack.c.l.bf16 %v634
    %v699 = vunpack.c.l.bf16 %v635
    %v700 = vunpack.c.l.bf16 %v636
    %v701 = vunpack.c.l.bf16 %v637
    %v702 = vunpack.c.l.bf16 %v638
    %v703 = vunpack.c.l.bf16 %v639
    %v704 = vunpack.c.l.bf16 %v640
    %v705 = vunpack.c.l.bf16 %v641
    %v706 = vunpack.c.l.bf16 %v642
    %v707 = vunpack.c.l.bf16 %v643
    %v708 = vunpack.c.l.bf16 %v644
    %v709 = vunpack.c.l.bf16 %v645
    %v710 = vunpack.c.l.bf16 %v646
    %v711 = vunpack.c.l.bf16 %v647
    %v712 = vunpack.c.l.bf16 %v648
    %v713 = vunpack.c.l.bf16 %v649
    %v714 = vunpack.c.l.bf16 %v650
    %v715 = vunpack.c.l.bf16 %v651
    %v716 = vunpack.c.l.bf16 %v652
    %v717 = vunpack.c.l.bf16 %v653
    %v718 = vunpack.c.l.bf16 %v654
    %v719 = vunpack.c.l.bf16 %v655
    %v720 = vunpack.c.l.bf16 %v656
    %v721 = vunpack.c.l.bf16 %v657
    %v722 = vunpack.c.l.bf16 %v658
    %v723 = vunpack.c.l.bf16 %v659
    %v724 = vunpack.c.l.bf16 %v660
    %v725 = vunpack.c.l.bf16 %v661
    %v726 = vunpack.c.l.bf16 %v662
    %v727 = vunpack.c.l.bf16 %v663
    %v728 = vunpack.c.l.bf16 %v664
    %v729 = vunpack.c.l.bf16 %v665
    %v730 = vunpack.c.l.bf16 %v666
    %v731 = vunpack.c.l.bf16 %v667
    %v732 = vunpack.c.l.bf16 %v668
    %v733 = vunpack.c.l.bf16 %v669
    %v734 = vunpack.c.l.bf16 %v670
    %v735 = vunpack.c.l.bf16 %v671
    %v736 = vunpack.c.l.bf16 %v672
    %v737 = vunpack.c.l.bf16 %v673
    %v738 = vunpack.c.l.bf16 %v674
    %v739 = vunpack.c.l.bf16 %v675
    %v740 = vunpack.c.l.bf16 %v676
    %v741 = vunpack.c.l.bf16 %v677
    %v742 = vunpack.c.l.bf16 %v678
    %v743 = vunpack.c.l.bf16 %v679
    %v744 = vunpack.c.l.bf16 %v680
    %v745 = vunpack.c.l.bf16 %v681
    %v746 = vunpack.c.l.bf16 %v682
    %v747 = vunpack.c.l.bf16 %v683
    %v748 = vunpack.c.l.bf16 %v684
    %v749 = vunpack.c.l.bf16 %v685
    %v750 = vunpack.c.l.bf16 %v686
    %v751 = vunpack.c.l.bf16 %v687
    %v752 = vunpack.c.l.bf16 %v688
    %v753 = vunpack.c.l.bf16 %v689
    %v754 = vunpack.c.l.bf16 %v690
    %755 = vrot.lane.b32.xlu0 %v437, 120
    %v756 = vpop.permute.xlu0 %755
    %757 = vrot.lane.b32.xlu0 %v442, 120
    %v758 = vpop.permute.xlu0 %757
    %759 = vrot.lane.b32.xlu0 %v447, 120
    %v760 = vpop.permute.xlu0 %759
    %761 = vrot.lane.b32.xlu0 %v452, 120
    %v762 = vpop.permute.xlu0 %761
    %763 = vrot.lane.b32.xlu0 %v457, 120
    %v764 = vpop.permute.xlu0 %763
    %765 = vrot.lane.b32.xlu0 %v462, 120
    %v766 = vpop.permute.xlu0 %765
    %767 = vrot.lane.b32.xlu0 %v467, 120
    %v768 = vpop.permute.xlu0 %767
    %769 = vrot.lane.b32.xlu0 %v472, 120
    %v770 = vpop.permute.xlu0 %769
    %vm771 = vcmask 64512
    %v772 = vsel %vm771, %v437, 0
    %v774 = vsel %vm771, %v442, 0
    %v776 = vsel %vm771, %v447, 0
    %v778 = vsel %vm771, %v452, 0
    %v780 = vsel %vm771, %v457, 0
    %v782 = vsel %vm771, %v462, 0
    %v784 = vsel %vm771, %v467, 0
    %v786 = vsel %vm771, %v472, 0
    %v788 = vsel %vm771, %v756, 0
    %v790 = vsel %vm771, %v758, 0
    %v792 = vsel %vm771, %v760, 0
    %v794 = vsel %vm771, %v762, 0
    %v796 = vsel %vm771, %v764, 0
    %v798 = vsel %vm771, %v766, 0
    %v800 = vsel %vm771, %v768, 0
    %v802 = vsel %vm771, %v770, 0
    %804 = vmatprep.subr.mxu0 0.0
    %805 = vmatpush1.xpose.msra.mxu0 %v788
    %806 = vmatprep.subr.mxu0 0.0
    %807 = vmatpush1.xpose.msra.mxu0 %v790
    %808 = vmatprep.subr.mxu0 0.0
    %809 = vmatpush1.xpose.msra.mxu0 %v792
    %810 = vmatprep.subr.mxu0 0.0
    %811 = vmatpush1.xpose.msra.mxu0 %v794
    %812 = vmatprep.subr.mxu0 0.0
    %813 = vmatpush1.xpose.msra.mxu0 %v796
    %814 = vmatprep.subr.mxu0 0.0
    %815 = vmatpush1.xpose.msra.mxu0 %v798
    %816 = vmatprep.subr.mxu0 0.0
    %817 = vmatpush1.xpose.msra.mxu0 %v800
    %818 = vmatprep.subr.mxu0 0.0
    %819 = vmatpush1.xpose.msra.mxu0 %v802
    %820 = vmatprep.subr.mxu0 0.0
    %821 = vmatpush1.xpose.msra.mxu0 0.0
    %822 = vmatprep.subr.mxu0 0.0
    %823 = vmatpush1.xpose.msra.mxu0 0.0
    %824 = vmatprep.subr.mxu0 0.0
    %825 = vmatpush1.xpose.msra.mxu0 0.0
    %826 = vmatprep.subr.mxu0 0.0
    %827 = vmatpush1.xpose.msra.mxu0 0.0
    %828 = vmatprep.subr.mxu0 0.0
    %829 = vmatpush1.xpose.msra.mxu0 0.0
    %830 = vmatprep.subr.mxu0 0.0
    %831 = vmatpush1.xpose.msra.mxu0 0.0
    %832 = vmatprep.subr.mxu0 0.0
    %833 = vmatpush1.xpose.msra.mxu0 0.0
    %834 = vmatprep.subr.mxu0 0.0
    %835 = vmatpush1.xpose.msra.mxu0 0.0
    %836 = vmatprep.subr.mxu0 0.0
    %837 = vmatpush1.xpose.msra.mxu0 0.0
    %838 = vmatprep.subr.mxu0 0.0
    %839 = vmatpush1.xpose.msra.mxu0 0.0
    %840 = vmatprep.subr.mxu0 0.0
    %841 = vmatpush1.xpose.msra.mxu0 0.0
    %842 = vmatprep.subr.mxu0 0.0
    %843 = vmatpush1.xpose.msra.mxu0 0.0
    %844 = vmatprep.subr.mxu0 0.0
    %845 = vmatpush1.xpose.msra.mxu0 0.0
    %846 = vmatprep.subr.mxu0 0.0
    %847 = vmatpush1.xpose.msra.mxu0 0.0
    %848 = vmatprep.subr.mxu0 0.0
    %849 = vmatpush1.xpose.msra.mxu0 0.0
    %850 = vmatprep.subr.mxu0 0.0
    %851 = vmatpush1.xpose.msra.mxu0 0.0
    %852 = vmatprep.subr.mxu0 0.0
    %853 = vmatpush1.xpose.msra.mxu0 0.0
    %854 = vmatprep.subr.mxu0 0.0
    %855 = vmatpush1.xpose.msra.mxu0 0.0
    %856 = vmatprep.subr.mxu0 0.0
    %857 = vmatpush1.xpose.msra.mxu0 0.0
    %858 = vmatprep.subr.mxu0 0.0
    %859 = vmatpush1.xpose.msra.mxu0 0.0
    %860 = vmatprep.subr.mxu0 0.0
    %861 = vmatpush1.xpose.msra.mxu0 0.0
    %862 = vmatprep.subr.mxu0 0.0
    %863 = vmatpush1.xpose.msra.mxu0 0.0
    %864 = vmatprep.subr.mxu0 0.0
    %865 = vmatpush1.xpose.msra.mxu0 0.0
    %866 = vmatprep.subr.mxu0 0.0
    %867 = vmatpush1.xpose.msra.mxu0 0.0
    %868 = vmatprep.mubr.f32.mxu0 0.0
    %869 = vmatmul.mubr.f32.gmra.mrb[0].mxu0 %v772
    %v870 = vpop.f32.mrb[0].mxu0
    %v871 = vadd.f32 %v691, %v870
    %v872 = vpop.f32.mrb[0].mxu0
    %873 = vmatprep.mubr.f32.mxu0 0.0
    %874 = vmatmul.mubr.f32.gmra.mrb[0].mxu0 %v774
    %v875 = vpop.f32.mrb[0].mxu0
    %v876 = vadd.f32 %v692, %v875
    %v877 = vpop.f32.mrb[0].mxu0
    %878 = vmatprep.mubr.f32.mxu0 0.0
    %879 = vmatmul.mubr.f32.gmra.mrb[0].mxu0 %v776
    %v880 = vpop.f32.mrb[0].mxu0
    %v881 = vadd.f32 %v693, %v880
    %v882 = vpop.f32.mrb[0].mxu0
    %883 = vmatprep.mubr.f32.mxu0 0.0
    %884 = vmatmul.mubr.f32.gmra.mrb[0].mxu0 %v778
    %v885 = vpop.f32.mrb[0].mxu0
    %v886 = vadd.f32 %v694, %v885
    %v887 = vpop.f32.mrb[0].mxu0
    %888 = vmatprep.mubr.f32.mxu0 0.0
    %889 = vmatmul.mubr.f32.gmra.mrb[0].mxu0 %v780
    %v890 = vpop.f32.mrb[0].mxu0
    %v891 = vadd.f32 %v695, %v890
    %v892 = vpop.f32.mrb[0].mxu0
    %893 = vmatprep.mubr.f32.mxu0 0.0
    %894 = vmatmul.mubr.f32.gmra.mrb[0].mxu0 %v782
    %v895 = vpop.f32.mrb[0].mxu0
    %v896 = vadd.f32 %v696, %v895
    %v897 = vpop.f32.mrb[0].mxu0
    %898 = vmatprep.mubr.f32.mxu0 0.0
    %899 = vmatmul.mubr.f32.gmra.mrb[0].mxu0 %v784
    %v900 = vpop.f32.mrb[0].mxu0
    %v901 = vadd.f32 %v697, %v900
    %v902 = vpop.f32.mrb[0].mxu0
    %903 = vmatprep.mubr.f32.mxu0 0.0
    %904 = vmatmul.mubr.f32.gmra.mrb[0].mxu0 %v786
    %v905 = vpop.f32.mrb[0].mxu0
    %v906 = vadd.f32 %v698, %v905
    %v907 = vpop.f32.mrb[0].mxu0
    %908 = vdwg.mxu0
    %909 = vrot.lane.b32.xlu0 %v524, 120
    %v910 = vpop.permute.xlu0 %909
    %911 = vrot.lane.b32.xlu0 %v526, 120
    %v912 = vpop.permute.xlu0 %911
    %913 = vrot.lane.b32.xlu0 %v528, 120
    %v914 = vpop.permute.xlu0 %913
    %915 = vrot.lane.b32.xlu0 %v530, 120
    %v916 = vpop.permute.xlu0 %915
    %917 = vrot.lane.b32.xlu0 %v532, 120
    %v918 = vpop.permute.xlu0 %917
    %919 = vrot.lane.b32.xlu0 %v534, 120
    %v920 = vpop.permute.xlu0 %919
    %921 = vrot.lane.b32.xlu0 %v536, 120
    %v922 = vpop.permute.xlu0 %921
    %923 = vrot.lane.b32.xlu0 %v538, 120
    %v924 = vpop.permute.xlu0 %923
    %v925 = vsel %vm771, %v524, 0
    %v927 = vsel %vm771, %v526, 0
    %v929 = vsel %vm771, %v528, 0
    %v931 = vsel %vm771, %v530, 0
    %v933 = vsel %vm771, %v532, 0
    %v935 = vsel %vm771, %v534, 0
    %v937 = vsel %vm771, %v536, 0
    %v939 = vsel %vm771, %v538, 0
    %v941 = vsel %vm771, %v910, 0
    %v943 = vsel %vm771, %v912, 0
    %v945 = vsel %vm771, %v914, 0
    %v947 = vsel %vm771, %v916, 0
    %v949 = vsel %vm771, %v918, 0
    %v951 = vsel %vm771, %v920, 0
    %v953 = vsel %vm771, %v922, 0
    %v955 = vsel %vm771, %v924, 0
    %957 = vmatprep.subr.mxu0 0.0
    %958 = vmatpush1.xpose.msra.mxu0 %v941
    %959 = vmatprep.subr.mxu0 0.0
    %960 = vmatpush1.xpose.msra.mxu0 %v943
    %961 = vmatprep.subr.mxu0 0.0
    %962 = vmatpush1.xpose.msra.mxu0 %v945
    %963 = vmatprep.subr.mxu0 0.0
    %964 = vmatpush1.xpose.msra.mxu0 %v947
    %965 = vmatprep.subr.mxu0 0.0
    %966 = vmatpush1.xpose.msra.mxu0 %v949
    %967 = vmatprep.subr.mxu0 0.0
    %968 = vmatpush1.xpose.msra.mxu0 %v951
    %969 = vmatprep.subr.mxu0 0.0
    %970 = vmatpush1.xpose.msra.mxu0 %v953
    %971 = vmatprep.subr.mxu0 0.0
    %972 = vmatpush1.xpose.msra.mxu0 %v955
    %973 = vmatprep.subr.mxu0 0.0
    %974 = vmatpush1.xpose.msra.mxu0 0.0
    %975 = vmatprep.subr.mxu0 0.0
    %976 = vmatpush1.xpose.msra.mxu0 0.0
    %977 = vmatprep.subr.mxu0 0.0
    %978 = vmatpush1.xpose.msra.mxu0 0.0
    %979 = vmatprep.subr.mxu0 0.0
    %980 = vmatpush1.xpose.msra.mxu0 0.0
    %981 = vmatprep.subr.mxu0 0.0
    %982 = vmatpush1.xpose.msra.mxu0 0.0
    %983 = vmatprep.subr.mxu0 0.0
    %984 = vmatpush1.xpose.msra.mxu0 0.0
    %985 = vmatprep.subr.mxu0 0.0
    %986 = vmatpush1.xpose.msra.mxu0 0.0
    %987 = vmatprep.subr.mxu0 0.0
    %988 = vmatpush1.xpose.msra.mxu0 0.0
    %989 = vmatprep.subr.mxu0 0.0
    %990 = vmatpush1.xpose.msra.mxu0 0.0
    %991 = vmatprep.subr.mxu0 0.0
    %992 = vmatpush1.xpose.msra.mxu0 0.0
    %993 = vmatprep.subr.mxu0 0.0
    %994 = vmatpush1.xpose.msra.mxu0 0.0
    %995 = vmatprep.subr.mxu0 0.0
    %996 = vmatpush1.xpose.msra.mxu0 0.0
    %997 = vmatprep.subr.mxu0 0.0
    %998 = vmatpush1.xpose.msra.mxu0 0.0
    %999 = vmatprep.subr.mxu0 0.0
    %1000 = vmatpush1.xpose.msra.mxu0 0.0
    %1001 = vmatprep.subr.mxu0 0.0
    %1002 = vmatpush1.xpose.msra.mxu0 0.0
    %1003 = vmatprep.subr.mxu0 0.0
    %1004 = vmatpush1.xpose.msra.mxu0 0.0
    %1005 = vmatprep.subr.mxu0 0.0
    %1006 = vmatpush1.xpose.msra.mxu0 0.0
    %1007 = vmatprep.subr.mxu0 0.0
    %1008 = vmatpush1.xpose.msra.mxu0 0.0
    %1009 = vmatprep.subr.mxu0 0.0
    %1010 = vmatpush1.xpose.msra.mxu0 0.0
    %1011 = vmatprep.subr.mxu0 0.0
    %1012 = vmatpush1.xpose.msra.mxu0 0.0
    %1013 = vmatprep.subr.mxu0 0.0
    %1014 = vmatpush1.xpose.msra.mxu0 0.0
    %1015 = vmatprep.subr.mxu0 0.0
    %1016 = vmatpush1.xpose.msra.mxu0 0.0
    %1017 = vmatprep.subr.mxu0 0.0
    %1018 = vmatpush1.xpose.msra.mxu0 0.0
    %1019 = vmatprep.subr.mxu0 0.0
    %1020 = vmatpush1.xpose.msra.mxu0 0.0
    %1021 = vmatprep.mubr.f32.mxu0 0.0
    %1022 = vmatmul.mubr.f32.gmra.mrb[0].mxu0 %v925
    %v1023 = vpop.f32.mrb[0].mxu0
    %v1024 = vadd.f32 %v699, %v1023
    %v1025 = vpop.f32.mrb[0].mxu0
    %1026 = vmatprep.mubr.f32.mxu0 0.0
    %1027 = vmatmul.mubr.f32.gmra.mrb[0].mxu0 %v927
    %v1028 = vpop.f32.mrb[0].mxu0
    %v1029 = vadd.f32 %v700, %v1028
    %v1030 = vpop.f32.mrb[0].mxu0
    %1031 = vmatprep.mubr.f32.mxu0 0.0
    %1032 = vmatmul.mubr.f32.gmra.mrb[0].mxu0 %v929
    %v1033 = vpop.f32.mrb[0].mxu0
    %v1034 = vadd.f32 %v701, %v1033
    %v1035 = vpop.f32.mrb[0].mxu0
    %1036 = vmatprep.mubr.f32.mxu0 0.0
    %1037 = vmatmul.mubr.f32.gmra.mrb[0].mxu0 %v931
    %v1038 = vpop.f32.mrb[0].mxu0
    %v1039 = vadd.f32 %v702, %v1038
    %v1040 = vpop.f32.mrb[0].mxu0
    %1041 = vmatprep.mubr.f32.mxu0 0.0
    %1042 = vmatmul.mubr.f32.gmra.mrb[0].mxu0 %v933
    %v1043 = vpop.f32.mrb[0].mxu0
    %v1044 = vadd.f32 %v703, %v1043
    %v1045 = vpop.f32.mrb[0].mxu0
    %1046 = vmatprep.mubr.f32.mxu0 0.0
    %1047 = vmatmul.mubr.f32.gmra.mrb[0].mxu0 %v935
    %v1048 = vpop.f32.mrb[0].mxu0
    %v1049 = vadd.f32 %v704, %v1048
    %v1050 = vpop.f32.mrb[0].mxu0
    %1051 = vmatprep.mubr.f32.mxu0 0.0
    %1052 = vmatmul.mubr.f32.gmra.mrb[0].mxu0 %v937
    %v1053 = vpop.f32.mrb[0].mxu0
    %v1054 = vadd.f32 %v705, %v1053
    %v1055 = vpop.f32.mrb[0].mxu0
    %1056 = vmatprep.mubr.f32.mxu0 0.0
    %1057 = vmatmul.mubr.f32.gmra.mrb[0].mxu0 %v939
    %v1058 = vpop.f32.mrb[0].mxu0
    %v1059 = vadd.f32 %v706, %v1058
    %v1060 = vpop.f32.mrb[0].mxu0
    %1061 = vdwg.mxu0
    %1062 = vrot.lane.b32.xlu0 %v540, 120
    %v1063 = vpop.permute.xlu0 %1062
    %1064 = vrot.lane.b32.xlu0 %v542, 120
    %v1065 = vpop.permute.xlu0 %1064
    %1066 = vrot.lane.b32.xlu0 %v544, 120
    %v1067 = vpop.permute.xlu0 %1066
    %1068 = vrot.lane.b32.xlu0 %v546, 120
    %v1069 = vpop.permute.xlu0 %1068
    %1070 = vrot.lane.b32.xlu0 %v548, 120
    %v1071 = vpop.permute.xlu0 %1070
    %1072 = vrot.lane.b32.xlu0 %v550, 120
    %v1073 = vpop.permute.xlu0 %1072
    %1074 = vrot.lane.b32.xlu0 %v552, 120
    %v1075 = vpop.permute.xlu0 %1074
    %1076 = vrot.lane.b32.xlu0 %v554, 120
    %v1077 = vpop.permute.xlu0 %1076
    %v1078 = vsel %vm771, %v540, 0
    %v1080 = vsel %vm771, %v542, 0
    %v1082 = vsel %vm771, %v544, 0
    %v1084 = vsel %vm771, %v546, 0
    %v1086 = vsel %vm771, %v548, 0
    %v1088 = vsel %vm771, %v550, 0
    %v1090 = vsel %vm771, %v552, 0
    %v1092 = vsel %vm771, %v554, 0
    %v1094 = vsel %vm771, %v1063, 0
    %v1096 = vsel %vm771, %v1065, 0
    %v1098 = vsel %vm771, %v1067, 0
    %v1100 = vsel %vm771, %v1069, 0
    %v1102 = vsel %vm771, %v1071, 0
    %v1104 = vsel %vm771, %v1073, 0
    %v1106 = vsel %vm771, %v1075, 0
    %v1108 = vsel %vm771, %v1077, 0
    %1110 = vmatprep.subr.mxu0 0.0
    %1111 = vmatpush1.xpose.msra.mxu0 %v1094
    %1112 = vmatprep.subr.mxu0 0.0
    %1113 = vmatpush1.xpose.msra.mxu0 %v1096
    %1114 = vmatprep.subr.mxu0 0.0
    %1115 = vmatpush1.xpose.msra.mxu0 %v1098
    %1116 = vmatprep.subr.mxu0 0.0
    %1117 = vmatpush1.xpose.msra.mxu0 %v1100
    %1118 = vmatprep.subr.mxu0 0.0
    %1119 = vmatpush1.xpose.msra.mxu0 %v1102
    %1120 = vmatprep.subr.mxu0 0.0
    %1121 = vmatpush1.xpose.msra.mxu0 %v1104
    %1122 = vmatprep.subr.mxu0 0.0
    %1123 = vmatpush1.xpose.msra.mxu0 %v1106
    %1124 = vmatprep.subr.mxu0 0.0
    %1125 = vmatpush1.xpose.msra.mxu0 %v1108
    %1126 = vmatprep.subr.mxu0 0.0
    %1127 = vmatpush1.xpose.msra.mxu0 0.0
    %1128 = vmatprep.subr.mxu0 0.0
    %1129 = vmatpush1.xpose.msra.mxu0 0.0
    %1130 = vmatprep.subr.mxu0 0.0
    %1131 = vmatpush1.xpose.msra.mxu0 0.0
    %1132 = vmatprep.subr.mxu0 0.0
    %1133 = vmatpush1.xpose.msra.mxu0 0.0
    %1134 = vmatprep.subr.mxu0 0.0
    %1135 = vmatpush1.xpose.msra.mxu0 0.0
    %1136 = vmatprep.subr.mxu0 0.0
    %1137 = vmatpush1.xpose.msra.mxu0 0.0
    %1138 = vmatprep.subr.mxu0 0.0
    %1139 = vmatpush1.xpose.msra.mxu0 0.0
    %1140 = vmatprep.subr.mxu0 0.0
    %1141 = vmatpush1.xpose.msra.mxu0 0.0
    %1142 = vmatprep.subr.mxu0 0.0
    %1143 = vmatpush1.xpose.msra.mxu0 0.0
    %1144 = vmatprep.subr.mxu0 0.0
    %1145 = vmatpush1.xpose.msra.mxu0 0.0
    %1146 = vmatprep.subr.mxu0 0.0
    %1147 = vmatpush1.xpose.msra.mxu0 0.0
    %1148 = vmatprep.subr.mxu0 0.0
    %1149 = vmatpush1.xpose.msra.mxu0 0.0
    %1150 = vmatprep.subr.mxu0 0.0
    %1151 = vmatpush1.xpose.msra.mxu0 0.0
    %1152 = vmatprep.subr.mxu0 0.0
    %1153 = vmatpush1.xpose.msra.mxu0 0.0
    %1154 = vmatprep.subr.mxu0 0.0
    %1155 = vmatpush1.xpose.msra.mxu0 0.0
    %1156 = vmatprep.subr.mxu0 0.0
    %1157 = vmatpush1.xpose.msra.mxu0 0.0
    %1158 = vmatprep.subr.mxu0 0.0
    %1159 = vmatpush1.xpose.msra.mxu0 0.0
    %1160 = vmatprep.subr.mxu0 0.0
    %1161 = vmatpush1.xpose.msra.mxu0 0.0
    %1162 = vmatprep.subr.mxu0 0.0
    %1163 = vmatpush1.xpose.msra.mxu0 0.0
    %1164 = vmatprep.subr.mxu0 0.0
    %1165 = vmatpush1.xpose.msra.mxu0 0.0
    %1166 = vmatprep.subr.mxu0 0.0
    %1167 = vmatpush1.xpose.msra.mxu0 0.0
    %1168 = vmatprep.subr.mxu0 0.0
    %1169 = vmatpush1.xpose.msra.mxu0 0.0
    %1170 = vmatprep.subr.mxu0 0.0
    %1171 = vmatpush1.xpose.msra.mxu0 0.0
    %1172 = vmatprep.subr.mxu0 0.0
    %1173 = vmatpush1.xpose.msra.mxu0 0.0
    %1174 = vmatprep.mubr.f32.mxu0 0.0
    %1175 = vmatmul.mubr.f32.gmra.mrb[0].mxu0 %v1078
    %v1176 = vpop.f32.mrb[0].mxu0
    %v1177 = vadd.f32 %v707, %v1176
    %v1178 = vpop.f32.mrb[0].mxu0
    %1179 = vmatprep.mubr.f32.mxu0 0.0
    %1180 = vmatmul.mubr.f32.gmra.mrb[0].mxu0 %v1080
    %v1181 = vpop.f32.mrb[0].mxu0
    %v1182 = vadd.f32 %v708, %v1181
    %v1183 = vpop.f32.mrb[0].mxu0
    %1184 = vmatprep.mubr.f32.mxu0 0.0
    %1185 = vmatmul.mubr.f32.gmra.mrb[0].mxu0 %v1082
    %v1186 = vpop.f32.mrb[0].mxu0
    %v1187 = vadd.f32 %v709, %v1186
    %v1188 = vpop.f32.mrb[0].mxu0
    %1189 = vmatprep.mubr.f32.mxu0 0.0
    %1190 = vmatmul.mubr.f32.gmra.mrb[0].mxu0 %v1084
    %v1191 = vpop.f32.mrb[0].mxu0
    %v1192 = vadd.f32 %v710, %v1191
    %v1193 = vpop.f32.mrb[0].mxu0
    %1194 = vmatprep.mubr.f32.mxu0 0.0
    %1195 = vmatmul.mubr.f32.gmra.mrb[0].mxu0 %v1086
    %v1196 = vpop.f32.mrb[0].mxu0
    %v1197 = vadd.f32 %v711, %v1196
    %v1198 = vpop.f32.mrb[0].mxu0
    %1199 = vmatprep.mubr.f32.mxu0 0.0
    %1200 = vmatmul.mubr.f32.gmra.mrb[0].mxu0 %v1088
    %v1201 = vpop.f32.mrb[0].mxu0
    %v1202 = vadd.f32 %v712, %v1201
    %v1203 = vpop.f32.mrb[0].mxu0
    %1204 = vmatprep.mubr.f32.mxu0 0.0
    %1205 = vmatmul.mubr.f32.gmra.mrb[0].mxu0 %v1090
    %v1206 = vpop.f32.mrb[0].mxu0
    %v1207 = vadd.f32 %v713, %v1206
    %v1208 = vpop.f32.mrb[0].mxu0
    %1209 = vmatprep.mubr.f32.mxu0 0.0
    %1210 = vmatmul.mubr.f32.gmra.mrb[0].mxu0 %v1092
    %v1211 = vpop.f32.mrb[0].mxu0
    %v1212 = vadd.f32 %v714, %v1211
    %v1213 = vpop.f32.mrb[0].mxu0
    %1214 = vdwg.mxu0
    %1215 = vrot.lane.b32.xlu0 %v556, 120
    %v1216 = vpop.permute.xlu0 %1215
    %1217 = vrot.lane.b32.xlu0 %v558, 120
    %v1218 = vpop.permute.xlu0 %1217
    %1219 = vrot.lane.b32.xlu0 %v560, 120
    %v1220 = vpop.permute.xlu0 %1219
    %1221 = vrot.lane.b32.xlu0 %v562, 120
    %v1222 = vpop.permute.xlu0 %1221
    %1223 = vrot.lane.b32.xlu0 %v564, 120
    %v1224 = vpop.permute.xlu0 %1223
    %1225 = vrot.lane.b32.xlu0 %v566, 120
    %v1226 = vpop.permute.xlu0 %1225
    %1227 = vrot.lane.b32.xlu0 %v568, 120
    %v1228 = vpop.permute.xlu0 %1227
    %1229 = vrot.lane.b32.xlu0 %v570, 120
    %v1230 = vpop.permute.xlu0 %1229
    %v1231 = vsel %vm771, %v556, 0
    %v1233 = vsel %vm771, %v558, 0
    %v1235 = vsel %vm771, %v560, 0
    %v1237 = vsel %vm771, %v562, 0
    %v1239 = vsel %vm771, %v564, 0
    %v1241 = vsel %vm771, %v566, 0
    %v1243 = vsel %vm771, %v568, 0
    %v1245 = vsel %vm771, %v570, 0
    %v1247 = vsel %vm771, %v1216, 0
    %v1249 = vsel %vm771, %v1218, 0
    %v1251 = vsel %vm771, %v1220, 0
    %v1253 = vsel %vm771, %v1222, 0
    %v1255 = vsel %vm771, %v1224, 0
    %v1257 = vsel %vm771, %v1226, 0
    %v1259 = vsel %vm771, %v1228, 0
    %v1261 = vsel %vm771, %v1230, 0
    %1263 = vmatprep.subr.mxu0 0.0
    %1264 = vmatpush1.xpose.msra.mxu0 %v1247
    %1265 = vmatprep.subr.mxu0 0.0
    %1266 = vmatpush1.xpose.msra.mxu0 %v1249
    %1267 = vmatprep.subr.mxu0 0.0
    %1268 = vmatpush1.xpose.msra.mxu0 %v1251
    %1269 = vmatprep.subr.mxu0 0.0
    %1270 = vmatpush1.xpose.msra.mxu0 %v1253
    %1271 = vmatprep.subr.mxu0 0.0
    %1272 = vmatpush1.xpose.msra.mxu0 %v1255
    %1273 = vmatprep.subr.mxu0 0.0
    %1274 = vmatpush1.xpose.msra.mxu0 %v1257
    %1275 = vmatprep.subr.mxu0 0.0
    %1276 = vmatpush1.xpose.msra.mxu0 %v1259
    %1277 = vmatprep.subr.mxu0 0.0
    %1278 = vmatpush1.xpose.msra.mxu0 %v1261
    %1279 = vmatprep.subr.mxu0 0.0
    %1280 = vmatpush1.xpose.msra.mxu0 0.0
    %1281 = vmatprep.subr.mxu0 0.0
    %1282 = vmatpush1.xpose.msra.mxu0 0.0
    %1283 = vmatprep.subr.mxu0 0.0
    %1284 = vmatpush1.xpose.msra.mxu0 0.0
    %1285 = vmatprep.subr.mxu0 0.0
    %1286 = vmatpush1.xpose.msra.mxu0 0.0
    %1287 = vmatprep.subr.mxu0 0.0
    %1288 = vmatpush1.xpose.msra.mxu0 0.0
    %1289 = vmatprep.subr.mxu0 0.0
    %1290 = vmatpush1.xpose.msra.mxu0 0.0
    %1291 = vmatprep.subr.mxu0 0.0
    %1292 = vmatpush1.xpose.msra.mxu0 0.0
    %1293 = vmatprep.subr.mxu0 0.0
    %1294 = vmatpush1.xpose.msra.mxu0 0.0
    %1295 = vmatprep.subr.mxu0 0.0
    %1296 = vmatpush1.xpose.msra.mxu0 0.0
    %1297 = vmatprep.subr.mxu0 0.0
    %1298 = vmatpush1.xpose.msra.mxu0 0.0
    %1299 = vmatprep.subr.mxu0 0.0
    %1300 = vmatpush1.xpose.msra.mxu0 0.0
    %1301 = vmatprep.subr.mxu0 0.0
    %1302 = vmatpush1.xpose.msra.mxu0 0.0
    %1303 = vmatprep.subr.mxu0 0.0
    %1304 = vmatpush1.xpose.msra.mxu0 0.0
    %1305 = vmatprep.subr.mxu0 0.0
    %1306 = vmatpush1.xpose.msra.mxu0 0.0
    %1307 = vmatprep.subr.mxu0 0.0
    %1308 = vmatpush1.xpose.msra.mxu0 0.0
    %1309 = vmatprep.subr.mxu0 0.0
    %1310 = vmatpush1.xpose.msra.mxu0 0.0
    %1311 = vmatprep.subr.mxu0 0.0
    %1312 = vmatpush1.xpose.msra.mxu0 0.0
    %1313 = vmatprep.subr.mxu0 0.0
    %1314 = vmatpush1.xpose.msra.mxu0 0.0
    %1315 = vmatprep.subr.mxu0 0.0
    %1316 = vmatpush1.xpose.msra.mxu0 0.0
    %1317 = vmatprep.subr.mxu0 0.0
    %1318 = vmatpush1.xpose.msra.mxu0 0.0
    %1319 = vmatprep.subr.mxu0 0.0
    %1320 = vmatpush1.xpose.msra.mxu0 0.0
    %1321 = vmatprep.subr.mxu0 0.0
    %1322 = vmatpush1.xpose.msra.mxu0 0.0
    %1323 = vmatprep.subr.mxu0 0.0
    %1324 = vmatpush1.xpose.msra.mxu0 0.0
    %1325 = vmatprep.subr.mxu0 0.0
    %1326 = vmatpush1.xpose.msra.mxu0 0.0
    %1327 = vmatprep.mubr.f32.mxu0 0.0
    %1328 = vmatmul.mubr.f32.gmra.mrb[0].mxu0 %v1231
    %v1329 = vpop.f32.mrb[0].mxu0
    %v1330 = vadd.f32 %v715, %v1329
    %v1331 = vpop.f32.mrb[0].mxu0
    %1332 = vmatprep.mubr.f32.mxu0 0.0
    %1333 = vmatmul.mubr.f32.gmra.mrb[0].mxu0 %v1233
    %v1334 = vpop.f32.mrb[0].mxu0
    %v1335 = vadd.f32 %v716, %v1334
    %v1336 = vpop.f32.mrb[0].mxu0
    %1337 = vmatprep.mubr.f32.mxu0 0.0
    %1338 = vmatmul.mubr.f32.gmra.mrb[0].mxu0 %v1235
    %v1339 = vpop.f32.mrb[0].mxu0
    %v1340 = vadd.f32 %v717, %v1339
    %v1341 = vpop.f32.mrb[0].mxu0
    %1342 = vmatprep.mubr.f32.mxu0 0.0
    %1343 = vmatmul.mubr.f32.gmra.mrb[0].mxu0 %v1237
    %v1344 = vpop.f32.mrb[0].mxu0
    %v1345 = vadd.f32 %v718, %v1344
    %v1346 = vpop.f32.mrb[0].mxu0
    %1347 = vmatprep.mubr.f32.mxu0 0.0
    %1348 = vmatmul.mubr.f32.gmra.mrb[0].mxu0 %v1239
    %v1349 = vpop.f32.mrb[0].mxu0
    %v1350 = vadd.f32 %v719, %v1349
    %v1351 = vpop.f32.mrb[0].mxu0
    %1352 = vmatprep.mubr.f32.mxu0 0.0
    %1353 = vmatmul.mubr.f32.gmra.mrb[0].mxu0 %v1241
    %v1354 = vpop.f32.mrb[0].mxu0
    %v1355 = vadd.f32 %v720, %v1354
    %v1356 = vpop.f32.mrb[0].mxu0
    %1357 = vmatprep.mubr.f32.mxu0 0.0
    %1358 = vmatmul.mubr.f32.gmra.mrb[0].mxu0 %v1243
    %v1359 = vpop.f32.mrb[0].mxu0
    %v1360 = vadd.f32 %v721, %v1359
    %v1361 = vpop.f32.mrb[0].mxu0
    %1362 = vmatprep.mubr.f32.mxu0 0.0
    %1363 = vmatmul.mubr.f32.gmra.mrb[0].mxu0 %v1245
    %v1364 = vpop.f32.mrb[0].mxu0
    %v1365 = vadd.f32 %v722, %v1364
    %v1366 = vpop.f32.mrb[0].mxu0
    %1367 = vdwg.mxu0
    %1368 = vrot.lane.b32.xlu0 %v477, 120
    %v1369 = vpop.permute.xlu0 %1368
    %1370 = vrot.lane.b32.xlu0 %v482, 120
    %v1371 = vpop.permute.xlu0 %1370
    %1372 = vrot.lane.b32.xlu0 %v487, 120
    %v1373 = vpop.permute.xlu0 %1372
    %1374 = vrot.lane.b32.xlu0 %v492, 120
    %v1375 = vpop.permute.xlu0 %1374
    %1376 = vrot.lane.b32.xlu0 %v497, 120
    %v1377 = vpop.permute.xlu0 %1376
    %1378 = vrot.lane.b32.xlu0 %v502, 120
    %v1379 = vpop.permute.xlu0 %1378
    %1380 = vrot.lane.b32.xlu0 %v507, 120
    %v1381 = vpop.permute.xlu0 %1380
    %1382 = vrot.lane.b32.xlu0 %v512, 120
    %v1383 = vpop.permute.xlu0 %1382
    %v1384 = vsel %vm771, %v477, 0
    %v1386 = vsel %vm771, %v482, 0
    %v1388 = vsel %vm771, %v487, 0
    %v1390 = vsel %vm771, %v492, 0
    %v1392 = vsel %vm771, %v497, 0
    %v1394 = vsel %vm771, %v502, 0
    %v1396 = vsel %vm771, %v507, 0
    %v1398 = vsel %vm771, %v512, 0
    %v1400 = vsel %vm771, %v1369, 0
    %v1402 = vsel %vm771, %v1371, 0
    %v1404 = vsel %vm771, %v1373, 0
    %v1406 = vsel %vm771, %v1375, 0
    %v1408 = vsel %vm771, %v1377, 0
    %v1410 = vsel %vm771, %v1379, 0
    %v1412 = vsel %vm771, %v1381, 0
    %v1414 = vsel %vm771, %v1383, 0
    %1416 = vmatprep.subr.mxu0 0.0
    %1417 = vmatpush1.xpose.msra.mxu0 %v1400
    %1418 = vmatprep.subr.mxu0 0.0
    %1419 = vmatpush1.xpose.msra.mxu0 %v1402
    %1420 = vmatprep.subr.mxu0 0.0
    %1421 = vmatpush1.xpose.msra.mxu0 %v1404
    %1422 = vmatprep.subr.mxu0 0.0
    %1423 = vmatpush1.xpose.msra.mxu0 %v1406
    %1424 = vmatprep.subr.mxu0 0.0
    %1425 = vmatpush1.xpose.msra.mxu0 %v1408
    %1426 = vmatprep.subr.mxu0 0.0
    %1427 = vmatpush1.xpose.msra.mxu0 %v1410
    %1428 = vmatprep.subr.mxu0 0.0
    %1429 = vmatpush1.xpose.msra.mxu0 %v1412
    %1430 = vmatprep.subr.mxu0 0.0
    %1431 = vmatpush1.xpose.msra.mxu0 %v1414
    %1432 = vmatprep.subr.mxu0 0.0
    %1433 = vmatpush1.xpose.msra.mxu0 0.0
    %1434 = vmatprep.subr.mxu0 0.0
    %1435 = vmatpush1.xpose.msra.mxu0 0.0
    %1436 = vmatprep.subr.mxu0 0.0
    %1437 = vmatpush1.xpose.msra.mxu0 0.0
    %1438 = vmatprep.subr.mxu0 0.0
    %1439 = vmatpush1.xpose.msra.mxu0 0.0
    %1440 = vmatprep.subr.mxu0 0.0
    %1441 = vmatpush1.xpose.msra.mxu0 0.0
    %1442 = vmatprep.subr.mxu0 0.0
    %1443 = vmatpush1.xpose.msra.mxu0 0.0
    %1444 = vmatprep.subr.mxu0 0.0
    %1445 = vmatpush1.xpose.msra.mxu0 0.0
    %1446 = vmatprep.subr.mxu0 0.0
    %1447 = vmatpush1.xpose.msra.mxu0 0.0
    %1448 = vmatprep.subr.mxu0 0.0
    %1449 = vmatpush1.xpose.msra.mxu0 0.0
    %1450 = vmatprep.subr.mxu0 0.0
    %1451 = vmatpush1.xpose.msra.mxu0 0.0
    %1452 = vmatprep.subr.mxu0 0.0
    %1453 = vmatpush1.xpose.msra.mxu0 0.0
    %1454 = vmatprep.subr.mxu0 0.0
    %1455 = vmatpush1.xpose.msra.mxu0 0.0
    %1456 = vmatprep.subr.mxu0 0.0
    %1457 = vmatpush1.xpose.msra.mxu0 0.0
    %1458 = vmatprep.subr.mxu0 0.0
    %1459 = vmatpush1.xpose.msra.mxu0 0.0
    %1460 = vmatprep.subr.mxu0 0.0
    %1461 = vmatpush1.xpose.msra.mxu0 0.0
    %1462 = vmatprep.subr.mxu0 0.0
    %1463 = vmatpush1.xpose.msra.mxu0 0.0
    %1464 = vmatprep.subr.mxu0 0.0
    %1465 = vmatpush1.xpose.msra.mxu0 0.0
    %1466 = vmatprep.subr.mxu0 0.0
    %1467 = vmatpush1.xpose.msra.mxu0 0.0
    %1468 = vmatprep.subr.mxu0 0.0
    %1469 = vmatpush1.xpose.msra.mxu0 0.0
    %1470 = vmatprep.subr.mxu0 0.0
    %1471 = vmatpush1.xpose.msra.mxu0 0.0
    %1472 = vmatprep.subr.mxu0 0.0
    %1473 = vmatpush1.xpose.msra.mxu0 0.0
    %1474 = vmatprep.subr.mxu0 0.0
    %1475 = vmatpush1.xpose.msra.mxu0 0.0
    %1476 = vmatprep.subr.mxu0 0.0
    %1477 = vmatpush1.xpose.msra.mxu0 0.0
    %1478 = vmatprep.subr.mxu0 0.0
    %1479 = vmatpush1.xpose.msra.mxu0 0.0
    %1480 = vmatprep.mubr.f32.mxu0 0.0
    %1481 = vmatmul.mubr.f32.gmra.mrb[0].mxu0 %v1384
    %v1482 = vpop.f32.mrb[0].mxu0
    %v1483 = vadd.f32 %v723, %v1482
    %v1484 = vpop.f32.mrb[0].mxu0
    %1485 = vmatprep.mubr.f32.mxu0 0.0
    %1486 = vmatmul.mubr.f32.gmra.mrb[0].mxu0 %v1386
    %v1487 = vpop.f32.mrb[0].mxu0
    %v1488 = vadd.f32 %v724, %v1487
    %v1489 = vpop.f32.mrb[0].mxu0
    %1490 = vmatprep.mubr.f32.mxu0 0.0
    %1491 = vmatmul.mubr.f32.gmra.mrb[0].mxu0 %v1388
    %v1492 = vpop.f32.mrb[0].mxu0
    %v1493 = vadd.f32 %v725, %v1492
    %v1494 = vpop.f32.mrb[0].mxu0
    %1495 = vmatprep.mubr.f32.mxu0 0.0
    %1496 = vmatmul.mubr.f32.gmra.mrb[0].mxu0 %v1390
    %v1497 = vpop.f32.mrb[0].mxu0
    %v1498 = vadd.f32 %v726, %v1497
    %v1499 = vpop.f32.mrb[0].mxu0
    %1500 = vmatprep.mubr.f32.mxu0 0.0
    %1501 = vmatmul.mubr.f32.gmra.mrb[0].mxu0 %v1392
    %v1502 = vpop.f32.mrb[0].mxu0
    %v1503 = vadd.f32 %v727, %v1502
    %v1504 = vpop.f32.mrb[0].mxu0
    %1505 = vmatprep.mubr.f32.mxu0 0.0
    %1506 = vmatmul.mubr.f32.gmra.mrb[0].mxu0 %v1394
    %v1507 = vpop.f32.mrb[0].mxu0
    %v1508 = vadd.f32 %v728, %v1507
    %v1509 = vpop.f32.mrb[0].mxu0
    %1510 = vmatprep.mubr.f32.mxu0 0.0
    %1511 = vmatmul.mubr.f32.gmra.mrb[0].mxu0 %v1396
    %v1512 = vpop.f32.mrb[0].mxu0
    %v1513 = vadd.f32 %v729, %v1512
    %v1514 = vpop.f32.mrb[0].mxu0
    %1515 = vmatprep.mubr.f32.mxu0 0.0
    %1516 = vmatmul.mubr.f32.gmra.mrb[0].mxu0 %v1398
    %v1517 = vpop.f32.mrb[0].mxu0
    %v1518 = vadd.f32 %v730, %v1517
    %v1519 = vpop.f32.mrb[0].mxu0
    %1520 = vdwg.mxu0
    %1521 = vrot.lane.b32.xlu0 %v580, 120
    %v1522 = vpop.permute.xlu0 %1521
    %1523 = vrot.lane.b32.xlu0 %v582, 120
    %v1524 = vpop.permute.xlu0 %1523
    %1525 = vrot.lane.b32.xlu0 %v584, 120
    %v1526 = vpop.permute.xlu0 %1525
    %1527 = vrot.lane.b32.xlu0 %v586, 120
    %v1528 = vpop.permute.xlu0 %1527
    %1529 = vrot.lane.b32.xlu0 %v588, 120
    %v1530 = vpop.permute.xlu0 %1529
    %1531 = vrot.lane.b32.xlu0 %v590, 120
    %v1532 = vpop.permute.xlu0 %1531
    %1533 = vrot.lane.b32.xlu0 %v592, 120
    %v1534 = vpop.permute.xlu0 %1533
    %1535 = vrot.lane.b32.xlu0 %v594, 120
    %v1536 = vpop.permute.xlu0 %1535
    %v1537 = vsel %vm771, %v580, 0
    %v1539 = vsel %vm771, %v582, 0
    %v1541 = vsel %vm771, %v584, 0
    %v1543 = vsel %vm771, %v586, 0
    %v1545 = vsel %vm771, %v588, 0
    %v1547 = vsel %vm771, %v590, 0
    %v1549 = vsel %vm771, %v592, 0
    %v1551 = vsel %vm771, %v594, 0
    %v1553 = vsel %vm771, %v1522, 0
    %v1555 = vsel %vm771, %v1524, 0
    %v1557 = vsel %vm771, %v1526, 0
    %v1559 = vsel %vm771, %v1528, 0
    %v1561 = vsel %vm771, %v1530, 0
    %v1563 = vsel %vm771, %v1532, 0
    %v1565 = vsel %vm771, %v1534, 0
    %v1567 = vsel %vm771, %v1536, 0
    %1569 = vmatprep.subr.mxu0 0.0
    %1570 = vmatpush1.xpose.msra.mxu0 %v1553
    %1571 = vmatprep.subr.mxu0 0.0
    %1572 = vmatpush1.xpose.msra.mxu0 %v1555
    %1573 = vmatprep.subr.mxu0 0.0
    %1574 = vmatpush1.xpose.msra.mxu0 %v1557
    %1575 = vmatprep.subr.mxu0 0.0
    %1576 = vmatpush1.xpose.msra.mxu0 %v1559
    %1577 = vmatprep.subr.mxu0 0.0
    %1578 = vmatpush1.xpose.msra.mxu0 %v1561
    %1579 = vmatprep.subr.mxu0 0.0
    %1580 = vmatpush1.xpose.msra.mxu0 %v1563
    %1581 = vmatprep.subr.mxu0 0.0
    %1582 = vmatpush1.xpose.msra.mxu0 %v1565
    %1583 = vmatprep.subr.mxu0 0.0
    %1584 = vmatpush1.xpose.msra.mxu0 %v1567
    %1585 = vmatprep.subr.mxu0 0.0
    %1586 = vmatpush1.xpose.msra.mxu0 0.0
    %1587 = vmatprep.subr.mxu0 0.0
    %1588 = vmatpush1.xpose.msra.mxu0 0.0
    %1589 = vmatprep.subr.mxu0 0.0
    %1590 = vmatpush1.xpose.msra.mxu0 0.0
    %1591 = vmatprep.subr.mxu0 0.0
    %1592 = vmatpush1.xpose.msra.mxu0 0.0
    %1593 = vmatprep.subr.mxu0 0.0
    %1594 = vmatpush1.xpose.msra.mxu0 0.0
    %1595 = vmatprep.subr.mxu0 0.0
    %1596 = vmatpush1.xpose.msra.mxu0 0.0
    %1597 = vmatprep.subr.mxu0 0.0
    %1598 = vmatpush1.xpose.msra.mxu0 0.0
    %1599 = vmatprep.subr.mxu0 0.0
    %1600 = vmatpush1.xpose.msra.mxu0 0.0
    %1601 = vmatprep.subr.mxu0 0.0
    %1602 = vmatpush1.xpose.msra.mxu0 0.0
    %1603 = vmatprep.subr.mxu0 0.0
    %1604 = vmatpush1.xpose.msra.mxu0 0.0
    %1605 = vmatprep.subr.mxu0 0.0
    %1606 = vmatpush1.xpose.msra.mxu0 0.0
    %1607 = vmatprep.subr.mxu0 0.0
    %1608 = vmatpush1.xpose.msra.mxu0 0.0
    %1609 = vmatprep.subr.mxu0 0.0
    %1610 = vmatpush1.xpose.msra.mxu0 0.0
    %1611 = vmatprep.subr.mxu0 0.0
    %1612 = vmatpush1.xpose.msra.mxu0 0.0
    %1613 = vmatprep.subr.mxu0 0.0
    %1614 = vmatpush1.xpose.msra.mxu0 0.0
    %1615 = vmatprep.subr.mxu0 0.0
    %1616 = vmatpush1.xpose.msra.mxu0 0.0
    %1617 = vmatprep.subr.mxu0 0.0
    %1618 = vmatpush1.xpose.msra.mxu0 0.0
    %1619 = vmatprep.subr.mxu0 0.0
    %1620 = vmatpush1.xpose.msra.mxu0 0.0
    %1621 = vmatprep.subr.mxu0 0.0
    %1622 = vmatpush1.xpose.msra.mxu0 0.0
    %1623 = vmatprep.subr.mxu0 0.0
    %1624 = vmatpush1.xpose.msra.mxu0 0.0
    %1625 = vmatprep.subr.mxu0 0.0
    %1626 = vmatpush1.xpose.msra.mxu0 0.0
    %1627 = vmatprep.subr.mxu0 0.0
    %1628 = vmatpush1.xpose.msra.mxu0 0.0
    %1629 = vmatprep.subr.mxu0 0.0
    %1630 = vmatpush1.xpose.msra.mxu0 0.0
    %1631 = vmatprep.subr.mxu0 0.0
    %1632 = vmatpush1.xpose.msra.mxu0 0.0
    %1633 = vmatprep.mubr.f32.mxu0 0.0
    %1634 = vmatmul.mubr.f32.gmra.mrb[0].mxu0 %v1537
    %v1635 = vpop.f32.mrb[0].mxu0
    %v1636 = vadd.f32 %v731, %v1635
    %v1637 = vpop.f32.mrb[0].mxu0
    %1638 = vmatprep.mubr.f32.mxu0 0.0
    %1639 = vmatmul.mubr.f32.gmra.mrb[0].mxu0 %v1539
    %v1640 = vpop.f32.mrb[0].mxu0
    %v1641 = vadd.f32 %v732, %v1640
    %v1642 = vpop.f32.mrb[0].mxu0
    %1643 = vmatprep.mubr.f32.mxu0 0.0
    %1644 = vmatmul.mubr.f32.gmra.mrb[0].mxu0 %v1541
    %v1645 = vpop.f32.mrb[0].mxu0
    %v1646 = vadd.f32 %v733, %v1645
    %v1647 = vpop.f32.mrb[0].mxu0
    %1648 = vmatprep.mubr.f32.mxu0 0.0
    %1649 = vmatmul.mubr.f32.gmra.mrb[0].mxu0 %v1543
    %v1650 = vpop.f32.mrb[0].mxu0
    %v1651 = vadd.f32 %v734, %v1650
    %v1652 = vpop.f32.mrb[0].mxu0
    %1653 = vmatprep.mubr.f32.mxu0 0.0
    %1654 = vmatmul.mubr.f32.gmra.mrb[0].mxu0 %v1545
    %v1655 = vpop.f32.mrb[0].mxu0
    %v1656 = vadd.f32 %v735, %v1655
    %v1657 = vpop.f32.mrb[0].mxu0
    %1658 = vmatprep.mubr.f32.mxu0 0.0
    %1659 = vmatmul.mubr.f32.gmra.mrb[0].mxu0 %v1547
    %v1660 = vpop.f32.mrb[0].mxu0
    %v1661 = vadd.f32 %v736, %v1660
    %v1662 = vpop.f32.mrb[0].mxu0
    %1663 = vmatprep.mubr.f32.mxu0 0.0
    %1664 = vmatmul.mubr.f32.gmra.mrb[0].mxu0 %v1549
    %v1665 = vpop.f32.mrb[0].mxu0
    %v1666 = vadd.f32 %v737, %v1665
    %v1667 = vpop.f32.mrb[0].mxu0
    %1668 = vmatprep.mubr.f32.mxu0 0.0
    %1669 = vmatmul.mubr.f32.gmra.mrb[0].mxu0 %v1551
    %v1670 = vpop.f32.mrb[0].mxu0
    %v1671 = vadd.f32 %v738, %v1670
    %v1672 = vpop.f32.mrb[0].mxu0
    %1673 = vdwg.mxu0
    %1674 = vrot.lane.b32.xlu0 %v596, 120
    %v1675 = vpop.permute.xlu0 %1674
    %1676 = vrot.lane.b32.xlu0 %v598, 120
    %v1677 = vpop.permute.xlu0 %1676
    %1678 = vrot.lane.b32.xlu0 %v600, 120
    %v1679 = vpop.permute.xlu0 %1678
    %1680 = vrot.lane.b32.xlu0 %v602, 120
    %v1681 = vpop.permute.xlu0 %1680
    %1682 = vrot.lane.b32.xlu0 %v604, 120
    %v1683 = vpop.permute.xlu0 %1682
    %1684 = vrot.lane.b32.xlu0 %v606, 120
    %v1685 = vpop.permute.xlu0 %1684
    %1686 = vrot.lane.b32.xlu0 %v608, 120
    %v1687 = vpop.permute.xlu0 %1686
    %1688 = vrot.lane.b32.xlu0 %v610, 120
    %v1689 = vpop.permute.xlu0 %1688
    %v1690 = vsel %vm771, %v596, 0
    %v1692 = vsel %vm771, %v598, 0
    %v1694 = vsel %vm771, %v600, 0
    %v1696 = vsel %vm771, %v602, 0
    %v1698 = vsel %vm771, %v604, 0
    %v1700 = vsel %vm771, %v606, 0
    %v1702 = vsel %vm771, %v608, 0
    %v1704 = vsel %vm771, %v610, 0
    %v1706 = vsel %vm771, %v1675, 0
    %v1708 = vsel %vm771, %v1677, 0
    %v1710 = vsel %vm771, %v1679, 0
    %v1712 = vsel %vm771, %v1681, 0
    %v1714 = vsel %vm771, %v1683, 0
    %v1716 = vsel %vm771, %v1685, 0
    %v1718 = vsel %vm771, %v1687, 0
    %v1720 = vsel %vm771, %v1689, 0
    %1722 = vmatprep.subr.mxu0 0.0
    %1723 = vmatpush1.xpose.msra.mxu0 %v1706
    %1724 = vmatprep.subr.mxu0 0.0
    %1725 = vmatpush1.xpose.msra.mxu0 %v1708
    %1726 = vmatprep.subr.mxu0 0.0
    %1727 = vmatpush1.xpose.msra.mxu0 %v1710
    %1728 = vmatprep.subr.mxu0 0.0
    %1729 = vmatpush1.xpose.msra.mxu0 %v1712
    %1730 = vmatprep.subr.mxu0 0.0
    %1731 = vmatpush1.xpose.msra.mxu0 %v1714
    %1732 = vmatprep.subr.mxu0 0.0
    %1733 = vmatpush1.xpose.msra.mxu0 %v1716
    %1734 = vmatprep.subr.mxu0 0.0
    %1735 = vmatpush1.xpose.msra.mxu0 %v1718
    %1736 = vmatprep.subr.mxu0 0.0
    %1737 = vmatpush1.xpose.msra.mxu0 %v1720
    %1738 = vmatprep.subr.mxu0 0.0
    %1739 = vmatpush1.xpose.msra.mxu0 0.0
    %1740 = vmatprep.subr.mxu0 0.0
    %1741 = vmatpush1.xpose.msra.mxu0 0.0
    %1742 = vmatprep.subr.mxu0 0.0
    %1743 = vmatpush1.xpose.msra.mxu0 0.0
    %1744 = vmatprep.subr.mxu0 0.0
    %1745 = vmatpush1.xpose.msra.mxu0 0.0
    %1746 = vmatprep.subr.mxu0 0.0
    %1747 = vmatpush1.xpose.msra.mxu0 0.0
    %1748 = vmatprep.subr.mxu0 0.0
    %1749 = vmatpush1.xpose.msra.mxu0 0.0
    %1750 = vmatprep.subr.mxu0 0.0
    %1751 = vmatpush1.xpose.msra.mxu0 0.0
    %1752 = vmatprep.subr.mxu0 0.0
    %1753 = vmatpush1.xpose.msra.mxu0 0.0
    %1754 = vmatprep.subr.mxu0 0.0
    %1755 = vmatpush1.xpose.msra.mxu0 0.0
    %1756 = vmatprep.subr.mxu0 0.0
    %1757 = vmatpush1.xpose.msra.mxu0 0.0
    %1758 = vmatprep.subr.mxu0 0.0
    %1759 = vmatpush1.xpose.msra.mxu0 0.0
    %1760 = vmatprep.subr.mxu0 0.0
    %1761 = vmatpush1.xpose.msra.mxu0 0.0
    %1762 = vmatprep.subr.mxu0 0.0
    %1763 = vmatpush1.xpose.msra.mxu0 0.0
    %1764 = vmatprep.subr.mxu0 0.0
    %1765 = vmatpush1.xpose.msra.mxu0 0.0
    %1766 = vmatprep.subr.mxu0 0.0
    %1767 = vmatpush1.xpose.msra.mxu0 0.0
    %1768 = vmatprep.subr.mxu0 0.0
    %1769 = vmatpush1.xpose.msra.mxu0 0.0
    %1770 = vmatprep.subr.mxu0 0.0
    %1771 = vmatpush1.xpose.msra.mxu0 0.0
    %1772 = vmatprep.subr.mxu0 0.0
    %1773 = vmatpush1.xpose.msra.mxu0 0.0
    %1774 = vmatprep.subr.mxu0 0.0
    %1775 = vmatpush1.xpose.msra.mxu0 0.0
    %1776 = vmatprep.subr.mxu0 0.0
    %1777 = vmatpush1.xpose.msra.mxu0 0.0
    %1778 = vmatprep.subr.mxu0 0.0
    %1779 = vmatpush1.xpose.msra.mxu0 0.0
    %1780 = vmatprep.subr.mxu0 0.0
    %1781 = vmatpush1.xpose.msra.mxu0 0.0
    %1782 = vmatprep.subr.mxu0 0.0
    %1783 = vmatpush1.xpose.msra.mxu0 0.0
    %1784 = vmatprep.subr.mxu0 0.0
    %1785 = vmatpush1.xpose.msra.mxu0 0.0
    %1786 = vmatprep.mubr.f32.mxu0 0.0
    %1787 = vmatmul.mubr.f32.gmra.mrb[0].mxu0 %v1690
    %v1788 = vpop.f32.mrb[0].mxu0
    %v1789 = vadd.f32 %v739, %v1788
    %v1790 = vpop.f32.mrb[0].mxu0
    %1791 = vmatprep.mubr.f32.mxu0 0.0
    %1792 = vmatmul.mubr.f32.gmra.mrb[0].mxu0 %v1692
    %v1793 = vpop.f32.mrb[0].mxu0
    %v1794 = vadd.f32 %v740, %v1793
    %v1795 = vpop.f32.mrb[0].mxu0
    %1796 = vmatprep.mubr.f32.mxu0 0.0
    %1797 = vmatmul.mubr.f32.gmra.mrb[0].mxu0 %v1694
    %v1798 = vpop.f32.mrb[0].mxu0
    %v1799 = vadd.f32 %v741, %v1798
    %v1800 = vpop.f32.mrb[0].mxu0
    %1801 = vmatprep.mubr.f32.mxu0 0.0
    %1802 = vmatmul.mubr.f32.gmra.mrb[0].mxu0 %v1696
    %v1803 = vpop.f32.mrb[0].mxu0
    %v1804 = vadd.f32 %v742, %v1803
    %v1805 = vpop.f32.mrb[0].mxu0
    %1806 = vmatprep.mubr.f32.mxu0 0.0
    %1807 = vmatmul.mubr.f32.gmra.mrb[0].mxu0 %v1698
    %v1808 = vpop.f32.mrb[0].mxu0
    %v1809 = vadd.f32 %v743, %v1808
    %v1810 = vpop.f32.mrb[0].mxu0
    %1811 = vmatprep.mubr.f32.mxu0 0.0
    %1812 = vmatmul.mubr.f32.gmra.mrb[0].mxu0 %v1700
    %v1813 = vpop.f32.mrb[0].mxu0
    %v1814 = vadd.f32 %v744, %v1813
    %v1815 = vpop.f32.mrb[0].mxu0
    %1816 = vmatprep.mubr.f32.mxu0 0.0
    %1817 = vmatmul.mubr.f32.gmra.mrb[0].mxu0 %v1702
    %v1818 = vpop.f32.mrb[0].mxu0
    %v1819 = vadd.f32 %v745, %v1818
    %v1820 = vpop.f32.mrb[0].mxu0
    %1821 = vmatprep.mubr.f32.mxu0 0.0
    %1822 = vmatmul.mubr.f32.gmra.mrb[0].mxu0 %v1704
    %v1823 = vpop.f32.mrb[0].mxu0
    %v1824 = vadd.f32 %v746, %v1823
    %v1825 = vpop.f32.mrb[0].mxu0
    %1826 = vdwg.mxu0
    %1827 = vrot.lane.b32.xlu0 %v612, 120
    %v1828 = vpop.permute.xlu0 %1827
    %1829 = vrot.lane.b32.xlu0 %v614, 120
    %v1830 = vpop.permute.xlu0 %1829
    %1831 = vrot.lane.b32.xlu0 %v616, 120
    %v1832 = vpop.permute.xlu0 %1831
    %1833 = vrot.lane.b32.xlu0 %v618, 120
    %v1834 = vpop.permute.xlu0 %1833
    %1835 = vrot.lane.b32.xlu0 %v620, 120
    %v1836 = vpop.permute.xlu0 %1835
    %1837 = vrot.lane.b32.xlu0 %v622, 120
    %v1838 = vpop.permute.xlu0 %1837
    %1839 = vrot.lane.b32.xlu0 %v624, 120
    %v1840 = vpop.permute.xlu0 %1839
    %1841 = vrot.lane.b32.xlu0 %v626, 120
    %v1842 = vpop.permute.xlu0 %1841
    %v1843 = vsel %vm771, %v612, 0
    %v1845 = vsel %vm771, %v614, 0
    %v1847 = vsel %vm771, %v616, 0
    %v1849 = vsel %vm771, %v618, 0
    %v1851 = vsel %vm771, %v620, 0
    %v1853 = vsel %vm771, %v622, 0
    %v1855 = vsel %vm771, %v624, 0
    %v1857 = vsel %vm771, %v626, 0
    %v1859 = vsel %vm771, %v1828, 0
    %v1861 = vsel %vm771, %v1830, 0
    %v1863 = vsel %vm771, %v1832, 0
    %v1865 = vsel %vm771, %v1834, 0
    %v1867 = vsel %vm771, %v1836, 0
    %v1869 = vsel %vm771, %v1838, 0
    %v1871 = vsel %vm771, %v1840, 0
    %v1873 = vsel %vm771, %v1842, 0
    %1875 = vmatprep.subr.mxu0 0.0
    %1876 = vmatpush1.xpose.msra.mxu0 %v1859
    %1877 = vmatprep.subr.mxu0 0.0
    %1878 = vmatpush1.xpose.msra.mxu0 %v1861
    %1879 = vmatprep.subr.mxu0 0.0
    %1880 = vmatpush1.xpose.msra.mxu0 %v1863
    %1881 = vmatprep.subr.mxu0 0.0
    %1882 = vmatpush1.xpose.msra.mxu0 %v1865
    %1883 = vmatprep.subr.mxu0 0.0
    %1884 = vmatpush1.xpose.msra.mxu0 %v1867
    %1885 = vmatprep.subr.mxu0 0.0
    %1886 = vmatpush1.xpose.msra.mxu0 %v1869
    %1887 = vmatprep.subr.mxu0 0.0
    %1888 = vmatpush1.xpose.msra.mxu0 %v1871
    %1889 = vmatprep.subr.mxu0 0.0
    %1890 = vmatpush1.xpose.msra.mxu0 %v1873
    %1891 = vmatprep.subr.mxu0 0.0
    %1892 = vmatpush1.xpose.msra.mxu0 0.0
    %1893 = vmatprep.subr.mxu0 0.0
    %1894 = vmatpush1.xpose.msra.mxu0 0.0
    %1895 = vmatprep.subr.mxu0 0.0
    %1896 = vmatpush1.xpose.msra.mxu0 0.0
    %1897 = vmatprep.subr.mxu0 0.0
    %1898 = vmatpush1.xpose.msra.mxu0 0.0
    %1899 = vmatprep.subr.mxu0 0.0
    %1900 = vmatpush1.xpose.msra.mxu0 0.0
    %1901 = vmatprep.subr.mxu0 0.0
    %1902 = vmatpush1.xpose.msra.mxu0 0.0
    %1903 = vmatprep.subr.mxu0 0.0
    %1904 = vmatpush1.xpose.msra.mxu0 0.0
    %1905 = vmatprep.subr.mxu0 0.0
    %1906 = vmatpush1.xpose.msra.mxu0 0.0
    %1907 = vmatprep.subr.mxu0 0.0
    %1908 = vmatpush1.xpose.msra.mxu0 0.0
    %1909 = vmatprep.subr.mxu0 0.0
    %1910 = vmatpush1.xpose.msra.mxu0 0.0
    %1911 = vmatprep.subr.mxu0 0.0
    %1912 = vmatpush1.xpose.msra.mxu0 0.0
    %1913 = vmatprep.subr.mxu0 0.0
    %1914 = vmatpush1.xpose.msra.mxu0 0.0
    %1915 = vmatprep.subr.mxu0 0.0
    %1916 = vmatpush1.xpose.msra.mxu0 0.0
    %1917 = vmatprep.subr.mxu0 0.0
    %1918 = vmatpush1.xpose.msra.mxu0 0.0
    %1919 = vmatprep.subr.mxu0 0.0
    %1920 = vmatpush1.xpose.msra.mxu0 0.0
    %1921 = vmatprep.subr.mxu0 0.0
    %1922 = vmatpush1.xpose.msra.mxu0 0.0
    %1923 = vmatprep.subr.mxu0 0.0
    %1924 = vmatpush1.xpose.msra.mxu0 0.0
    %1925 = vmatprep.subr.mxu0 0.0
    %1926 = vmatpush1.xpose.msra.mxu0 0.0
    %1927 = vmatprep.subr.mxu0 0.0
    %1928 = vmatpush1.xpose.msra.mxu0 0.0
    %1929 = vmatprep.subr.mxu0 0.0
    %1930 = vmatpush1.xpose.msra.mxu0 0.0
    %1931 = vmatprep.subr.mxu0 0.0
    %1932 = vmatpush1.xpose.msra.mxu0 0.0
    %1933 = vmatprep.subr.mxu0 0.0
    %1934 = vmatpush1.xpose.msra.mxu0 0.0
    %1935 = vmatprep.subr.mxu0 0.0
    %1936 = vmatpush1.xpose.msra.mxu0 0.0
    %1937 = vmatprep.subr.mxu0 0.0
    %1938 = vmatpush1.xpose.msra.mxu0 0.0
    %1939 = vmatprep.mubr.f32.mxu0 0.0
    %1940 = vmatmul.mubr.f32.gmra.mrb[0].mxu0 %v1843
    %v1941 = vpop.f32.mrb[0].mxu0
    %v1942 = vadd.f32 %v747, %v1941
    %v1943 = vpop.f32.mrb[0].mxu0
    %1944 = vmatprep.mubr.f32.mxu0 0.0
    %1945 = vmatmul.mubr.f32.gmra.mrb[0].mxu0 %v1845
    %v1946 = vpop.f32.mrb[0].mxu0
    %v1947 = vadd.f32 %v748, %v1946
    %v1948 = vpop.f32.mrb[0].mxu0
    %1949 = vmatprep.mubr.f32.mxu0 0.0
    %1950 = vmatmul.mubr.f32.gmra.mrb[0].mxu0 %v1847
    %v1951 = vpop.f32.mrb[0].mxu0
    %v1952 = vadd.f32 %v749, %v1951
    %v1953 = vpop.f32.mrb[0].mxu0
    %1954 = vmatprep.mubr.f32.mxu0 0.0
    %1955 = vmatmul.mubr.f32.gmra.mrb[0].mxu0 %v1849
    %v1956 = vpop.f32.mrb[0].mxu0
    %v1957 = vadd.f32 %v750, %v1956
    %v1958 = vpop.f32.mrb[0].mxu0
    %1959 = vmatprep.mubr.f32.mxu0 0.0
    %1960 = vmatmul.mubr.f32.gmra.mrb[0].mxu0 %v1851
    %v1961 = vpop.f32.mrb[0].mxu0
    %v1962 = vadd.f32 %v751, %v1961
    %v1963 = vpop.f32.mrb[0].mxu0
    %1964 = vmatprep.mubr.f32.mxu0 0.0
    %1965 = vmatmul.mubr.f32.gmra.mrb[0].mxu0 %v1853
    %v1966 = vpop.f32.mrb[0].mxu0
    %v1967 = vadd.f32 %v752, %v1966
    %v1968 = vpop.f32.mrb[0].mxu0
    %1969 = vmatprep.mubr.f32.mxu0 0.0
    %1970 = vmatmul.mubr.f32.gmra.mrb[0].mxu0 %v1855
    %v1971 = vpop.f32.mrb[0].mxu0
    %v1972 = vadd.f32 %v753, %v1971
    %v1973 = vpop.f32.mrb[0].mxu0
    %1974 = vmatprep.mubr.f32.mxu0 0.0
    %1975 = vmatmul.mubr.f32.gmra.mrb[0].mxu0 %v1857
    %v1976 = vpop.f32.mrb[0].mxu0
    %v1977 = vadd.f32 %v754, %v1976
    %v1978 = vpop.f32.mrb[0].mxu0
    %1979 = vdwg.mxu0
    %vm1980 = vcmask 523264
    %v1981 = vsel %vm1980, %v871, -inf
    %1982 = vmax.xlane.f32.xlu0 %v1981
    %v1983 = vpop.xlane.xlu0 %1982
    %v1984 = vsel %vm1980, %v876, -inf
    %1985 = vmax.xlane.f32.xlu0 %v1984
    %v1986 = vpop.xlane.xlu0 %1985
    %v1987 = vsel %vm1980, %v881, -inf
    %1988 = vmax.xlane.f32.xlu0 %v1987
    %v1989 = vpop.xlane.xlu0 %1988
    %v1990 = vsel %vm1980, %v886, -inf
    %1991 = vmax.xlane.f32.xlu0 %v1990
    %v1992 = vpop.xlane.xlu0 %1991
    %v1993 = vsel %vm1980, %v891, -inf
    %1994 = vmax.xlane.f32.xlu0 %v1993
    %v1995 = vpop.xlane.xlu0 %1994
    %v1996 = vsel %vm1980, %v896, -inf
    %1997 = vmax.xlane.f32.xlu0 %v1996
    %v1998 = vpop.xlane.xlu0 %1997
    %v1999 = vsel %vm1980, %v901, -inf
    %2000 = vmax.xlane.f32.xlu0 %v1999
    %v2001 = vpop.xlane.xlu0 %2000
    %v2002 = vsel %vm1980, %v906, -inf
    %2003 = vmax.xlane.f32.xlu0 %v2002
    %v2004 = vpop.xlane.xlu0 %2003
    %v2005 = vsel %vm1980, %v1024, -inf
    %2006 = vmax.xlane.f32.xlu0 %v2005
    %v2007 = vpop.xlane.xlu0 %2006
    %v2008 = vsel %vm1980, %v1029, -inf
    %2009 = vmax.xlane.f32.xlu0 %v2008
    %v2010 = vpop.xlane.xlu0 %2009
    %v2011 = vsel %vm1980, %v1034, -inf
    %2012 = vmax.xlane.f32.xlu0 %v2011
    %v2013 = vpop.xlane.xlu0 %2012
    %v2014 = vsel %vm1980, %v1039, -inf
    %2015 = vmax.xlane.f32.xlu0 %v2014
    %v2016 = vpop.xlane.xlu0 %2015
    %v2017 = vsel %vm1980, %v1044, -inf
    %2018 = vmax.xlane.f32.xlu0 %v2017
    %v2019 = vpop.xlane.xlu0 %2018
    %v2020 = vsel %vm1980, %v1049, -inf
    %2021 = vmax.xlane.f32.xlu0 %v2020
    %v2022 = vpop.xlane.xlu0 %2021
    %v2023 = vsel %vm1980, %v1054, -inf
    %2024 = vmax.xlane.f32.xlu0 %v2023
    %v2025 = vpop.xlane.xlu0 %2024
    %v2026 = vsel %vm1980, %v1059, -inf
    %2027 = vmax.xlane.f32.xlu0 %v2026
    %v2028 = vpop.xlane.xlu0 %2027
    %v2029 = vsel %vm1980, %v1177, -inf
    %2030 = vmax.xlane.f32.xlu0 %v2029
    %v2031 = vpop.xlane.xlu0 %2030
    %v2032 = vsel %vm1980, %v1182, -inf
    %2033 = vmax.xlane.f32.xlu0 %v2032
    %v2034 = vpop.xlane.xlu0 %2033
    %v2035 = vsel %vm1980, %v1187, -inf
    %2036 = vmax.xlane.f32.xlu0 %v2035
    %v2037 = vpop.xlane.xlu0 %2036
    %v2038 = vsel %vm1980, %v1192, -inf
    %2039 = vmax.xlane.f32.xlu0 %v2038
    %v2040 = vpop.xlane.xlu0 %2039
    %v2041 = vsel %vm1980, %v1197, -inf
    %2042 = vmax.xlane.f32.xlu0 %v2041
    %v2043 = vpop.xlane.xlu0 %2042
    %v2044 = vsel %vm1980, %v1202, -inf
    %2045 = vmax.xlane.f32.xlu0 %v2044
    %v2046 = vpop.xlane.xlu0 %2045
    %v2047 = vsel %vm1980, %v1207, -inf
    %2048 = vmax.xlane.f32.xlu0 %v2047
    %v2049 = vpop.xlane.xlu0 %2048
    %v2050 = vsel %vm1980, %v1212, -inf
    %2051 = vmax.xlane.f32.xlu0 %v2050
    %v2052 = vpop.xlane.xlu0 %2051
    %v2053 = vsel %vm1980, %v1330, -inf
    %2054 = vmax.xlane.f32.xlu0 %v2053
    %v2055 = vpop.xlane.xlu0 %2054
    %v2056 = vsel %vm1980, %v1335, -inf
    %2057 = vmax.xlane.f32.xlu0 %v2056
    %v2058 = vpop.xlane.xlu0 %2057
    %v2059 = vsel %vm1980, %v1340, -inf
    %2060 = vmax.xlane.f32.xlu0 %v2059
    %v2061 = vpop.xlane.xlu0 %2060
    %v2062 = vsel %vm1980, %v1345, -inf
    %2063 = vmax.xlane.f32.xlu0 %v2062
    %v2064 = vpop.xlane.xlu0 %2063
    %v2065 = vsel %vm1980, %v1350, -inf
    %2066 = vmax.xlane.f32.xlu0 %v2065
    %v2067 = vpop.xlane.xlu0 %2066
    %v2068 = vsel %vm1980, %v1355, -inf
    %2069 = vmax.xlane.f32.xlu0 %v2068
    %v2070 = vpop.xlane.xlu0 %2069
    %v2071 = vsel %vm1980, %v1360, -inf
    %2072 = vmax.xlane.f32.xlu0 %v2071
    %v2073 = vpop.xlane.xlu0 %2072
    %v2074 = vsel %vm1980, %v1365, -inf
    %2075 = vmax.xlane.f32.xlu0 %v2074
    %v2076 = vpop.xlane.xlu0 %2075
    %v2077 = vsel %vm1980, %v1483, -inf
    %2078 = vmax.xlane.f32.xlu0 %v2077
    %v2079 = vpop.xlane.xlu0 %2078
    %v2080 = vsel %vm1980, %v1488, -inf
    %2081 = vmax.xlane.f32.xlu0 %v2080
    %v2082 = vpop.xlane.xlu0 %2081
    %v2083 = vsel %vm1980, %v1493, -inf
    %2084 = vmax.xlane.f32.xlu0 %v2083
    %v2085 = vpop.xlane.xlu0 %2084
    %v2086 = vsel %vm1980, %v1498, -inf
    %2087 = vmax.xlane.f32.xlu0 %v2086
    %v2088 = vpop.xlane.xlu0 %2087
    %v2089 = vsel %vm1980, %v1503, -inf
    %2090 = vmax.xlane.f32.xlu0 %v2089
    %v2091 = vpop.xlane.xlu0 %2090
    %v2092 = vsel %vm1980, %v1508, -inf
    %2093 = vmax.xlane.f32.xlu0 %v2092
    %v2094 = vpop.xlane.xlu0 %2093
    %v2095 = vsel %vm1980, %v1513, -inf
    %2096 = vmax.xlane.f32.xlu0 %v2095
    %v2097 = vpop.xlane.xlu0 %2096
    %v2098 = vsel %vm1980, %v1518, -inf
    %2099 = vmax.xlane.f32.xlu0 %v2098
    %v2100 = vpop.xlane.xlu0 %2099
    %v2101 = vsel %vm1980, %v1636, -inf
    %2102 = vmax.xlane.f32.xlu0 %v2101
    %v2103 = vpop.xlane.xlu0 %2102
    %v2104 = vsel %vm1980, %v1641, -inf
    %2105 = vmax.xlane.f32.xlu0 %v2104
    %v2106 = vpop.xlane.xlu0 %2105
    %v2107 = vsel %vm1980, %v1646, -inf
    %2108 = vmax.xlane.f32.xlu0 %v2107
    %v2109 = vpop.xlane.xlu0 %2108
    %v2110 = vsel %vm1980, %v1651, -inf
    %2111 = vmax.xlane.f32.xlu0 %v2110
    %v2112 = vpop.xlane.xlu0 %2111
    %v2113 = vsel %vm1980, %v1656, -inf
    %2114 = vmax.xlane.f32.xlu0 %v2113
    %v2115 = vpop.xlane.xlu0 %2114
    %v2116 = vsel %vm1980, %v1661, -inf
    %2117 = vmax.xlane.f32.xlu0 %v2116
    %v2118 = vpop.xlane.xlu0 %2117
    %v2119 = vsel %vm1980, %v1666, -inf
    %2120 = vmax.xlane.f32.xlu0 %v2119
    %v2121 = vpop.xlane.xlu0 %2120
    %v2122 = vsel %vm1980, %v1671, -inf
    %2123 = vmax.xlane.f32.xlu0 %v2122
    %v2124 = vpop.xlane.xlu0 %2123
    %v2125 = vsel %vm1980, %v1789, -inf
    %2126 = vmax.xlane.f32.xlu0 %v2125
    %v2127 = vpop.xlane.xlu0 %2126
    %v2128 = vsel %vm1980, %v1794, -inf
    %2129 = vmax.xlane.f32.xlu0 %v2128
    %v2130 = vpop.xlane.xlu0 %2129
    %v2131 = vsel %vm1980, %v1799, -inf
    %2132 = vmax.xlane.f32.xlu0 %v2131
    %v2133 = vpop.xlane.xlu0 %2132
    %v2134 = vsel %vm1980, %v1804, -inf
    %2135 = vmax.xlane.f32.xlu0 %v2134
    %v2136 = vpop.xlane.xlu0 %2135
    %v2137 = vsel %vm1980, %v1809, -inf
    %2138 = vmax.xlane.f32.xlu0 %v2137
    %v2139 = vpop.xlane.xlu0 %2138
    %v2140 = vsel %vm1980, %v1814, -inf
    %2141 = vmax.xlane.f32.xlu0 %v2140
    %v2142 = vpop.xlane.xlu0 %2141
    %v2143 = vsel %vm1980, %v1819, -inf
    %2144 = vmax.xlane.f32.xlu0 %v2143
    %v2145 = vpop.xlane.xlu0 %2144
    %v2146 = vsel %vm1980, %v1824, -inf
    %2147 = vmax.xlane.f32.xlu0 %v2146
    %v2148 = vpop.xlane.xlu0 %2147
    %v2149 = vsel %vm1980, %v1942, -inf
    %2150 = vmax.xlane.f32.xlu0 %v2149
    %v2151 = vpop.xlane.xlu0 %2150
    %v2152 = vsel %vm1980, %v1947, -inf
    %2153 = vmax.xlane.f32.xlu0 %v2152
    %v2154 = vpop.xlane.xlu0 %2153
    %v2155 = vsel %vm1980, %v1952, -inf
    %2156 = vmax.xlane.f32.xlu0 %v2155
    %v2157 = vpop.xlane.xlu0 %2156
    %v2158 = vsel %vm1980, %v1957, -inf
    %2159 = vmax.xlane.f32.xlu0 %v2158
    %v2160 = vpop.xlane.xlu0 %2159
    %v2161 = vsel %vm1980, %v1962, -inf
    %2162 = vmax.xlane.f32.xlu0 %v2161
    %v2163 = vpop.xlane.xlu0 %2162
    %v2164 = vsel %vm1980, %v1967, -inf
    %2165 = vmax.xlane.f32.xlu0 %v2164
    %v2166 = vpop.xlane.xlu0 %2165
    %v2167 = vsel %vm1980, %v1972, -inf
    %2168 = vmax.xlane.f32.xlu0 %v2167
    %v2169 = vpop.xlane.xlu0 %2168
    %v2170 = vsel %vm1980, %v1977, -inf
    %2171 = vmax.xlane.f32.xlu0 %v2170
    %v2172 = vpop.xlane.xlu0 %2171
    %v2173 = vsub.f32 %v871, %v1983
    %v2174 = vsub.f32 %v876, %v1986
    %v2175 = vsub.f32 %v881, %v1989
    %v2176 = vsub.f32 %v886, %v1992
    %v2177 = vsub.f32 %v891, %v1995
    %v2178 = vsub.f32 %v896, %v1998
    %v2179 = vsub.f32 %v901, %v2001
    %v2180 = vsub.f32 %v906, %v2004
    %v2181 = vsub.f32 %v1024, %v2007
    %v2182 = vsub.f32 %v1029, %v2010
    %v2183 = vsub.f32 %v1034, %v2013
    %v2184 = vsub.f32 %v1039, %v2016
    %v2185 = vsub.f32 %v1044, %v2019
    %v2186 = vsub.f32 %v1049, %v2022
    %v2187 = vsub.f32 %v1054, %v2025
    %v2188 = vsub.f32 %v1059, %v2028
    %v2189 = vsub.f32 %v1177, %v2031
    %v2190 = vsub.f32 %v1182, %v2034
    %v2191 = vsub.f32 %v1187, %v2037
    %v2192 = vsub.f32 %v1192, %v2040
    %v2193 = vsub.f32 %v1197, %v2043
    %v2194 = vsub.f32 %v1202, %v2046
    %v2195 = vsub.f32 %v1207, %v2049
    %v2196 = vsub.f32 %v1212, %v2052
    %v2197 = vsub.f32 %v1330, %v2055
    %v2198 = vsub.f32 %v1335, %v2058
    %v2199 = vsub.f32 %v1340, %v2061
    %v2200 = vsub.f32 %v1345, %v2064
    %v2201 = vsub.f32 %v1350, %v2067
    %v2202 = vsub.f32 %v1355, %v2070
    %v2203 = vsub.f32 %v1360, %v2073
    %v2204 = vsub.f32 %v1365, %v2076
    %v2205 = vsub.f32 %v1483, %v2079
    %v2206 = vsub.f32 %v1488, %v2082
    %v2207 = vsub.f32 %v1493, %v2085
    %v2208 = vsub.f32 %v1498, %v2088
    %v2209 = vsub.f32 %v1503, %v2091
    %v2210 = vsub.f32 %v1508, %v2094
    %v2211 = vsub.f32 %v1513, %v2097
    %v2212 = vsub.f32 %v1518, %v2100
    %v2213 = vsub.f32 %v1636, %v2103
    %v2214 = vsub.f32 %v1641, %v2106
    %v2215 = vsub.f32 %v1646, %v2109
    %v2216 = vsub.f32 %v1651, %v2112
    %v2217 = vsub.f32 %v1656, %v2115
    %v2218 = vsub.f32 %v1661, %v2118
    %v2219 = vsub.f32 %v1666, %v2121
    %v2220 = vsub.f32 %v1671, %v2124
    %v2221 = vsub.f32 %v1789, %v2127
    %v2222 = vsub.f32 %v1794, %v2130
    %v2223 = vsub.f32 %v1799, %v2133
    %v2224 = vsub.f32 %v1804, %v2136
    %v2225 = vsub.f32 %v1809, %v2139
    %v2226 = vsub.f32 %v1814, %v2142
    %v2227 = vsub.f32 %v1819, %v2145
    %v2228 = vsub.f32 %v1824, %v2148
    %v2229 = vsub.f32 %v1942, %v2151
    %v2230 = vsub.f32 %v1947, %v2154
    %v2231 = vsub.f32 %v1952, %v2157
    %v2232 = vsub.f32 %v1957, %v2160
    %v2233 = vsub.f32 %v1962, %v2163
    %v2234 = vsub.f32 %v1967, %v2166
    %v2235 = vsub.f32 %v1972, %v2169
    %v2236 = vsub.f32 %v1977, %v2172
    %v2237 = vmul.f32 %v2173, 1.442695
    %v2238 = vpow.pop %v2237
    %v2239 = vmul.f32 %v2174, 1.442695
    %v2240 = vpow.pop %v2239
    %v2241 = vmul.f32 %v2175, 1.442695
    %v2242 = vpow.pop %v2241
    %v2243 = vmul.f32 %v2176, 1.442695
    %v2244 = vpow.pop %v2243
    %v2245 = vmul.f32 %v2177, 1.442695
    %v2246 = vpow.pop %v2245
    %v2247 = vmul.f32 %v2178, 1.442695
    %v2248 = vpow.pop %v2247
    %v2249 = vmul.f32 %v2179, 1.442695
    %v2250 = vpow.pop %v2249
    %v2251 = vmul.f32 %v2180, 1.442695
    %v2252 = vpow.pop %v2251
    %v2253 = vmul.f32 %v2181, 1.442695
    %v2254 = vpow.pop %v2253
    %v2255 = vmul.f32 %v2182, 1.442695
    %v2256 = vpow.pop %v2255
    %v2257 = vmul.f32 %v2183, 1.442695
    %v2258 = vpow.pop %v2257
    %v2259 = vmul.f32 %v2184, 1.442695
    %v2260 = vpow.pop %v2259
    %v2261 = vmul.f32 %v2185, 1.442695
    %v2262 = vpow.pop %v2261
    %v2263 = vmul.f32 %v2186, 1.442695
    %v2264 = vpow.pop %v2263
    %v2265 = vmul.f32 %v2187, 1.442695
    %v2266 = vpow.pop %v2265
    %v2267 = vmul.f32 %v2188, 1.442695
    %v2268 = vpow.pop %v2267
    %v2269 = vmul.f32 %v2189, 1.442695
    %v2270 = vpow.pop %v2269
    %v2271 = vmul.f32 %v2190, 1.442695
    %v2272 = vpow.pop %v2271
    %v2273 = vmul.f32 %v2191, 1.442695
    %v2274 = vpow.pop %v2273
    %v2275 = vmul.f32 %v2192, 1.442695
    %v2276 = vpow.pop %v2275
    %v2277 = vmul.f32 %v2193, 1.442695
    %v2278 = vpow.pop %v2277
    %v2279 = vmul.f32 %v2194, 1.442695
    %v2280 = vpow.pop %v2279
    %v2281 = vmul.f32 %v2195, 1.442695
    %v2282 = vpow.pop %v2281
    %v2283 = vmul.f32 %v2196, 1.442695
    %v2284 = vpow.pop %v2283
    %v2285 = vmul.f32 %v2197, 1.442695
    %v2286 = vpow.pop %v2285
    %v2287 = vmul.f32 %v2198, 1.442695
    %v2288 = vpow.pop %v2287
    %v2289 = vmul.f32 %v2199, 1.442695
    %v2290 = vpow.pop %v2289
    %v2291 = vmul.f32 %v2200, 1.442695
    %v2292 = vpow.pop %v2291
    %v2293 = vmul.f32 %v2201, 1.442695
    %v2294 = vpow.pop %v2293
    %v2295 = vmul.f32 %v2202, 1.442695
    %v2296 = vpow.pop %v2295
    %v2297 = vmul.f32 %v2203, 1.442695
    %v2298 = vpow.pop %v2297
    %v2299 = vmul.f32 %v2204, 1.442695
    %v2300 = vpow.pop %v2299
    %v2301 = vmul.f32 %v2205, 1.442695
    %v2302 = vpow.pop %v2301
    %v2303 = vmul.f32 %v2206, 1.442695
    %v2304 = vpow.pop %v2303
    %v2305 = vmul.f32 %v2207, 1.442695
    %v2306 = vpow.pop %v2305
    %v2307 = vmul.f32 %v2208, 1.442695
    %v2308 = vpow.pop %v2307
    %v2309 = vmul.f32 %v2209, 1.442695
    %v2310 = vpow.pop %v2309
    %v2311 = vmul.f32 %v2210, 1.442695
    %v2312 = vpow.pop %v2311
    %v2313 = vmul.f32 %v2211, 1.442695
    %v2314 = vpow.pop %v2313
    %v2315 = vmul.f32 %v2212, 1.442695
    %v2316 = vpow.pop %v2315
    %v2317 = vmul.f32 %v2213, 1.442695
    %v2318 = vpow.pop %v2317
    %v2319 = vmul.f32 %v2214, 1.442695
    %v2320 = vpow.pop %v2319
    %v2321 = vmul.f32 %v2215, 1.442695
    %v2322 = vpow.pop %v2321
    %v2323 = vmul.f32 %v2216, 1.442695
    %v2324 = vpow.pop %v2323
    %v2325 = vmul.f32 %v2217, 1.442695
    %v2326 = vpow.pop %v2325
    %v2327 = vmul.f32 %v2218, 1.442695
    %v2328 = vpow.pop %v2327
    %v2329 = vmul.f32 %v2219, 1.442695
    %v2330 = vpow.pop %v2329
    %v2331 = vmul.f32 %v2220, 1.442695
    %v2332 = vpow.pop %v2331
    %v2333 = vmul.f32 %v2221, 1.442695
    %v2334 = vpow.pop %v2333
    %v2335 = vmul.f32 %v2222, 1.442695
    %v2336 = vpow.pop %v2335
    %v2337 = vmul.f32 %v2223, 1.442695
    %v2338 = vpow.pop %v2337
    %v2339 = vmul.f32 %v2224, 1.442695
    %v2340 = vpow.pop %v2339
    %v2341 = vmul.f32 %v2225, 1.442695
    %v2342 = vpow.pop %v2341
    %v2343 = vmul.f32 %v2226, 1.442695
    %v2344 = vpow.pop %v2343
    %v2345 = vmul.f32 %v2227, 1.442695
    %v2346 = vpow.pop %v2345
    %v2347 = vmul.f32 %v2228, 1.442695
    %v2348 = vpow.pop %v2347
    %v2349 = vmul.f32 %v2229, 1.442695
    %v2350 = vpow.pop %v2349
    %v2351 = vmul.f32 %v2230, 1.442695
    %v2352 = vpow.pop %v2351
    %v2353 = vmul.f32 %v2231, 1.442695
    %v2354 = vpow.pop %v2353
    %v2355 = vmul.f32 %v2232, 1.442695
    %v2356 = vpow.pop %v2355
    %v2357 = vmul.f32 %v2233, 1.442695
    %v2358 = vpow.pop %v2357
    %v2359 = vmul.f32 %v2234, 1.442695
    %v2360 = vpow.pop %v2359
    %v2361 = vmul.f32 %v2235, 1.442695
    %v2362 = vpow.pop %v2361
    %v2363 = vmul.f32 %v2236, 1.442695
    %v2364 = vpow.pop %v2363
    %v2365 = vsel %vm1980, %v2238, 0.0
    %2366 = vadd.xlane.f32.xlu0 %v2365
    %v2367 = vpop.xlane.xlu0 %2366
    %v2368 = vsel %vm1980, %v2240, 0.0
    %2369 = vadd.xlane.f32.xlu0 %v2368
    %v2370 = vpop.xlane.xlu0 %2369
    %v2371 = vsel %vm1980, %v2242, 0.0
    %2372 = vadd.xlane.f32.xlu0 %v2371
    %v2373 = vpop.xlane.xlu0 %2372
    %v2374 = vsel %vm1980, %v2244, 0.0
    %2375 = vadd.xlane.f32.xlu0 %v2374
    %v2376 = vpop.xlane.xlu0 %2375
    %v2377 = vsel %vm1980, %v2246, 0.0
    %2378 = vadd.xlane.f32.xlu0 %v2377
    %v2379 = vpop.xlane.xlu0 %2378
    %v2380 = vsel %vm1980, %v2248, 0.0
    %2381 = vadd.xlane.f32.xlu0 %v2380
    %v2382 = vpop.xlane.xlu0 %2381
    %v2383 = vsel %vm1980, %v2250, 0.0
    %2384 = vadd.xlane.f32.xlu0 %v2383
    %v2385 = vpop.xlane.xlu0 %2384
    %v2386 = vsel %vm1980, %v2252, 0.0
    %2387 = vadd.xlane.f32.xlu0 %v2386
    %v2388 = vpop.xlane.xlu0 %2387
    %v2389 = vsel %vm1980, %v2254, 0.0
    %2390 = vadd.xlane.f32.xlu0 %v2389
    %v2391 = vpop.xlane.xlu0 %2390
    %v2392 = vsel %vm1980, %v2256, 0.0
    %2393 = vadd.xlane.f32.xlu0 %v2392
    %v2394 = vpop.xlane.xlu0 %2393
    %v2395 = vsel %vm1980, %v2258, 0.0
    %2396 = vadd.xlane.f32.xlu0 %v2395
    %v2397 = vpop.xlane.xlu0 %2396
    %v2398 = vsel %vm1980, %v2260, 0.0
    %2399 = vadd.xlane.f32.xlu0 %v2398
    %v2400 = vpop.xlane.xlu0 %2399
    %v2401 = vsel %vm1980, %v2262, 0.0
    %2402 = vadd.xlane.f32.xlu0 %v2401
    %v2403 = vpop.xlane.xlu0 %2402
    %v2404 = vsel %vm1980, %v2264, 0.0
    %2405 = vadd.xlane.f32.xlu0 %v2404
    %v2406 = vpop.xlane.xlu0 %2405
    %v2407 = vsel %vm1980, %v2266, 0.0
    %2408 = vadd.xlane.f32.xlu0 %v2407
    %v2409 = vpop.xlane.xlu0 %2408
    %v2410 = vsel %vm1980, %v2268, 0.0
    %2411 = vadd.xlane.f32.xlu0 %v2410
    %v2412 = vpop.xlane.xlu0 %2411
    %v2413 = vsel %vm1980, %v2270, 0.0
    %2414 = vadd.xlane.f32.xlu0 %v2413
    %v2415 = vpop.xlane.xlu0 %2414
    %v2416 = vsel %vm1980, %v2272, 0.0
    %2417 = vadd.xlane.f32.xlu0 %v2416
    %v2418 = vpop.xlane.xlu0 %2417
    %v2419 = vsel %vm1980, %v2274, 0.0
    %2420 = vadd.xlane.f32.xlu0 %v2419
    %v2421 = vpop.xlane.xlu0 %2420
    %v2422 = vsel %vm1980, %v2276, 0.0
    %2423 = vadd.xlane.f32.xlu0 %v2422
    %v2424 = vpop.xlane.xlu0 %2423
    %v2425 = vsel %vm1980, %v2278, 0.0
    %2426 = vadd.xlane.f32.xlu0 %v2425
    %v2427 = vpop.xlane.xlu0 %2426
    %v2428 = vsel %vm1980, %v2280, 0.0
    %2429 = vadd.xlane.f32.xlu0 %v2428
    %v2430 = vpop.xlane.xlu0 %2429
    %v2431 = vsel %vm1980, %v2282, 0.0
    %2432 = vadd.xlane.f32.xlu0 %v2431
    %v2433 = vpop.xlane.xlu0 %2432
    %v2434 = vsel %vm1980, %v2284, 0.0
    %2435 = vadd.xlane.f32.xlu0 %v2434
    %v2436 = vpop.xlane.xlu0 %2435
    %v2437 = vsel %vm1980, %v2286, 0.0
    %2438 = vadd.xlane.f32.xlu0 %v2437
    %v2439 = vpop.xlane.xlu0 %2438
    %v2440 = vsel %vm1980, %v2288, 0.0
    %2441 = vadd.xlane.f32.xlu0 %v2440
    %v2442 = vpop.xlane.xlu0 %2441
    %v2443 = vsel %vm1980, %v2290, 0.0
    %2444 = vadd.xlane.f32.xlu0 %v2443
    %v2445 = vpop.xlane.xlu0 %2444
    %v2446 = vsel %vm1980, %v2292, 0.0
    %2447 = vadd.xlane.f32.xlu0 %v2446
    %v2448 = vpop.xlane.xlu0 %2447
    %v2449 = vsel %vm1980, %v2294, 0.0
    %2450 = vadd.xlane.f32.xlu0 %v2449
    %v2451 = vpop.xlane.xlu0 %2450
    %v2452 = vsel %vm1980, %v2296, 0.0
    %2453 = vadd.xlane.f32.xlu0 %v2452
    %v2454 = vpop.xlane.xlu0 %2453
    %v2455 = vsel %vm1980, %v2298, 0.0
    %2456 = vadd.xlane.f32.xlu0 %v2455
    %v2457 = vpop.xlane.xlu0 %2456
    %v2458 = vsel %vm1980, %v2300, 0.0
    %2459 = vadd.xlane.f32.xlu0 %v2458
    %v2460 = vpop.xlane.xlu0 %2459
    %v2461 = vsel %vm1980, %v2302, 0.0
    %2462 = vadd.xlane.f32.xlu0 %v2461
    %v2463 = vpop.xlane.xlu0 %2462
    %v2464 = vsel %vm1980, %v2304, 0.0
    %2465 = vadd.xlane.f32.xlu0 %v2464
    %v2466 = vpop.xlane.xlu0 %2465
    %v2467 = vsel %vm1980, %v2306, 0.0
    %2468 = vadd.xlane.f32.xlu0 %v2467
    %v2469 = vpop.xlane.xlu0 %2468
    %v2470 = vsel %vm1980, %v2308, 0.0
    %2471 = vadd.xlane.f32.xlu0 %v2470
    %v2472 = vpop.xlane.xlu0 %2471
    %v2473 = vsel %vm1980, %v2310, 0.0
    %2474 = vadd.xlane.f32.xlu0 %v2473
    %v2475 = vpop.xlane.xlu0 %2474
    %v2476 = vsel %vm1980, %v2312, 0.0
    %2477 = vadd.xlane.f32.xlu0 %v2476
    %v2478 = vpop.xlane.xlu0 %2477
    %v2479 = vsel %vm1980, %v2314, 0.0
    %2480 = vadd.xlane.f32.xlu0 %v2479
    %v2481 = vpop.xlane.xlu0 %2480
    %v2482 = vsel %vm1980, %v2316, 0.0
    %2483 = vadd.xlane.f32.xlu0 %v2482
    %v2484 = vpop.xlane.xlu0 %2483
    %v2485 = vsel %vm1980, %v2318, 0.0
    %2486 = vadd.xlane.f32.xlu0 %v2485
    %v2487 = vpop.xlane.xlu0 %2486
    %v2488 = vsel %vm1980, %v2320, 0.0
    %2489 = vadd.xlane.f32.xlu0 %v2488
    %v2490 = vpop.xlane.xlu0 %2489
    %v2491 = vsel %vm1980, %v2322, 0.0
    %2492 = vadd.xlane.f32.xlu0 %v2491
    %v2493 = vpop.xlane.xlu0 %2492
    %v2494 = vsel %vm1980, %v2324, 0.0
    %2495 = vadd.xlane.f32.xlu0 %v2494
    %v2496 = vpop.xlane.xlu0 %2495
    %v2497 = vsel %vm1980, %v2326, 0.0
    %2498 = vadd.xlane.f32.xlu0 %v2497
    %v2499 = vpop.xlane.xlu0 %2498
    %v2500 = vsel %vm1980, %v2328, 0.0
    %2501 = vadd.xlane.f32.xlu0 %v2500
    %v2502 = vpop.xlane.xlu0 %2501
    %v2503 = vsel %vm1980, %v2330, 0.0
    %2504 = vadd.xlane.f32.xlu0 %v2503
    %v2505 = vpop.xlane.xlu0 %2504
    %v2506 = vsel %vm1980, %v2332, 0.0
    %2507 = vadd.xlane.f32.xlu0 %v2506
    %v2508 = vpop.xlane.xlu0 %2507
    %v2509 = vsel %vm1980, %v2334, 0.0
    %2510 = vadd.xlane.f32.xlu0 %v2509
    %v2511 = vpop.xlane.xlu0 %2510
    %v2512 = vsel %vm1980, %v2336, 0.0
    %2513 = vadd.xlane.f32.xlu0 %v2512
    %v2514 = vpop.xlane.xlu0 %2513
    %v2515 = vsel %vm1980, %v2338, 0.0
    %2516 = vadd.xlane.f32.xlu0 %v2515
    %v2517 = vpop.xlane.xlu0 %2516
    %v2518 = vsel %vm1980, %v2340, 0.0
    %2519 = vadd.xlane.f32.xlu0 %v2518
    %v2520 = vpop.xlane.xlu0 %2519
    %v2521 = vsel %vm1980, %v2342, 0.0
    %2522 = vadd.xlane.f32.xlu0 %v2521
    %v2523 = vpop.xlane.xlu0 %2522
    %v2524 = vsel %vm1980, %v2344, 0.0
    %2525 = vadd.xlane.f32.xlu0 %v2524
    %v2526 = vpop.xlane.xlu0 %2525
    %v2527 = vsel %vm1980, %v2346, 0.0
    %2528 = vadd.xlane.f32.xlu0 %v2527
    %v2529 = vpop.xlane.xlu0 %2528
    %v2530 = vsel %vm1980, %v2348, 0.0
    %2531 = vadd.xlane.f32.xlu0 %v2530
    %v2532 = vpop.xlane.xlu0 %2531
    %v2533 = vsel %vm1980, %v2350, 0.0
    %2534 = vadd.xlane.f32.xlu0 %v2533
    %v2535 = vpop.xlane.xlu0 %2534
    %v2536 = vsel %vm1980, %v2352, 0.0
    %2537 = vadd.xlane.f32.xlu0 %v2536
    %v2538 = vpop.xlane.xlu0 %2537
    %v2539 = vsel %vm1980, %v2354, 0.0
    %2540 = vadd.xlane.f32.xlu0 %v2539
    %v2541 = vpop.xlane.xlu0 %2540
    %v2542 = vsel %vm1980, %v2356, 0.0
    %2543 = vadd.xlane.f32.xlu0 %v2542
    %v2544 = vpop.xlane.xlu0 %2543
    %v2545 = vsel %vm1980, %v2358, 0.0
    %2546 = vadd.xlane.f32.xlu0 %v2545
    %v2547 = vpop.xlane.xlu0 %2546
    %v2548 = vsel %vm1980, %v2360, 0.0
    %2549 = vadd.xlane.f32.xlu0 %v2548
    %v2550 = vpop.xlane.xlu0 %2549
    %v2551 = vsel %vm1980, %v2362, 0.0
    %2552 = vadd.xlane.f32.xlu0 %v2551
    %v2553 = vpop.xlane.xlu0 %2552
    %v2554 = vsel %vm1980, %v2364, 0.0
    %2555 = vadd.xlane.f32.xlu0 %v2554
    %v2556 = vpop.xlane.xlu0 %2555
    %v2557 = vrcp.pop %v2367
    %v2558 = vmul.f32 %v2238, %v2557
    %v2559 = vrcp.pop %v2370
    %v2560 = vmul.f32 %v2240, %v2559
    %v2561 = vrcp.pop %v2373
    %v2562 = vmul.f32 %v2242, %v2561
    %v2563 = vrcp.pop %v2376
    %v2564 = vmul.f32 %v2244, %v2563
    %v2565 = vrcp.pop %v2379
    %v2566 = vmul.f32 %v2246, %v2565
    %v2567 = vrcp.pop %v2382
    %v2568 = vmul.f32 %v2248, %v2567
    %v2569 = vrcp.pop %v2385
    %v2570 = vmul.f32 %v2250, %v2569
    %v2571 = vrcp.pop %v2388
    %v2572 = vmul.f32 %v2252, %v2571
    %v2573 = vrcp.pop %v2391
    %v2574 = vmul.f32 %v2254, %v2573
    %v2575 = vrcp.pop %v2394
    %v2576 = vmul.f32 %v2256, %v2575
    %v2577 = vrcp.pop %v2397
    %v2578 = vmul.f32 %v2258, %v2577
    %v2579 = vrcp.pop %v2400
    %v2580 = vmul.f32 %v2260, %v2579
    %v2581 = vrcp.pop %v2403
    %v2582 = vmul.f32 %v2262, %v2581
    %v2583 = vrcp.pop %v2406
    %v2584 = vmul.f32 %v2264, %v2583
    %v2585 = vrcp.pop %v2409
    %v2586 = vmul.f32 %v2266, %v2585
    %v2587 = vrcp.pop %v2412
    %v2588 = vmul.f32 %v2268, %v2587
    %v2589 = vrcp.pop %v2415
    %v2590 = vmul.f32 %v2270, %v2589
    %v2591 = vrcp.pop %v2418
    %v2592 = vmul.f32 %v2272, %v2591
    %v2593 = vrcp.pop %v2421
    %v2594 = vmul.f32 %v2274, %v2593
    %v2595 = vrcp.pop %v2424
    %v2596 = vmul.f32 %v2276, %v2595
    %v2597 = vrcp.pop %v2427
    %v2598 = vmul.f32 %v2278, %v2597
    %v2599 = vrcp.pop %v2430
    %v2600 = vmul.f32 %v2280, %v2599
    %v2601 = vrcp.pop %v2433
    %v2602 = vmul.f32 %v2282, %v2601
    %v2603 = vrcp.pop %v2436
    %v2604 = vmul.f32 %v2284, %v2603
    %v2605 = vrcp.pop %v2439
    %v2606 = vmul.f32 %v2286, %v2605
    %v2607 = vrcp.pop %v2442
    %v2608 = vmul.f32 %v2288, %v2607
    %v2609 = vrcp.pop %v2445
    %v2610 = vmul.f32 %v2290, %v2609
    %v2611 = vrcp.pop %v2448
    %v2612 = vmul.f32 %v2292, %v2611
    %v2613 = vrcp.pop %v2451
    %v2614 = vmul.f32 %v2294, %v2613
    %v2615 = vrcp.pop %v2454
    %v2616 = vmul.f32 %v2296, %v2615
    %v2617 = vrcp.pop %v2457
    %v2618 = vmul.f32 %v2298, %v2617
    %v2619 = vrcp.pop %v2460
    %v2620 = vmul.f32 %v2300, %v2619
    %v2621 = vrcp.pop %v2463
    %v2622 = vmul.f32 %v2302, %v2621
    %v2623 = vrcp.pop %v2466
    %v2624 = vmul.f32 %v2304, %v2623
    %v2625 = vrcp.pop %v2469
    %v2626 = vmul.f32 %v2306, %v2625
    %v2627 = vrcp.pop %v2472
    %v2628 = vmul.f32 %v2308, %v2627
    %v2629 = vrcp.pop %v2475
    %v2630 = vmul.f32 %v2310, %v2629
    %v2631 = vrcp.pop %v2478
    %v2632 = vmul.f32 %v2312, %v2631
    %v2633 = vrcp.pop %v2481
    %v2634 = vmul.f32 %v2314, %v2633
    %v2635 = vrcp.pop %v2484
    %v2636 = vmul.f32 %v2316, %v2635
    %v2637 = vrcp.pop %v2487
    %v2638 = vmul.f32 %v2318, %v2637
    %v2639 = vrcp.pop %v2490
    %v2640 = vmul.f32 %v2320, %v2639
    %v2641 = vrcp.pop %v2493
    %v2642 = vmul.f32 %v2322, %v2641
    %v2643 = vrcp.pop %v2496
    %v2644 = vmul.f32 %v2324, %v2643
    %v2645 = vrcp.pop %v2499
    %v2646 = vmul.f32 %v2326, %v2645
    %v2647 = vrcp.pop %v2502
    %v2648 = vmul.f32 %v2328, %v2647
    %v2649 = vrcp.pop %v2505
    %v2650 = vmul.f32 %v2330, %v2649
    %v2651 = vrcp.pop %v2508
    %v2652 = vmul.f32 %v2332, %v2651
    %v2653 = vrcp.pop %v2511
    %v2654 = vmul.f32 %v2334, %v2653
    %v2655 = vrcp.pop %v2514
    %v2656 = vmul.f32 %v2336, %v2655
    %v2657 = vrcp.pop %v2517
    %v2658 = vmul.f32 %v2338, %v2657
    %v2659 = vrcp.pop %v2520
    %v2660 = vmul.f32 %v2340, %v2659
    %v2661 = vrcp.pop %v2523
    %v2662 = vmul.f32 %v2342, %v2661
    %v2663 = vrcp.pop %v2526
    %v2664 = vmul.f32 %v2344, %v2663
    %v2665 = vrcp.pop %v2529
    %v2666 = vmul.f32 %v2346, %v2665
    %v2667 = vrcp.pop %v2532
    %v2668 = vmul.f32 %v2348, %v2667
    %v2669 = vrcp.pop %v2535
    %v2670 = vmul.f32 %v2350, %v2669
    %v2671 = vrcp.pop %v2538
    %v2672 = vmul.f32 %v2352, %v2671
    %v2673 = vrcp.pop %v2541
    %v2674 = vmul.f32 %v2354, %v2673
    %v2675 = vrcp.pop %v2544
    %v2676 = vmul.f32 %v2356, %v2675
    %v2677 = vrcp.pop %v2547
    %v2678 = vmul.f32 %v2358, %v2677
    %v2679 = vrcp.pop %v2550
    %v2680 = vmul.f32 %v2360, %v2679
    %v2681 = vrcp.pop %v2553
    %v2682 = vmul.f32 %v2362, %v2681
    %v2683 = vrcp.pop %v2556
    %v2684 = vmul.f32 %v2364, %v2683
    %2685 = vrot.lane.b32.xlu0 %v437, 112
    %v2686 = vpop.permute.xlu0 %2685
    %2687 = vrot.lane.b32.xlu0 %v442, 112
    %v2688 = vpop.permute.xlu0 %2687
    %2689 = vrot.lane.b32.xlu0 %v447, 112
    %v2690 = vpop.permute.xlu0 %2689
    %2691 = vrot.lane.b32.xlu0 %v452, 112
    %v2692 = vpop.permute.xlu0 %2691
    %2693 = vrot.lane.b32.xlu0 %v457, 112
    %v2694 = vpop.permute.xlu0 %2693
    %2695 = vrot.lane.b32.xlu0 %v462, 112
    %v2696 = vpop.permute.xlu0 %2695
    %2697 = vrot.lane.b32.xlu0 %v467, 112
    %v2698 = vpop.permute.xlu0 %2697
    %2699 = vrot.lane.b32.xlu0 %v472, 112
    %v2700 = vpop.permute.xlu0 %2699
    %v2710 = vsel %vm1980, %v2558, 0
    %v2713 = vsel %vm1980, %v2560, 0
    %v2716 = vsel %vm1980, %v2562, 0
    %v2719 = vsel %vm1980, %v2564, 0
    %v2722 = vsel %vm1980, %v2566, 0
    %v2725 = vsel %vm1980, %v2568, 0
    %v2728 = vsel %vm1980, %v2570, 0
    %v2731 = vsel %vm1980, %v2572, 0
    %2733 = vmatprep.subr.mxu0 0.0
    %2734 = vmatpush1.msra.mxu0 %v2686
    %2735 = vmatprep.subr.mxu0 0.0
    %2736 = vmatpush1.msra.mxu0 %v2688
    %2737 = vmatprep.subr.mxu0 0.0
    %2738 = vmatpush1.msra.mxu0 %v2690
    %2739 = vmatprep.subr.mxu0 0.0
    %2740 = vmatpush1.msra.mxu0 %v2692
    %2741 = vmatprep.subr.mxu0 0.0
    %2742 = vmatpush1.msra.mxu0 %v2694
    %2743 = vmatprep.subr.mxu0 0.0
    %2744 = vmatpush1.msra.mxu0 %v2696
    %2745 = vmatprep.subr.mxu0 0.0
    %2746 = vmatpush1.msra.mxu0 %v2698
    %2747 = vmatprep.subr.mxu0 0.0
    %2748 = vmatpush1.msra.mxu0 %v2700
    %2749 = vmatprep.subr.mxu0 0.0
    %2750 = vmatpush1.msra.mxu0 0.0
    %2751 = vmatprep.subr.mxu0 0.0
    %2752 = vmatpush1.msra.mxu0 0.0
    %2753 = vmatprep.subr.mxu0 0.0
    %2754 = vmatpush1.msra.mxu0 0.0
    %2755 = vmatprep.subr.mxu0 0.0
    %2756 = vmatpush1.msra.mxu0 0.0
    %2757 = vmatprep.subr.mxu0 0.0
    %2758 = vmatpush1.msra.mxu0 0.0
    %2759 = vmatprep.subr.mxu0 0.0
    %2760 = vmatpush1.msra.mxu0 0.0
    %2761 = vmatprep.subr.mxu0 0.0
    %2762 = vmatpush1.msra.mxu0 0.0
    %2763 = vmatprep.subr.mxu0 0.0
    %2764 = vmatpush1.msra.mxu0 0.0
    %2765 = vmatprep.subr.mxu0 0.0
    %2766 = vmatpush1.msra.mxu0 0.0
    %2767 = vmatprep.subr.mxu0 0.0
    %2768 = vmatpush1.msra.mxu0 0.0
    %2769 = vmatprep.subr.mxu0 0.0
    %2770 = vmatpush1.msra.mxu0 0.0
    %2771 = vmatprep.subr.mxu0 0.0
    %2772 = vmatpush1.msra.mxu0 0.0
    %2773 = vmatprep.subr.mxu0 0.0
    %2774 = vmatpush1.msra.mxu0 0.0
    %2775 = vmatprep.subr.mxu0 0.0
    %2776 = vmatpush1.msra.mxu0 0.0
    %2777 = vmatprep.subr.mxu0 0.0
    %2778 = vmatpush1.msra.mxu0 0.0
    %2779 = vmatprep.subr.mxu0 0.0
    %2780 = vmatpush1.msra.mxu0 0.0
    %2781 = vmatprep.subr.mxu0 0.0
    %2782 = vmatpush1.msra.mxu0 0.0
    %2783 = vmatprep.subr.mxu0 0.0
    %2784 = vmatpush1.msra.mxu0 0.0
    %2785 = vmatprep.subr.mxu0 0.0
    %2786 = vmatpush1.msra.mxu0 0.0
    %2787 = vmatprep.subr.mxu0 0.0
    %2788 = vmatpush1.msra.mxu0 0.0
    %2789 = vmatprep.subr.mxu0 0.0
    %2790 = vmatpush1.msra.mxu0 0.0
    %2791 = vmatprep.subr.mxu0 0.0
    %2792 = vmatpush1.msra.mxu0 0.0
    %2793 = vmatprep.subr.mxu0 0.0
    %2794 = vmatpush1.msra.mxu0 0.0
    %2795 = vmatprep.subr.mxu0 0.0
    %2796 = vmatpush1.msra.mxu0 0.0
    %2797 = vmatprep.mubr.f32.mxu0 0.0
    %2798 = vmatmul.mubr.f32.gmra.mrb[0].mxu0 %v2710
    %v2799 = vpop.f32.mrb[0].mxu0
    %v2800 = vadd.f32 0.0, %v2799
    %v2801 = vpop.f32.mrb[0].mxu0
    %2802 = vmatprep.mubr.f32.mxu0 0.0
    %2803 = vmatmul.mubr.f32.gmra.mrb[0].mxu0 %v2713
    %v2804 = vpop.f32.mrb[0].mxu0
    %v2805 = vadd.f32 0.0, %v2804
    %v2806 = vpop.f32.mrb[0].mxu0
    %2807 = vmatprep.mubr.f32.mxu0 0.0
    %2808 = vmatmul.mubr.f32.gmra.mrb[0].mxu0 %v2716
    %v2809 = vpop.f32.mrb[0].mxu0
    %v2810 = vadd.f32 0.0, %v2809
    %v2811 = vpop.f32.mrb[0].mxu0
    %2812 = vmatprep.mubr.f32.mxu0 0.0
    %2813 = vmatmul.mubr.f32.gmra.mrb[0].mxu0 %v2719
    %v2814 = vpop.f32.mrb[0].mxu0
    %v2815 = vadd.f32 0.0, %v2814
    %v2816 = vpop.f32.mrb[0].mxu0
    %2817 = vmatprep.mubr.f32.mxu0 0.0
    %2818 = vmatmul.mubr.f32.gmra.mrb[0].mxu0 %v2722
    %v2819 = vpop.f32.mrb[0].mxu0
    %v2820 = vadd.f32 0.0, %v2819
    %v2821 = vpop.f32.mrb[0].mxu0
    %2822 = vmatprep.mubr.f32.mxu0 0.0
    %2823 = vmatmul.mubr.f32.gmra.mrb[0].mxu0 %v2725
    %v2824 = vpop.f32.mrb[0].mxu0
    %v2825 = vadd.f32 0.0, %v2824
    %v2826 = vpop.f32.mrb[0].mxu0
    %2827 = vmatprep.mubr.f32.mxu0 0.0
    %2828 = vmatmul.mubr.f32.gmra.mrb[0].mxu0 %v2728
    %v2829 = vpop.f32.mrb[0].mxu0
    %v2830 = vadd.f32 0.0, %v2829
    %v2831 = vpop.f32.mrb[0].mxu0
    %2832 = vmatprep.mubr.f32.mxu0 0.0
    %2833 = vmatmul.mubr.f32.gmra.mrb[0].mxu0 %v2731
    %v2834 = vpop.f32.mrb[0].mxu0
    %v2835 = vadd.f32 0.0, %v2834
    %v2836 = vpop.f32.mrb[0].mxu0
    %2837 = vdwg.mxu0
    %2838 = vrot.lane.b32.xlu0 %v524, 112
    %v2839 = vpop.permute.xlu0 %2838
    %2840 = vrot.lane.b32.xlu0 %v526, 112
    %v2841 = vpop.permute.xlu0 %2840
    %2842 = vrot.lane.b32.xlu0 %v528, 112
    %v2843 = vpop.permute.xlu0 %2842
    %2844 = vrot.lane.b32.xlu0 %v530, 112
    %v2845 = vpop.permute.xlu0 %2844
    %2846 = vrot.lane.b32.xlu0 %v532, 112
    %v2847 = vpop.permute.xlu0 %2846
    %2848 = vrot.lane.b32.xlu0 %v534, 112
    %v2849 = vpop.permute.xlu0 %2848
    %2850 = vrot.lane.b32.xlu0 %v536, 112
    %v2851 = vpop.permute.xlu0 %2850
    %2852 = vrot.lane.b32.xlu0 %v538, 112
    %v2853 = vpop.permute.xlu0 %2852
    %v2863 = vsel %vm1980, %v2574, 0
    %v2866 = vsel %vm1980, %v2576, 0
    %v2869 = vsel %vm1980, %v2578, 0
    %v2872 = vsel %vm1980, %v2580, 0
    %v2875 = vsel %vm1980, %v2582, 0
    %v2878 = vsel %vm1980, %v2584, 0
    %v2881 = vsel %vm1980, %v2586, 0
    %v2884 = vsel %vm1980, %v2588, 0
    %2886 = vmatprep.subr.mxu0 0.0
    %2887 = vmatpush1.msra.mxu0 %v2839
    %2888 = vmatprep.subr.mxu0 0.0
    %2889 = vmatpush1.msra.mxu0 %v2841
    %2890 = vmatprep.subr.mxu0 0.0
    %2891 = vmatpush1.msra.mxu0 %v2843
    %2892 = vmatprep.subr.mxu0 0.0
    %2893 = vmatpush1.msra.mxu0 %v2845
    %2894 = vmatprep.subr.mxu0 0.0
    %2895 = vmatpush1.msra.mxu0 %v2847
    %2896 = vmatprep.subr.mxu0 0.0
    %2897 = vmatpush1.msra.mxu0 %v2849
    %2898 = vmatprep.subr.mxu0 0.0
    %2899 = vmatpush1.msra.mxu0 %v2851
    %2900 = vmatprep.subr.mxu0 0.0
    %2901 = vmatpush1.msra.mxu0 %v2853
    %2902 = vmatprep.subr.mxu0 0.0
    %2903 = vmatpush1.msra.mxu0 0.0
    %2904 = vmatprep.subr.mxu0 0.0
    %2905 = vmatpush1.msra.mxu0 0.0
    %2906 = vmatprep.subr.mxu0 0.0
    %2907 = vmatpush1.msra.mxu0 0.0
    %2908 = vmatprep.subr.mxu0 0.0
    %2909 = vmatpush1.msra.mxu0 0.0
    %2910 = vmatprep.subr.mxu0 0.0
    %2911 = vmatpush1.msra.mxu0 0.0
    %2912 = vmatprep.subr.mxu0 0.0
    %2913 = vmatpush1.msra.mxu0 0.0
    %2914 = vmatprep.subr.mxu0 0.0
    %2915 = vmatpush1.msra.mxu0 0.0
    %2916 = vmatprep.subr.mxu0 0.0
    %2917 = vmatpush1.msra.mxu0 0.0
    %2918 = vmatprep.subr.mxu0 0.0
    %2919 = vmatpush1.msra.mxu0 0.0
    %2920 = vmatprep.subr.mxu0 0.0
    %2921 = vmatpush1.msra.mxu0 0.0
    %2922 = vmatprep.subr.mxu0 0.0
    %2923 = vmatpush1.msra.mxu0 0.0
    %2924 = vmatprep.subr.mxu0 0.0
    %2925 = vmatpush1.msra.mxu0 0.0
    %2926 = vmatprep.subr.mxu0 0.0
    %2927 = vmatpush1.msra.mxu0 0.0
    %2928 = vmatprep.subr.mxu0 0.0
    %2929 = vmatpush1.msra.mxu0 0.0
    %2930 = vmatprep.subr.mxu0 0.0
    %2931 = vmatpush1.msra.mxu0 0.0
    %2932 = vmatprep.subr.mxu0 0.0
    %2933 = vmatpush1.msra.mxu0 0.0
    %2934 = vmatprep.subr.mxu0 0.0
    %2935 = vmatpush1.msra.mxu0 0.0
    %2936 = vmatprep.subr.mxu0 0.0
    %2937 = vmatpush1.msra.mxu0 0.0
    %2938 = vmatprep.subr.mxu0 0.0
    %2939 = vmatpush1.msra.mxu0 0.0
    %2940 = vmatprep.subr.mxu0 0.0
    %2941 = vmatpush1.msra.mxu0 0.0
    %2942 = vmatprep.subr.mxu0 0.0
    %2943 = vmatpush1.msra.mxu0 0.0
    %2944 = vmatprep.subr.mxu0 0.0
    %2945 = vmatpush1.msra.mxu0 0.0
    %2946 = vmatprep.subr.mxu0 0.0
    %2947 = vmatpush1.msra.mxu0 0.0
    %2948 = vmatprep.subr.mxu0 0.0
    %2949 = vmatpush1.msra.mxu0 0.0
    %2950 = vmatprep.mubr.f32.mxu0 0.0
    %2951 = vmatmul.mubr.f32.gmra.mrb[0].mxu0 %v2863
    %v2952 = vpop.f32.mrb[0].mxu0
    %v2953 = vadd.f32 0.0, %v2952
    %v2954 = vpop.f32.mrb[0].mxu0
    %2955 = vmatprep.mubr.f32.mxu0 0.0
    %2956 = vmatmul.mubr.f32.gmra.mrb[0].mxu0 %v2866
    %v2957 = vpop.f32.mrb[0].mxu0
    %v2958 = vadd.f32 0.0, %v2957
    %v2959 = vpop.f32.mrb[0].mxu0
    %2960 = vmatprep.mubr.f32.mxu0 0.0
    %2961 = vmatmul.mubr.f32.gmra.mrb[0].mxu0 %v2869
    %v2962 = vpop.f32.mrb[0].mxu0
    %v2963 = vadd.f32 0.0, %v2962
    %v2964 = vpop.f32.mrb[0].mxu0
    %2965 = vmatprep.mubr.f32.mxu0 0.0
    %2966 = vmatmul.mubr.f32.gmra.mrb[0].mxu0 %v2872
    %v2967 = vpop.f32.mrb[0].mxu0
    %v2968 = vadd.f32 0.0, %v2967
    %v2969 = vpop.f32.mrb[0].mxu0
    %2970 = vmatprep.mubr.f32.mxu0 0.0
    %2971 = vmatmul.mubr.f32.gmra.mrb[0].mxu0 %v2875
    %v2972 = vpop.f32.mrb[0].mxu0
    %v2973 = vadd.f32 0.0, %v2972
    %v2974 = vpop.f32.mrb[0].mxu0
    %2975 = vmatprep.mubr.f32.mxu0 0.0
    %2976 = vmatmul.mubr.f32.gmra.mrb[0].mxu0 %v2878
    %v2977 = vpop.f32.mrb[0].mxu0
    %v2978 = vadd.f32 0.0, %v2977
    %v2979 = vpop.f32.mrb[0].mxu0
    %2980 = vmatprep.mubr.f32.mxu0 0.0
    %2981 = vmatmul.mubr.f32.gmra.mrb[0].mxu0 %v2881
    %v2982 = vpop.f32.mrb[0].mxu0
    %v2983 = vadd.f32 0.0, %v2982
    %v2984 = vpop.f32.mrb[0].mxu0
    %2985 = vmatprep.mubr.f32.mxu0 0.0
    %2986 = vmatmul.mubr.f32.gmra.mrb[0].mxu0 %v2884
    %v2987 = vpop.f32.mrb[0].mxu0
    %v2988 = vadd.f32 0.0, %v2987
    %v2989 = vpop.f32.mrb[0].mxu0
    %2990 = vdwg.mxu0
    %2991 = vrot.lane.b32.xlu0 %v540, 112
    %v2992 = vpop.permute.xlu0 %2991
    %2993 = vrot.lane.b32.xlu0 %v542, 112
    %v2994 = vpop.permute.xlu0 %2993
    %2995 = vrot.lane.b32.xlu0 %v544, 112
    %v2996 = vpop.permute.xlu0 %2995
    %2997 = vrot.lane.b32.xlu0 %v546, 112
    %v2998 = vpop.permute.xlu0 %2997
    %2999 = vrot.lane.b32.xlu0 %v548, 112
    %v3000 = vpop.permute.xlu0 %2999
    %3001 = vrot.lane.b32.xlu0 %v550, 112
    %v3002 = vpop.permute.xlu0 %3001
    %3003 = vrot.lane.b32.xlu0 %v552, 112
    %v3004 = vpop.permute.xlu0 %3003
    %3005 = vrot.lane.b32.xlu0 %v554, 112
    %v3006 = vpop.permute.xlu0 %3005
    %v3016 = vsel %vm1980, %v2590, 0
    %v3019 = vsel %vm1980, %v2592, 0
    %v3022 = vsel %vm1980, %v2594, 0
    %v3025 = vsel %vm1980, %v2596, 0
    %v3028 = vsel %vm1980, %v2598, 0
    %v3031 = vsel %vm1980, %v2600, 0
    %v3034 = vsel %vm1980, %v2602, 0
    %v3037 = vsel %vm1980, %v2604, 0
    %3039 = vmatprep.subr.mxu0 0.0
    %3040 = vmatpush1.msra.mxu0 %v2992
    %3041 = vmatprep.subr.mxu0 0.0
    %3042 = vmatpush1.msra.mxu0 %v2994
    %3043 = vmatprep.subr.mxu0 0.0
    %3044 = vmatpush1.msra.mxu0 %v2996
    %3045 = vmatprep.subr.mxu0 0.0
    %3046 = vmatpush1.msra.mxu0 %v2998
    %3047 = vmatprep.subr.mxu0 0.0
    %3048 = vmatpush1.msra.mxu0 %v3000
    %3049 = vmatprep.subr.mxu0 0.0
    %3050 = vmatpush1.msra.mxu0 %v3002
    %3051 = vmatprep.subr.mxu0 0.0
    %3052 = vmatpush1.msra.mxu0 %v3004
    %3053 = vmatprep.subr.mxu0 0.0
    %3054 = vmatpush1.msra.mxu0 %v3006
    %3055 = vmatprep.subr.mxu0 0.0
    %3056 = vmatpush1.msra.mxu0 0.0
    %3057 = vmatprep.subr.mxu0 0.0
    %3058 = vmatpush1.msra.mxu0 0.0
    %3059 = vmatprep.subr.mxu0 0.0
    %3060 = vmatpush1.msra.mxu0 0.0
    %3061 = vmatprep.subr.mxu0 0.0
    %3062 = vmatpush1.msra.mxu0 0.0
    %3063 = vmatprep.subr.mxu0 0.0
    %3064 = vmatpush1.msra.mxu0 0.0
    %3065 = vmatprep.subr.mxu0 0.0
    %3066 = vmatpush1.msra.mxu0 0.0
    %3067 = vmatprep.subr.mxu0 0.0
    %3068 = vmatpush1.msra.mxu0 0.0
    %3069 = vmatprep.subr.mxu0 0.0
    %3070 = vmatpush1.msra.mxu0 0.0
    %3071 = vmatprep.subr.mxu0 0.0
    %3072 = vmatpush1.msra.mxu0 0.0
    %3073 = vmatprep.subr.mxu0 0.0
    %3074 = vmatpush1.msra.mxu0 0.0
    %3075 = vmatprep.subr.mxu0 0.0
    %3076 = vmatpush1.msra.mxu0 0.0
    %3077 = vmatprep.subr.mxu0 0.0
    %3078 = vmatpush1.msra.mxu0 0.0
    %3079 = vmatprep.subr.mxu0 0.0
    %3080 = vmatpush1.msra.mxu0 0.0
    %3081 = vmatprep.subr.mxu0 0.0
    %3082 = vmatpush1.msra.mxu0 0.0
    %3083 = vmatprep.subr.mxu0 0.0
    %3084 = vmatpush1.msra.mxu0 0.0
    %3085 = vmatprep.subr.mxu0 0.0
    %3086 = vmatpush1.msra.mxu0 0.0
    %3087 = vmatprep.subr.mxu0 0.0
    %3088 = vmatpush1.msra.mxu0 0.0
    %3089 = vmatprep.subr.mxu0 0.0
    %3090 = vmatpush1.msra.mxu0 0.0
    %3091 = vmatprep.subr.mxu0 0.0
    %3092 = vmatpush1.msra.mxu0 0.0
    %3093 = vmatprep.subr.mxu0 0.0
    %3094 = vmatpush1.msra.mxu0 0.0
    %3095 = vmatprep.subr.mxu0 0.0
    %3096 = vmatpush1.msra.mxu0 0.0
    %3097 = vmatprep.subr.mxu0 0.0
    %3098 = vmatpush1.msra.mxu0 0.0
    %3099 = vmatprep.subr.mxu0 0.0
    %3100 = vmatpush1.msra.mxu0 0.0
    %3101 = vmatprep.subr.mxu0 0.0
    %3102 = vmatpush1.msra.mxu0 0.0
    %3103 = vmatprep.mubr.f32.mxu0 0.0
    %3104 = vmatmul.mubr.f32.gmra.mrb[0].mxu0 %v3016
    %v3105 = vpop.f32.mrb[0].mxu0
    %v3106 = vadd.f32 0.0, %v3105
    %v3107 = vpop.f32.mrb[0].mxu0
    %3108 = vmatprep.mubr.f32.mxu0 0.0
    %3109 = vmatmul.mubr.f32.gmra.mrb[0].mxu0 %v3019
    %v3110 = vpop.f32.mrb[0].mxu0
    %v3111 = vadd.f32 0.0, %v3110
    %v3112 = vpop.f32.mrb[0].mxu0
    %3113 = vmatprep.mubr.f32.mxu0 0.0
    %3114 = vmatmul.mubr.f32.gmra.mrb[0].mxu0 %v3022
    %v3115 = vpop.f32.mrb[0].mxu0
    %v3116 = vadd.f32 0.0, %v3115
    %v3117 = vpop.f32.mrb[0].mxu0
    %3118 = vmatprep.mubr.f32.mxu0 0.0
    %3119 = vmatmul.mubr.f32.gmra.mrb[0].mxu0 %v3025
    %v3120 = vpop.f32.mrb[0].mxu0
    %v3121 = vadd.f32 0.0, %v3120
    %v3122 = vpop.f32.mrb[0].mxu0
    %3123 = vmatprep.mubr.f32.mxu0 0.0
    %3124 = vmatmul.mubr.f32.gmra.mrb[0].mxu0 %v3028
    %v3125 = vpop.f32.mrb[0].mxu0
    %v3126 = vadd.f32 0.0, %v3125
    %v3127 = vpop.f32.mrb[0].mxu0
    %3128 = vmatprep.mubr.f32.mxu0 0.0
    %3129 = vmatmul.mubr.f32.gmra.mrb[0].mxu0 %v3031
    %v3130 = vpop.f32.mrb[0].mxu0
    %v3131 = vadd.f32 0.0, %v3130
    %v3132 = vpop.f32.mrb[0].mxu0
    %3133 = vmatprep.mubr.f32.mxu0 0.0
    %3134 = vmatmul.mubr.f32.gmra.mrb[0].mxu0 %v3034
    %v3135 = vpop.f32.mrb[0].mxu0
    %v3136 = vadd.f32 0.0, %v3135
    %v3137 = vpop.f32.mrb[0].mxu0
    %3138 = vmatprep.mubr.f32.mxu0 0.0
    %3139 = vmatmul.mubr.f32.gmra.mrb[0].mxu0 %v3037
    %v3140 = vpop.f32.mrb[0].mxu0
    %v3141 = vadd.f32 0.0, %v3140
    %v3142 = vpop.f32.mrb[0].mxu0
    %3143 = vdwg.mxu0
    %3144 = vrot.lane.b32.xlu0 %v556, 112
    %v3145 = vpop.permute.xlu0 %3144
    %3146 = vrot.lane.b32.xlu0 %v558, 112
    %v3147 = vpop.permute.xlu0 %3146
    %3148 = vrot.lane.b32.xlu0 %v560, 112
    %v3149 = vpop.permute.xlu0 %3148
    %3150 = vrot.lane.b32.xlu0 %v562, 112
    %v3151 = vpop.permute.xlu0 %3150
    %3152 = vrot.lane.b32.xlu0 %v564, 112
    %v3153 = vpop.permute.xlu0 %3152
    %3154 = vrot.lane.b32.xlu0 %v566, 112
    %v3155 = vpop.permute.xlu0 %3154
    %3156 = vrot.lane.b32.xlu0 %v568, 112
    %v3157 = vpop.permute.xlu0 %3156
    %3158 = vrot.lane.b32.xlu0 %v570, 112
    %v3159 = vpop.permute.xlu0 %3158
    %v3169 = vsel %vm1980, %v2606, 0
    %v3172 = vsel %vm1980, %v2608, 0
    %v3175 = vsel %vm1980, %v2610, 0
    %v3178 = vsel %vm1980, %v2612, 0
    %v3181 = vsel %vm1980, %v2614, 0
    %v3184 = vsel %vm1980, %v2616, 0
    %v3187 = vsel %vm1980, %v2618, 0
    %v3190 = vsel %vm1980, %v2620, 0
    %3192 = vmatprep.subr.mxu0 0.0
    %3193 = vmatpush1.msra.mxu0 %v3145
    %3194 = vmatprep.subr.mxu0 0.0
    %3195 = vmatpush1.msra.mxu0 %v3147
    %3196 = vmatprep.subr.mxu0 0.0
    %3197 = vmatpush1.msra.mxu0 %v3149
    %3198 = vmatprep.subr.mxu0 0.0
    %3199 = vmatpush1.msra.mxu0 %v3151
    %3200 = vmatprep.subr.mxu0 0.0
    %3201 = vmatpush1.msra.mxu0 %v3153
    %3202 = vmatprep.subr.mxu0 0.0
    %3203 = vmatpush1.msra.mxu0 %v3155
    %3204 = vmatprep.subr.mxu0 0.0
    %3205 = vmatpush1.msra.mxu0 %v3157
    %3206 = vmatprep.subr.mxu0 0.0
    %3207 = vmatpush1.msra.mxu0 %v3159
    %3208 = vmatprep.subr.mxu0 0.0
    %3209 = vmatpush1.msra.mxu0 0.0
    %3210 = vmatprep.subr.mxu0 0.0
    %3211 = vmatpush1.msra.mxu0 0.0
    %3212 = vmatprep.subr.mxu0 0.0
    %3213 = vmatpush1.msra.mxu0 0.0
    %3214 = vmatprep.subr.mxu0 0.0
    %3215 = vmatpush1.msra.mxu0 0.0
    %3216 = vmatprep.subr.mxu0 0.0
    %3217 = vmatpush1.msra.mxu0 0.0
    %3218 = vmatprep.subr.mxu0 0.0
    %3219 = vmatpush1.msra.mxu0 0.0
    %3220 = vmatprep.subr.mxu0 0.0
    %3221 = vmatpush1.msra.mxu0 0.0
    %3222 = vmatprep.subr.mxu0 0.0
    %3223 = vmatpush1.msra.mxu0 0.0
    %3224 = vmatprep.subr.mxu0 0.0
    %3225 = vmatpush1.msra.mxu0 0.0
    %3226 = vmatprep.subr.mxu0 0.0
    %3227 = vmatpush1.msra.mxu0 0.0
    %3228 = vmatprep.subr.mxu0 0.0
    %3229 = vmatpush1.msra.mxu0 0.0
    %3230 = vmatprep.subr.mxu0 0.0
    %3231 = vmatpush1.msra.mxu0 0.0
    %3232 = vmatprep.subr.mxu0 0.0
    %3233 = vmatpush1.msra.mxu0 0.0
    %3234 = vmatprep.subr.mxu0 0.0
    %3235 = vmatpush1.msra.mxu0 0.0
    %3236 = vmatprep.subr.mxu0 0.0
    %3237 = vmatpush1.msra.mxu0 0.0
    %3238 = vmatprep.subr.mxu0 0.0
    %3239 = vmatpush1.msra.mxu0 0.0
    %3240 = vmatprep.subr.mxu0 0.0
    %3241 = vmatpush1.msra.mxu0 0.0
    %3242 = vmatprep.subr.mxu0 0.0
    %3243 = vmatpush1.msra.mxu0 0.0
    %3244 = vmatprep.subr.mxu0 0.0
    %3245 = vmatpush1.msra.mxu0 0.0
    %3246 = vmatprep.subr.mxu0 0.0
    %3247 = vmatpush1.msra.mxu0 0.0
    %3248 = vmatprep.subr.mxu0 0.0
    %3249 = vmatpush1.msra.mxu0 0.0
    %3250 = vmatprep.subr.mxu0 0.0
    %3251 = vmatpush1.msra.mxu0 0.0
    %3252 = vmatprep.subr.mxu0 0.0
    %3253 = vmatpush1.msra.mxu0 0.0
    %3254 = vmatprep.subr.mxu0 0.0
    %3255 = vmatpush1.msra.mxu0 0.0
    %3256 = vmatprep.mubr.f32.mxu0 0.0
    %3257 = vmatmul.mubr.f32.gmra.mrb[0].mxu0 %v3169
    %v3258 = vpop.f32.mrb[0].mxu0
    %v3259 = vadd.f32 0.0, %v3258
    %v3260 = vpop.f32.mrb[0].mxu0
    %3261 = vmatprep.mubr.f32.mxu0 0.0
    %3262 = vmatmul.mubr.f32.gmra.mrb[0].mxu0 %v3172
    %v3263 = vpop.f32.mrb[0].mxu0
    %v3264 = vadd.f32 0.0, %v3263
    %v3265 = vpop.f32.mrb[0].mxu0
    %3266 = vmatprep.mubr.f32.mxu0 0.0
    %3267 = vmatmul.mubr.f32.gmra.mrb[0].mxu0 %v3175
    %v3268 = vpop.f32.mrb[0].mxu0
    %v3269 = vadd.f32 0.0, %v3268
    %v3270 = vpop.f32.mrb[0].mxu0
    %3271 = vmatprep.mubr.f32.mxu0 0.0
    %3272 = vmatmul.mubr.f32.gmra.mrb[0].mxu0 %v3178
    %v3273 = vpop.f32.mrb[0].mxu0
    %v3274 = vadd.f32 0.0, %v3273
    %v3275 = vpop.f32.mrb[0].mxu0
    %3276 = vmatprep.mubr.f32.mxu0 0.0
    %3277 = vmatmul.mubr.f32.gmra.mrb[0].mxu0 %v3181
    %v3278 = vpop.f32.mrb[0].mxu0
    %v3279 = vadd.f32 0.0, %v3278
    %v3280 = vpop.f32.mrb[0].mxu0
    %3281 = vmatprep.mubr.f32.mxu0 0.0
    %3282 = vmatmul.mubr.f32.gmra.mrb[0].mxu0 %v3184
    %v3283 = vpop.f32.mrb[0].mxu0
    %v3284 = vadd.f32 0.0, %v3283
    %v3285 = vpop.f32.mrb[0].mxu0
    %3286 = vmatprep.mubr.f32.mxu0 0.0
    %3287 = vmatmul.mubr.f32.gmra.mrb[0].mxu0 %v3187
    %v3288 = vpop.f32.mrb[0].mxu0
    %v3289 = vadd.f32 0.0, %v3288
    %v3290 = vpop.f32.mrb[0].mxu0
    %3291 = vmatprep.mubr.f32.mxu0 0.0
    %3292 = vmatmul.mubr.f32.gmra.mrb[0].mxu0 %v3190
    %v3293 = vpop.f32.mrb[0].mxu0
    %v3294 = vadd.f32 0.0, %v3293
    %v3295 = vpop.f32.mrb[0].mxu0
    %3296 = vdwg.mxu0
    %3297 = vrot.lane.b32.xlu0 %v477, 112
    %v3298 = vpop.permute.xlu0 %3297
    %3299 = vrot.lane.b32.xlu0 %v482, 112
    %v3300 = vpop.permute.xlu0 %3299
    %3301 = vrot.lane.b32.xlu0 %v487, 112
    %v3302 = vpop.permute.xlu0 %3301
    %3303 = vrot.lane.b32.xlu0 %v492, 112
    %v3304 = vpop.permute.xlu0 %3303
    %3305 = vrot.lane.b32.xlu0 %v497, 112
    %v3306 = vpop.permute.xlu0 %3305
    %3307 = vrot.lane.b32.xlu0 %v502, 112
    %v3308 = vpop.permute.xlu0 %3307
    %3309 = vrot.lane.b32.xlu0 %v507, 112
    %v3310 = vpop.permute.xlu0 %3309
    %3311 = vrot.lane.b32.xlu0 %v512, 112
    %v3312 = vpop.permute.xlu0 %3311
    %v3322 = vsel %vm1980, %v2622, 0
    %v3325 = vsel %vm1980, %v2624, 0
    %v3328 = vsel %vm1980, %v2626, 0
    %v3331 = vsel %vm1980, %v2628, 0
    %v3334 = vsel %vm1980, %v2630, 0
    %v3337 = vsel %vm1980, %v2632, 0
    %v3340 = vsel %vm1980, %v2634, 0
    %v3343 = vsel %vm1980, %v2636, 0
    %3345 = vmatprep.subr.mxu0 0.0
    %3346 = vmatpush1.msra.mxu0 %v3298
    %3347 = vmatprep.subr.mxu0 0.0
    %3348 = vmatpush1.msra.mxu0 %v3300
    %3349 = vmatprep.subr.mxu0 0.0
    %3350 = vmatpush1.msra.mxu0 %v3302
    %3351 = vmatprep.subr.mxu0 0.0
    %3352 = vmatpush1.msra.mxu0 %v3304
    %3353 = vmatprep.subr.mxu0 0.0
    %3354 = vmatpush1.msra.mxu0 %v3306
    %3355 = vmatprep.subr.mxu0 0.0
    %3356 = vmatpush1.msra.mxu0 %v3308
    %3357 = vmatprep.subr.mxu0 0.0
    %3358 = vmatpush1.msra.mxu0 %v3310
    %3359 = vmatprep.subr.mxu0 0.0
    %3360 = vmatpush1.msra.mxu0 %v3312
    %3361 = vmatprep.subr.mxu0 0.0
    %3362 = vmatpush1.msra.mxu0 0.0
    %3363 = vmatprep.subr.mxu0 0.0
    %3364 = vmatpush1.msra.mxu0 0.0
    %3365 = vmatprep.subr.mxu0 0.0
    %3366 = vmatpush1.msra.mxu0 0.0
    %3367 = vmatprep.subr.mxu0 0.0
    %3368 = vmatpush1.msra.mxu0 0.0
    %3369 = vmatprep.subr.mxu0 0.0
    %3370 = vmatpush1.msra.mxu0 0.0
    %3371 = vmatprep.subr.mxu0 0.0
    %3372 = vmatpush1.msra.mxu0 0.0
    %3373 = vmatprep.subr.mxu0 0.0
    %3374 = vmatpush1.msra.mxu0 0.0
    %3375 = vmatprep.subr.mxu0 0.0
    %3376 = vmatpush1.msra.mxu0 0.0
    %3377 = vmatprep.subr.mxu0 0.0
    %3378 = vmatpush1.msra.mxu0 0.0
    %3379 = vmatprep.subr.mxu0 0.0
    %3380 = vmatpush1.msra.mxu0 0.0
    %3381 = vmatprep.subr.mxu0 0.0
    %3382 = vmatpush1.msra.mxu0 0.0
    %3383 = vmatprep.subr.mxu0 0.0
    %3384 = vmatpush1.msra.mxu0 0.0
    %3385 = vmatprep.subr.mxu0 0.0
    %3386 = vmatpush1.msra.mxu0 0.0
    %3387 = vmatprep.subr.mxu0 0.0
    %3388 = vmatpush1.msra.mxu0 0.0
    %3389 = vmatprep.subr.mxu0 0.0
    %3390 = vmatpush1.msra.mxu0 0.0
    %3391 = vmatprep.subr.mxu0 0.0
    %3392 = vmatpush1.msra.mxu0 0.0
    %3393 = vmatprep.subr.mxu0 0.0
    %3394 = vmatpush1.msra.mxu0 0.0
    %3395 = vmatprep.subr.mxu0 0.0
    %3396 = vmatpush1.msra.mxu0 0.0
    %3397 = vmatprep.subr.mxu0 0.0
    %3398 = vmatpush1.msra.mxu0 0.0
    %3399 = vmatprep.subr.mxu0 0.0
    %3400 = vmatpush1.msra.mxu0 0.0
    %3401 = vmatprep.subr.mxu0 0.0
    %3402 = vmatpush1.msra.mxu0 0.0
    %3403 = vmatprep.subr.mxu0 0.0
    %3404 = vmatpush1.msra.mxu0 0.0
    %3405 = vmatprep.subr.mxu0 0.0
    %3406 = vmatpush1.msra.mxu0 0.0
    %3407 = vmatprep.subr.mxu0 0.0
    %3408 = vmatpush1.msra.mxu0 0.0
    %3409 = vmatprep.mubr.f32.mxu0 0.0
    %3410 = vmatmul.mubr.f32.gmra.mrb[0].mxu0 %v3322
    %v3411 = vpop.f32.mrb[0].mxu0
    %v3412 = vadd.f32 0.0, %v3411
    %v3413 = vpop.f32.mrb[0].mxu0
    %3414 = vmatprep.mubr.f32.mxu0 0.0
    %3415 = vmatmul.mubr.f32.gmra.mrb[0].mxu0 %v3325
    %v3416 = vpop.f32.mrb[0].mxu0
    %v3417 = vadd.f32 0.0, %v3416
    %v3418 = vpop.f32.mrb[0].mxu0
    %3419 = vmatprep.mubr.f32.mxu0 0.0
    %3420 = vmatmul.mubr.f32.gmra.mrb[0].mxu0 %v3328
    %v3421 = vpop.f32.mrb[0].mxu0
    %v3422 = vadd.f32 0.0, %v3421
    %v3423 = vpop.f32.mrb[0].mxu0
    %3424 = vmatprep.mubr.f32.mxu0 0.0
    %3425 = vmatmul.mubr.f32.gmra.mrb[0].mxu0 %v3331
    %v3426 = vpop.f32.mrb[0].mxu0
    %v3427 = vadd.f32 0.0, %v3426
    %v3428 = vpop.f32.mrb[0].mxu0
    %3429 = vmatprep.mubr.f32.mxu0 0.0
    %3430 = vmatmul.mubr.f32.gmra.mrb[0].mxu0 %v3334
    %v3431 = vpop.f32.mrb[0].mxu0
    %v3432 = vadd.f32 0.0, %v3431
    %v3433 = vpop.f32.mrb[0].mxu0
    %3434 = vmatprep.mubr.f32.mxu0 0.0
    %3435 = vmatmul.mubr.f32.gmra.mrb[0].mxu0 %v3337
    %v3436 = vpop.f32.mrb[0].mxu0
    %v3437 = vadd.f32 0.0, %v3436
    %v3438 = vpop.f32.mrb[0].mxu0
    %3439 = vmatprep.mubr.f32.mxu0 0.0
    %3440 = vmatmul.mubr.f32.gmra.mrb[0].mxu0 %v3340
    %v3441 = vpop.f32.mrb[0].mxu0
    %v3442 = vadd.f32 0.0, %v3441
    %v3443 = vpop.f32.mrb[0].mxu0
    %3444 = vmatprep.mubr.f32.mxu0 0.0
    %3445 = vmatmul.mubr.f32.gmra.mrb[0].mxu0 %v3343
    %v3446 = vpop.f32.mrb[0].mxu0
    %v3447 = vadd.f32 0.0, %v3446
    %v3448 = vpop.f32.mrb[0].mxu0
    %3449 = vdwg.mxu0
    %3450 = vrot.lane.b32.xlu0 %v580, 112
    %v3451 = vpop.permute.xlu0 %3450
    %3452 = vrot.lane.b32.xlu0 %v582, 112
    %v3453 = vpop.permute.xlu0 %3452
    %3454 = vrot.lane.b32.xlu0 %v584, 112
    %v3455 = vpop.permute.xlu0 %3454
    %3456 = vrot.lane.b32.xlu0 %v586, 112
    %v3457 = vpop.permute.xlu0 %3456
    %3458 = vrot.lane.b32.xlu0 %v588, 112
    %v3459 = vpop.permute.xlu0 %3458
    %3460 = vrot.lane.b32.xlu0 %v590, 112
    %v3461 = vpop.permute.xlu0 %3460
    %3462 = vrot.lane.b32.xlu0 %v592, 112
    %v3463 = vpop.permute.xlu0 %3462
    %3464 = vrot.lane.b32.xlu0 %v594, 112
    %v3465 = vpop.permute.xlu0 %3464
    %v3475 = vsel %vm1980, %v2638, 0
    %v3478 = vsel %vm1980, %v2640, 0
    %v3481 = vsel %vm1980, %v2642, 0
    %v3484 = vsel %vm1980, %v2644, 0
    %v3487 = vsel %vm1980, %v2646, 0
    %v3490 = vsel %vm1980, %v2648, 0
    %v3493 = vsel %vm1980, %v2650, 0
    %v3496 = vsel %vm1980, %v2652, 0
    %3498 = vmatprep.subr.mxu0 0.0
    %3499 = vmatpush1.msra.mxu0 %v3451
    %3500 = vmatprep.subr.mxu0 0.0
    %3501 = vmatpush1.msra.mxu0 %v3453
    %3502 = vmatprep.subr.mxu0 0.0
    %3503 = vmatpush1.msra.mxu0 %v3455
    %3504 = vmatprep.subr.mxu0 0.0
    %3505 = vmatpush1.msra.mxu0 %v3457
    %3506 = vmatprep.subr.mxu0 0.0
    %3507 = vmatpush1.msra.mxu0 %v3459
    %3508 = vmatprep.subr.mxu0 0.0
    %3509 = vmatpush1.msra.mxu0 %v3461
    %3510 = vmatprep.subr.mxu0 0.0
    %3511 = vmatpush1.msra.mxu0 %v3463
    %3512 = vmatprep.subr.mxu0 0.0
    %3513 = vmatpush1.msra.mxu0 %v3465
    %3514 = vmatprep.subr.mxu0 0.0
    %3515 = vmatpush1.msra.mxu0 0.0
    %3516 = vmatprep.subr.mxu0 0.0
    %3517 = vmatpush1.msra.mxu0 0.0
    %3518 = vmatprep.subr.mxu0 0.0
    %3519 = vmatpush1.msra.mxu0 0.0
    %3520 = vmatprep.subr.mxu0 0.0
    %3521 = vmatpush1.msra.mxu0 0.0
    %3522 = vmatprep.subr.mxu0 0.0
    %3523 = vmatpush1.msra.mxu0 0.0
    %3524 = vmatprep.subr.mxu0 0.0
    %3525 = vmatpush1.msra.mxu0 0.0
    %3526 = vmatprep.subr.mxu0 0.0
    %3527 = vmatpush1.msra.mxu0 0.0
    %3528 = vmatprep.subr.mxu0 0.0
    %3529 = vmatpush1.msra.mxu0 0.0
    %3530 = vmatprep.subr.mxu0 0.0
    %3531 = vmatpush1.msra.mxu0 0.0
    %3532 = vmatprep.subr.mxu0 0.0
    %3533 = vmatpush1.msra.mxu0 0.0
    %3534 = vmatprep.subr.mxu0 0.0
    %3535 = vmatpush1.msra.mxu0 0.0
    %3536 = vmatprep.subr.mxu0 0.0
    %3537 = vmatpush1.msra.mxu0 0.0
    %3538 = vmatprep.subr.mxu0 0.0
    %3539 = vmatpush1.msra.mxu0 0.0
    %3540 = vmatprep.subr.mxu0 0.0
    %3541 = vmatpush1.msra.mxu0 0.0
    %3542 = vmatprep.subr.mxu0 0.0
    %3543 = vmatpush1.msra.mxu0 0.0
    %3544 = vmatprep.subr.mxu0 0.0
    %3545 = vmatpush1.msra.mxu0 0.0
    %3546 = vmatprep.subr.mxu0 0.0
    %3547 = vmatpush1.msra.mxu0 0.0
    %3548 = vmatprep.subr.mxu0 0.0
    %3549 = vmatpush1.msra.mxu0 0.0
    %3550 = vmatprep.subr.mxu0 0.0
    %3551 = vmatpush1.msra.mxu0 0.0
    %3552 = vmatprep.subr.mxu0 0.0
    %3553 = vmatpush1.msra.mxu0 0.0
    %3554 = vmatprep.subr.mxu0 0.0
    %3555 = vmatpush1.msra.mxu0 0.0
    %3556 = vmatprep.subr.mxu0 0.0
    %3557 = vmatpush1.msra.mxu0 0.0
    %3558 = vmatprep.subr.mxu0 0.0
    %3559 = vmatpush1.msra.mxu0 0.0
    %3560 = vmatprep.subr.mxu0 0.0
    %3561 = vmatpush1.msra.mxu0 0.0
    %3562 = vmatprep.mubr.f32.mxu0 0.0
    %3563 = vmatmul.mubr.f32.gmra.mrb[0].mxu0 %v3475
    %v3564 = vpop.f32.mrb[0].mxu0
    %v3565 = vadd.f32 0.0, %v3564
    %v3566 = vpop.f32.mrb[0].mxu0
    %3567 = vmatprep.mubr.f32.mxu0 0.0
    %3568 = vmatmul.mubr.f32.gmra.mrb[0].mxu0 %v3478
    %v3569 = vpop.f32.mrb[0].mxu0
    %v3570 = vadd.f32 0.0, %v3569
    %v3571 = vpop.f32.mrb[0].mxu0
    %3572 = vmatprep.mubr.f32.mxu0 0.0
    %3573 = vmatmul.mubr.f32.gmra.mrb[0].mxu0 %v3481
    %v3574 = vpop.f32.mrb[0].mxu0
    %v3575 = vadd.f32 0.0, %v3574
    %v3576 = vpop.f32.mrb[0].mxu0
    %3577 = vmatprep.mubr.f32.mxu0 0.0
    %3578 = vmatmul.mubr.f32.gmra.mrb[0].mxu0 %v3484
    %v3579 = vpop.f32.mrb[0].mxu0
    %v3580 = vadd.f32 0.0, %v3579
    %v3581 = vpop.f32.mrb[0].mxu0
    %3582 = vmatprep.mubr.f32.mxu0 0.0
    %3583 = vmatmul.mubr.f32.gmra.mrb[0].mxu0 %v3487
    %v3584 = vpop.f32.mrb[0].mxu0
    %v3585 = vadd.f32 0.0, %v3584
    %v3586 = vpop.f32.mrb[0].mxu0
    %3587 = vmatprep.mubr.f32.mxu0 0.0
    %3588 = vmatmul.mubr.f32.gmra.mrb[0].mxu0 %v3490
    %v3589 = vpop.f32.mrb[0].mxu0
    %v3590 = vadd.f32 0.0, %v3589
    %v3591 = vpop.f32.mrb[0].mxu0
    %3592 = vmatprep.mubr.f32.mxu0 0.0
    %3593 = vmatmul.mubr.f32.gmra.mrb[0].mxu0 %v3493
    %v3594 = vpop.f32.mrb[0].mxu0
    %v3595 = vadd.f32 0.0, %v3594
    %v3596 = vpop.f32.mrb[0].mxu0
    %3597 = vmatprep.mubr.f32.mxu0 0.0
    %3598 = vmatmul.mubr.f32.gmra.mrb[0].mxu0 %v3496
    %v3599 = vpop.f32.mrb[0].mxu0
    %v3600 = vadd.f32 0.0, %v3599
    %v3601 = vpop.f32.mrb[0].mxu0
    %3602 = vdwg.mxu0
    %3603 = vrot.lane.b32.xlu0 %v596, 112
    %v3604 = vpop.permute.xlu0 %3603
    %3605 = vrot.lane.b32.xlu0 %v598, 112
    %v3606 = vpop.permute.xlu0 %3605
    %3607 = vrot.lane.b32.xlu0 %v600, 112
    %v3608 = vpop.permute.xlu0 %3607
    %3609 = vrot.lane.b32.xlu0 %v602, 112
    %v3610 = vpop.permute.xlu0 %3609
    %3611 = vrot.lane.b32.xlu0 %v604, 112
    %v3612 = vpop.permute.xlu0 %3611
    %3613 = vrot.lane.b32.xlu0 %v606, 112
    %v3614 = vpop.permute.xlu0 %3613
    %3615 = vrot.lane.b32.xlu0 %v608, 112
    %v3616 = vpop.permute.xlu0 %3615
    %3617 = vrot.lane.b32.xlu0 %v610, 112
    %v3618 = vpop.permute.xlu0 %3617
    %v3628 = vsel %vm1980, %v2654, 0
    %v3631 = vsel %vm1980, %v2656, 0
    %v3634 = vsel %vm1980, %v2658, 0
    %v3637 = vsel %vm1980, %v2660, 0
    %v3640 = vsel %vm1980, %v2662, 0
    %v3643 = vsel %vm1980, %v2664, 0
    %v3646 = vsel %vm1980, %v2666, 0
    %v3649 = vsel %vm1980, %v2668, 0
    %3651 = vmatprep.subr.mxu0 0.0
    %3652 = vmatpush1.msra.mxu0 %v3604
    %3653 = vmatprep.subr.mxu0 0.0
    %3654 = vmatpush1.msra.mxu0 %v3606
    %3655 = vmatprep.subr.mxu0 0.0
    %3656 = vmatpush1.msra.mxu0 %v3608
    %3657 = vmatprep.subr.mxu0 0.0
    %3658 = vmatpush1.msra.mxu0 %v3610
    %3659 = vmatprep.subr.mxu0 0.0
    %3660 = vmatpush1.msra.mxu0 %v3612
    %3661 = vmatprep.subr.mxu0 0.0
    %3662 = vmatpush1.msra.mxu0 %v3614
    %3663 = vmatprep.subr.mxu0 0.0
    %3664 = vmatpush1.msra.mxu0 %v3616
    %3665 = vmatprep.subr.mxu0 0.0
    %3666 = vmatpush1.msra.mxu0 %v3618
    %3667 = vmatprep.subr.mxu0 0.0
    %3668 = vmatpush1.msra.mxu0 0.0
    %3669 = vmatprep.subr.mxu0 0.0
    %3670 = vmatpush1.msra.mxu0 0.0
    %3671 = vmatprep.subr.mxu0 0.0
    %3672 = vmatpush1.msra.mxu0 0.0
    %3673 = vmatprep.subr.mxu0 0.0
    %3674 = vmatpush1.msra.mxu0 0.0
    %3675 = vmatprep.subr.mxu0 0.0
    %3676 = vmatpush1.msra.mxu0 0.0
    %3677 = vmatprep.subr.mxu0 0.0
    %3678 = vmatpush1.msra.mxu0 0.0
    %3679 = vmatprep.subr.mxu0 0.0
    %3680 = vmatpush1.msra.mxu0 0.0
    %3681 = vmatprep.subr.mxu0 0.0
    %3682 = vmatpush1.msra.mxu0 0.0
    %3683 = vmatprep.subr.mxu0 0.0
    %3684 = vmatpush1.msra.mxu0 0.0
    %3685 = vmatprep.subr.mxu0 0.0
    %3686 = vmatpush1.msra.mxu0 0.0
    %3687 = vmatprep.subr.mxu0 0.0
    %3688 = vmatpush1.msra.mxu0 0.0
    %3689 = vmatprep.subr.mxu0 0.0
    %3690 = vmatpush1.msra.mxu0 0.0
    %3691 = vmatprep.subr.mxu0 0.0
    %3692 = vmatpush1.msra.mxu0 0.0
    %3693 = vmatprep.subr.mxu0 0.0
    %3694 = vmatpush1.msra.mxu0 0.0
    %3695 = vmatprep.subr.mxu0 0.0
    %3696 = vmatpush1.msra.mxu0 0.0
    %3697 = vmatprep.subr.mxu0 0.0
    %3698 = vmatpush1.msra.mxu0 0.0
    %3699 = vmatprep.subr.mxu0 0.0
    %3700 = vmatpush1.msra.mxu0 0.0
    %3701 = vmatprep.subr.mxu0 0.0
    %3702 = vmatpush1.msra.mxu0 0.0
    %3703 = vmatprep.subr.mxu0 0.0
    %3704 = vmatpush1.msra.mxu0 0.0
    %3705 = vmatprep.subr.mxu0 0.0
    %3706 = vmatpush1.msra.mxu0 0.0
    %3707 = vmatprep.subr.mxu0 0.0
    %3708 = vmatpush1.msra.mxu0 0.0
    %3709 = vmatprep.subr.mxu0 0.0
    %3710 = vmatpush1.msra.mxu0 0.0
    %3711 = vmatprep.subr.mxu0 0.0
    %3712 = vmatpush1.msra.mxu0 0.0
    %3713 = vmatprep.subr.mxu0 0.0
    %3714 = vmatpush1.msra.mxu0 0.0
    %3715 = vmatprep.mubr.f32.mxu0 0.0
    %3716 = vmatmul.mubr.f32.gmra.mrb[0].mxu0 %v3628
    %v3717 = vpop.f32.mrb[0].mxu0
    %v3718 = vadd.f32 0.0, %v3717
    %v3719 = vpop.f32.mrb[0].mxu0
    %3720 = vmatprep.mubr.f32.mxu0 0.0
    %3721 = vmatmul.mubr.f32.gmra.mrb[0].mxu0 %v3631
    %v3722 = vpop.f32.mrb[0].mxu0
    %v3723 = vadd.f32 0.0, %v3722
    %v3724 = vpop.f32.mrb[0].mxu0
    %3725 = vmatprep.mubr.f32.mxu0 0.0
    %3726 = vmatmul.mubr.f32.gmra.mrb[0].mxu0 %v3634
    %v3727 = vpop.f32.mrb[0].mxu0
    %v3728 = vadd.f32 0.0, %v3727
    %v3729 = vpop.f32.mrb[0].mxu0
    %3730 = vmatprep.mubr.f32.mxu0 0.0
    %3731 = vmatmul.mubr.f32.gmra.mrb[0].mxu0 %v3637
    %v3732 = vpop.f32.mrb[0].mxu0
    %v3733 = vadd.f32 0.0, %v3732
    %v3734 = vpop.f32.mrb[0].mxu0
    %3735 = vmatprep.mubr.f32.mxu0 0.0
    %3736 = vmatmul.mubr.f32.gmra.mrb[0].mxu0 %v3640
    %v3737 = vpop.f32.mrb[0].mxu0
    %v3738 = vadd.f32 0.0, %v3737
    %v3739 = vpop.f32.mrb[0].mxu0
    %3740 = vmatprep.mubr.f32.mxu0 0.0
    %3741 = vmatmul.mubr.f32.gmra.mrb[0].mxu0 %v3643
    %v3742 = vpop.f32.mrb[0].mxu0
    %v3743 = vadd.f32 0.0, %v3742
    %v3744 = vpop.f32.mrb[0].mxu0
    %3745 = vmatprep.mubr.f32.mxu0 0.0
    %3746 = vmatmul.mubr.f32.gmra.mrb[0].mxu0 %v3646
    %v3747 = vpop.f32.mrb[0].mxu0
    %v3748 = vadd.f32 0.0, %v3747
    %v3749 = vpop.f32.mrb[0].mxu0
    %3750 = vmatprep.mubr.f32.mxu0 0.0
    %3751 = vmatmul.mubr.f32.gmra.mrb[0].mxu0 %v3649
    %v3752 = vpop.f32.mrb[0].mxu0
    %v3753 = vadd.f32 0.0, %v3752
    %v3754 = vpop.f32.mrb[0].mxu0
    %3755 = vdwg.mxu0
    %3756 = vrot.lane.b32.xlu0 %v612, 112
    %v3757 = vpop.permute.xlu0 %3756
    %3758 = vrot.lane.b32.xlu0 %v614, 112
    %v3759 = vpop.permute.xlu0 %3758
    %3760 = vrot.lane.b32.xlu0 %v616, 112
    %v3761 = vpop.permute.xlu0 %3760
    %3762 = vrot.lane.b32.xlu0 %v618, 112
    %v3763 = vpop.permute.xlu0 %3762
    %3764 = vrot.lane.b32.xlu0 %v620, 112
    %v3765 = vpop.permute.xlu0 %3764
    %3766 = vrot.lane.b32.xlu0 %v622, 112
    %v3767 = vpop.permute.xlu0 %3766
    %3768 = vrot.lane.b32.xlu0 %v624, 112
    %v3769 = vpop.permute.xlu0 %3768
    %3770 = vrot.lane.b32.xlu0 %v626, 112
    %v3771 = vpop.permute.xlu0 %3770
    %v3781 = vsel %vm1980, %v2670, 0
    %v3784 = vsel %vm1980, %v2672, 0
    %v3787 = vsel %vm1980, %v2674, 0
    %v3790 = vsel %vm1980, %v2676, 0
    %v3793 = vsel %vm1980, %v2678, 0
    %v3796 = vsel %vm1980, %v2680, 0
    %v3799 = vsel %vm1980, %v2682, 0
    %v3802 = vsel %vm1980, %v2684, 0
    %3804 = vmatprep.subr.mxu0 0.0
    %3805 = vmatpush1.msra.mxu0 %v3757
    %3806 = vmatprep.subr.mxu0 0.0
    %3807 = vmatpush1.msra.mxu0 %v3759
    %3808 = vmatprep.subr.mxu0 0.0
    %3809 = vmatpush1.msra.mxu0 %v3761
    %3810 = vmatprep.subr.mxu0 0.0
    %3811 = vmatpush1.msra.mxu0 %v3763
    %3812 = vmatprep.subr.mxu0 0.0
    %3813 = vmatpush1.msra.mxu0 %v3765
    %3814 = vmatprep.subr.mxu0 0.0
    %3815 = vmatpush1.msra.mxu0 %v3767
    %3816 = vmatprep.subr.mxu0 0.0
    %3817 = vmatpush1.msra.mxu0 %v3769
    %3818 = vmatprep.subr.mxu0 0.0
    %3819 = vmatpush1.msra.mxu0 %v3771
    %3820 = vmatprep.subr.mxu0 0.0
    %3821 = vmatpush1.msra.mxu0 0.0
    %3822 = vmatprep.subr.mxu0 0.0
    %3823 = vmatpush1.msra.mxu0 0.0
    %3824 = vmatprep.subr.mxu0 0.0
    %3825 = vmatpush1.msra.mxu0 0.0
    %3826 = vmatprep.subr.mxu0 0.0
    %3827 = vmatpush1.msra.mxu0 0.0
    %3828 = vmatprep.subr.mxu0 0.0
    %3829 = vmatpush1.msra.mxu0 0.0
    %3830 = vmatprep.subr.mxu0 0.0
    %3831 = vmatpush1.msra.mxu0 0.0
    %3832 = vmatprep.subr.mxu0 0.0
    %3833 = vmatpush1.msra.mxu0 0.0
    %3834 = vmatprep.subr.mxu0 0.0
    %3835 = vmatpush1.msra.mxu0 0.0
    %3836 = vmatprep.subr.mxu0 0.0
    %3837 = vmatpush1.msra.mxu0 0.0
    %3838 = vmatprep.subr.mxu0 0.0
    %3839 = vmatpush1.msra.mxu0 0.0
    %3840 = vmatprep.subr.mxu0 0.0
    %3841 = vmatpush1.msra.mxu0 0.0
    %3842 = vmatprep.subr.mxu0 0.0
    %3843 = vmatpush1.msra.mxu0 0.0
    %3844 = vmatprep.subr.mxu0 0.0
    %3845 = vmatpush1.msra.mxu0 0.0
    %3846 = vmatprep.subr.mxu0 0.0
    %3847 = vmatpush1.msra.mxu0 0.0
    %3848 = vmatprep.subr.mxu0 0.0
    %3849 = vmatpush1.msra.mxu0 0.0
    %3850 = vmatprep.subr.mxu0 0.0
    %3851 = vmatpush1.msra.mxu0 0.0
    %3852 = vmatprep.subr.mxu0 0.0
    %3853 = vmatpush1.msra.mxu0 0.0
    %3854 = vmatprep.subr.mxu0 0.0
    %3855 = vmatpush1.msra.mxu0 0.0
    %3856 = vmatprep.subr.mxu0 0.0
    %3857 = vmatpush1.msra.mxu0 0.0
    %3858 = vmatprep.subr.mxu0 0.0
    %3859 = vmatpush1.msra.mxu0 0.0
    %3860 = vmatprep.subr.mxu0 0.0
    %3861 = vmatpush1.msra.mxu0 0.0
    %3862 = vmatprep.subr.mxu0 0.0
    %3863 = vmatpush1.msra.mxu0 0.0
    %3864 = vmatprep.subr.mxu0 0.0
    %3865 = vmatpush1.msra.mxu0 0.0
    %3866 = vmatprep.subr.mxu0 0.0
    %3867 = vmatpush1.msra.mxu0 0.0
    %3868 = vmatprep.mubr.f32.mxu0 0.0
    %3869 = vmatmul.mubr.f32.gmra.mrb[0].mxu0 %v3781
    %v3870 = vpop.f32.mrb[0].mxu0
    %v3871 = vadd.f32 0.0, %v3870
    %v3872 = vpop.f32.mrb[0].mxu0
    %3873 = vmatprep.mubr.f32.mxu0 0.0
    %3874 = vmatmul.mubr.f32.gmra.mrb[0].mxu0 %v3784
    %v3875 = vpop.f32.mrb[0].mxu0
    %v3876 = vadd.f32 0.0, %v3875
    %v3877 = vpop.f32.mrb[0].mxu0
    %3878 = vmatprep.mubr.f32.mxu0 0.0
    %3879 = vmatmul.mubr.f32.gmra.mrb[0].mxu0 %v3787
    %v3880 = vpop.f32.mrb[0].mxu0
    %v3881 = vadd.f32 0.0, %v3880
    %v3882 = vpop.f32.mrb[0].mxu0
    %3883 = vmatprep.mubr.f32.mxu0 0.0
    %3884 = vmatmul.mubr.f32.gmra.mrb[0].mxu0 %v3790
    %v3885 = vpop.f32.mrb[0].mxu0
    %v3886 = vadd.f32 0.0, %v3885
    %v3887 = vpop.f32.mrb[0].mxu0
    %3888 = vmatprep.mubr.f32.mxu0 0.0
    %3889 = vmatmul.mubr.f32.gmra.mrb[0].mxu0 %v3793
    %v3890 = vpop.f32.mrb[0].mxu0
    %v3891 = vadd.f32 0.0, %v3890
    %v3892 = vpop.f32.mrb[0].mxu0
    %3893 = vmatprep.mubr.f32.mxu0 0.0
    %3894 = vmatmul.mubr.f32.gmra.mrb[0].mxu0 %v3796
    %v3895 = vpop.f32.mrb[0].mxu0
    %v3896 = vadd.f32 0.0, %v3895
    %v3897 = vpop.f32.mrb[0].mxu0
    %3898 = vmatprep.mubr.f32.mxu0 0.0
    %3899 = vmatmul.mubr.f32.gmra.mrb[0].mxu0 %v3799
    %v3900 = vpop.f32.mrb[0].mxu0
    %v3901 = vadd.f32 0.0, %v3900
    %v3902 = vpop.f32.mrb[0].mxu0
    %3903 = vmatprep.mubr.f32.mxu0 0.0
    %3904 = vmatmul.mubr.f32.gmra.mrb[0].mxu0 %v3802
    %v3905 = vpop.f32.mrb[0].mxu0
    %v3906 = vadd.f32 0.0, %v3905
    %v3907 = vpop.f32.mrb[0].mxu0
    %3908 = vdwg.mxu0
    %v3909 = vld [vmem:[%s3] sm:$0xff]
    %v3910 = vld [vmem:[%s3 + $0x8] sm:$0xff]
    %v3911 = vld [vmem:[%s3 + $0x10] sm:$0xff]
    %v3912 = vld [vmem:[%s3 + $0x18] sm:$0xff]
    %v3914 = vsel %vm771, %v2800, 0
    %v3917 = vsel %vm771, %v2805, 0
    %v3920 = vsel %vm771, %v2810, 0
    %v3923 = vsel %vm771, %v2815, 0
    %v3926 = vsel %vm771, %v2820, 0
    %v3929 = vsel %vm771, %v2825, 0
    %v3932 = vsel %vm771, %v2830, 0
    %v3935 = vsel %vm771, %v2835, 0
    %3937 = vmatprep.subr.mxu0 0.0
    %3938 = vmatpush1.msra.mxu0 %v3909
    %3939 = vmatprep.subr.mxu0 0.0
    %3940 = vmatpush1.msra.mxu0 0.0
    %3941 = vmatprep.subr.mxu0 0.0
    %3942 = vmatpush1.msra.mxu0 0.0
    %3943 = vmatprep.subr.mxu0 0.0
    %3944 = vmatpush1.msra.mxu0 0.0
    %3945 = vmatprep.subr.mxu0 0.0
    %3946 = vmatpush1.msra.mxu0 0.0
    %3947 = vmatprep.subr.mxu0 0.0
    %3948 = vmatpush1.msra.mxu0 0.0
    %3949 = vmatprep.subr.mxu0 0.0
    %3950 = vmatpush1.msra.mxu0 0.0
    %3951 = vmatprep.subr.mxu0 0.0
    %3952 = vmatpush1.msra.mxu0 0.0
    %3953 = vmatprep.subr.mxu0 0.0
    %3954 = vmatpush1.msra.mxu0 0.0
    %3955 = vmatprep.subr.mxu0 0.0
    %3956 = vmatpush1.msra.mxu0 0.0
    %3957 = vmatprep.subr.mxu0 0.0
    %3958 = vmatpush1.msra.mxu0 0.0
    %3959 = vmatprep.subr.mxu0 0.0
    %3960 = vmatpush1.msra.mxu0 0.0
    %3961 = vmatprep.subr.mxu0 0.0
    %3962 = vmatpush1.msra.mxu0 0.0
    %3963 = vmatprep.subr.mxu0 0.0
    %3964 = vmatpush1.msra.mxu0 0.0
    %3965 = vmatprep.subr.mxu0 0.0
    %3966 = vmatpush1.msra.mxu0 0.0
    %3967 = vmatprep.subr.mxu0 0.0
    %3968 = vmatpush1.msra.mxu0 0.0
    %3969 = vmatprep.subr.mxu0 0.0
    %3970 = vmatpush1.msra.mxu0 0.0
    %3971 = vmatprep.subr.mxu0 0.0
    %3972 = vmatpush1.msra.mxu0 0.0
    %3973 = vmatprep.subr.mxu0 0.0
    %3974 = vmatpush1.msra.mxu0 0.0
    %3975 = vmatprep.subr.mxu0 0.0
    %3976 = vmatpush1.msra.mxu0 0.0
    %3977 = vmatprep.subr.mxu0 0.0
    %3978 = vmatpush1.msra.mxu0 0.0
    %3979 = vmatprep.subr.mxu0 0.0
    %3980 = vmatpush1.msra.mxu0 0.0
    %3981 = vmatprep.subr.mxu0 0.0
    %3982 = vmatpush1.msra.mxu0 0.0
    %3983 = vmatprep.subr.mxu0 0.0
    %3984 = vmatpush1.msra.mxu0 0.0
    %3985 = vmatprep.subr.mxu0 0.0
    %3986 = vmatpush1.msra.mxu0 0.0
    %3987 = vmatprep.subr.mxu0 0.0
    %3988 = vmatpush1.msra.mxu0 0.0
    %3989 = vmatprep.subr.mxu0 0.0
    %3990 = vmatpush1.msra.mxu0 0.0
    %3991 = vmatprep.subr.mxu0 0.0
    %3992 = vmatpush1.msra.mxu0 0.0
    %3993 = vmatprep.subr.mxu0 0.0
    %3994 = vmatpush1.msra.mxu0 0.0
    %3995 = vmatprep.subr.mxu0 0.0
    %3996 = vmatpush1.msra.mxu0 0.0
    %3997 = vmatprep.subr.mxu0 0.0
    %3998 = vmatpush1.msra.mxu0 0.0
    %3999 = vmatprep.subr.mxu0 0.0
    %4000 = vmatpush1.msra.mxu0 0.0
    %4001 = vmatprep.mubr.f32.mxu0 0.0
    %4002 = vmatmul.mubr.f32.gmra.mrb[0].mxu0 %v3914
    %v4003 = vpop.f32.mrb[0].mxu0
    %v4004 = vadd.f32 0.0, %v4003
    %v4005 = vpop.f32.mrb[0].mxu0
    %4006 = vmatprep.mubr.f32.mxu0 0.0
    %4007 = vmatmul.mubr.f32.gmra.mrb[0].mxu0 %v3917
    %v4008 = vpop.f32.mrb[0].mxu0
    %v4009 = vadd.f32 0.0, %v4008
    %v4010 = vpop.f32.mrb[0].mxu0
    %4011 = vmatprep.mubr.f32.mxu0 0.0
    %4012 = vmatmul.mubr.f32.gmra.mrb[0].mxu0 %v3920
    %v4013 = vpop.f32.mrb[0].mxu0
    %v4014 = vadd.f32 0.0, %v4013
    %v4015 = vpop.f32.mrb[0].mxu0
    %4016 = vmatprep.mubr.f32.mxu0 0.0
    %4017 = vmatmul.mubr.f32.gmra.mrb[0].mxu0 %v3923
    %v4018 = vpop.f32.mrb[0].mxu0
    %v4019 = vadd.f32 0.0, %v4018
    %v4020 = vpop.f32.mrb[0].mxu0
    %4021 = vmatprep.mubr.f32.mxu0 0.0
    %4022 = vmatmul.mubr.f32.gmra.mrb[0].mxu0 %v3926
    %v4023 = vpop.f32.mrb[0].mxu0
    %v4024 = vadd.f32 0.0, %v4023
    %v4025 = vpop.f32.mrb[0].mxu0
    %4026 = vmatprep.mubr.f32.mxu0 0.0
    %4027 = vmatmul.mubr.f32.gmra.mrb[0].mxu0 %v3929
    %v4028 = vpop.f32.mrb[0].mxu0
    %v4029 = vadd.f32 0.0, %v4028
    %v4030 = vpop.f32.mrb[0].mxu0
    %4031 = vmatprep.mubr.f32.mxu0 0.0
    %4032 = vmatmul.mubr.f32.gmra.mrb[0].mxu0 %v3932
    %v4033 = vpop.f32.mrb[0].mxu0
    %v4034 = vadd.f32 0.0, %v4033
    %v4035 = vpop.f32.mrb[0].mxu0
    %4036 = vmatprep.mubr.f32.mxu0 0.0
    %4037 = vmatmul.mubr.f32.gmra.mrb[0].mxu0 %v3935
    %v4038 = vpop.f32.mrb[0].mxu0
    %v4039 = vadd.f32 0.0, %v4038
    %v4040 = vpop.f32.mrb[0].mxu0
    %4041 = vdwg.mxu0
    %v4043 = vsel %vm771, %v2953, 0
    %v4046 = vsel %vm771, %v2958, 0
    %v4049 = vsel %vm771, %v2963, 0
    %v4052 = vsel %vm771, %v2968, 0
    %v4055 = vsel %vm771, %v2973, 0
    %v4058 = vsel %vm771, %v2978, 0
    %v4061 = vsel %vm771, %v2983, 0
    %v4064 = vsel %vm771, %v2988, 0
    %4066 = vmatprep.subr.mxu0 0.0
    %4067 = vmatpush1.msra.mxu0 %v3910
    %4068 = vmatprep.subr.mxu0 0.0
    %4069 = vmatpush1.msra.mxu0 0.0
    %4070 = vmatprep.subr.mxu0 0.0
    %4071 = vmatpush1.msra.mxu0 0.0
    %4072 = vmatprep.subr.mxu0 0.0
    %4073 = vmatpush1.msra.mxu0 0.0
    %4074 = vmatprep.subr.mxu0 0.0
    %4075 = vmatpush1.msra.mxu0 0.0
    %4076 = vmatprep.subr.mxu0 0.0
    %4077 = vmatpush1.msra.mxu0 0.0
    %4078 = vmatprep.subr.mxu0 0.0
    %4079 = vmatpush1.msra.mxu0 0.0
    %4080 = vmatprep.subr.mxu0 0.0
    %4081 = vmatpush1.msra.mxu0 0.0
    %4082 = vmatprep.subr.mxu0 0.0
    %4083 = vmatpush1.msra.mxu0 0.0
    %4084 = vmatprep.subr.mxu0 0.0
    %4085 = vmatpush1.msra.mxu0 0.0
    %4086 = vmatprep.subr.mxu0 0.0
    %4087 = vmatpush1.msra.mxu0 0.0
    %4088 = vmatprep.subr.mxu0 0.0
    %4089 = vmatpush1.msra.mxu0 0.0
    %4090 = vmatprep.subr.mxu0 0.0
    %4091 = vmatpush1.msra.mxu0 0.0
    %4092 = vmatprep.subr.mxu0 0.0
    %4093 = vmatpush1.msra.mxu0 0.0
    %4094 = vmatprep.subr.mxu0 0.0
    %4095 = vmatpush1.msra.mxu0 0.0
    %4096 = vmatprep.subr.mxu0 0.0
    %4097 = vmatpush1.msra.mxu0 0.0
    %4098 = vmatprep.subr.mxu0 0.0
    %4099 = vmatpush1.msra.mxu0 0.0
    %4100 = vmatprep.subr.mxu0 0.0
    %4101 = vmatpush1.msra.mxu0 0.0
    %4102 = vmatprep.subr.mxu0 0.0
    %4103 = vmatpush1.msra.mxu0 0.0
    %4104 = vmatprep.subr.mxu0 0.0
    %4105 = vmatpush1.msra.mxu0 0.0
    %4106 = vmatprep.subr.mxu0 0.0
    %4107 = vmatpush1.msra.mxu0 0.0
    %4108 = vmatprep.subr.mxu0 0.0
    %4109 = vmatpush1.msra.mxu0 0.0
    %4110 = vmatprep.subr.mxu0 0.0
    %4111 = vmatpush1.msra.mxu0 0.0
    %4112 = vmatprep.subr.mxu0 0.0
    %4113 = vmatpush1.msra.mxu0 0.0
    %4114 = vmatprep.subr.mxu0 0.0
    %4115 = vmatpush1.msra.mxu0 0.0
    %4116 = vmatprep.subr.mxu0 0.0
    %4117 = vmatpush1.msra.mxu0 0.0
    %4118 = vmatprep.subr.mxu0 0.0
    %4119 = vmatpush1.msra.mxu0 0.0
    %4120 = vmatprep.subr.mxu0 0.0
    %4121 = vmatpush1.msra.mxu0 0.0
    %4122 = vmatprep.subr.mxu0 0.0
    %4123 = vmatpush1.msra.mxu0 0.0
    %4124 = vmatprep.subr.mxu0 0.0
    %4125 = vmatpush1.msra.mxu0 0.0
    %4126 = vmatprep.subr.mxu0 0.0
    %4127 = vmatpush1.msra.mxu0 0.0
    %4128 = vmatprep.subr.mxu0 0.0
    %4129 = vmatpush1.msra.mxu0 0.0
    %4130 = vmatprep.mubr.f32.mxu0 0.0
    %4131 = vmatmul.mubr.f32.gmra.mrb[0].mxu0 %v4043
    %v4132 = vpop.f32.mrb[0].mxu0
    %v4133 = vadd.f32 0.0, %v4132
    %v4134 = vpop.f32.mrb[0].mxu0
    %4135 = vmatprep.mubr.f32.mxu0 0.0
    %4136 = vmatmul.mubr.f32.gmra.mrb[0].mxu0 %v4046
    %v4137 = vpop.f32.mrb[0].mxu0
    %v4138 = vadd.f32 0.0, %v4137
    %v4139 = vpop.f32.mrb[0].mxu0
    %4140 = vmatprep.mubr.f32.mxu0 0.0
    %4141 = vmatmul.mubr.f32.gmra.mrb[0].mxu0 %v4049
    %v4142 = vpop.f32.mrb[0].mxu0
    %v4143 = vadd.f32 0.0, %v4142
    %v4144 = vpop.f32.mrb[0].mxu0
    %4145 = vmatprep.mubr.f32.mxu0 0.0
    %4146 = vmatmul.mubr.f32.gmra.mrb[0].mxu0 %v4052
    %v4147 = vpop.f32.mrb[0].mxu0
    %v4148 = vadd.f32 0.0, %v4147
    %v4149 = vpop.f32.mrb[0].mxu0
    %4150 = vmatprep.mubr.f32.mxu0 0.0
    %4151 = vmatmul.mubr.f32.gmra.mrb[0].mxu0 %v4055
    %v4152 = vpop.f32.mrb[0].mxu0
    %v4153 = vadd.f32 0.0, %v4152
    %v4154 = vpop.f32.mrb[0].mxu0
    %4155 = vmatprep.mubr.f32.mxu0 0.0
    %4156 = vmatmul.mubr.f32.gmra.mrb[0].mxu0 %v4058
    %v4157 = vpop.f32.mrb[0].mxu0
    %v4158 = vadd.f32 0.0, %v4157
    %v4159 = vpop.f32.mrb[0].mxu0
    %4160 = vmatprep.mubr.f32.mxu0 0.0
    %4161 = vmatmul.mubr.f32.gmra.mrb[0].mxu0 %v4061
    %v4162 = vpop.f32.mrb[0].mxu0
    %v4163 = vadd.f32 0.0, %v4162
    %v4164 = vpop.f32.mrb[0].mxu0
    %4165 = vmatprep.mubr.f32.mxu0 0.0
    %4166 = vmatmul.mubr.f32.gmra.mrb[0].mxu0 %v4064
    %v4167 = vpop.f32.mrb[0].mxu0
    %v4168 = vadd.f32 0.0, %v4167
    %v4169 = vpop.f32.mrb[0].mxu0
    %4170 = vdwg.mxu0
    %v4172 = vsel %vm771, %v3106, 0
    %v4175 = vsel %vm771, %v3111, 0
    %v4178 = vsel %vm771, %v3116, 0
    %v4181 = vsel %vm771, %v3121, 0
    %v4184 = vsel %vm771, %v3126, 0
    %v4187 = vsel %vm771, %v3131, 0
    %v4190 = vsel %vm771, %v3136, 0
    %v4193 = vsel %vm771, %v3141, 0
    %4195 = vmatprep.subr.mxu0 0.0
    %4196 = vmatpush1.msra.mxu0 %v3911
    %4197 = vmatprep.subr.mxu0 0.0
    %4198 = vmatpush1.msra.mxu0 0.0
    %4199 = vmatprep.subr.mxu0 0.0
    %4200 = vmatpush1.msra.mxu0 0.0
    %4201 = vmatprep.subr.mxu0 0.0
    %4202 = vmatpush1.msra.mxu0 0.0
    %4203 = vmatprep.subr.mxu0 0.0
    %4204 = vmatpush1.msra.mxu0 0.0
    %4205 = vmatprep.subr.mxu0 0.0
    %4206 = vmatpush1.msra.mxu0 0.0
    %4207 = vmatprep.subr.mxu0 0.0
    %4208 = vmatpush1.msra.mxu0 0.0
    %4209 = vmatprep.subr.mxu0 0.0
    %4210 = vmatpush1.msra.mxu0 0.0
    %4211 = vmatprep.subr.mxu0 0.0
    %4212 = vmatpush1.msra.mxu0 0.0
    %4213 = vmatprep.subr.mxu0 0.0
    %4214 = vmatpush1.msra.mxu0 0.0
    %4215 = vmatprep.subr.mxu0 0.0
    %4216 = vmatpush1.msra.mxu0 0.0
    %4217 = vmatprep.subr.mxu0 0.0
    %4218 = vmatpush1.msra.mxu0 0.0
    %4219 = vmatprep.subr.mxu0 0.0
    %4220 = vmatpush1.msra.mxu0 0.0
    %4221 = vmatprep.subr.mxu0 0.0
    %4222 = vmatpush1.msra.mxu0 0.0
    %4223 = vmatprep.subr.mxu0 0.0
    %4224 = vmatpush1.msra.mxu0 0.0
    %4225 = vmatprep.subr.mxu0 0.0
    %4226 = vmatpush1.msra.mxu0 0.0
    %4227 = vmatprep.subr.mxu0 0.0
    %4228 = vmatpush1.msra.mxu0 0.0
    %4229 = vmatprep.subr.mxu0 0.0
    %4230 = vmatpush1.msra.mxu0 0.0
    %4231 = vmatprep.subr.mxu0 0.0
    %4232 = vmatpush1.msra.mxu0 0.0
    %4233 = vmatprep.subr.mxu0 0.0
    %4234 = vmatpush1.msra.mxu0 0.0
    %4235 = vmatprep.subr.mxu0 0.0
    %4236 = vmatpush1.msra.mxu0 0.0
    %4237 = vmatprep.subr.mxu0 0.0
    %4238 = vmatpush1.msra.mxu0 0.0
    %4239 = vmatprep.subr.mxu0 0.0
    %4240 = vmatpush1.msra.mxu0 0.0
    %4241 = vmatprep.subr.mxu0 0.0
    %4242 = vmatpush1.msra.mxu0 0.0
    %4243 = vmatprep.subr.mxu0 0.0
    %4244 = vmatpush1.msra.mxu0 0.0
    %4245 = vmatprep.subr.mxu0 0.0
    %4246 = vmatpush1.msra.mxu0 0.0
    %4247 = vmatprep.subr.mxu0 0.0
    %4248 = vmatpush1.msra.mxu0 0.0
    %4249 = vmatprep.subr.mxu0 0.0
    %4250 = vmatpush1.msra.mxu0 0.0
    %4251 = vmatprep.subr.mxu0 0.0
    %4252 = vmatpush1.msra.mxu0 0.0
    %4253 = vmatprep.subr.mxu0 0.0
    %4254 = vmatpush1.msra.mxu0 0.0
    %4255 = vmatprep.subr.mxu0 0.0
    %4256 = vmatpush1.msra.mxu0 0.0
    %4257 = vmatprep.subr.mxu0 0.0
    %4258 = vmatpush1.msra.mxu0 0.0
    %4259 = vmatprep.mubr.f32.mxu0 0.0
    %4260 = vmatmul.mubr.f32.gmra.mrb[0].mxu0 %v4172
    %v4261 = vpop.f32.mrb[0].mxu0
    %v4262 = vadd.f32 0.0, %v4261
    %v4263 = vpop.f32.mrb[0].mxu0
    %4264 = vmatprep.mubr.f32.mxu0 0.0
    %4265 = vmatmul.mubr.f32.gmra.mrb[0].mxu0 %v4175
    %v4266 = vpop.f32.mrb[0].mxu0
    %v4267 = vadd.f32 0.0, %v4266
    %v4268 = vpop.f32.mrb[0].mxu0
    %4269 = vmatprep.mubr.f32.mxu0 0.0
    %4270 = vmatmul.mubr.f32.gmra.mrb[0].mxu0 %v4178
    %v4271 = vpop.f32.mrb[0].mxu0
    %v4272 = vadd.f32 0.0, %v4271
    %v4273 = vpop.f32.mrb[0].mxu0
    %4274 = vmatprep.mubr.f32.mxu0 0.0
    %4275 = vmatmul.mubr.f32.gmra.mrb[0].mxu0 %v4181
    %v4276 = vpop.f32.mrb[0].mxu0
    %v4277 = vadd.f32 0.0, %v4276
    %v4278 = vpop.f32.mrb[0].mxu0
    %4279 = vmatprep.mubr.f32.mxu0 0.0
    %4280 = vmatmul.mubr.f32.gmra.mrb[0].mxu0 %v4184
    %v4281 = vpop.f32.mrb[0].mxu0
    %v4282 = vadd.f32 0.0, %v4281
    %v4283 = vpop.f32.mrb[0].mxu0
    %4284 = vmatprep.mubr.f32.mxu0 0.0
    %4285 = vmatmul.mubr.f32.gmra.mrb[0].mxu0 %v4187
    %v4286 = vpop.f32.mrb[0].mxu0
    %v4287 = vadd.f32 0.0, %v4286
    %v4288 = vpop.f32.mrb[0].mxu0
    %4289 = vmatprep.mubr.f32.mxu0 0.0
    %4290 = vmatmul.mubr.f32.gmra.mrb[0].mxu0 %v4190
    %v4291 = vpop.f32.mrb[0].mxu0
    %v4292 = vadd.f32 0.0, %v4291
    %v4293 = vpop.f32.mrb[0].mxu0
    %4294 = vmatprep.mubr.f32.mxu0 0.0
    %4295 = vmatmul.mubr.f32.gmra.mrb[0].mxu0 %v4193
    %v4296 = vpop.f32.mrb[0].mxu0
    %v4297 = vadd.f32 0.0, %v4296
    %v4298 = vpop.f32.mrb[0].mxu0
    %4299 = vdwg.mxu0
    %v4301 = vsel %vm771, %v3259, 0
    %v4304 = vsel %vm771, %v3264, 0
    %v4307 = vsel %vm771, %v3269, 0
    %v4310 = vsel %vm771, %v3274, 0
    %v4313 = vsel %vm771, %v3279, 0
    %v4316 = vsel %vm771, %v3284, 0
    %v4319 = vsel %vm771, %v3289, 0
    %v4322 = vsel %vm771, %v3294, 0
    %4324 = vmatprep.subr.mxu0 0.0
    %4325 = vmatpush1.msra.mxu0 %v3912
    %4326 = vmatprep.subr.mxu0 0.0
    %4327 = vmatpush1.msra.mxu0 0.0
    %4328 = vmatprep.subr.mxu0 0.0
    %4329 = vmatpush1.msra.mxu0 0.0
    %4330 = vmatprep.subr.mxu0 0.0
    %4331 = vmatpush1.msra.mxu0 0.0
    %4332 = vmatprep.subr.mxu0 0.0
    %4333 = vmatpush1.msra.mxu0 0.0
    %4334 = vmatprep.subr.mxu0 0.0
    %4335 = vmatpush1.msra.mxu0 0.0
    %4336 = vmatprep.subr.mxu0 0.0
    %4337 = vmatpush1.msra.mxu0 0.0
    %4338 = vmatprep.subr.mxu0 0.0
    %4339 = vmatpush1.msra.mxu0 0.0
    %4340 = vmatprep.subr.mxu0 0.0
    %4341 = vmatpush1.msra.mxu0 0.0
    %4342 = vmatprep.subr.mxu0 0.0
    %4343 = vmatpush1.msra.mxu0 0.0
    %4344 = vmatprep.subr.mxu0 0.0
    %4345 = vmatpush1.msra.mxu0 0.0
    %4346 = vmatprep.subr.mxu0 0.0
    %4347 = vmatpush1.msra.mxu0 0.0
    %4348 = vmatprep.subr.mxu0 0.0
    %4349 = vmatpush1.msra.mxu0 0.0
    %4350 = vmatprep.subr.mxu0 0.0
    %4351 = vmatpush1.msra.mxu0 0.0
    %4352 = vmatprep.subr.mxu0 0.0
    %4353 = vmatpush1.msra.mxu0 0.0
    %4354 = vmatprep.subr.mxu0 0.0
    %4355 = vmatpush1.msra.mxu0 0.0
    %4356 = vmatprep.subr.mxu0 0.0
    %4357 = vmatpush1.msra.mxu0 0.0
    %4358 = vmatprep.subr.mxu0 0.0
    %4359 = vmatpush1.msra.mxu0 0.0
    %4360 = vmatprep.subr.mxu0 0.0
    %4361 = vmatpush1.msra.mxu0 0.0
    %4362 = vmatprep.subr.mxu0 0.0
    %4363 = vmatpush1.msra.mxu0 0.0
    %4364 = vmatprep.subr.mxu0 0.0
    %4365 = vmatpush1.msra.mxu0 0.0
    %4366 = vmatprep.subr.mxu0 0.0
    %4367 = vmatpush1.msra.mxu0 0.0
    %4368 = vmatprep.subr.mxu0 0.0
    %4369 = vmatpush1.msra.mxu0 0.0
    %4370 = vmatprep.subr.mxu0 0.0
    %4371 = vmatpush1.msra.mxu0 0.0
    %4372 = vmatprep.subr.mxu0 0.0
    %4373 = vmatpush1.msra.mxu0 0.0
    %4374 = vmatprep.subr.mxu0 0.0
    %4375 = vmatpush1.msra.mxu0 0.0
    %4376 = vmatprep.subr.mxu0 0.0
    %4377 = vmatpush1.msra.mxu0 0.0
    %4378 = vmatprep.subr.mxu0 0.0
    %4379 = vmatpush1.msra.mxu0 0.0
    %4380 = vmatprep.subr.mxu0 0.0
    %4381 = vmatpush1.msra.mxu0 0.0
    %4382 = vmatprep.subr.mxu0 0.0
    %4383 = vmatpush1.msra.mxu0 0.0
    %4384 = vmatprep.subr.mxu0 0.0
    %4385 = vmatpush1.msra.mxu0 0.0
    %4386 = vmatprep.subr.mxu0 0.0
    %4387 = vmatpush1.msra.mxu0 0.0
    %4388 = vmatprep.mubr.f32.mxu0 0.0
    %4389 = vmatmul.mubr.f32.gmra.mrb[0].mxu0 %v4301
    %v4390 = vpop.f32.mrb[0].mxu0
    %v4391 = vadd.f32 0.0, %v4390
    %v4392 = vpop.f32.mrb[0].mxu0
    %4393 = vmatprep.mubr.f32.mxu0 0.0
    %4394 = vmatmul.mubr.f32.gmra.mrb[0].mxu0 %v4304
    %v4395 = vpop.f32.mrb[0].mxu0
    %v4396 = vadd.f32 0.0, %v4395
    %v4397 = vpop.f32.mrb[0].mxu0
    %4398 = vmatprep.mubr.f32.mxu0 0.0
    %4399 = vmatmul.mubr.f32.gmra.mrb[0].mxu0 %v4307
    %v4400 = vpop.f32.mrb[0].mxu0
    %v4401 = vadd.f32 0.0, %v4400
    %v4402 = vpop.f32.mrb[0].mxu0
    %4403 = vmatprep.mubr.f32.mxu0 0.0
    %4404 = vmatmul.mubr.f32.gmra.mrb[0].mxu0 %v4310
    %v4405 = vpop.f32.mrb[0].mxu0
    %v4406 = vadd.f32 0.0, %v4405
    %v4407 = vpop.f32.mrb[0].mxu0
    %4408 = vmatprep.mubr.f32.mxu0 0.0
    %4409 = vmatmul.mubr.f32.gmra.mrb[0].mxu0 %v4313
    %v4410 = vpop.f32.mrb[0].mxu0
    %v4411 = vadd.f32 0.0, %v4410
    %v4412 = vpop.f32.mrb[0].mxu0
    %4413 = vmatprep.mubr.f32.mxu0 0.0
    %4414 = vmatmul.mubr.f32.gmra.mrb[0].mxu0 %v4316
    %v4415 = vpop.f32.mrb[0].mxu0
    %v4416 = vadd.f32 0.0, %v4415
    %v4417 = vpop.f32.mrb[0].mxu0
    %4418 = vmatprep.mubr.f32.mxu0 0.0
    %4419 = vmatmul.mubr.f32.gmra.mrb[0].mxu0 %v4319
    %v4420 = vpop.f32.mrb[0].mxu0
    %v4421 = vadd.f32 0.0, %v4420
    %v4422 = vpop.f32.mrb[0].mxu0
    %4423 = vmatprep.mubr.f32.mxu0 0.0
    %4424 = vmatmul.mubr.f32.gmra.mrb[0].mxu0 %v4322
    %v4425 = vpop.f32.mrb[0].mxu0
    %v4426 = vadd.f32 0.0, %v4425
    %v4427 = vpop.f32.mrb[0].mxu0
    %4428 = vdwg.mxu0
    %v4429 = vsel %vm64, %v4004, 0.0
    %v4430 = vsel %vm64, %v4133, 0.0
    %v4431 = vadd.f32 %v4429, %v4430
    %v4432 = vsel %vm64, %v4262, 0.0
    %v4433 = vadd.f32 %v4431, %v4432
    %v4434 = vsel %vm64, %v4391, 0.0
    %v4435 = vadd.f32 %v4433, %v4434
    %v4436 = vsel %vm64, %v4009, 0.0
    %v4437 = vsel %vm64, %v4138, 0.0
    %v4438 = vadd.f32 %v4436, %v4437
    %v4439 = vsel %vm64, %v4267, 0.0
    %v4440 = vadd.f32 %v4438, %v4439
    %v4441 = vsel %vm64, %v4396, 0.0
    %v4442 = vadd.f32 %v4440, %v4441
    %v4443 = vsel %vm64, %v4014, 0.0
    %v4444 = vsel %vm64, %v4143, 0.0
    %v4445 = vadd.f32 %v4443, %v4444
    %v4446 = vsel %vm64, %v4272, 0.0
    %v4447 = vadd.f32 %v4445, %v4446
    %v4448 = vsel %vm64, %v4401, 0.0
    %v4449 = vadd.f32 %v4447, %v4448
    %v4450 = vsel %vm64, %v4019, 0.0
    %v4451 = vsel %vm64, %v4148, 0.0
    %v4452 = vadd.f32 %v4450, %v4451
    %v4453 = vsel %vm64, %v4277, 0.0
    %v4454 = vadd.f32 %v4452, %v4453
    %v4455 = vsel %vm64, %v4406, 0.0
    %v4456 = vadd.f32 %v4454, %v4455
    %v4457 = vsel %vm64, %v4024, 0.0
    %v4458 = vsel %vm64, %v4153, 0.0
    %v4459 = vadd.f32 %v4457, %v4458
    %v4460 = vsel %vm64, %v4282, 0.0
    %v4461 = vadd.f32 %v4459, %v4460
    %v4462 = vsel %vm64, %v4411, 0.0
    %v4463 = vadd.f32 %v4461, %v4462
    %v4464 = vsel %vm64, %v4029, 0.0
    %v4465 = vsel %vm64, %v4158, 0.0
    %v4466 = vadd.f32 %v4464, %v4465
    %v4467 = vsel %vm64, %v4287, 0.0
    %v4468 = vadd.f32 %v4466, %v4467
    %v4469 = vsel %vm64, %v4416, 0.0
    %v4470 = vadd.f32 %v4468, %v4469
    %v4471 = vsel %vm64, %v4034, 0.0
    %v4472 = vsel %vm64, %v4163, 0.0
    %v4473 = vadd.f32 %v4471, %v4472
    %v4474 = vsel %vm64, %v4292, 0.0
    %v4475 = vadd.f32 %v4473, %v4474
    %v4476 = vsel %vm64, %v4421, 0.0
    %v4477 = vadd.f32 %v4475, %v4476
    %v4478 = vsel %vm64, %v4039, 0.0
    %v4479 = vsel %vm64, %v4168, 0.0
    %v4480 = vadd.f32 %v4478, %v4479
    %v4481 = vsel %vm64, %v4297, 0.0
    %v4482 = vadd.f32 %v4480, %v4481
    %v4483 = vsel %vm64, %v4426, 0.0
    %v4484 = vadd.f32 %v4482, %v4483
    %v4486 = vsel %vm771, %v3412, 0
    %v4489 = vsel %vm771, %v3417, 0
    %v4492 = vsel %vm771, %v3422, 0
    %v4495 = vsel %vm771, %v3427, 0
    %v4498 = vsel %vm771, %v3432, 0
    %v4501 = vsel %vm771, %v3437, 0
    %v4504 = vsel %vm771, %v3442, 0
    %v4507 = vsel %vm771, %v3447, 0
    %4509 = vmatprep.subr.mxu0 0.0
    %4510 = vmatpush1.msra.mxu0 %v3909
    %4511 = vmatprep.subr.mxu0 0.0
    %4512 = vmatpush1.msra.mxu0 0.0
    %4513 = vmatprep.subr.mxu0 0.0
    %4514 = vmatpush1.msra.mxu0 0.0
    %4515 = vmatprep.subr.mxu0 0.0
    %4516 = vmatpush1.msra.mxu0 0.0
    %4517 = vmatprep.subr.mxu0 0.0
    %4518 = vmatpush1.msra.mxu0 0.0
    %4519 = vmatprep.subr.mxu0 0.0
    %4520 = vmatpush1.msra.mxu0 0.0
    %4521 = vmatprep.subr.mxu0 0.0
    %4522 = vmatpush1.msra.mxu0 0.0
    %4523 = vmatprep.subr.mxu0 0.0
    %4524 = vmatpush1.msra.mxu0 0.0
    %4525 = vmatprep.subr.mxu0 0.0
    %4526 = vmatpush1.msra.mxu0 0.0
    %4527 = vmatprep.subr.mxu0 0.0
    %4528 = vmatpush1.msra.mxu0 0.0
    %4529 = vmatprep.subr.mxu0 0.0
    %4530 = vmatpush1.msra.mxu0 0.0
    %4531 = vmatprep.subr.mxu0 0.0
    %4532 = vmatpush1.msra.mxu0 0.0
    %4533 = vmatprep.subr.mxu0 0.0
    %4534 = vmatpush1.msra.mxu0 0.0
    %4535 = vmatprep.subr.mxu0 0.0
    %4536 = vmatpush1.msra.mxu0 0.0
    %4537 = vmatprep.subr.mxu0 0.0
    %4538 = vmatpush1.msra.mxu0 0.0
    %4539 = vmatprep.subr.mxu0 0.0
    %4540 = vmatpush1.msra.mxu0 0.0
    %4541 = vmatprep.subr.mxu0 0.0
    %4542 = vmatpush1.msra.mxu0 0.0
    %4543 = vmatprep.subr.mxu0 0.0
    %4544 = vmatpush1.msra.mxu0 0.0
    %4545 = vmatprep.subr.mxu0 0.0
    %4546 = vmatpush1.msra.mxu0 0.0
    %4547 = vmatprep.subr.mxu0 0.0
    %4548 = vmatpush1.msra.mxu0 0.0
    %4549 = vmatprep.subr.mxu0 0.0
    %4550 = vmatpush1.msra.mxu0 0.0
    %4551 = vmatprep.subr.mxu0 0.0
    %4552 = vmatpush1.msra.mxu0 0.0
    %4553 = vmatprep.subr.mxu0 0.0
    %4554 = vmatpush1.msra.mxu0 0.0
    %4555 = vmatprep.subr.mxu0 0.0
    %4556 = vmatpush1.msra.mxu0 0.0
    %4557 = vmatprep.subr.mxu0 0.0
    %4558 = vmatpush1.msra.mxu0 0.0
    %4559 = vmatprep.subr.mxu0 0.0
    %4560 = vmatpush1.msra.mxu0 0.0
    %4561 = vmatprep.subr.mxu0 0.0
    %4562 = vmatpush1.msra.mxu0 0.0
    %4563 = vmatprep.subr.mxu0 0.0
    %4564 = vmatpush1.msra.mxu0 0.0
    %4565 = vmatprep.subr.mxu0 0.0
    %4566 = vmatpush1.msra.mxu0 0.0
    %4567 = vmatprep.subr.mxu0 0.0
    %4568 = vmatpush1.msra.mxu0 0.0
    %4569 = vmatprep.subr.mxu0 0.0
    %4570 = vmatpush1.msra.mxu0 0.0
    %4571 = vmatprep.subr.mxu0 0.0
    %4572 = vmatpush1.msra.mxu0 0.0
    %4573 = vmatprep.mubr.f32.mxu0 0.0
    %4574 = vmatmul.mubr.f32.gmra.mrb[0].mxu0 %v4486
    %v4575 = vpop.f32.mrb[0].mxu0
    %v4576 = vadd.f32 0.0, %v4575
    %v4577 = vpop.f32.mrb[0].mxu0
    %4578 = vmatprep.mubr.f32.mxu0 0.0
    %4579 = vmatmul.mubr.f32.gmra.mrb[0].mxu0 %v4489
    %v4580 = vpop.f32.mrb[0].mxu0
    %v4581 = vadd.f32 0.0, %v4580
    %v4582 = vpop.f32.mrb[0].mxu0
    %4583 = vmatprep.mubr.f32.mxu0 0.0
    %4584 = vmatmul.mubr.f32.gmra.mrb[0].mxu0 %v4492
    %v4585 = vpop.f32.mrb[0].mxu0
    %v4586 = vadd.f32 0.0, %v4585
    %v4587 = vpop.f32.mrb[0].mxu0
    %4588 = vmatprep.mubr.f32.mxu0 0.0
    %4589 = vmatmul.mubr.f32.gmra.mrb[0].mxu0 %v4495
    %v4590 = vpop.f32.mrb[0].mxu0
    %v4591 = vadd.f32 0.0, %v4590
    %v4592 = vpop.f32.mrb[0].mxu0
    %4593 = vmatprep.mubr.f32.mxu0 0.0
    %4594 = vmatmul.mubr.f32.gmra.mrb[0].mxu0 %v4498
    %v4595 = vpop.f32.mrb[0].mxu0
    %v4596 = vadd.f32 0.0, %v4595
    %v4597 = vpop.f32.mrb[0].mxu0
    %4598 = vmatprep.mubr.f32.mxu0 0.0
    %4599 = vmatmul.mubr.f32.gmra.mrb[0].mxu0 %v4501
    %v4600 = vpop.f32.mrb[0].mxu0
    %v4601 = vadd.f32 0.0, %v4600
    %v4602 = vpop.f32.mrb[0].mxu0
    %4603 = vmatprep.mubr.f32.mxu0 0.0
    %4604 = vmatmul.mubr.f32.gmra.mrb[0].mxu0 %v4504
    %v4605 = vpop.f32.mrb[0].mxu0
    %v4606 = vadd.f32 0.0, %v4605
    %v4607 = vpop.f32.mrb[0].mxu0
    %4608 = vmatprep.mubr.f32.mxu0 0.0
    %4609 = vmatmul.mubr.f32.gmra.mrb[0].mxu0 %v4507
    %v4610 = vpop.f32.mrb[0].mxu0
    %v4611 = vadd.f32 0.0, %v4610
    %v4612 = vpop.f32.mrb[0].mxu0
    %4613 = vdwg.mxu0
    %v4615 = vsel %vm771, %v3565, 0
    %v4618 = vsel %vm771, %v3570, 0
    %v4621 = vsel %vm771, %v3575, 0
    %v4624 = vsel %vm771, %v3580, 0
    %v4627 = vsel %vm771, %v3585, 0
    %v4630 = vsel %vm771, %v3590, 0
    %v4633 = vsel %vm771, %v3595, 0
    %v4636 = vsel %vm771, %v3600, 0
    %4638 = vmatprep.subr.mxu0 0.0
    %4639 = vmatpush1.msra.mxu0 %v3910
    %4640 = vmatprep.subr.mxu0 0.0
    %4641 = vmatpush1.msra.mxu0 0.0
    %4642 = vmatprep.subr.mxu0 0.0
    %4643 = vmatpush1.msra.mxu0 0.0
    %4644 = vmatprep.subr.mxu0 0.0
    %4645 = vmatpush1.msra.mxu0 0.0
    %4646 = vmatprep.subr.mxu0 0.0
    %4647 = vmatpush1.msra.mxu0 0.0
    %4648 = vmatprep.subr.mxu0 0.0
    %4649 = vmatpush1.msra.mxu0 0.0
    %4650 = vmatprep.subr.mxu0 0.0
    %4651 = vmatpush1.msra.mxu0 0.0
    %4652 = vmatprep.subr.mxu0 0.0
    %4653 = vmatpush1.msra.mxu0 0.0
    %4654 = vmatprep.subr.mxu0 0.0
    %4655 = vmatpush1.msra.mxu0 0.0
    %4656 = vmatprep.subr.mxu0 0.0
    %4657 = vmatpush1.msra.mxu0 0.0
    %4658 = vmatprep.subr.mxu0 0.0
    %4659 = vmatpush1.msra.mxu0 0.0
    %4660 = vmatprep.subr.mxu0 0.0
    %4661 = vmatpush1.msra.mxu0 0.0
    %4662 = vmatprep.subr.mxu0 0.0
    %4663 = vmatpush1.msra.mxu0 0.0
    %4664 = vmatprep.subr.mxu0 0.0
    %4665 = vmatpush1.msra.mxu0 0.0
    %4666 = vmatprep.subr.mxu0 0.0
    %4667 = vmatpush1.msra.mxu0 0.0
    %4668 = vmatprep.subr.mxu0 0.0
    %4669 = vmatpush1.msra.mxu0 0.0
    %4670 = vmatprep.subr.mxu0 0.0
    %4671 = vmatpush1.msra.mxu0 0.0
    %4672 = vmatprep.subr.mxu0 0.0
    %4673 = vmatpush1.msra.mxu0 0.0
    %4674 = vmatprep.subr.mxu0 0.0
    %4675 = vmatpush1.msra.mxu0 0.0
    %4676 = vmatprep.subr.mxu0 0.0
    %4677 = vmatpush1.msra.mxu0 0.0
    %4678 = vmatprep.subr.mxu0 0.0
    %4679 = vmatpush1.msra.mxu0 0.0
    %4680 = vmatprep.subr.mxu0 0.0
    %4681 = vmatpush1.msra.mxu0 0.0
    %4682 = vmatprep.subr.mxu0 0.0
    %4683 = vmatpush1.msra.mxu0 0.0
    %4684 = vmatprep.subr.mxu0 0.0
    %4685 = vmatpush1.msra.mxu0 0.0
    %4686 = vmatprep.subr.mxu0 0.0
    %4687 = vmatpush1.msra.mxu0 0.0
    %4688 = vmatprep.subr.mxu0 0.0
    %4689 = vmatpush1.msra.mxu0 0.0
    %4690 = vmatprep.subr.mxu0 0.0
    %4691 = vmatpush1.msra.mxu0 0.0
    %4692 = vmatprep.subr.mxu0 0.0
    %4693 = vmatpush1.msra.mxu0 0.0
    %4694 = vmatprep.subr.mxu0 0.0
    %4695 = vmatpush1.msra.mxu0 0.0
    %4696 = vmatprep.subr.mxu0 0.0
    %4697 = vmatpush1.msra.mxu0 0.0
    %4698 = vmatprep.subr.mxu0 0.0
    %4699 = vmatpush1.msra.mxu0 0.0
    %4700 = vmatprep.subr.mxu0 0.0
    %4701 = vmatpush1.msra.mxu0 0.0
    %4702 = vmatprep.mubr.f32.mxu0 0.0
    %4703 = vmatmul.mubr.f32.gmra.mrb[0].mxu0 %v4615
    %v4704 = vpop.f32.mrb[0].mxu0
    %v4705 = vadd.f32 0.0, %v4704
    %v4706 = vpop.f32.mrb[0].mxu0
    %4707 = vmatprep.mubr.f32.mxu0 0.0
    %4708 = vmatmul.mubr.f32.gmra.mrb[0].mxu0 %v4618
    %v4709 = vpop.f32.mrb[0].mxu0
    %v4710 = vadd.f32 0.0, %v4709
    %v4711 = vpop.f32.mrb[0].mxu0
    %4712 = vmatprep.mubr.f32.mxu0 0.0
    %4713 = vmatmul.mubr.f32.gmra.mrb[0].mxu0 %v4621
    %v4714 = vpop.f32.mrb[0].mxu0
    %v4715 = vadd.f32 0.0, %v4714
    %v4716 = vpop.f32.mrb[0].mxu0
    %4717 = vmatprep.mubr.f32.mxu0 0.0
    %4718 = vmatmul.mubr.f32.gmra.mrb[0].mxu0 %v4624
    %v4719 = vpop.f32.mrb[0].mxu0
    %v4720 = vadd.f32 0.0, %v4719
    %v4721 = vpop.f32.mrb[0].mxu0
    %4722 = vmatprep.mubr.f32.mxu0 0.0
    %4723 = vmatmul.mubr.f32.gmra.mrb[0].mxu0 %v4627
    %v4724 = vpop.f32.mrb[0].mxu0
    %v4725 = vadd.f32 0.0, %v4724
    %v4726 = vpop.f32.mrb[0].mxu0
    %4727 = vmatprep.mubr.f32.mxu0 0.0
    %4728 = vmatmul.mubr.f32.gmra.mrb[0].mxu0 %v4630
    %v4729 = vpop.f32.mrb[0].mxu0
    %v4730 = vadd.f32 0.0, %v4729
    %v4731 = vpop.f32.mrb[0].mxu0
    %4732 = vmatprep.mubr.f32.mxu0 0.0
    %4733 = vmatmul.mubr.f32.gmra.mrb[0].mxu0 %v4633
    %v4734 = vpop.f32.mrb[0].mxu0
    %v4735 = vadd.f32 0.0, %v4734
    %v4736 = vpop.f32.mrb[0].mxu0
    %4737 = vmatprep.mubr.f32.mxu0 0.0
    %4738 = vmatmul.mubr.f32.gmra.mrb[0].mxu0 %v4636
    %v4739 = vpop.f32.mrb[0].mxu0
    %v4740 = vadd.f32 0.0, %v4739
    %v4741 = vpop.f32.mrb[0].mxu0
    %4742 = vdwg.mxu0
    %v4744 = vsel %vm771, %v3718, 0
    %v4747 = vsel %vm771, %v3723, 0
    %v4750 = vsel %vm771, %v3728, 0
    %v4753 = vsel %vm771, %v3733, 0
    %v4756 = vsel %vm771, %v3738, 0
    %v4759 = vsel %vm771, %v3743, 0
    %v4762 = vsel %vm771, %v3748, 0
    %v4765 = vsel %vm771, %v3753, 0
    %4767 = vmatprep.subr.mxu0 0.0
    %4768 = vmatpush1.msra.mxu0 %v3911
    %4769 = vmatprep.subr.mxu0 0.0
    %4770 = vmatpush1.msra.mxu0 0.0
    %4771 = vmatprep.subr.mxu0 0.0
    %4772 = vmatpush1.msra.mxu0 0.0
    %4773 = vmatprep.subr.mxu0 0.0
    %4774 = vmatpush1.msra.mxu0 0.0
    %4775 = vmatprep.subr.mxu0 0.0
    %4776 = vmatpush1.msra.mxu0 0.0
    %4777 = vmatprep.subr.mxu0 0.0
    %4778 = vmatpush1.msra.mxu0 0.0
    %4779 = vmatprep.subr.mxu0 0.0
    %4780 = vmatpush1.msra.mxu0 0.0
    %4781 = vmatprep.subr.mxu0 0.0
    %4782 = vmatpush1.msra.mxu0 0.0
    %4783 = vmatprep.subr.mxu0 0.0
    %4784 = vmatpush1.msra.mxu0 0.0
    %4785 = vmatprep.subr.mxu0 0.0
    %4786 = vmatpush1.msra.mxu0 0.0
    %4787 = vmatprep.subr.mxu0 0.0
    %4788 = vmatpush1.msra.mxu0 0.0
    %4789 = vmatprep.subr.mxu0 0.0
    %4790 = vmatpush1.msra.mxu0 0.0
    %4791 = vmatprep.subr.mxu0 0.0
    %4792 = vmatpush1.msra.mxu0 0.0
    %4793 = vmatprep.subr.mxu0 0.0
    %4794 = vmatpush1.msra.mxu0 0.0
    %4795 = vmatprep.subr.mxu0 0.0
    %4796 = vmatpush1.msra.mxu0 0.0
    %4797 = vmatprep.subr.mxu0 0.0
    %4798 = vmatpush1.msra.mxu0 0.0
    %4799 = vmatprep.subr.mxu0 0.0
    %4800 = vmatpush1.msra.mxu0 0.0
    %4801 = vmatprep.subr.mxu0 0.0
    %4802 = vmatpush1.msra.mxu0 0.0
    %4803 = vmatprep.subr.mxu0 0.0
    %4804 = vmatpush1.msra.mxu0 0.0
    %4805 = vmatprep.subr.mxu0 0.0
    %4806 = vmatpush1.msra.mxu0 0.0
    %4807 = vmatprep.subr.mxu0 0.0
    %4808 = vmatpush1.msra.mxu0 0.0
    %4809 = vmatprep.subr.mxu0 0.0
    %4810 = vmatpush1.msra.mxu0 0.0
    %4811 = vmatprep.subr.mxu0 0.0
    %4812 = vmatpush1.msra.mxu0 0.0
    %4813 = vmatprep.subr.mxu0 0.0
    %4814 = vmatpush1.msra.mxu0 0.0
    %4815 = vmatprep.subr.mxu0 0.0
    %4816 = vmatpush1.msra.mxu0 0.0
    %4817 = vmatprep.subr.mxu0 0.0
    %4818 = vmatpush1.msra.mxu0 0.0
    %4819 = vmatprep.subr.mxu0 0.0
    %4820 = vmatpush1.msra.mxu0 0.0
    %4821 = vmatprep.subr.mxu0 0.0
    %4822 = vmatpush1.msra.mxu0 0.0
    %4823 = vmatprep.subr.mxu0 0.0
    %4824 = vmatpush1.msra.mxu0 0.0
    %4825 = vmatprep.subr.mxu0 0.0
    %4826 = vmatpush1.msra.mxu0 0.0
    %4827 = vmatprep.subr.mxu0 0.0
    %4828 = vmatpush1.msra.mxu0 0.0
    %4829 = vmatprep.subr.mxu0 0.0
    %4830 = vmatpush1.msra.mxu0 0.0
    %4831 = vmatprep.mubr.f32.mxu0 0.0
    %4832 = vmatmul.mubr.f32.gmra.mrb[0].mxu0 %v4744
    %v4833 = vpop.f32.mrb[0].mxu0
    %v4834 = vadd.f32 0.0, %v4833
    %v4835 = vpop.f32.mrb[0].mxu0
    %4836 = vmatprep.mubr.f32.mxu0 0.0
    %4837 = vmatmul.mubr.f32.gmra.mrb[0].mxu0 %v4747
    %v4838 = vpop.f32.mrb[0].mxu0
    %v4839 = vadd.f32 0.0, %v4838
    %v4840 = vpop.f32.mrb[0].mxu0
    %4841 = vmatprep.mubr.f32.mxu0 0.0
    %4842 = vmatmul.mubr.f32.gmra.mrb[0].mxu0 %v4750
    %v4843 = vpop.f32.mrb[0].mxu0
    %v4844 = vadd.f32 0.0, %v4843
    %v4845 = vpop.f32.mrb[0].mxu0
    %4846 = vmatprep.mubr.f32.mxu0 0.0
    %4847 = vmatmul.mubr.f32.gmra.mrb[0].mxu0 %v4753
    %v4848 = vpop.f32.mrb[0].mxu0
    %v4849 = vadd.f32 0.0, %v4848
    %v4850 = vpop.f32.mrb[0].mxu0
    %4851 = vmatprep.mubr.f32.mxu0 0.0
    %4852 = vmatmul.mubr.f32.gmra.mrb[0].mxu0 %v4756
    %v4853 = vpop.f32.mrb[0].mxu0
    %v4854 = vadd.f32 0.0, %v4853
    %v4855 = vpop.f32.mrb[0].mxu0
    %4856 = vmatprep.mubr.f32.mxu0 0.0
    %4857 = vmatmul.mubr.f32.gmra.mrb[0].mxu0 %v4759
    %v4858 = vpop.f32.mrb[0].mxu0
    %v4859 = vadd.f32 0.0, %v4858
    %v4860 = vpop.f32.mrb[0].mxu0
    %4861 = vmatprep.mubr.f32.mxu0 0.0
    %4862 = vmatmul.mubr.f32.gmra.mrb[0].mxu0 %v4762
    %v4863 = vpop.f32.mrb[0].mxu0
    %v4864 = vadd.f32 0.0, %v4863
    %v4865 = vpop.f32.mrb[0].mxu0
    %4866 = vmatprep.mubr.f32.mxu0 0.0
    %4867 = vmatmul.mubr.f32.gmra.mrb[0].mxu0 %v4765
    %v4868 = vpop.f32.mrb[0].mxu0
    %v4869 = vadd.f32 0.0, %v4868
    %v4870 = vpop.f32.mrb[0].mxu0
    %4871 = vdwg.mxu0
    %v4873 = vsel %vm771, %v3871, 0
    %v4876 = vsel %vm771, %v3876, 0
    %v4879 = vsel %vm771, %v3881, 0
    %v4882 = vsel %vm771, %v3886, 0
    %v4885 = vsel %vm771, %v3891, 0
    %v4888 = vsel %vm771, %v3896, 0
    %v4891 = vsel %vm771, %v3901, 0
    %v4894 = vsel %vm771, %v3906, 0
    %4896 = vmatprep.subr.mxu0 0.0
    %4897 = vmatpush1.msra.mxu0 %v3912
    %4898 = vmatprep.subr.mxu0 0.0
    %4899 = vmatpush1.msra.mxu0 0.0
    %4900 = vmatprep.subr.mxu0 0.0
    %4901 = vmatpush1.msra.mxu0 0.0
    %4902 = vmatprep.subr.mxu0 0.0
    %4903 = vmatpush1.msra.mxu0 0.0
    %4904 = vmatprep.subr.mxu0 0.0
    %4905 = vmatpush1.msra.mxu0 0.0
    %4906 = vmatprep.subr.mxu0 0.0
    %4907 = vmatpush1.msra.mxu0 0.0
    %4908 = vmatprep.subr.mxu0 0.0
    %4909 = vmatpush1.msra.mxu0 0.0
    %4910 = vmatprep.subr.mxu0 0.0
    %4911 = vmatpush1.msra.mxu0 0.0
    %4912 = vmatprep.subr.mxu0 0.0
    %4913 = vmatpush1.msra.mxu0 0.0
    %4914 = vmatprep.subr.mxu0 0.0
    %4915 = vmatpush1.msra.mxu0 0.0
    %4916 = vmatprep.subr.mxu0 0.0
    %4917 = vmatpush1.msra.mxu0 0.0
    %4918 = vmatprep.subr.mxu0 0.0
    %4919 = vmatpush1.msra.mxu0 0.0
    %4920 = vmatprep.subr.mxu0 0.0
    %4921 = vmatpush1.msra.mxu0 0.0
    %4922 = vmatprep.subr.mxu0 0.0
    %4923 = vmatpush1.msra.mxu0 0.0
    %4924 = vmatprep.subr.mxu0 0.0
    %4925 = vmatpush1.msra.mxu0 0.0
    %4926 = vmatprep.subr.mxu0 0.0
    %4927 = vmatpush1.msra.mxu0 0.0
    %4928 = vmatprep.subr.mxu0 0.0
    %4929 = vmatpush1.msra.mxu0 0.0
    %4930 = vmatprep.subr.mxu0 0.0
    %4931 = vmatpush1.msra.mxu0 0.0
    %4932 = vmatprep.subr.mxu0 0.0
    %4933 = vmatpush1.msra.mxu0 0.0
    %4934 = vmatprep.subr.mxu0 0.0
    %4935 = vmatpush1.msra.mxu0 0.0
    %4936 = vmatprep.subr.mxu0 0.0
    %4937 = vmatpush1.msra.mxu0 0.0
    %4938 = vmatprep.subr.mxu0 0.0
    %4939 = vmatpush1.msra.mxu0 0.0
    %4940 = vmatprep.subr.mxu0 0.0
    %4941 = vmatpush1.msra.mxu0 0.0
    %4942 = vmatprep.subr.mxu0 0.0
    %4943 = vmatpush1.msra.mxu0 0.0
    %4944 = vmatprep.subr.mxu0 0.0
    %4945 = vmatpush1.msra.mxu0 0.0
    %4946 = vmatprep.subr.mxu0 0.0
    %4947 = vmatpush1.msra.mxu0 0.0
    %4948 = vmatprep.subr.mxu0 0.0
    %4949 = vmatpush1.msra.mxu0 0.0
    %4950 = vmatprep.subr.mxu0 0.0
    %4951 = vmatpush1.msra.mxu0 0.0
    %4952 = vmatprep.subr.mxu0 0.0
    %4953 = vmatpush1.msra.mxu0 0.0
    %4954 = vmatprep.subr.mxu0 0.0
    %4955 = vmatpush1.msra.mxu0 0.0
    %4956 = vmatprep.subr.mxu0 0.0
    %4957 = vmatpush1.msra.mxu0 0.0
    %4958 = vmatprep.subr.mxu0 0.0
    %4959 = vmatpush1.msra.mxu0 0.0
    %4960 = vmatprep.mubr.f32.mxu0 0.0
    %4961 = vmatmul.mubr.f32.gmra.mrb[0].mxu0 %v4873
    %v4962 = vpop.f32.mrb[0].mxu0
    %v4963 = vadd.f32 0.0, %v4962
    %v4964 = vpop.f32.mrb[0].mxu0
    %4965 = vmatprep.mubr.f32.mxu0 0.0
    %4966 = vmatmul.mubr.f32.gmra.mrb[0].mxu0 %v4876
    %v4967 = vpop.f32.mrb[0].mxu0
    %v4968 = vadd.f32 0.0, %v4967
    %v4969 = vpop.f32.mrb[0].mxu0
    %4970 = vmatprep.mubr.f32.mxu0 0.0
    %4971 = vmatmul.mubr.f32.gmra.mrb[0].mxu0 %v4879
    %v4972 = vpop.f32.mrb[0].mxu0
    %v4973 = vadd.f32 0.0, %v4972
    %v4974 = vpop.f32.mrb[0].mxu0
    %4975 = vmatprep.mubr.f32.mxu0 0.0
    %4976 = vmatmul.mubr.f32.gmra.mrb[0].mxu0 %v4882
    %v4977 = vpop.f32.mrb[0].mxu0
    %v4978 = vadd.f32 0.0, %v4977
    %v4979 = vpop.f32.mrb[0].mxu0
    %4980 = vmatprep.mubr.f32.mxu0 0.0
    %4981 = vmatmul.mubr.f32.gmra.mrb[0].mxu0 %v4885
    %v4982 = vpop.f32.mrb[0].mxu0
    %v4983 = vadd.f32 0.0, %v4982
    %v4984 = vpop.f32.mrb[0].mxu0
    %4985 = vmatprep.mubr.f32.mxu0 0.0
    %4986 = vmatmul.mubr.f32.gmra.mrb[0].mxu0 %v4888
    %v4987 = vpop.f32.mrb[0].mxu0
    %v4988 = vadd.f32 0.0, %v4987
    %v4989 = vpop.f32.mrb[0].mxu0
    %4990 = vmatprep.mubr.f32.mxu0 0.0
    %4991 = vmatmul.mubr.f32.gmra.mrb[0].mxu0 %v4891
    %v4992 = vpop.f32.mrb[0].mxu0
    %v4993 = vadd.f32 0.0, %v4992
    %v4994 = vpop.f32.mrb[0].mxu0
    %4995 = vmatprep.mubr.f32.mxu0 0.0
    %4996 = vmatmul.mubr.f32.gmra.mrb[0].mxu0 %v4894
    %v4997 = vpop.f32.mrb[0].mxu0
    %v4998 = vadd.f32 0.0, %v4997
    %v4999 = vpop.f32.mrb[0].mxu0
    %5000 = vdwg.mxu0
    %v5001 = vsel %vm64, %v4576, 0.0
    %v5002 = vsel %vm64, %v4705, 0.0
    %v5003 = vadd.f32 %v5001, %v5002
    %v5004 = vsel %vm64, %v4834, 0.0
    %v5005 = vadd.f32 %v5003, %v5004
    %v5006 = vsel %vm64, %v4963, 0.0
    %v5007 = vadd.f32 %v5005, %v5006
    %v5008 = vsel %vm64, %v4581, 0.0
    %v5009 = vsel %vm64, %v4710, 0.0
    %v5010 = vadd.f32 %v5008, %v5009
    %v5011 = vsel %vm64, %v4839, 0.0
    %v5012 = vadd.f32 %v5010, %v5011
    %v5013 = vsel %vm64, %v4968, 0.0
    %v5014 = vadd.f32 %v5012, %v5013
    %v5015 = vsel %vm64, %v4586, 0.0
    %v5016 = vsel %vm64, %v4715, 0.0
    %v5017 = vadd.f32 %v5015, %v5016
    %v5018 = vsel %vm64, %v4844, 0.0
    %v5019 = vadd.f32 %v5017, %v5018
    %v5020 = vsel %vm64, %v4973, 0.0
    %v5021 = vadd.f32 %v5019, %v5020
    %v5022 = vsel %vm64, %v4591, 0.0
    %v5023 = vsel %vm64, %v4720, 0.0
    %v5024 = vadd.f32 %v5022, %v5023
    %v5025 = vsel %vm64, %v4849, 0.0
    %v5026 = vadd.f32 %v5024, %v5025
    %v5027 = vsel %vm64, %v4978, 0.0
    %v5028 = vadd.f32 %v5026, %v5027
    %v5029 = vsel %vm64, %v4596, 0.0
    %v5030 = vsel %vm64, %v4725, 0.0
    %v5031 = vadd.f32 %v5029, %v5030
    %v5032 = vsel %vm64, %v4854, 0.0
    %v5033 = vadd.f32 %v5031, %v5032
    %v5034 = vsel %vm64, %v4983, 0.0
    %v5035 = vadd.f32 %v5033, %v5034
    %v5036 = vsel %vm64, %v4601, 0.0
    %v5037 = vsel %vm64, %v4730, 0.0
    %v5038 = vadd.f32 %v5036, %v5037
    %v5039 = vsel %vm64, %v4859, 0.0
    %v5040 = vadd.f32 %v5038, %v5039
    %v5041 = vsel %vm64, %v4988, 0.0
    %v5042 = vadd.f32 %v5040, %v5041
    %v5043 = vsel %vm64, %v4606, 0.0
    %v5044 = vsel %vm64, %v4735, 0.0
    %v5045 = vadd.f32 %v5043, %v5044
    %v5046 = vsel %vm64, %v4864, 0.0
    %v5047 = vadd.f32 %v5045, %v5046
    %v5048 = vsel %vm64, %v4993, 0.0
    %v5049 = vadd.f32 %v5047, %v5048
    %v5050 = vsel %vm64, %v4611, 0.0
    %v5051 = vsel %vm64, %v4740, 0.0
    %v5052 = vadd.f32 %v5050, %v5051
    %v5053 = vsel %vm64, %v4869, 0.0
    %v5054 = vadd.f32 %v5052, %v5053
    %v5055 = vsel %vm64, %v4998, 0.0
    %v5056 = vadd.f32 %v5054, %v5055
    %v5057 = vlaneseq
    %v5058 = vshrl.u32 %v5057, 7
    %v5059 = vsub.s32 0, %v5058
    %v5060 = vrot.slane %v61, %v5059
    %v5061 = vadd.f32 %v4435, %v5060
    %v5062 = vadd.f32 %v4442, %v5060
    %v5063 = vadd.f32 %v4449, %v5060
    %v5064 = vadd.f32 %v4456, %v5060
    %v5065 = vadd.f32 %v4463, %v5060
    %v5066 = vadd.f32 %v4470, %v5060
    %v5067 = vadd.f32 %v4477, %v5060
    %v5068 = vadd.f32 %v4484, %v5060
    %v5069 = vadd.f32 %v5007, %v5060
    %v5070 = vadd.f32 %v5014, %v5060
    %v5071 = vadd.f32 %v5021, %v5060
    %v5072 = vadd.f32 %v5028, %v5060
    %v5073 = vadd.f32 %v5035, %v5060
    %v5074 = vadd.f32 %v5042, %v5060
    %v5075 = vadd.f32 %v5049, %v5060
    %v5076 = vadd.f32 %v5056, %v5060
    %v5077 = vadd.f32 %v40, %v5061
    %v5078 = vadd.f32 %v41, %v5062
    %v5079 = vadd.f32 %v42, %v5063
    %v5080 = vadd.f32 %v43, %v5064
    %v5081 = vadd.f32 %v44, %v5065
    %v5082 = vadd.f32 %v45, %v5066
    %v5083 = vadd.f32 %v46, %v5067
    %v5084 = vadd.f32 %v47, %v5068
    %v5085 = vadd.f32 %v48, %v5069
    %v5086 = vadd.f32 %v49, %v5070
    %v5087 = vadd.f32 %v50, %v5071
    %v5088 = vadd.f32 %v51, %v5072
    %v5089 = vadd.f32 %v52, %v5073
    %v5090 = vadd.f32 %v53, %v5074
    %v5091 = vadd.f32 %v54, %v5075
    %v5092 = vadd.f32 %v55, %v5076
    %v5093 = vsel %vm64, %v5077, 0.0
    %5094 = vadd.xlane.f32.xlu0 %v5093
    %v5095 = vpop.xlane.xlu0 %5094
    %v5096 = vsel %vm64, %v5078, 0.0
    %5097 = vadd.xlane.f32.xlu0 %v5096
    %v5098 = vpop.xlane.xlu0 %5097
    %v5099 = vsel %vm64, %v5079, 0.0
    %5100 = vadd.xlane.f32.xlu0 %v5099
    %v5101 = vpop.xlane.xlu0 %5100
    %v5102 = vsel %vm64, %v5080, 0.0
    %5103 = vadd.xlane.f32.xlu0 %v5102
    %v5104 = vpop.xlane.xlu0 %5103
    %v5105 = vsel %vm64, %v5081, 0.0
    %5106 = vadd.xlane.f32.xlu0 %v5105
    %v5107 = vpop.xlane.xlu0 %5106
    %v5108 = vsel %vm64, %v5082, 0.0
    %5109 = vadd.xlane.f32.xlu0 %v5108
    %v5110 = vpop.xlane.xlu0 %5109
    %v5111 = vsel %vm64, %v5083, 0.0
    %5112 = vadd.xlane.f32.xlu0 %v5111
    %v5113 = vpop.xlane.xlu0 %5112
    %v5114 = vsel %vm64, %v5084, 0.0
    %5115 = vadd.xlane.f32.xlu0 %v5114
    %v5116 = vpop.xlane.xlu0 %5115
    %v5117 = vsel %vm64, %v5085, 0.0
    %5118 = vadd.xlane.f32.xlu0 %v5117
    %v5119 = vpop.xlane.xlu0 %5118
    %v5120 = vsel %vm64, %v5086, 0.0
    %5121 = vadd.xlane.f32.xlu0 %v5120
    %v5122 = vpop.xlane.xlu0 %5121
    %v5123 = vsel %vm64, %v5087, 0.0
    %5124 = vadd.xlane.f32.xlu0 %v5123
    %v5125 = vpop.xlane.xlu0 %5124
    %v5126 = vsel %vm64, %v5088, 0.0
    %5127 = vadd.xlane.f32.xlu0 %v5126
    %v5128 = vpop.xlane.xlu0 %5127
    %v5129 = vsel %vm64, %v5089, 0.0
    %5130 = vadd.xlane.f32.xlu0 %v5129
    %v5131 = vpop.xlane.xlu0 %5130
    %v5132 = vsel %vm64, %v5090, 0.0
    %5133 = vadd.xlane.f32.xlu0 %v5132
    %v5134 = vpop.xlane.xlu0 %5133
    %v5135 = vsel %vm64, %v5091, 0.0
    %5136 = vadd.xlane.f32.xlu0 %v5135
    %v5137 = vpop.xlane.xlu0 %5136
    %v5138 = vsel %vm64, %v5092, 0.0
    %5139 = vadd.xlane.f32.xlu0 %v5138
    %v5140 = vpop.xlane.xlu0 %5139
    %v5141 = vmul.f32 %v5095, %v113
    %v5142 = vmul.f32 %v5098, %v113
    %v5143 = vmul.f32 %v5101, %v113
    %v5144 = vmul.f32 %v5104, %v113
    %v5145 = vmul.f32 %v5107, %v113
    %v5146 = vmul.f32 %v5110, %v113
    %v5147 = vmul.f32 %v5113, %v113
    %v5148 = vmul.f32 %v5116, %v113
    %v5149 = vmul.f32 %v5119, %v113
    %v5150 = vmul.f32 %v5122, %v113
    %v5151 = vmul.f32 %v5125, %v113
    %v5152 = vmul.f32 %v5128, %v113
    %v5153 = vmul.f32 %v5131, %v113
    %v5154 = vmul.f32 %v5134, %v113
    %v5155 = vmul.f32 %v5137, %v113
    %v5156 = vmul.f32 %v5140, %v113
    %v5157 = vsub.f32 %v5077, %v5141
    %v5158 = vsub.f32 %v5078, %v5142
    %v5159 = vsub.f32 %v5079, %v5143
    %v5160 = vsub.f32 %v5080, %v5144
    %v5161 = vsub.f32 %v5081, %v5145
    %v5162 = vsub.f32 %v5082, %v5146
    %v5163 = vsub.f32 %v5083, %v5147
    %v5164 = vsub.f32 %v5084, %v5148
    %v5165 = vsub.f32 %v5085, %v5149
    %v5166 = vsub.f32 %v5086, %v5150
    %v5167 = vsub.f32 %v5087, %v5151
    %v5168 = vsub.f32 %v5088, %v5152
    %v5169 = vsub.f32 %v5089, %v5153
    %v5170 = vsub.f32 %v5090, %v5154
    %v5171 = vsub.f32 %v5091, %v5155
    %v5172 = vsub.f32 %v5092, %v5156
    %v5173 = vmul.f32 %v5157, %v5157
    %v5174 = vmul.f32 %v5158, %v5158
    %v5175 = vmul.f32 %v5159, %v5159
    %v5176 = vmul.f32 %v5160, %v5160
    %v5177 = vmul.f32 %v5161, %v5161
    %v5178 = vmul.f32 %v5162, %v5162
    %v5179 = vmul.f32 %v5163, %v5163
    %v5180 = vmul.f32 %v5164, %v5164
    %v5181 = vmul.f32 %v5165, %v5165
    %v5182 = vmul.f32 %v5166, %v5166
    %v5183 = vmul.f32 %v5167, %v5167
    %v5184 = vmul.f32 %v5168, %v5168
    %v5185 = vmul.f32 %v5169, %v5169
    %v5186 = vmul.f32 %v5170, %v5170
    %v5187 = vmul.f32 %v5171, %v5171
    %v5188 = vmul.f32 %v5172, %v5172
    %v5189 = vsel %vm64, %v5173, 0.0
    %5190 = vadd.xlane.f32.xlu0 %v5189
    %v5191 = vpop.xlane.xlu0 %5190
    %v5192 = vsel %vm64, %v5174, 0.0
    %5193 = vadd.xlane.f32.xlu0 %v5192
    %v5194 = vpop.xlane.xlu0 %5193
    %v5195 = vsel %vm64, %v5175, 0.0
    %5196 = vadd.xlane.f32.xlu0 %v5195
    %v5197 = vpop.xlane.xlu0 %5196
    %v5198 = vsel %vm64, %v5176, 0.0
    %5199 = vadd.xlane.f32.xlu0 %v5198
    %v5200 = vpop.xlane.xlu0 %5199
    %v5201 = vsel %vm64, %v5177, 0.0
    %5202 = vadd.xlane.f32.xlu0 %v5201
    %v5203 = vpop.xlane.xlu0 %5202
    %v5204 = vsel %vm64, %v5178, 0.0
    %5205 = vadd.xlane.f32.xlu0 %v5204
    %v5206 = vpop.xlane.xlu0 %5205
    %v5207 = vsel %vm64, %v5179, 0.0
    %5208 = vadd.xlane.f32.xlu0 %v5207
    %v5209 = vpop.xlane.xlu0 %5208
    %v5210 = vsel %vm64, %v5180, 0.0
    %5211 = vadd.xlane.f32.xlu0 %v5210
    %v5212 = vpop.xlane.xlu0 %5211
    %v5213 = vsel %vm64, %v5181, 0.0
    %5214 = vadd.xlane.f32.xlu0 %v5213
    %v5215 = vpop.xlane.xlu0 %5214
    %v5216 = vsel %vm64, %v5182, 0.0
    %5217 = vadd.xlane.f32.xlu0 %v5216
    %v5218 = vpop.xlane.xlu0 %5217
    %v5219 = vsel %vm64, %v5183, 0.0
    %5220 = vadd.xlane.f32.xlu0 %v5219
    %v5221 = vpop.xlane.xlu0 %5220
    %v5222 = vsel %vm64, %v5184, 0.0
    %5223 = vadd.xlane.f32.xlu0 %v5222
    %v5224 = vpop.xlane.xlu0 %5223
    %v5225 = vsel %vm64, %v5185, 0.0
    %5226 = vadd.xlane.f32.xlu0 %v5225
    %v5227 = vpop.xlane.xlu0 %5226
    %v5228 = vsel %vm64, %v5186, 0.0
    %5229 = vadd.xlane.f32.xlu0 %v5228
    %v5230 = vpop.xlane.xlu0 %5229
    %v5231 = vsel %vm64, %v5187, 0.0
    %5232 = vadd.xlane.f32.xlu0 %v5231
    %v5233 = vpop.xlane.xlu0 %5232
    %v5234 = vsel %vm64, %v5188, 0.0
    %5235 = vadd.xlane.f32.xlu0 %v5234
    %v5236 = vpop.xlane.xlu0 %5235
    %v5237 = vmul.f32 %v5191, %v113
    %v5238 = vmul.f32 %v5194, %v113
    %v5239 = vmul.f32 %v5197, %v113
    %v5240 = vmul.f32 %v5200, %v113
    %v5241 = vmul.f32 %v5203, %v113
    %v5242 = vmul.f32 %v5206, %v113
    %v5243 = vmul.f32 %v5209, %v113
    %v5244 = vmul.f32 %v5212, %v113
    %v5245 = vmul.f32 %v5215, %v113
    %v5246 = vmul.f32 %v5218, %v113
    %v5247 = vmul.f32 %v5221, %v113
    %v5248 = vmul.f32 %v5224, %v113
    %v5249 = vmul.f32 %v5227, %v113
    %v5250 = vmul.f32 %v5230, %v113
    %v5251 = vmul.f32 %v5233, %v113
    %v5252 = vmul.f32 %v5236, %v113
    %v5253 = vadd.f32 %v5237, 1e-05
    %v5254 = vadd.f32 %v5238, 1e-05
    %v5255 = vadd.f32 %v5239, 1e-05
    %v5256 = vadd.f32 %v5240, 1e-05
    %v5257 = vadd.f32 %v5241, 1e-05
    %v5258 = vadd.f32 %v5242, 1e-05
    %v5259 = vadd.f32 %v5243, 1e-05
    %v5260 = vadd.f32 %v5244, 1e-05
    %v5261 = vadd.f32 %v5245, 1e-05
    %v5262 = vadd.f32 %v5246, 1e-05
    %v5263 = vadd.f32 %v5247, 1e-05
    %v5264 = vadd.f32 %v5248, 1e-05
    %v5265 = vadd.f32 %v5249, 1e-05
    %v5266 = vadd.f32 %v5250, 1e-05
    %v5267 = vadd.f32 %v5251, 1e-05
    %v5268 = vadd.f32 %v5252, 1e-05
    %v5269 = vrsqrt.pop %v5253
    %v5270 = vrsqrt.pop %v5254
    %v5271 = vrsqrt.pop %v5255
    %v5272 = vrsqrt.pop %v5256
    %v5273 = vrsqrt.pop %v5257
    %v5274 = vrsqrt.pop %v5258
    %v5275 = vrsqrt.pop %v5259
    %v5276 = vrsqrt.pop %v5260
    %v5277 = vrsqrt.pop %v5261
    %v5278 = vrsqrt.pop %v5262
    %v5279 = vrsqrt.pop %v5263
    %v5280 = vrsqrt.pop %v5264
    %v5281 = vrsqrt.pop %v5265
    %v5282 = vrsqrt.pop %v5266
    %v5283 = vrsqrt.pop %v5267
    %v5284 = vrsqrt.pop %v5268
    %v5285 = vmul.f32 %v5157, %v5269
    %v5286 = vmul.f32 %v5158, %v5270
    %v5287 = vmul.f32 %v5159, %v5271
    %v5288 = vmul.f32 %v5160, %v5272
    %v5289 = vmul.f32 %v5161, %v5273
    %v5290 = vmul.f32 %v5162, %v5274
    %v5291 = vmul.f32 %v5163, %v5275
    %v5292 = vmul.f32 %v5164, %v5276
    %v5293 = vmul.f32 %v5165, %v5277
    %v5294 = vmul.f32 %v5166, %v5278
    %v5295 = vmul.f32 %v5167, %v5279
    %v5296 = vmul.f32 %v5168, %v5280
    %v5297 = vmul.f32 %v5169, %v5281
    %v5298 = vmul.f32 %v5170, %v5282
    %v5299 = vmul.f32 %v5171, %v5283
    %v5300 = vmul.f32 %v5172, %v5284
    %v5301 = vlaneseq
    %v5302 = vshrl.u32 %v5301, 7
    %v5303 = vsub.s32 0, %v5302
    %v5304 = vrot.slane %v58, %v5303
    %v5305 = vmul.f32 %v5285, %v5304
    %v5306 = vmul.f32 %v5286, %v5304
    %v5307 = vmul.f32 %v5287, %v5304
    %v5308 = vmul.f32 %v5288, %v5304
    %v5309 = vmul.f32 %v5289, %v5304
    %v5310 = vmul.f32 %v5290, %v5304
    %v5311 = vmul.f32 %v5291, %v5304
    %v5312 = vmul.f32 %v5292, %v5304
    %v5313 = vmul.f32 %v5293, %v5304
    %v5314 = vmul.f32 %v5294, %v5304
    %v5315 = vmul.f32 %v5295, %v5304
    %v5316 = vmul.f32 %v5296, %v5304
    %v5317 = vmul.f32 %v5297, %v5304
    %v5318 = vmul.f32 %v5298, %v5304
    %v5319 = vmul.f32 %v5299, %v5304
    %v5320 = vmul.f32 %v5300, %v5304
    %v5321 = vlaneseq
    %v5322 = vshrl.u32 %v5321, 7
    %v5323 = vsub.s32 0, %v5322
    %v5324 = vrot.slane %v59, %v5323
    %v5325 = vadd.f32 %v5305, %v5324
    %v5326 = vadd.f32 %v5306, %v5324
    %v5327 = vadd.f32 %v5307, %v5324
    %v5328 = vadd.f32 %v5308, %v5324
    %v5329 = vadd.f32 %v5309, %v5324
    %v5330 = vadd.f32 %v5310, %v5324
    %v5331 = vadd.f32 %v5311, %v5324
    %v5332 = vadd.f32 %v5312, %v5324
    %v5333 = vadd.f32 %v5313, %v5324
    %v5334 = vadd.f32 %v5314, %v5324
    %v5335 = vadd.f32 %v5315, %v5324
    %v5336 = vadd.f32 %v5316, %v5324
    %v5337 = vadd.f32 %v5317, %v5324
    %v5338 = vadd.f32 %v5318, %v5324
    %v5339 = vadd.f32 %v5319, %v5324
    %v5340 = vadd.f32 %v5320, %v5324
    %v5341 = vld [vmem:[%s5] sm:$0xff]
    %v5342 = vld [vmem:[%s5 + $0x8] sm:$0xff]
    %v5343 = vld [vmem:[%s5 + $0x10] sm:$0xff]
    %v5344 = vld [vmem:[%s5 + $0x18] sm:$0xff]
    %v5345 = vlaneseq
    %v5346 = vshrl.u32 %v5345, 7
    %v5347 = vsub.s32 0, %v5346
    %v5348 = vrot.slane %v62, %v5347
    %v5350 = vsel %vm64, %v5325, 0
    %v5353 = vsel %vm64, %v5326, 0
    %v5356 = vsel %vm64, %v5327, 0
    %v5359 = vsel %vm64, %v5328, 0
    %v5362 = vsel %vm64, %v5329, 0
    %v5365 = vsel %vm64, %v5330, 0
    %v5368 = vsel %vm64, %v5331, 0
    %v5371 = vsel %vm64, %v5332, 0
    %v5374 = vsel %vm64, %v5333, 0
    %v5377 = vsel %vm64, %v5334, 0
    %v5380 = vsel %vm64, %v5335, 0
    %v5383 = vsel %vm64, %v5336, 0
    %v5386 = vsel %vm64, %v5337, 0
    %v5389 = vsel %vm64, %v5338, 0
    %v5392 = vsel %vm64, %v5339, 0
    %v5395 = vsel %vm64, %v5340, 0
    %5397 = vmatprep.subr.mxu0 0.0
    %5398 = vmatpush1.msra.mxu0 %v5341
    %5399 = vmatprep.subr.mxu0 0.0
    %5400 = vmatpush1.msra.mxu0 %v5342
    %5401 = vmatprep.subr.mxu0 0.0
    %5402 = vmatpush1.msra.mxu0 %v5343
    %5403 = vmatprep.subr.mxu0 0.0
    %5404 = vmatpush1.msra.mxu0 %v5344
    %5405 = vmatprep.subr.mxu0 0.0
    %5406 = vmatpush1.msra.mxu0 0.0
    %5407 = vmatprep.subr.mxu0 0.0
    %5408 = vmatpush1.msra.mxu0 0.0
    %5409 = vmatprep.subr.mxu0 0.0
    %5410 = vmatpush1.msra.mxu0 0.0
    %5411 = vmatprep.subr.mxu0 0.0
    %5412 = vmatpush1.msra.mxu0 0.0
    %5413 = vmatprep.subr.mxu0 0.0
    %5414 = vmatpush1.msra.mxu0 0.0
    %5415 = vmatprep.subr.mxu0 0.0
    %5416 = vmatpush1.msra.mxu0 0.0
    %5417 = vmatprep.subr.mxu0 0.0
    %5418 = vmatpush1.msra.mxu0 0.0
    %5419 = vmatprep.subr.mxu0 0.0
    %5420 = vmatpush1.msra.mxu0 0.0
    %5421 = vmatprep.subr.mxu0 0.0
    %5422 = vmatpush1.msra.mxu0 0.0
    %5423 = vmatprep.subr.mxu0 0.0
    %5424 = vmatpush1.msra.mxu0 0.0
    %5425 = vmatprep.subr.mxu0 0.0
    %5426 = vmatpush1.msra.mxu0 0.0
    %5427 = vmatprep.subr.mxu0 0.0
    %5428 = vmatpush1.msra.mxu0 0.0
    %5429 = vmatprep.subr.mxu0 0.0
    %5430 = vmatpush1.msra.mxu0 0.0
    %5431 = vmatprep.subr.mxu0 0.0
    %5432 = vmatpush1.msra.mxu0 0.0
    %5433 = vmatprep.subr.mxu0 0.0
    %5434 = vmatpush1.msra.mxu0 0.0
    %5435 = vmatprep.subr.mxu0 0.0
    %5436 = vmatpush1.msra.mxu0 0.0
    %5437 = vmatprep.subr.mxu0 0.0
    %5438 = vmatpush1.msra.mxu0 0.0
    %5439 = vmatprep.subr.mxu0 0.0
    %5440 = vmatpush1.msra.mxu0 0.0
    %5441 = vmatprep.subr.mxu0 0.0
    %5442 = vmatpush1.msra.mxu0 0.0
    %5443 = vmatprep.subr.mxu0 0.0
    %5444 = vmatpush1.msra.mxu0 0.0
    %5445 = vmatprep.subr.mxu0 0.0
    %5446 = vmatpush1.msra.mxu0 0.0
    %5447 = vmatprep.subr.mxu0 0.0
    %5448 = vmatpush1.msra.mxu0 0.0
    %5449 = vmatprep.subr.mxu0 0.0
    %5450 = vmatpush1.msra.mxu0 0.0
    %5451 = vmatprep.subr.mxu0 0.0
    %5452 = vmatpush1.msra.mxu0 0.0
    %5453 = vmatprep.subr.mxu0 0.0
    %5454 = vmatpush1.msra.mxu0 0.0
    %5455 = vmatprep.subr.mxu0 0.0
    %5456 = vmatpush1.msra.mxu0 0.0
    %5457 = vmatprep.subr.mxu0 0.0
    %5458 = vmatpush1.msra.mxu0 0.0
    %5459 = vmatprep.subr.mxu0 0.0
    %5460 = vmatpush1.msra.mxu0 0.0
    %5461 = vmatprep.mubr.f32.mxu0 0.0
    %5462 = vmatmul.mubr.f32.gmra.mrb[0].mxu0 %v5350
    %v5463 = vpop.f32.mrb[0].mxu0
    %v5464 = vadd.f32 %v5348, %v5463
    %v5465 = vpop.f32.mrb[0].mxu0
    %5466 = vmatprep.mubr.f32.mxu0 0.0
    %5467 = vmatmul.mubr.f32.gmra.mrb[0].mxu0 %v5353
    %v5468 = vpop.f32.mrb[0].mxu0
    %v5469 = vadd.f32 %v5348, %v5468
    %v5470 = vpop.f32.mrb[0].mxu0
    %5471 = vmatprep.mubr.f32.mxu0 0.0
    %5472 = vmatmul.mubr.f32.gmra.mrb[0].mxu0 %v5356
    %v5473 = vpop.f32.mrb[0].mxu0
    %v5474 = vadd.f32 %v5348, %v5473
    %v5475 = vpop.f32.mrb[0].mxu0
    %5476 = vmatprep.mubr.f32.mxu0 0.0
    %5477 = vmatmul.mubr.f32.gmra.mrb[0].mxu0 %v5359
    %v5478 = vpop.f32.mrb[0].mxu0
    %v5479 = vadd.f32 %v5348, %v5478
    %v5480 = vpop.f32.mrb[0].mxu0
    %5481 = vmatprep.mubr.f32.mxu0 0.0
    %5482 = vmatmul.mubr.f32.gmra.mrb[0].mxu0 %v5362
    %v5483 = vpop.f32.mrb[0].mxu0
    %v5484 = vadd.f32 %v5348, %v5483
    %v5485 = vpop.f32.mrb[0].mxu0
    %5486 = vmatprep.mubr.f32.mxu0 0.0
    %5487 = vmatmul.mubr.f32.gmra.mrb[0].mxu0 %v5365
    %v5488 = vpop.f32.mrb[0].mxu0
    %v5489 = vadd.f32 %v5348, %v5488
    %v5490 = vpop.f32.mrb[0].mxu0
    %5491 = vmatprep.mubr.f32.mxu0 0.0
    %5492 = vmatmul.mubr.f32.gmra.mrb[0].mxu0 %v5368
    %v5493 = vpop.f32.mrb[0].mxu0
    %v5494 = vadd.f32 %v5348, %v5493
    %v5495 = vpop.f32.mrb[0].mxu0
    %5496 = vmatprep.mubr.f32.mxu0 0.0
    %5497 = vmatmul.mubr.f32.gmra.mrb[0].mxu0 %v5371
    %v5498 = vpop.f32.mrb[0].mxu0
    %v5499 = vadd.f32 %v5348, %v5498
    %v5500 = vpop.f32.mrb[0].mxu0
    %5501 = vmatprep.mubr.f32.mxu0 0.0
    %5502 = vmatmul.mubr.f32.gmra.mrb[0].mxu0 %v5374
    %v5503 = vpop.f32.mrb[0].mxu0
    %v5504 = vadd.f32 %v5348, %v5503
    %v5505 = vpop.f32.mrb[0].mxu0
    %5506 = vmatprep.mubr.f32.mxu0 0.0
    %5507 = vmatmul.mubr.f32.gmra.mrb[0].mxu0 %v5377
    %v5508 = vpop.f32.mrb[0].mxu0
    %v5509 = vadd.f32 %v5348, %v5508
    %v5510 = vpop.f32.mrb[0].mxu0
    %5511 = vmatprep.mubr.f32.mxu0 0.0
    %5512 = vmatmul.mubr.f32.gmra.mrb[0].mxu0 %v5380
    %v5513 = vpop.f32.mrb[0].mxu0
    %v5514 = vadd.f32 %v5348, %v5513
    %v5515 = vpop.f32.mrb[0].mxu0
    %5516 = vmatprep.mubr.f32.mxu0 0.0
    %5517 = vmatmul.mubr.f32.gmra.mrb[0].mxu0 %v5383
    %v5518 = vpop.f32.mrb[0].mxu0
    %v5519 = vadd.f32 %v5348, %v5518
    %v5520 = vpop.f32.mrb[0].mxu0
    %5521 = vmatprep.mubr.f32.mxu0 0.0
    %5522 = vmatmul.mubr.f32.gmra.mrb[0].mxu0 %v5386
    %v5523 = vpop.f32.mrb[0].mxu0
    %v5524 = vadd.f32 %v5348, %v5523
    %v5525 = vpop.f32.mrb[0].mxu0
    %5526 = vmatprep.mubr.f32.mxu0 0.0
    %5527 = vmatmul.mubr.f32.gmra.mrb[0].mxu0 %v5389
    %v5528 = vpop.f32.mrb[0].mxu0
    %v5529 = vadd.f32 %v5348, %v5528
    %v5530 = vpop.f32.mrb[0].mxu0
    %5531 = vmatprep.mubr.f32.mxu0 0.0
    %5532 = vmatmul.mubr.f32.gmra.mrb[0].mxu0 %v5392
    %v5533 = vpop.f32.mrb[0].mxu0
    %v5534 = vadd.f32 %v5348, %v5533
    %v5535 = vpop.f32.mrb[0].mxu0
    %5536 = vmatprep.mubr.f32.mxu0 0.0
    %5537 = vmatmul.mubr.f32.gmra.mrb[0].mxu0 %v5395
    %v5538 = vpop.f32.mrb[0].mxu0
    %v5539 = vadd.f32 %v5348, %v5538
    %v5540 = vpop.f32.mrb[0].mxu0
    %5541 = vdwg.mxu0
    %v5542 = vmul.f32 %v5464, 0.5
    %v5543 = vmul.f32 %v5469, 0.5
    %v5544 = vmul.f32 %v5474, 0.5
    %v5545 = vmul.f32 %v5479, 0.5
    %v5546 = vmul.f32 %v5484, 0.5
    %v5547 = vmul.f32 %v5489, 0.5
    %v5548 = vmul.f32 %v5494, 0.5
    %v5549 = vmul.f32 %v5499, 0.5
    %v5550 = vmul.f32 %v5504, 0.5
    %v5551 = vmul.f32 %v5509, 0.5
    %v5552 = vmul.f32 %v5514, 0.5
    %v5553 = vmul.f32 %v5519, 0.5
    %v5554 = vmul.f32 %v5524, 0.5
    %v5555 = vmul.f32 %v5529, 0.5
    %v5556 = vmul.f32 %v5534, 0.5
    %v5557 = vmul.f32 %v5539, 0.5
    %v5558 = vmul.f32 %v5464, 0.70710677
    %v5559 = vmul.f32 %v5469, 0.70710677
    %v5560 = vmul.f32 %v5474, 0.70710677
    %v5561 = vmul.f32 %v5479, 0.70710677
    %v5562 = vmul.f32 %v5484, 0.70710677
    %v5563 = vmul.f32 %v5489, 0.70710677
    %v5564 = vmul.f32 %v5494, 0.70710677
    %v5565 = vmul.f32 %v5499, 0.70710677
    %v5566 = vmul.f32 %v5504, 0.70710677
    %v5567 = vmul.f32 %v5509, 0.70710677
    %v5568 = vmul.f32 %v5514, 0.70710677
    %v5569 = vmul.f32 %v5519, 0.70710677
    %v5570 = vmul.f32 %v5524, 0.70710677
    %v5571 = vmul.f32 %v5529, 0.70710677
    %v5572 = vmul.f32 %v5534, 0.70710677
    %v5573 = vmul.f32 %v5539, 0.70710677
    %v5574 = verf.f32.pop %v5558
    %v5575 = verf.f32.pop %v5559
    %v5576 = verf.f32.pop %v5560
    %v5577 = verf.f32.pop %v5561
    %v5578 = verf.f32.pop %v5562
    %v5579 = verf.f32.pop %v5563
    %v5580 = verf.f32.pop %v5564
    %v5581 = verf.f32.pop %v5565
    %v5582 = verf.f32.pop %v5566
    %v5583 = verf.f32.pop %v5567
    %v5584 = verf.f32.pop %v5568
    %v5585 = verf.f32.pop %v5569
    %v5586 = verf.f32.pop %v5570
    %v5587 = verf.f32.pop %v5571
    %v5588 = verf.f32.pop %v5572
    %v5589 = verf.f32.pop %v5573
    %v5590 = vadd.f32 %v5574, 1.0
    %v5591 = vadd.f32 %v5575, 1.0
    %v5592 = vadd.f32 %v5576, 1.0
    %v5593 = vadd.f32 %v5577, 1.0
    %v5594 = vadd.f32 %v5578, 1.0
    %v5595 = vadd.f32 %v5579, 1.0
    %v5596 = vadd.f32 %v5580, 1.0
    %v5597 = vadd.f32 %v5581, 1.0
    %v5598 = vadd.f32 %v5582, 1.0
    %v5599 = vadd.f32 %v5583, 1.0
    %v5600 = vadd.f32 %v5584, 1.0
    %v5601 = vadd.f32 %v5585, 1.0
    %v5602 = vadd.f32 %v5586, 1.0
    %v5603 = vadd.f32 %v5587, 1.0
    %v5604 = vadd.f32 %v5588, 1.0
    %v5605 = vadd.f32 %v5589, 1.0
    %v5606 = vmul.f32 %v5542, %v5590
    %v5607 = vmul.f32 %v5543, %v5591
    %v5608 = vmul.f32 %v5544, %v5592
    %v5609 = vmul.f32 %v5545, %v5593
    %v5610 = vmul.f32 %v5546, %v5594
    %v5611 = vmul.f32 %v5547, %v5595
    %v5612 = vmul.f32 %v5548, %v5596
    %v5613 = vmul.f32 %v5549, %v5597
    %v5614 = vmul.f32 %v5550, %v5598
    %v5615 = vmul.f32 %v5551, %v5599
    %v5616 = vmul.f32 %v5552, %v5600
    %v5617 = vmul.f32 %v5553, %v5601
    %v5618 = vmul.f32 %v5554, %v5602
    %v5619 = vmul.f32 %v5555, %v5603
    %v5620 = vmul.f32 %v5556, %v5604
    %v5621 = vmul.f32 %v5557, %v5605
    %v5622 = vld [vmem:[%s6] sm:$0xff]
    %v5623 = vld [vmem:[%s6 + $0x8] sm:$0xff]
    %v5624 = vld [vmem:[%s6 + $0x10] sm:$0xff]
    %v5625 = vld [vmem:[%s6 + $0x18] sm:$0xff]
    %v5626 = vld [vmem:[%s6 + $0x20] sm:$0xff]
    %v5627 = vld [vmem:[%s6 + $0x28] sm:$0xff]
    %v5628 = vld [vmem:[%s6 + $0x30] sm:$0xff]
    %v5629 = vld [vmem:[%s6 + $0x38] sm:$0xff]
    %v5630 = vld [vmem:[%s6 + $0x40] sm:$0xff]
    %v5631 = vld [vmem:[%s6 + $0x48] sm:$0xff]
    %v5632 = vld [vmem:[%s6 + $0x50] sm:$0xff]
    %v5633 = vld [vmem:[%s6 + $0x58] sm:$0xff]
    %v5634 = vld [vmem:[%s6 + $0x60] sm:$0xff]
    %v5635 = vld [vmem:[%s6 + $0x68] sm:$0xff]
    %v5636 = vld [vmem:[%s6 + $0x70] sm:$0xff]
    %v5637 = vld [vmem:[%s6 + $0x78] sm:$0xff]
    %v5638 = vlaneseq
    %v5639 = vshrl.u32 %v5638, 7
    %v5640 = vsub.s32 0, %v5639
    %v5641 = vrot.slane %v63, %v5640
    %5642 = vmatprep.subr.mxu0 0.0
    %5643 = vmatpush1.msra.mxu0 %v5622
    %5644 = vmatprep.subr.mxu0 0.0
    %5645 = vmatpush1.msra.mxu0 %v5623
    %5646 = vmatprep.subr.mxu0 0.0
    %5647 = vmatpush1.msra.mxu0 %v5624
    %5648 = vmatprep.subr.mxu0 0.0
    %5649 = vmatpush1.msra.mxu0 %v5625
    %5650 = vmatprep.subr.mxu0 0.0
    %5651 = vmatpush1.msra.mxu0 %v5626
    %5652 = vmatprep.subr.mxu0 0.0
    %5653 = vmatpush1.msra.mxu0 %v5627
    %5654 = vmatprep.subr.mxu0 0.0
    %5655 = vmatpush1.msra.mxu0 %v5628
    %5656 = vmatprep.subr.mxu0 0.0
    %5657 = vmatpush1.msra.mxu0 %v5629
    %5658 = vmatprep.subr.mxu0 0.0
    %5659 = vmatpush1.msra.mxu0 %v5630
    %5660 = vmatprep.subr.mxu0 0.0
    %5661 = vmatpush1.msra.mxu0 %v5631
    %5662 = vmatprep.subr.mxu0 0.0
    %5663 = vmatpush1.msra.mxu0 %v5632
    %5664 = vmatprep.subr.mxu0 0.0
    %5665 = vmatpush1.msra.mxu0 %v5633
    %5666 = vmatprep.subr.mxu0 0.0
    %5667 = vmatpush1.msra.mxu0 %v5634
    %5668 = vmatprep.subr.mxu0 0.0
    %5669 = vmatpush1.msra.mxu0 %v5635
    %5670 = vmatprep.subr.mxu0 0.0
    %5671 = vmatpush1.msra.mxu0 %v5636
    %5672 = vmatprep.subr.mxu0 0.0
    %5673 = vmatpush1.msra.mxu0 %v5637
    %5674 = vmatprep.subr.mxu0 0.0
    %5675 = vmatpush1.msra.mxu0 0.0
    %5676 = vmatprep.subr.mxu0 0.0
    %5677 = vmatpush1.msra.mxu0 0.0
    %5678 = vmatprep.subr.mxu0 0.0
    %5679 = vmatpush1.msra.mxu0 0.0
    %5680 = vmatprep.subr.mxu0 0.0
    %5681 = vmatpush1.msra.mxu0 0.0
    %5682 = vmatprep.subr.mxu0 0.0
    %5683 = vmatpush1.msra.mxu0 0.0
    %5684 = vmatprep.subr.mxu0 0.0
    %5685 = vmatpush1.msra.mxu0 0.0
    %5686 = vmatprep.subr.mxu0 0.0
    %5687 = vmatpush1.msra.mxu0 0.0
    %5688 = vmatprep.subr.mxu0 0.0
    %5689 = vmatpush1.msra.mxu0 0.0
    %5690 = vmatprep.subr.mxu0 0.0
    %5691 = vmatpush1.msra.mxu0 0.0
    %5692 = vmatprep.subr.mxu0 0.0
    %5693 = vmatpush1.msra.mxu0 0.0
    %5694 = vmatprep.subr.mxu0 0.0
    %5695 = vmatpush1.msra.mxu0 0.0
    %5696 = vmatprep.subr.mxu0 0.0
    %5697 = vmatpush1.msra.mxu0 0.0
    %5698 = vmatprep.subr.mxu0 0.0
    %5699 = vmatpush1.msra.mxu0 0.0
    %5700 = vmatprep.subr.mxu0 0.0
    %5701 = vmatpush1.msra.mxu0 0.0
    %5702 = vmatprep.subr.mxu0 0.0
    %5703 = vmatpush1.msra.mxu0 0.0
    %5704 = vmatprep.subr.mxu0 0.0
    %5705 = vmatpush1.msra.mxu0 0.0
    %5706 = vmatprep.mubr.f32.mxu0 0.0
    %5707 = vmatmul.mubr.f32.gmra.mrb[0].mxu0 %v5606
    %v5708 = vpop.f32.mrb[0].mxu0
    %v5709 = vadd.f32 %v5641, %v5708
    %v5710 = vpop.f32.mrb[0].mxu0
    %5711 = vmatprep.mubr.f32.mxu0 0.0
    %5712 = vmatmul.mubr.f32.gmra.mrb[0].mxu0 %v5607
    %v5713 = vpop.f32.mrb[0].mxu0
    %v5714 = vadd.f32 %v5641, %v5713
    %v5715 = vpop.f32.mrb[0].mxu0
    %5716 = vmatprep.mubr.f32.mxu0 0.0
    %5717 = vmatmul.mubr.f32.gmra.mrb[0].mxu0 %v5608
    %v5718 = vpop.f32.mrb[0].mxu0
    %v5719 = vadd.f32 %v5641, %v5718
    %v5720 = vpop.f32.mrb[0].mxu0
    %5721 = vmatprep.mubr.f32.mxu0 0.0
    %5722 = vmatmul.mubr.f32.gmra.mrb[0].mxu0 %v5609
    %v5723 = vpop.f32.mrb[0].mxu0
    %v5724 = vadd.f32 %v5641, %v5723
    %v5725 = vpop.f32.mrb[0].mxu0
    %5726 = vmatprep.mubr.f32.mxu0 0.0
    %5727 = vmatmul.mubr.f32.gmra.mrb[0].mxu0 %v5610
    %v5728 = vpop.f32.mrb[0].mxu0
    %v5729 = vadd.f32 %v5641, %v5728
    %v5730 = vpop.f32.mrb[0].mxu0
    %5731 = vmatprep.mubr.f32.mxu0 0.0
    %5732 = vmatmul.mubr.f32.gmra.mrb[0].mxu0 %v5611
    %v5733 = vpop.f32.mrb[0].mxu0
    %v5734 = vadd.f32 %v5641, %v5733
    %v5735 = vpop.f32.mrb[0].mxu0
    %5736 = vmatprep.mubr.f32.mxu0 0.0
    %5737 = vmatmul.mubr.f32.gmra.mrb[0].mxu0 %v5612
    %v5738 = vpop.f32.mrb[0].mxu0
    %v5739 = vadd.f32 %v5641, %v5738
    %v5740 = vpop.f32.mrb[0].mxu0
    %5741 = vmatprep.mubr.f32.mxu0 0.0
    %5742 = vmatmul.mubr.f32.gmra.mrb[0].mxu0 %v5613
    %v5743 = vpop.f32.mrb[0].mxu0
    %v5744 = vadd.f32 %v5641, %v5743
    %v5745 = vpop.f32.mrb[0].mxu0
    %5746 = vmatprep.mubr.f32.mxu0 0.0
    %5747 = vmatmul.mubr.f32.gmra.mrb[0].mxu0 %v5614
    %v5748 = vpop.f32.mrb[0].mxu0
    %v5749 = vadd.f32 %v5641, %v5748
    %v5750 = vpop.f32.mrb[0].mxu0
    %5751 = vmatprep.mubr.f32.mxu0 0.0
    %5752 = vmatmul.mubr.f32.gmra.mrb[0].mxu0 %v5615
    %v5753 = vpop.f32.mrb[0].mxu0
    %v5754 = vadd.f32 %v5641, %v5753
    %v5755 = vpop.f32.mrb[0].mxu0
    %5756 = vmatprep.mubr.f32.mxu0 0.0
    %5757 = vmatmul.mubr.f32.gmra.mrb[0].mxu0 %v5616
    %v5758 = vpop.f32.mrb[0].mxu0
    %v5759 = vadd.f32 %v5641, %v5758
    %v5760 = vpop.f32.mrb[0].mxu0
    %5761 = vmatprep.mubr.f32.mxu0 0.0
    %5762 = vmatmul.mubr.f32.gmra.mrb[0].mxu0 %v5617
    %v5763 = vpop.f32.mrb[0].mxu0
    %v5764 = vadd.f32 %v5641, %v5763
    %v5765 = vpop.f32.mrb[0].mxu0
    %5766 = vmatprep.mubr.f32.mxu0 0.0
    %5767 = vmatmul.mubr.f32.gmra.mrb[0].mxu0 %v5618
    %v5768 = vpop.f32.mrb[0].mxu0
    %v5769 = vadd.f32 %v5641, %v5768
    %v5770 = vpop.f32.mrb[0].mxu0
    %5771 = vmatprep.mubr.f32.mxu0 0.0
    %5772 = vmatmul.mubr.f32.gmra.mrb[0].mxu0 %v5619
    %v5773 = vpop.f32.mrb[0].mxu0
    %v5774 = vadd.f32 %v5641, %v5773
    %v5775 = vpop.f32.mrb[0].mxu0
    %5776 = vmatprep.mubr.f32.mxu0 0.0
    %5777 = vmatmul.mubr.f32.gmra.mrb[0].mxu0 %v5620
    %v5778 = vpop.f32.mrb[0].mxu0
    %v5779 = vadd.f32 %v5641, %v5778
    %v5780 = vpop.f32.mrb[0].mxu0
    %5781 = vmatprep.mubr.f32.mxu0 0.0
    %5782 = vmatmul.mubr.f32.gmra.mrb[0].mxu0 %v5621
    %v5783 = vpop.f32.mrb[0].mxu0
    %v5784 = vadd.f32 %v5641, %v5783
    %v5785 = vpop.f32.mrb[0].mxu0
    %5786 = vdwg.mxu0
    %v5787 = vadd.f32 %v5077, %v5709
    %v5788 = vadd.f32 %v5078, %v5714
    %v5789 = vadd.f32 %v5079, %v5719
    %v5790 = vadd.f32 %v5080, %v5724
    %v5791 = vadd.f32 %v5081, %v5729
    %v5792 = vadd.f32 %v5082, %v5734
    %v5793 = vadd.f32 %v5083, %v5739
    %v5794 = vadd.f32 %v5084, %v5744
    %v5795 = vadd.f32 %v5085, %v5749
    %v5796 = vadd.f32 %v5086, %v5754
    %v5797 = vadd.f32 %v5087, %v5759
    %v5798 = vadd.f32 %v5088, %v5764
    %v5799 = vadd.f32 %v5089, %v5769
    %v5800 = vadd.f32 %v5090, %v5774
    %v5801 = vadd.f32 %v5091, %v5779
    %v5802 = vadd.f32 %v5092, %v5784
    %v5803 = vld [vmem:[%s1 + $0x8] sm:$0x1]
    %v5804 = vld [vmem:[%s1 + $0x9] sm:$0x1]
    %v5805 = vld [vmem:[%s1 + $0xa] sm:$0x1]
    %v5806 = vld [vmem:[%s1 + $0xb] sm:$0x1]
    %v5807 = vld [vmem:[%s1 + $0xc] sm:$0x1]
    %v5808 = vld [vmem:[%s1 + $0xd] sm:$0x1]
    %v5809 = vld [vmem:[%s1 + $0xe] sm:$0x1]
    %v5810 = vld [vmem:[%s1 + $0xf] sm:$0x1]
    %v5811 = vsel %vm64, %v5787, 0.0
    %5812 = vadd.xlane.f32.xlu0 %v5811
    %v5813 = vpop.xlane.xlu0 %5812
    %v5814 = vsel %vm64, %v5788, 0.0
    %5815 = vadd.xlane.f32.xlu0 %v5814
    %v5816 = vpop.xlane.xlu0 %5815
    %v5817 = vsel %vm64, %v5789, 0.0
    %5818 = vadd.xlane.f32.xlu0 %v5817
    %v5819 = vpop.xlane.xlu0 %5818
    %v5820 = vsel %vm64, %v5790, 0.0
    %5821 = vadd.xlane.f32.xlu0 %v5820
    %v5822 = vpop.xlane.xlu0 %5821
    %v5823 = vsel %vm64, %v5791, 0.0
    %5824 = vadd.xlane.f32.xlu0 %v5823
    %v5825 = vpop.xlane.xlu0 %5824
    %v5826 = vsel %vm64, %v5792, 0.0
    %5827 = vadd.xlane.f32.xlu0 %v5826
    %v5828 = vpop.xlane.xlu0 %5827
    %v5829 = vsel %vm64, %v5793, 0.0
    %5830 = vadd.xlane.f32.xlu0 %v5829
    %v5831 = vpop.xlane.xlu0 %5830
    %v5832 = vsel %vm64, %v5794, 0.0
    %5833 = vadd.xlane.f32.xlu0 %v5832
    %v5834 = vpop.xlane.xlu0 %5833
    %v5835 = vsel %vm64, %v5795, 0.0
    %5836 = vadd.xlane.f32.xlu0 %v5835
    %v5837 = vpop.xlane.xlu0 %5836
    %v5838 = vsel %vm64, %v5796, 0.0
    %5839 = vadd.xlane.f32.xlu0 %v5838
    %v5840 = vpop.xlane.xlu0 %5839
    %v5841 = vsel %vm64, %v5797, 0.0
    %5842 = vadd.xlane.f32.xlu0 %v5841
    %v5843 = vpop.xlane.xlu0 %5842
    %v5844 = vsel %vm64, %v5798, 0.0
    %5845 = vadd.xlane.f32.xlu0 %v5844
    %v5846 = vpop.xlane.xlu0 %5845
    %v5847 = vsel %vm64, %v5799, 0.0
    %5848 = vadd.xlane.f32.xlu0 %v5847
    %v5849 = vpop.xlane.xlu0 %5848
    %v5850 = vsel %vm64, %v5800, 0.0
    %5851 = vadd.xlane.f32.xlu0 %v5850
    %v5852 = vpop.xlane.xlu0 %5851
    %v5853 = vsel %vm64, %v5801, 0.0
    %5854 = vadd.xlane.f32.xlu0 %v5853
    %v5855 = vpop.xlane.xlu0 %5854
    %v5856 = vsel %vm64, %v5802, 0.0
    %5857 = vadd.xlane.f32.xlu0 %v5856
    %v5858 = vpop.xlane.xlu0 %5857
    %v5859 = vmul.f32 %v5813, %v113
    %v5860 = vmul.f32 %v5816, %v113
    %v5861 = vmul.f32 %v5819, %v113
    %v5862 = vmul.f32 %v5822, %v113
    %v5863 = vmul.f32 %v5825, %v113
    %v5864 = vmul.f32 %v5828, %v113
    %v5865 = vmul.f32 %v5831, %v113
    %v5866 = vmul.f32 %v5834, %v113
    %v5867 = vmul.f32 %v5837, %v113
    %v5868 = vmul.f32 %v5840, %v113
    %v5869 = vmul.f32 %v5843, %v113
    %v5870 = vmul.f32 %v5846, %v113
    %v5871 = vmul.f32 %v5849, %v113
    %v5872 = vmul.f32 %v5852, %v113
    %v5873 = vmul.f32 %v5855, %v113
    %v5874 = vmul.f32 %v5858, %v113
    %v5875 = vsub.f32 %v5787, %v5859
    %v5876 = vsub.f32 %v5788, %v5860
    %v5877 = vsub.f32 %v5789, %v5861
    %v5878 = vsub.f32 %v5790, %v5862
    %v5879 = vsub.f32 %v5791, %v5863
    %v5880 = vsub.f32 %v5792, %v5864
    %v5881 = vsub.f32 %v5793, %v5865
    %v5882 = vsub.f32 %v5794, %v5866
    %v5883 = vsub.f32 %v5795, %v5867
    %v5884 = vsub.f32 %v5796, %v5868
    %v5885 = vsub.f32 %v5797, %v5869
    %v5886 = vsub.f32 %v5798, %v5870
    %v5887 = vsub.f32 %v5799, %v5871
    %v5888 = vsub.f32 %v5800, %v5872
    %v5889 = vsub.f32 %v5801, %v5873
    %v5890 = vsub.f32 %v5802, %v5874
    %v5891 = vmul.f32 %v5875, %v5875
    %v5892 = vmul.f32 %v5876, %v5876
    %v5893 = vmul.f32 %v5877, %v5877
    %v5894 = vmul.f32 %v5878, %v5878
    %v5895 = vmul.f32 %v5879, %v5879
    %v5896 = vmul.f32 %v5880, %v5880
    %v5897 = vmul.f32 %v5881, %v5881
    %v5898 = vmul.f32 %v5882, %v5882
    %v5899 = vmul.f32 %v5883, %v5883
    %v5900 = vmul.f32 %v5884, %v5884
    %v5901 = vmul.f32 %v5885, %v5885
    %v5902 = vmul.f32 %v5886, %v5886
    %v5903 = vmul.f32 %v5887, %v5887
    %v5904 = vmul.f32 %v5888, %v5888
    %v5905 = vmul.f32 %v5889, %v5889
    %v5906 = vmul.f32 %v5890, %v5890
    %v5907 = vsel %vm64, %v5891, 0.0
    %5908 = vadd.xlane.f32.xlu0 %v5907
    %v5909 = vpop.xlane.xlu0 %5908
    %v5910 = vsel %vm64, %v5892, 0.0
    %5911 = vadd.xlane.f32.xlu0 %v5910
    %v5912 = vpop.xlane.xlu0 %5911
    %v5913 = vsel %vm64, %v5893, 0.0
    %5914 = vadd.xlane.f32.xlu0 %v5913
    %v5915 = vpop.xlane.xlu0 %5914
    %v5916 = vsel %vm64, %v5894, 0.0
    %5917 = vadd.xlane.f32.xlu0 %v5916
    %v5918 = vpop.xlane.xlu0 %5917
    %v5919 = vsel %vm64, %v5895, 0.0
    %5920 = vadd.xlane.f32.xlu0 %v5919
    %v5921 = vpop.xlane.xlu0 %5920
    %v5922 = vsel %vm64, %v5896, 0.0
    %5923 = vadd.xlane.f32.xlu0 %v5922
    %v5924 = vpop.xlane.xlu0 %5923
    %v5925 = vsel %vm64, %v5897, 0.0
    %5926 = vadd.xlane.f32.xlu0 %v5925
    %v5927 = vpop.xlane.xlu0 %5926
    %v5928 = vsel %vm64, %v5898, 0.0
    %5929 = vadd.xlane.f32.xlu0 %v5928
    %v5930 = vpop.xlane.xlu0 %5929
    %v5931 = vsel %vm64, %v5899, 0.0
    %5932 = vadd.xlane.f32.xlu0 %v5931
    %v5933 = vpop.xlane.xlu0 %5932
    %v5934 = vsel %vm64, %v5900, 0.0
    %5935 = vadd.xlane.f32.xlu0 %v5934
    %v5936 = vpop.xlane.xlu0 %5935
    %v5937 = vsel %vm64, %v5901, 0.0
    %5938 = vadd.xlane.f32.xlu0 %v5937
    %v5939 = vpop.xlane.xlu0 %5938
    %v5940 = vsel %vm64, %v5902, 0.0
    %5941 = vadd.xlane.f32.xlu0 %v5940
    %v5942 = vpop.xlane.xlu0 %5941
    %v5943 = vsel %vm64, %v5903, 0.0
    %5944 = vadd.xlane.f32.xlu0 %v5943
    %v5945 = vpop.xlane.xlu0 %5944
    %v5946 = vsel %vm64, %v5904, 0.0
    %5947 = vadd.xlane.f32.xlu0 %v5946
    %v5948 = vpop.xlane.xlu0 %5947
    %v5949 = vsel %vm64, %v5905, 0.0
    %5950 = vadd.xlane.f32.xlu0 %v5949
    %v5951 = vpop.xlane.xlu0 %5950
    %v5952 = vsel %vm64, %v5906, 0.0
    %5953 = vadd.xlane.f32.xlu0 %v5952
    %v5954 = vpop.xlane.xlu0 %5953
    %v5955 = vmul.f32 %v5909, %v113
    %v5956 = vmul.f32 %v5912, %v113
    %v5957 = vmul.f32 %v5915, %v113
    %v5958 = vmul.f32 %v5918, %v113
    %v5959 = vmul.f32 %v5921, %v113
    %v5960 = vmul.f32 %v5924, %v113
    %v5961 = vmul.f32 %v5927, %v113
    %v5962 = vmul.f32 %v5930, %v113
    %v5963 = vmul.f32 %v5933, %v113
    %v5964 = vmul.f32 %v5936, %v113
    %v5965 = vmul.f32 %v5939, %v113
    %v5966 = vmul.f32 %v5942, %v113
    %v5967 = vmul.f32 %v5945, %v113
    %v5968 = vmul.f32 %v5948, %v113
    %v5969 = vmul.f32 %v5951, %v113
    %v5970 = vmul.f32 %v5954, %v113
    %v5971 = vadd.f32 %v5955, 1e-05
    %v5972 = vadd.f32 %v5956, 1e-05
    %v5973 = vadd.f32 %v5957, 1e-05
    %v5974 = vadd.f32 %v5958, 1e-05
    %v5975 = vadd.f32 %v5959, 1e-05
    %v5976 = vadd.f32 %v5960, 1e-05
    %v5977 = vadd.f32 %v5961, 1e-05
    %v5978 = vadd.f32 %v5962, 1e-05
    %v5979 = vadd.f32 %v5963, 1e-05
    %v5980 = vadd.f32 %v5964, 1e-05
    %v5981 = vadd.f32 %v5965, 1e-05
    %v5982 = vadd.f32 %v5966, 1e-05
    %v5983 = vadd.f32 %v5967, 1e-05
    %v5984 = vadd.f32 %v5968, 1e-05
    %v5985 = vadd.f32 %v5969, 1e-05
    %v5986 = vadd.f32 %v5970, 1e-05
    %v5987 = vrsqrt.pop %v5971
    %v5988 = vrsqrt.pop %v5972
    %v5989 = vrsqrt.pop %v5973
    %v5990 = vrsqrt.pop %v5974
    %v5991 = vrsqrt.pop %v5975
    %v5992 = vrsqrt.pop %v5976
    %v5993 = vrsqrt.pop %v5977
    %v5994 = vrsqrt.pop %v5978
    %v5995 = vrsqrt.pop %v5979
    %v5996 = vrsqrt.pop %v5980
    %v5997 = vrsqrt.pop %v5981
    %v5998 = vrsqrt.pop %v5982
    %v5999 = vrsqrt.pop %v5983
    %v6000 = vrsqrt.pop %v5984
    %v6001 = vrsqrt.pop %v5985
    %v6002 = vrsqrt.pop %v5986
    %v6003 = vmul.f32 %v5875, %v5987
    %v6004 = vmul.f32 %v5876, %v5988
    %v6005 = vmul.f32 %v5877, %v5989
    %v6006 = vmul.f32 %v5878, %v5990
    %v6007 = vmul.f32 %v5879, %v5991
    %v6008 = vmul.f32 %v5880, %v5992
    %v6009 = vmul.f32 %v5881, %v5993
    %v6010 = vmul.f32 %v5882, %v5994
    %v6011 = vmul.f32 %v5883, %v5995
    %v6012 = vmul.f32 %v5884, %v5996
    %v6013 = vmul.f32 %v5885, %v5997
    %v6014 = vmul.f32 %v5886, %v5998
    %v6015 = vmul.f32 %v5887, %v5999
    %v6016 = vmul.f32 %v5888, %v6000
    %v6017 = vmul.f32 %v5889, %v6001
    %v6018 = vmul.f32 %v5890, %v6002
    %v6019 = vlaneseq
    %v6020 = vshrl.u32 %v6019, 7
    %v6021 = vsub.s32 0, %v6020
    %v6022 = vrot.slane %v5803, %v6021
    %v6023 = vmul.f32 %v6003, %v6022
    %v6024 = vmul.f32 %v6004, %v6022
    %v6025 = vmul.f32 %v6005, %v6022
    %v6026 = vmul.f32 %v6006, %v6022
    %v6027 = vmul.f32 %v6007, %v6022
    %v6028 = vmul.f32 %v6008, %v6022
    %v6029 = vmul.f32 %v6009, %v6022
    %v6030 = vmul.f32 %v6010, %v6022
    %v6031 = vmul.f32 %v6011, %v6022
    %v6032 = vmul.f32 %v6012, %v6022
    %v6033 = vmul.f32 %v6013, %v6022
    %v6034 = vmul.f32 %v6014, %v6022
    %v6035 = vmul.f32 %v6015, %v6022
    %v6036 = vmul.f32 %v6016, %v6022
    %v6037 = vmul.f32 %v6017, %v6022
    %v6038 = vmul.f32 %v6018, %v6022
    %v6039 = vlaneseq
    %v6040 = vshrl.u32 %v6039, 7
    %v6041 = vsub.s32 0, %v6040
    %v6042 = vrot.slane %v5804, %v6041
    %v6043 = vadd.f32 %v6023, %v6042
    %v6044 = vadd.f32 %v6024, %v6042
    %v6045 = vadd.f32 %v6025, %v6042
    %v6046 = vadd.f32 %v6026, %v6042
    %v6047 = vadd.f32 %v6027, %v6042
    %v6048 = vadd.f32 %v6028, %v6042
    %v6049 = vadd.f32 %v6029, %v6042
    %v6050 = vadd.f32 %v6030, %v6042
    %v6051 = vadd.f32 %v6031, %v6042
    %v6052 = vadd.f32 %v6032, %v6042
    %v6053 = vadd.f32 %v6033, %v6042
    %v6054 = vadd.f32 %v6034, %v6042
    %v6055 = vadd.f32 %v6035, %v6042
    %v6056 = vadd.f32 %v6036, %v6042
    %v6057 = vadd.f32 %v6037, %v6042
    %v6058 = vadd.f32 %v6038, %v6042
    %s6059 = scalar_lea.vmem %s2, 32
    %v6060 = vld [vmem:[%s6059] sm:$0xff]
    %v6061 = vld [vmem:[%s6059 + $0x8] sm:$0xff]
    %v6062 = vld [vmem:[%s6059 + $0x10] sm:$0xff]
    %v6063 = vld [vmem:[%s6059 + $0x18] sm:$0xff]
    %v6064 = vlaneseq
    %v6065 = vshrl.u32 %v6064, 7
    %v6066 = vsub.s32 0, %v6065
    %v6067 = vrot.slane %v5807, %v6066
    %v6069 = vsel %vm64, %v6043, 0
    %v6072 = vsel %vm64, %v6044, 0
    %v6075 = vsel %vm64, %v6045, 0
    %v6078 = vsel %vm64, %v6046, 0
    %v6081 = vsel %vm64, %v6047, 0
    %v6084 = vsel %vm64, %v6048, 0
    %v6087 = vsel %vm64, %v6049, 0
    %v6090 = vsel %vm64, %v6050, 0
    %v6093 = vsel %vm64, %v6051, 0
    %v6096 = vsel %vm64, %v6052, 0
    %v6099 = vsel %vm64, %v6053, 0
    %v6102 = vsel %vm64, %v6054, 0
    %v6105 = vsel %vm64, %v6055, 0
    %v6108 = vsel %vm64, %v6056, 0
    %v6111 = vsel %vm64, %v6057, 0
    %v6114 = vsel %vm64, %v6058, 0
    %6116 = vmatprep.subr.mxu0 0.0
    %6117 = vmatpush1.msra.mxu0 %v6060
    %6118 = vmatprep.subr.mxu0 0.0
    %6119 = vmatpush1.msra.mxu0 %v6061
    %6120 = vmatprep.subr.mxu0 0.0
    %6121 = vmatpush1.msra.mxu0 %v6062
    %6122 = vmatprep.subr.mxu0 0.0
    %6123 = vmatpush1.msra.mxu0 %v6063
    %6124 = vmatprep.subr.mxu0 0.0
    %6125 = vmatpush1.msra.mxu0 0.0
    %6126 = vmatprep.subr.mxu0 0.0
    %6127 = vmatpush1.msra.mxu0 0.0
    %6128 = vmatprep.subr.mxu0 0.0
    %6129 = vmatpush1.msra.mxu0 0.0
    %6130 = vmatprep.subr.mxu0 0.0
    %6131 = vmatpush1.msra.mxu0 0.0
    %6132 = vmatprep.subr.mxu0 0.0
    %6133 = vmatpush1.msra.mxu0 0.0
    %6134 = vmatprep.subr.mxu0 0.0
    %6135 = vmatpush1.msra.mxu0 0.0
    %6136 = vmatprep.subr.mxu0 0.0
    %6137 = vmatpush1.msra.mxu0 0.0
    %6138 = vmatprep.subr.mxu0 0.0
    %6139 = vmatpush1.msra.mxu0 0.0
    %6140 = vmatprep.subr.mxu0 0.0
    %6141 = vmatpush1.msra.mxu0 0.0
    %6142 = vmatprep.subr.mxu0 0.0
    %6143 = vmatpush1.msra.mxu0 0.0
    %6144 = vmatprep.subr.mxu0 0.0
    %6145 = vmatpush1.msra.mxu0 0.0
    %6146 = vmatprep.subr.mxu0 0.0
    %6147 = vmatpush1.msra.mxu0 0.0
    %6148 = vmatprep.subr.mxu0 0.0
    %6149 = vmatpush1.msra.mxu0 0.0
    %6150 = vmatprep.subr.mxu0 0.0
    %6151 = vmatpush1.msra.mxu0 0.0
    %6152 = vmatprep.subr.mxu0 0.0
    %6153 = vmatpush1.msra.mxu0 0.0
    %6154 = vmatprep.subr.mxu0 0.0
    %6155 = vmatpush1.msra.mxu0 0.0
    %6156 = vmatprep.subr.mxu0 0.0
    %6157 = vmatpush1.msra.mxu0 0.0
    %6158 = vmatprep.subr.mxu0 0.0
    %6159 = vmatpush1.msra.mxu0 0.0
    %6160 = vmatprep.subr.mxu0 0.0
    %6161 = vmatpush1.msra.mxu0 0.0
    %6162 = vmatprep.subr.mxu0 0.0
    %6163 = vmatpush1.msra.mxu0 0.0
    %6164 = vmatprep.subr.mxu0 0.0
    %6165 = vmatpush1.msra.mxu0 0.0
    %6166 = vmatprep.subr.mxu0 0.0
    %6167 = vmatpush1.msra.mxu0 0.0
    %6168 = vmatprep.subr.mxu0 0.0
    %6169 = vmatpush1.msra.mxu0 0.0
    %6170 = vmatprep.subr.mxu0 0.0
    %6171 = vmatpush1.msra.mxu0 0.0
    %6172 = vmatprep.subr.mxu0 0.0
    %6173 = vmatpush1.msra.mxu0 0.0
    %6174 = vmatprep.subr.mxu0 0.0
    %6175 = vmatpush1.msra.mxu0 0.0
    %6176 = vmatprep.subr.mxu0 0.0
    %6177 = vmatpush1.msra.mxu0 0.0
    %6178 = vmatprep.subr.mxu0 0.0
    %6179 = vmatpush1.msra.mxu0 0.0
    %6180 = vmatprep.mubr.f32.mxu0 0.0
    %6181 = vmatmul.mubr.f32.gmra.mrb[0].mxu0 %v6069
    %v6182 = vpop.f32.mrb[0].mxu0
    %v6183 = vadd.f32 %v6067, %v6182
    %v6184 = vpop.f32.mrb[0].mxu0
    %6185 = vmatprep.mubr.f32.mxu0 0.0
    %6186 = vmatmul.mubr.f32.gmra.mrb[0].mxu0 %v6072
    %v6187 = vpop.f32.mrb[0].mxu0
    %v6188 = vadd.f32 %v6067, %v6187
    %v6189 = vpop.f32.mrb[0].mxu0
    %6190 = vmatprep.mubr.f32.mxu0 0.0
    %6191 = vmatmul.mubr.f32.gmra.mrb[0].mxu0 %v6075
    %v6192 = vpop.f32.mrb[0].mxu0
    %v6193 = vadd.f32 %v6067, %v6192
    %v6194 = vpop.f32.mrb[0].mxu0
    %6195 = vmatprep.mubr.f32.mxu0 0.0
    %6196 = vmatmul.mubr.f32.gmra.mrb[0].mxu0 %v6078
    %v6197 = vpop.f32.mrb[0].mxu0
    %v6198 = vadd.f32 %v6067, %v6197
    %v6199 = vpop.f32.mrb[0].mxu0
    %6200 = vmatprep.mubr.f32.mxu0 0.0
    %6201 = vmatmul.mubr.f32.gmra.mrb[0].mxu0 %v6081
    %v6202 = vpop.f32.mrb[0].mxu0
    %v6203 = vadd.f32 %v6067, %v6202
    %v6204 = vpop.f32.mrb[0].mxu0
    %6205 = vmatprep.mubr.f32.mxu0 0.0
    %6206 = vmatmul.mubr.f32.gmra.mrb[0].mxu0 %v6084
    %v6207 = vpop.f32.mrb[0].mxu0
    %v6208 = vadd.f32 %v6067, %v6207
    %v6209 = vpop.f32.mrb[0].mxu0
    %6210 = vmatprep.mubr.f32.mxu0 0.0
    %6211 = vmatmul.mubr.f32.gmra.mrb[0].mxu0 %v6087
    %v6212 = vpop.f32.mrb[0].mxu0
    %v6213 = vadd.f32 %v6067, %v6212
    %v6214 = vpop.f32.mrb[0].mxu0
    %6215 = vmatprep.mubr.f32.mxu0 0.0
    %6216 = vmatmul.mubr.f32.gmra.mrb[0].mxu0 %v6090
    %v6217 = vpop.f32.mrb[0].mxu0
    %v6218 = vadd.f32 %v6067, %v6217
    %v6219 = vpop.f32.mrb[0].mxu0
    %6220 = vmatprep.mubr.f32.mxu0 0.0
    %6221 = vmatmul.mubr.f32.gmra.mrb[0].mxu0 %v6093
    %v6222 = vpop.f32.mrb[0].mxu0
    %v6223 = vadd.f32 %v6067, %v6222
    %v6224 = vpop.f32.mrb[0].mxu0
    %6225 = vmatprep.mubr.f32.mxu0 0.0
    %6226 = vmatmul.mubr.f32.gmra.mrb[0].mxu0 %v6096
    %v6227 = vpop.f32.mrb[0].mxu0
    %v6228 = vadd.f32 %v6067, %v6227
    %v6229 = vpop.f32.mrb[0].mxu0
    %6230 = vmatprep.mubr.f32.mxu0 0.0
    %6231 = vmatmul.mubr.f32.gmra.mrb[0].mxu0 %v6099
    %v6232 = vpop.f32.mrb[0].mxu0
    %v6233 = vadd.f32 %v6067, %v6232
    %v6234 = vpop.f32.mrb[0].mxu0
    %6235 = vmatprep.mubr.f32.mxu0 0.0
    %6236 = vmatmul.mubr.f32.gmra.mrb[0].mxu0 %v6102
    %v6237 = vpop.f32.mrb[0].mxu0
    %v6238 = vadd.f32 %v6067, %v6237
    %v6239 = vpop.f32.mrb[0].mxu0
    %6240 = vmatprep.mubr.f32.mxu0 0.0
    %6241 = vmatmul.mubr.f32.gmra.mrb[0].mxu0 %v6105
    %v6242 = vpop.f32.mrb[0].mxu0
    %v6243 = vadd.f32 %v6067, %v6242
    %v6244 = vpop.f32.mrb[0].mxu0
    %6245 = vmatprep.mubr.f32.mxu0 0.0
    %6246 = vmatmul.mubr.f32.gmra.mrb[0].mxu0 %v6108
    %v6247 = vpop.f32.mrb[0].mxu0
    %v6248 = vadd.f32 %v6067, %v6247
    %v6249 = vpop.f32.mrb[0].mxu0
    %6250 = vmatprep.mubr.f32.mxu0 0.0
    %6251 = vmatmul.mubr.f32.gmra.mrb[0].mxu0 %v6111
    %v6252 = vpop.f32.mrb[0].mxu0
    %v6253 = vadd.f32 %v6067, %v6252
    %v6254 = vpop.f32.mrb[0].mxu0
    %6255 = vmatprep.mubr.f32.mxu0 0.0
    %6256 = vmatmul.mubr.f32.gmra.mrb[0].mxu0 %v6114
    %v6257 = vpop.f32.mrb[0].mxu0
    %v6258 = vadd.f32 %v6067, %v6257
    %v6259 = vpop.f32.mrb[0].mxu0
    %6260 = vdwg.mxu0
    %6269 = vrot.lane.b32.xlu0 %v6183, 104
    %v6270 = vpop.permute.xlu0 %6269
    %6271 = vrot.lane.b32.xlu0 %v6188, 104
    %v6272 = vpop.permute.xlu0 %6271
    %6273 = vrot.lane.b32.xlu0 %v6193, 104
    %v6274 = vpop.permute.xlu0 %6273
    %6275 = vrot.lane.b32.xlu0 %v6198, 104
    %v6276 = vpop.permute.xlu0 %6275
    %6277 = vrot.lane.b32.xlu0 %v6203, 104
    %v6278 = vpop.permute.xlu0 %6277
    %6279 = vrot.lane.b32.xlu0 %v6208, 104
    %v6280 = vpop.permute.xlu0 %6279
    %6281 = vrot.lane.b32.xlu0 %v6213, 104
    %v6282 = vpop.permute.xlu0 %6281
    %6283 = vrot.lane.b32.xlu0 %v6218, 104
    %v6284 = vpop.permute.xlu0 %6283
    %6285 = vrot.lane.b32.xlu0 %v6183, 80
    %v6286 = vpop.permute.xlu0 %6285
    %6287 = vrot.lane.b32.xlu0 %v6188, 80
    %v6288 = vpop.permute.xlu0 %6287
    %6289 = vrot.lane.b32.xlu0 %v6193, 80
    %v6290 = vpop.permute.xlu0 %6289
    %6291 = vrot.lane.b32.xlu0 %v6198, 80
    %v6292 = vpop.permute.xlu0 %6291
    %6293 = vrot.lane.b32.xlu0 %v6203, 80
    %v6294 = vpop.permute.xlu0 %6293
    %6295 = vrot.lane.b32.xlu0 %v6208, 80
    %v6296 = vpop.permute.xlu0 %6295
    %6297 = vrot.lane.b32.xlu0 %v6213, 80
    %v6298 = vpop.permute.xlu0 %6297
    %6299 = vrot.lane.b32.xlu0 %v6218, 80
    %v6300 = vpop.permute.xlu0 %6299
    %6301 = vrot.lane.b32.xlu0 %v6183, 56
    %v6302 = vpop.permute.xlu0 %6301
    %6303 = vrot.lane.b32.xlu0 %v6188, 56
    %v6304 = vpop.permute.xlu0 %6303
    %6305 = vrot.lane.b32.xlu0 %v6193, 56
    %v6306 = vpop.permute.xlu0 %6305
    %6307 = vrot.lane.b32.xlu0 %v6198, 56
    %v6308 = vpop.permute.xlu0 %6307
    %6309 = vrot.lane.b32.xlu0 %v6203, 56
    %v6310 = vpop.permute.xlu0 %6309
    %6311 = vrot.lane.b32.xlu0 %v6208, 56
    %v6312 = vpop.permute.xlu0 %6311
    %6313 = vrot.lane.b32.xlu0 %v6213, 56
    %v6314 = vpop.permute.xlu0 %6313
    %6315 = vrot.lane.b32.xlu0 %v6218, 56
    %v6316 = vpop.permute.xlu0 %6315
    %6325 = vrot.lane.b32.xlu0 %v6223, 104
    %v6326 = vpop.permute.xlu0 %6325
    %6327 = vrot.lane.b32.xlu0 %v6228, 104
    %v6328 = vpop.permute.xlu0 %6327
    %6329 = vrot.lane.b32.xlu0 %v6233, 104
    %v6330 = vpop.permute.xlu0 %6329
    %6331 = vrot.lane.b32.xlu0 %v6238, 104
    %v6332 = vpop.permute.xlu0 %6331
    %6333 = vrot.lane.b32.xlu0 %v6243, 104
    %v6334 = vpop.permute.xlu0 %6333
    %6335 = vrot.lane.b32.xlu0 %v6248, 104
    %v6336 = vpop.permute.xlu0 %6335
    %6337 = vrot.lane.b32.xlu0 %v6253, 104
    %v6338 = vpop.permute.xlu0 %6337
    %6339 = vrot.lane.b32.xlu0 %v6258, 104
    %v6340 = vpop.permute.xlu0 %6339
    %6341 = vrot.lane.b32.xlu0 %v6223, 80
    %v6342 = vpop.permute.xlu0 %6341
    %6343 = vrot.lane.b32.xlu0 %v6228, 80
    %v6344 = vpop.permute.xlu0 %6343
    %6345 = vrot.lane.b32.xlu0 %v6233, 80
    %v6346 = vpop.permute.xlu0 %6345
    %6347 = vrot.lane.b32.xlu0 %v6238, 80
    %v6348 = vpop.permute.xlu0 %6347
    %6349 = vrot.lane.b32.xlu0 %v6243, 80
    %v6350 = vpop.permute.xlu0 %6349
    %6351 = vrot.lane.b32.xlu0 %v6248, 80
    %v6352 = vpop.permute.xlu0 %6351
    %6353 = vrot.lane.b32.xlu0 %v6253, 80
    %v6354 = vpop.permute.xlu0 %6353
    %6355 = vrot.lane.b32.xlu0 %v6258, 80
    %v6356 = vpop.permute.xlu0 %6355
    %6357 = vrot.lane.b32.xlu0 %v6223, 56
    %v6358 = vpop.permute.xlu0 %6357
    %6359 = vrot.lane.b32.xlu0 %v6228, 56
    %v6360 = vpop.permute.xlu0 %6359
    %6361 = vrot.lane.b32.xlu0 %v6233, 56
    %v6362 = vpop.permute.xlu0 %6361
    %6363 = vrot.lane.b32.xlu0 %v6238, 56
    %v6364 = vpop.permute.xlu0 %6363
    %6365 = vrot.lane.b32.xlu0 %v6243, 56
    %v6366 = vpop.permute.xlu0 %6365
    %6367 = vrot.lane.b32.xlu0 %v6248, 56
    %v6368 = vpop.permute.xlu0 %6367
    %6369 = vrot.lane.b32.xlu0 %v6253, 56
    %v6370 = vpop.permute.xlu0 %6369
    %6371 = vrot.lane.b32.xlu0 %v6258, 56
    %v6372 = vpop.permute.xlu0 %6371
    %s6373 = scalar_lea.vmem [#allocation2], 256
    %v6374 = vld [vmem:[%s6373] sm:$0xf]
    %v6375 = vld [vmem:[%s6373 + $0x4] sm:$0xf]
    %v6376 = vld [vmem:[%s6373 + $0x8] sm:$0xf]
    %v6377 = vld [vmem:[%s6373 + $0xc] sm:$0xf]
    %v6378 = vld [vmem:[%s6373 + $0x10] sm:$0xf]
    %v6379 = vld [vmem:[%s6373 + $0x14] sm:$0xf]
    %v6380 = vld [vmem:[%s6373 + $0x18] sm:$0xf]
    %v6381 = vld [vmem:[%s6373 + $0x1c] sm:$0xf]
    %v6382 = vld [vmem:[%s6373 + $0x20] sm:$0xf]
    %v6383 = vld [vmem:[%s6373 + $0x24] sm:$0xf]
    %v6384 = vld [vmem:[%s6373 + $0x28] sm:$0xf]
    %v6385 = vld [vmem:[%s6373 + $0x2c] sm:$0xf]
    %v6386 = vld [vmem:[%s6373 + $0x30] sm:$0xf]
    %v6387 = vld [vmem:[%s6373 + $0x34] sm:$0xf]
    %v6388 = vld [vmem:[%s6373 + $0x38] sm:$0xf]
    %v6389 = vld [vmem:[%s6373 + $0x3c] sm:$0xf]
    %v6390 = vld [vmem:[%s6373 + $0x40] sm:$0xf]
    %v6391 = vld [vmem:[%s6373 + $0x44] sm:$0xf]
    %v6392 = vld [vmem:[%s6373 + $0x48] sm:$0xf]
    %v6393 = vld [vmem:[%s6373 + $0x4c] sm:$0xf]
    %v6394 = vld [vmem:[%s6373 + $0x50] sm:$0xf]
    %v6395 = vld [vmem:[%s6373 + $0x54] sm:$0xf]
    %v6396 = vld [vmem:[%s6373 + $0x58] sm:$0xf]
    %v6397 = vld [vmem:[%s6373 + $0x5c] sm:$0xf]
    %v6398 = vld [vmem:[%s6373 + $0x60] sm:$0xf]
    %v6399 = vld [vmem:[%s6373 + $0x64] sm:$0xf]
    %v6400 = vld [vmem:[%s6373 + $0x68] sm:$0xf]
    %v6401 = vld [vmem:[%s6373 + $0x6c] sm:$0xf]
    %v6402 = vld [vmem:[%s6373 + $0x70] sm:$0xf]
    %v6403 = vld [vmem:[%s6373 + $0x74] sm:$0xf]
    %v6404 = vld [vmem:[%s6373 + $0x78] sm:$0xf]
    %v6405 = vld [vmem:[%s6373 + $0x7c] sm:$0xf]
    %v6406 = vld [vmem:[%s6373 + $0x80] sm:$0xf]
    %v6407 = vld [vmem:[%s6373 + $0x84] sm:$0xf]
    %v6408 = vld [vmem:[%s6373 + $0x88] sm:$0xf]
    %v6409 = vld [vmem:[%s6373 + $0x8c] sm:$0xf]
    %v6410 = vld [vmem:[%s6373 + $0x90] sm:$0xf]
    %v6411 = vld [vmem:[%s6373 + $0x94] sm:$0xf]
    %v6412 = vld [vmem:[%s6373 + $0x98] sm:$0xf]
    %v6413 = vld [vmem:[%s6373 + $0x9c] sm:$0xf]
    %v6414 = vld [vmem:[%s6373 + $0xa0] sm:$0xf]
    %v6415 = vld [vmem:[%s6373 + $0xa4] sm:$0xf]
    %v6416 = vld [vmem:[%s6373 + $0xa8] sm:$0xf]
    %v6417 = vld [vmem:[%s6373 + $0xac] sm:$0xf]
    %v6418 = vld [vmem:[%s6373 + $0xb0] sm:$0xf]
    %v6419 = vld [vmem:[%s6373 + $0xb4] sm:$0xf]
    %v6420 = vld [vmem:[%s6373 + $0xb8] sm:$0xf]
    %v6421 = vld [vmem:[%s6373 + $0xbc] sm:$0xf]
    %v6422 = vld [vmem:[%s6373 + $0xc0] sm:$0xf]
    %v6423 = vld [vmem:[%s6373 + $0xc4] sm:$0xf]
    %v6424 = vld [vmem:[%s6373 + $0xc8] sm:$0xf]
    %v6425 = vld [vmem:[%s6373 + $0xcc] sm:$0xf]
    %v6426 = vld [vmem:[%s6373 + $0xd0] sm:$0xf]
    %v6427 = vld [vmem:[%s6373 + $0xd4] sm:$0xf]
    %v6428 = vld [vmem:[%s6373 + $0xd8] sm:$0xf]
    %v6429 = vld [vmem:[%s6373 + $0xdc] sm:$0xf]
    %v6430 = vld [vmem:[%s6373 + $0xe0] sm:$0xf]
    %v6431 = vld [vmem:[%s6373 + $0xe4] sm:$0xf]
    %v6432 = vld [vmem:[%s6373 + $0xe8] sm:$0xf]
    %v6433 = vld [vmem:[%s6373 + $0xec] sm:$0xf]
    %v6434 = vld [vmem:[%s6373 + $0xf0] sm:$0xf]
    %v6435 = vld [vmem:[%s6373 + $0xf4] sm:$0xf]
    %v6436 = vld [vmem:[%s6373 + $0xf8] sm:$0xf]
    %v6437 = vld [vmem:[%s6373 + $0xfc] sm:$0xf]
    %v6438 = vunpack.c.l.bf16 %v6374
    %v6439 = vunpack.c.l.bf16 %v6375
    %v6440 = vunpack.c.l.bf16 %v6376
    %v6441 = vunpack.c.l.bf16 %v6377
    %v6442 = vunpack.c.l.bf16 %v6378
    %v6443 = vunpack.c.l.bf16 %v6379
    %v6444 = vunpack.c.l.bf16 %v6380
    %v6445 = vunpack.c.l.bf16 %v6381
    %v6446 = vunpack.c.l.bf16 %v6382
    %v6447 = vunpack.c.l.bf16 %v6383
    %v6448 = vunpack.c.l.bf16 %v6384
    %v6449 = vunpack.c.l.bf16 %v6385
    %v6450 = vunpack.c.l.bf16 %v6386
    %v6451 = vunpack.c.l.bf16 %v6387
    %v6452 = vunpack.c.l.bf16 %v6388
    %v6453 = vunpack.c.l.bf16 %v6389
    %v6454 = vunpack.c.l.bf16 %v6390
    %v6455 = vunpack.c.l.bf16 %v6391
    %v6456 = vunpack.c.l.bf16 %v6392
    %v6457 = vunpack.c.l.bf16 %v6393
    %v6458 = vunpack.c.l.bf16 %v6394
    %v6459 = vunpack.c.l.bf16 %v6395
    %v6460 = vunpack.c.l.bf16 %v6396
    %v6461 = vunpack.c.l.bf16 %v6397
    %v6462 = vunpack.c.l.bf16 %v6398
    %v6463 = vunpack.c.l.bf16 %v6399
    %v6464 = vunpack.c.l.bf16 %v6400
    %v6465 = vunpack.c.l.bf16 %v6401
    %v6466 = vunpack.c.l.bf16 %v6402
    %v6467 = vunpack.c.l.bf16 %v6403
    %v6468 = vunpack.c.l.bf16 %v6404
    %v6469 = vunpack.c.l.bf16 %v6405
    %v6470 = vunpack.c.l.bf16 %v6406
    %v6471 = vunpack.c.l.bf16 %v6407
    %v6472 = vunpack.c.l.bf16 %v6408
    %v6473 = vunpack.c.l.bf16 %v6409
    %v6474 = vunpack.c.l.bf16 %v6410
    %v6475 = vunpack.c.l.bf16 %v6411
    %v6476 = vunpack.c.l.bf16 %v6412
    %v6477 = vunpack.c.l.bf16 %v6413
    %v6478 = vunpack.c.l.bf16 %v6414
    %v6479 = vunpack.c.l.bf16 %v6415
    %v6480 = vunpack.c.l.bf16 %v6416
    %v6481 = vunpack.c.l.bf16 %v6417
    %v6482 = vunpack.c.l.bf16 %v6418
    %v6483 = vunpack.c.l.bf16 %v6419
    %v6484 = vunpack.c.l.bf16 %v6420
    %v6485 = vunpack.c.l.bf16 %v6421
    %v6486 = vunpack.c.l.bf16 %v6422
    %v6487 = vunpack.c.l.bf16 %v6423
    %v6488 = vunpack.c.l.bf16 %v6424
    %v6489 = vunpack.c.l.bf16 %v6425
    %v6490 = vunpack.c.l.bf16 %v6426
    %v6491 = vunpack.c.l.bf16 %v6427
    %v6492 = vunpack.c.l.bf16 %v6428
    %v6493 = vunpack.c.l.bf16 %v6429
    %v6494 = vunpack.c.l.bf16 %v6430
    %v6495 = vunpack.c.l.bf16 %v6431
    %v6496 = vunpack.c.l.bf16 %v6432
    %v6497 = vunpack.c.l.bf16 %v6433
    %v6498 = vunpack.c.l.bf16 %v6434
    %v6499 = vunpack.c.l.bf16 %v6435
    %v6500 = vunpack.c.l.bf16 %v6436
    %v6501 = vunpack.c.l.bf16 %v6437
    %6502 = vrot.lane.b32.xlu0 %v6183, 120
    %v6503 = vpop.permute.xlu0 %6502
    %6504 = vrot.lane.b32.xlu0 %v6188, 120
    %v6505 = vpop.permute.xlu0 %6504
    %6506 = vrot.lane.b32.xlu0 %v6193, 120
    %v6507 = vpop.permute.xlu0 %6506
    %6508 = vrot.lane.b32.xlu0 %v6198, 120
    %v6509 = vpop.permute.xlu0 %6508
    %6510 = vrot.lane.b32.xlu0 %v6203, 120
    %v6511 = vpop.permute.xlu0 %6510
    %6512 = vrot.lane.b32.xlu0 %v6208, 120
    %v6513 = vpop.permute.xlu0 %6512
    %6514 = vrot.lane.b32.xlu0 %v6213, 120
    %v6515 = vpop.permute.xlu0 %6514
    %6516 = vrot.lane.b32.xlu0 %v6218, 120
    %v6517 = vpop.permute.xlu0 %6516
    %v6518 = vsel %vm771, %v6183, 0
    %v6520 = vsel %vm771, %v6188, 0
    %v6522 = vsel %vm771, %v6193, 0
    %v6524 = vsel %vm771, %v6198, 0
    %v6526 = vsel %vm771, %v6203, 0
    %v6528 = vsel %vm771, %v6208, 0
    %v6530 = vsel %vm771, %v6213, 0
    %v6532 = vsel %vm771, %v6218, 0
    %v6534 = vsel %vm771, %v6503, 0
    %v6536 = vsel %vm771, %v6505, 0
    %v6538 = vsel %vm771, %v6507, 0
    %v6540 = vsel %vm771, %v6509, 0
    %v6542 = vsel %vm771, %v6511, 0
    %v6544 = vsel %vm771, %v6513, 0
    %v6546 = vsel %vm771, %v6515, 0
    %v6548 = vsel %vm771, %v6517, 0
    %6550 = vmatprep.subr.mxu0 0.0
    %6551 = vmatpush1.xpose.msra.mxu0 %v6534
    %6552 = vmatprep.subr.mxu0 0.0
    %6553 = vmatpush1.xpose.msra.mxu0 %v6536
    %6554 = vmatprep.subr.mxu0 0.0
    %6555 = vmatpush1.xpose.msra.mxu0 %v6538
    %6556 = vmatprep.subr.mxu0 0.0
    %6557 = vmatpush1.xpose.msra.mxu0 %v6540
    %6558 = vmatprep.subr.mxu0 0.0
    %6559 = vmatpush1.xpose.msra.mxu0 %v6542
    %6560 = vmatprep.subr.mxu0 0.0
    %6561 = vmatpush1.xpose.msra.mxu0 %v6544
    %6562 = vmatprep.subr.mxu0 0.0
    %6563 = vmatpush1.xpose.msra.mxu0 %v6546
    %6564 = vmatprep.subr.mxu0 0.0
    %6565 = vmatpush1.xpose.msra.mxu0 %v6548
    %6566 = vmatprep.subr.mxu0 0.0
    %6567 = vmatpush1.xpose.msra.mxu0 0.0
    %6568 = vmatprep.subr.mxu0 0.0
    %6569 = vmatpush1.xpose.msra.mxu0 0.0
    %6570 = vmatprep.subr.mxu0 0.0
    %6571 = vmatpush1.xpose.msra.mxu0 0.0
    %6572 = vmatprep.subr.mxu0 0.0
    %6573 = vmatpush1.xpose.msra.mxu0 0.0
    %6574 = vmatprep.subr.mxu0 0.0
    %6575 = vmatpush1.xpose.msra.mxu0 0.0
    %6576 = vmatprep.subr.mxu0 0.0
    %6577 = vmatpush1.xpose.msra.mxu0 0.0
    %6578 = vmatprep.subr.mxu0 0.0
    %6579 = vmatpush1.xpose.msra.mxu0 0.0
    %6580 = vmatprep.subr.mxu0 0.0
    %6581 = vmatpush1.xpose.msra.mxu0 0.0
    %6582 = vmatprep.subr.mxu0 0.0
    %6583 = vmatpush1.xpose.msra.mxu0 0.0
    %6584 = vmatprep.subr.mxu0 0.0
    %6585 = vmatpush1.xpose.msra.mxu0 0.0
    %6586 = vmatprep.subr.mxu0 0.0
    %6587 = vmatpush1.xpose.msra.mxu0 0.0
    %6588 = vmatprep.subr.mxu0 0.0
    %6589 = vmatpush1.xpose.msra.mxu0 0.0
    %6590 = vmatprep.subr.mxu0 0.0
    %6591 = vmatpush1.xpose.msra.mxu0 0.0
    %6592 = vmatprep.subr.mxu0 0.0
    %6593 = vmatpush1.xpose.msra.mxu0 0.0
    %6594 = vmatprep.subr.mxu0 0.0
    %6595 = vmatpush1.xpose.msra.mxu0 0.0
    %6596 = vmatprep.subr.mxu0 0.0
    %6597 = vmatpush1.xpose.msra.mxu0 0.0
    %6598 = vmatprep.subr.mxu0 0.0
    %6599 = vmatpush1.xpose.msra.mxu0 0.0
    %6600 = vmatprep.subr.mxu0 0.0
    %6601 = vmatpush1.xpose.msra.mxu0 0.0
    %6602 = vmatprep.subr.mxu0 0.0
    %6603 = vmatpush1.xpose.msra.mxu0 0.0
    %6604 = vmatprep.subr.mxu0 0.0
    %6605 = vmatpush1.xpose.msra.mxu0 0.0
    %6606 = vmatprep.subr.mxu0 0.0
    %6607 = vmatpush1.xpose.msra.mxu0 0.0
    %6608 = vmatprep.subr.mxu0 0.0
    %6609 = vmatpush1.xpose.msra.mxu0 0.0
    %6610 = vmatprep.subr.mxu0 0.0
    %6611 = vmatpush1.xpose.msra.mxu0 0.0
    %6612 = vmatprep.subr.mxu0 0.0
    %6613 = vmatpush1.xpose.msra.mxu0 0.0
    %6614 = vmatprep.mubr.f32.mxu0 0.0
    %6615 = vmatmul.mubr.f32.gmra.mrb[0].mxu0 %v6518
    %v6616 = vpop.f32.mrb[0].mxu0
    %v6617 = vadd.f32 %v6438, %v6616
    %v6618 = vpop.f32.mrb[0].mxu0
    %6619 = vmatprep.mubr.f32.mxu0 0.0
    %6620 = vmatmul.mubr.f32.gmra.mrb[0].mxu0 %v6520
    %v6621 = vpop.f32.mrb[0].mxu0
    %v6622 = vadd.f32 %v6439, %v6621
    %v6623 = vpop.f32.mrb[0].mxu0
    %6624 = vmatprep.mubr.f32.mxu0 0.0
    %6625 = vmatmul.mubr.f32.gmra.mrb[0].mxu0 %v6522
    %v6626 = vpop.f32.mrb[0].mxu0
    %v6627 = vadd.f32 %v6440, %v6626
    %v6628 = vpop.f32.mrb[0].mxu0
    %6629 = vmatprep.mubr.f32.mxu0 0.0
    %6630 = vmatmul.mubr.f32.gmra.mrb[0].mxu0 %v6524
    %v6631 = vpop.f32.mrb[0].mxu0
    %v6632 = vadd.f32 %v6441, %v6631
    %v6633 = vpop.f32.mrb[0].mxu0
    %6634 = vmatprep.mubr.f32.mxu0 0.0
    %6635 = vmatmul.mubr.f32.gmra.mrb[0].mxu0 %v6526
    %v6636 = vpop.f32.mrb[0].mxu0
    %v6637 = vadd.f32 %v6442, %v6636
    %v6638 = vpop.f32.mrb[0].mxu0
    %6639 = vmatprep.mubr.f32.mxu0 0.0
    %6640 = vmatmul.mubr.f32.gmra.mrb[0].mxu0 %v6528
    %v6641 = vpop.f32.mrb[0].mxu0
    %v6642 = vadd.f32 %v6443, %v6641
    %v6643 = vpop.f32.mrb[0].mxu0
    %6644 = vmatprep.mubr.f32.mxu0 0.0
    %6645 = vmatmul.mubr.f32.gmra.mrb[0].mxu0 %v6530
    %v6646 = vpop.f32.mrb[0].mxu0
    %v6647 = vadd.f32 %v6444, %v6646
    %v6648 = vpop.f32.mrb[0].mxu0
    %6649 = vmatprep.mubr.f32.mxu0 0.0
    %6650 = vmatmul.mubr.f32.gmra.mrb[0].mxu0 %v6532
    %v6651 = vpop.f32.mrb[0].mxu0
    %v6652 = vadd.f32 %v6445, %v6651
    %v6653 = vpop.f32.mrb[0].mxu0
    %6654 = vdwg.mxu0
    %6655 = vrot.lane.b32.xlu0 %v6270, 120
    %v6656 = vpop.permute.xlu0 %6655
    %6657 = vrot.lane.b32.xlu0 %v6272, 120
    %v6658 = vpop.permute.xlu0 %6657
    %6659 = vrot.lane.b32.xlu0 %v6274, 120
    %v6660 = vpop.permute.xlu0 %6659
    %6661 = vrot.lane.b32.xlu0 %v6276, 120
    %v6662 = vpop.permute.xlu0 %6661
    %6663 = vrot.lane.b32.xlu0 %v6278, 120
    %v6664 = vpop.permute.xlu0 %6663
    %6665 = vrot.lane.b32.xlu0 %v6280, 120
    %v6666 = vpop.permute.xlu0 %6665
    %6667 = vrot.lane.b32.xlu0 %v6282, 120
    %v6668 = vpop.permute.xlu0 %6667
    %6669 = vrot.lane.b32.xlu0 %v6284, 120
    %v6670 = vpop.permute.xlu0 %6669
    %v6671 = vsel %vm771, %v6270, 0
    %v6673 = vsel %vm771, %v6272, 0
    %v6675 = vsel %vm771, %v6274, 0
    %v6677 = vsel %vm771, %v6276, 0
    %v6679 = vsel %vm771, %v6278, 0
    %v6681 = vsel %vm771, %v6280, 0
    %v6683 = vsel %vm771, %v6282, 0
    %v6685 = vsel %vm771, %v6284, 0
    %v6687 = vsel %vm771, %v6656, 0
    %v6689 = vsel %vm771, %v6658, 0
    %v6691 = vsel %vm771, %v6660, 0
    %v6693 = vsel %vm771, %v6662, 0
    %v6695 = vsel %vm771, %v6664, 0
    %v6697 = vsel %vm771, %v6666, 0
    %v6699 = vsel %vm771, %v6668, 0
    %v6701 = vsel %vm771, %v6670, 0
    %6703 = vmatprep.subr.mxu0 0.0
    %6704 = vmatpush1.xpose.msra.mxu0 %v6687
    %6705 = vmatprep.subr.mxu0 0.0
    %6706 = vmatpush1.xpose.msra.mxu0 %v6689
    %6707 = vmatprep.subr.mxu0 0.0
    %6708 = vmatpush1.xpose.msra.mxu0 %v6691
    %6709 = vmatprep.subr.mxu0 0.0
    %6710 = vmatpush1.xpose.msra.mxu0 %v6693
    %6711 = vmatprep.subr.mxu0 0.0
    %6712 = vmatpush1.xpose.msra.mxu0 %v6695
    %6713 = vmatprep.subr.mxu0 0.0
    %6714 = vmatpush1.xpose.msra.mxu0 %v6697
    %6715 = vmatprep.subr.mxu0 0.0
    %6716 = vmatpush1.xpose.msra.mxu0 %v6699
    %6717 = vmatprep.subr.mxu0 0.0
    %6718 = vmatpush1.xpose.msra.mxu0 %v6701
    %6719 = vmatprep.subr.mxu0 0.0
    %6720 = vmatpush1.xpose.msra.mxu0 0.0
    %6721 = vmatprep.subr.mxu0 0.0
    %6722 = vmatpush1.xpose.msra.mxu0 0.0
    %6723 = vmatprep.subr.mxu0 0.0
    %6724 = vmatpush1.xpose.msra.mxu0 0.0
    %6725 = vmatprep.subr.mxu0 0.0
    %6726 = vmatpush1.xpose.msra.mxu0 0.0
    %6727 = vmatprep.subr.mxu0 0.0
    %6728 = vmatpush1.xpose.msra.mxu0 0.0
    %6729 = vmatprep.subr.mxu0 0.0
    %6730 = vmatpush1.xpose.msra.mxu0 0.0
    %6731 = vmatprep.subr.mxu0 0.0
    %6732 = vmatpush1.xpose.msra.mxu0 0.0
    %6733 = vmatprep.subr.mxu0 0.0
    %6734 = vmatpush1.xpose.msra.mxu0 0.0
    %6735 = vmatprep.subr.mxu0 0.0
    %6736 = vmatpush1.xpose.msra.mxu0 0.0
    %6737 = vmatprep.subr.mxu0 0.0
    %6738 = vmatpush1.xpose.msra.mxu0 0.0
    %6739 = vmatprep.subr.mxu0 0.0
    %6740 = vmatpush1.xpose.msra.mxu0 0.0
    %6741 = vmatprep.subr.mxu0 0.0
    %6742 = vmatpush1.xpose.msra.mxu0 0.0
    %6743 = vmatprep.subr.mxu0 0.0
    %6744 = vmatpush1.xpose.msra.mxu0 0.0
    %6745 = vmatprep.subr.mxu0 0.0
    %6746 = vmatpush1.xpose.msra.mxu0 0.0
    %6747 = vmatprep.subr.mxu0 0.0
    %6748 = vmatpush1.xpose.msra.mxu0 0.0
    %6749 = vmatprep.subr.mxu0 0.0
    %6750 = vmatpush1.xpose.msra.mxu0 0.0
    %6751 = vmatprep.subr.mxu0 0.0
    %6752 = vmatpush1.xpose.msra.mxu0 0.0
    %6753 = vmatprep.subr.mxu0 0.0
    %6754 = vmatpush1.xpose.msra.mxu0 0.0
    %6755 = vmatprep.subr.mxu0 0.0
    %6756 = vmatpush1.xpose.msra.mxu0 0.0
    %6757 = vmatprep.subr.mxu0 0.0
    %6758 = vmatpush1.xpose.msra.mxu0 0.0
    %6759 = vmatprep.subr.mxu0 0.0
    %6760 = vmatpush1.xpose.msra.mxu0 0.0
    %6761 = vmatprep.subr.mxu0 0.0
    %6762 = vmatpush1.xpose.msra.mxu0 0.0
    %6763 = vmatprep.subr.mxu0 0.0
    %6764 = vmatpush1.xpose.msra.mxu0 0.0
    %6765 = vmatprep.subr.mxu0 0.0
    %6766 = vmatpush1.xpose.msra.mxu0 0.0
    %6767 = vmatprep.mubr.f32.mxu0 0.0
    %6768 = vmatmul.mubr.f32.gmra.mrb[0].mxu0 %v6671
    %v6769 = vpop.f32.mrb[0].mxu0
    %v6770 = vadd.f32 %v6446, %v6769
    %v6771 = vpop.f32.mrb[0].mxu0
    %6772 = vmatprep.mubr.f32.mxu0 0.0
    %6773 = vmatmul.mubr.f32.gmra.mrb[0].mxu0 %v6673
    %v6774 = vpop.f32.mrb[0].mxu0
    %v6775 = vadd.f32 %v6447, %v6774
    %v6776 = vpop.f32.mrb[0].mxu0
    %6777 = vmatprep.mubr.f32.mxu0 0.0
    %6778 = vmatmul.mubr.f32.gmra.mrb[0].mxu0 %v6675
    %v6779 = vpop.f32.mrb[0].mxu0
    %v6780 = vadd.f32 %v6448, %v6779
    %v6781 = vpop.f32.mrb[0].mxu0
    %6782 = vmatprep.mubr.f32.mxu0 0.0
    %6783 = vmatmul.mubr.f32.gmra.mrb[0].mxu0 %v6677
    %v6784 = vpop.f32.mrb[0].mxu0
    %v6785 = vadd.f32 %v6449, %v6784
    %v6786 = vpop.f32.mrb[0].mxu0
    %6787 = vmatprep.mubr.f32.mxu0 0.0
    %6788 = vmatmul.mubr.f32.gmra.mrb[0].mxu0 %v6679
    %v6789 = vpop.f32.mrb[0].mxu0
    %v6790 = vadd.f32 %v6450, %v6789
    %v6791 = vpop.f32.mrb[0].mxu0
    %6792 = vmatprep.mubr.f32.mxu0 0.0
    %6793 = vmatmul.mubr.f32.gmra.mrb[0].mxu0 %v6681
    %v6794 = vpop.f32.mrb[0].mxu0
    %v6795 = vadd.f32 %v6451, %v6794
    %v6796 = vpop.f32.mrb[0].mxu0
    %6797 = vmatprep.mubr.f32.mxu0 0.0
    %6798 = vmatmul.mubr.f32.gmra.mrb[0].mxu0 %v6683
    %v6799 = vpop.f32.mrb[0].mxu0
    %v6800 = vadd.f32 %v6452, %v6799
    %v6801 = vpop.f32.mrb[0].mxu0
    %6802 = vmatprep.mubr.f32.mxu0 0.0
    %6803 = vmatmul.mubr.f32.gmra.mrb[0].mxu0 %v6685
    %v6804 = vpop.f32.mrb[0].mxu0
    %v6805 = vadd.f32 %v6453, %v6804
    %v6806 = vpop.f32.mrb[0].mxu0
    %6807 = vdwg.mxu0
    %6808 = vrot.lane.b32.xlu0 %v6286, 120
    %v6809 = vpop.permute.xlu0 %6808
    %6810 = vrot.lane.b32.xlu0 %v6288, 120
    %v6811 = vpop.permute.xlu0 %6810
    %6812 = vrot.lane.b32.xlu0 %v6290, 120
    %v6813 = vpop.permute.xlu0 %6812
    %6814 = vrot.lane.b32.xlu0 %v6292, 120
    %v6815 = vpop.permute.xlu0 %6814
    %6816 = vrot.lane.b32.xlu0 %v6294, 120
    %v6817 = vpop.permute.xlu0 %6816
    %6818 = vrot.lane.b32.xlu0 %v6296, 120
    %v6819 = vpop.permute.xlu0 %6818
    %6820 = vrot.lane.b32.xlu0 %v6298, 120
    %v6821 = vpop.permute.xlu0 %6820
    %6822 = vrot.lane.b32.xlu0 %v6300, 120
    %v6823 = vpop.permute.xlu0 %6822
    %v6824 = vsel %vm771, %v6286, 0
    %v6826 = vsel %vm771, %v6288, 0
    %v6828 = vsel %vm771, %v6290, 0
    %v6830 = vsel %vm771, %v6292, 0
    %v6832 = vsel %vm771, %v6294, 0
    %v6834 = vsel %vm771, %v6296, 0
    %v6836 = vsel %vm771, %v6298, 0
    %v6838 = vsel %vm771, %v6300, 0
    %v6840 = vsel %vm771, %v6809, 0
    %v6842 = vsel %vm771, %v6811, 0
    %v6844 = vsel %vm771, %v6813, 0
    %v6846 = vsel %vm771, %v6815, 0
    %v6848 = vsel %vm771, %v6817, 0
    %v6850 = vsel %vm771, %v6819, 0
    %v6852 = vsel %vm771, %v6821, 0
    %v6854 = vsel %vm771, %v6823, 0
    %6856 = vmatprep.subr.mxu0 0.0
    %6857 = vmatpush1.xpose.msra.mxu0 %v6840
    %6858 = vmatprep.subr.mxu0 0.0
    %6859 = vmatpush1.xpose.msra.mxu0 %v6842
    %6860 = vmatprep.subr.mxu0 0.0
    %6861 = vmatpush1.xpose.msra.mxu0 %v6844
    %6862 = vmatprep.subr.mxu0 0.0
    %6863 = vmatpush1.xpose.msra.mxu0 %v6846
    %6864 = vmatprep.subr.mxu0 0.0
    %6865 = vmatpush1.xpose.msra.mxu0 %v6848
    %6866 = vmatprep.subr.mxu0 0.0
    %6867 = vmatpush1.xpose.msra.mxu0 %v6850
    %6868 = vmatprep.subr.mxu0 0.0
    %6869 = vmatpush1.xpose.msra.mxu0 %v6852
    %6870 = vmatprep.subr.mxu0 0.0
    %6871 = vmatpush1.xpose.msra.mxu0 %v6854
    %6872 = vmatprep.subr.mxu0 0.0
    %6873 = vmatpush1.xpose.msra.mxu0 0.0
    %6874 = vmatprep.subr.mxu0 0.0
    %6875 = vmatpush1.xpose.msra.mxu0 0.0
    %6876 = vmatprep.subr.mxu0 0.0
    %6877 = vmatpush1.xpose.msra.mxu0 0.0
    %6878 = vmatprep.subr.mxu0 0.0
    %6879 = vmatpush1.xpose.msra.mxu0 0.0
    %6880 = vmatprep.subr.mxu0 0.0
    %6881 = vmatpush1.xpose.msra.mxu0 0.0
    %6882 = vmatprep.subr.mxu0 0.0
    %6883 = vmatpush1.xpose.msra.mxu0 0.0
    %6884 = vmatprep.subr.mxu0 0.0
    %6885 = vmatpush1.xpose.msra.mxu0 0.0
    %6886 = vmatprep.subr.mxu0 0.0
    %6887 = vmatpush1.xpose.msra.mxu0 0.0
    %6888 = vmatprep.subr.mxu0 0.0
    %6889 = vmatpush1.xpose.msra.mxu0 0.0
    %6890 = vmatprep.subr.mxu0 0.0
    %6891 = vmatpush1.xpose.msra.mxu0 0.0
    %6892 = vmatprep.subr.mxu0 0.0
    %6893 = vmatpush1.xpose.msra.mxu0 0.0
    %6894 = vmatprep.subr.mxu0 0.0
    %6895 = vmatpush1.xpose.msra.mxu0 0.0
    %6896 = vmatprep.subr.mxu0 0.0
    %6897 = vmatpush1.xpose.msra.mxu0 0.0
    %6898 = vmatprep.subr.mxu0 0.0
    %6899 = vmatpush1.xpose.msra.mxu0 0.0
    %6900 = vmatprep.subr.mxu0 0.0
    %6901 = vmatpush1.xpose.msra.mxu0 0.0
    %6902 = vmatprep.subr.mxu0 0.0
    %6903 = vmatpush1.xpose.msra.mxu0 0.0
    %6904 = vmatprep.subr.mxu0 0.0
    %6905 = vmatpush1.xpose.msra.mxu0 0.0
    %6906 = vmatprep.subr.mxu0 0.0
    %6907 = vmatpush1.xpose.msra.mxu0 0.0
    %6908 = vmatprep.subr.mxu0 0.0
    %6909 = vmatpush1.xpose.msra.mxu0 0.0
    %6910 = vmatprep.subr.mxu0 0.0
    %6911 = vmatpush1.xpose.msra.mxu0 0.0
    %6912 = vmatprep.subr.mxu0 0.0
    %6913 = vmatpush1.xpose.msra.mxu0 0.0
    %6914 = vmatprep.subr.mxu0 0.0
    %6915 = vmatpush1.xpose.msra.mxu0 0.0
    %6916 = vmatprep.subr.mxu0 0.0
    %6917 = vmatpush1.xpose.msra.mxu0 0.0
    %6918 = vmatprep.subr.mxu0 0.0
    %6919 = vmatpush1.xpose.msra.mxu0 0.0
    %6920 = vmatprep.mubr.f32.mxu0 0.0
    %6921 = vmatmul.mubr.f32.gmra.mrb[0].mxu0 %v6824
    %v6922 = vpop.f32.mrb[0].mxu0
    %v6923 = vadd.f32 %v6454, %v6922
    %v6924 = vpop.f32.mrb[0].mxu0
    %6925 = vmatprep.mubr.f32.mxu0 0.0
    %6926 = vmatmul.mubr.f32.gmra.mrb[0].mxu0 %v6826
    %v6927 = vpop.f32.mrb[0].mxu0
    %v6928 = vadd.f32 %v6455, %v6927
    %v6929 = vpop.f32.mrb[0].mxu0
    %6930 = vmatprep.mubr.f32.mxu0 0.0
    %6931 = vmatmul.mubr.f32.gmra.mrb[0].mxu0 %v6828
    %v6932 = vpop.f32.mrb[0].mxu0
    %v6933 = vadd.f32 %v6456, %v6932
    %v6934 = vpop.f32.mrb[0].mxu0
    %6935 = vmatprep.mubr.f32.mxu0 0.0
    %6936 = vmatmul.mubr.f32.gmra.mrb[0].mxu0 %v6830
    %v6937 = vpop.f32.mrb[0].mxu0
    %v6938 = vadd.f32 %v6457, %v6937
    %v6939 = vpop.f32.mrb[0].mxu0
    %6940 = vmatprep.mubr.f32.mxu0 0.0
    %6941 = vmatmul.mubr.f32.gmra.mrb[0].mxu0 %v6832
    %v6942 = vpop.f32.mrb[0].mxu0
    %v6943 = vadd.f32 %v6458, %v6942
    %v6944 = vpop.f32.mrb[0].mxu0
    %6945 = vmatprep.mubr.f32.mxu0 0.0
    %6946 = vmatmul.mubr.f32.gmra.mrb[0].mxu0 %v6834
    %v6947 = vpop.f32.mrb[0].mxu0
    %v6948 = vadd.f32 %v6459, %v6947
    %v6949 = vpop.f32.mrb[0].mxu0
    %6950 = vmatprep.mubr.f32.mxu0 0.0
    %6951 = vmatmul.mubr.f32.gmra.mrb[0].mxu0 %v6836
    %v6952 = vpop.f32.mrb[0].mxu0
    %v6953 = vadd.f32 %v6460, %v6952
    %v6954 = vpop.f32.mrb[0].mxu0
    %6955 = vmatprep.mubr.f32.mxu0 0.0
    %6956 = vmatmul.mubr.f32.gmra.mrb[0].mxu0 %v6838
    %v6957 = vpop.f32.mrb[0].mxu0
    %v6958 = vadd.f32 %v6461, %v6957
    %v6959 = vpop.f32.mrb[0].mxu0
    %6960 = vdwg.mxu0
    %6961 = vrot.lane.b32.xlu0 %v6302, 120
    %v6962 = vpop.permute.xlu0 %6961
    %6963 = vrot.lane.b32.xlu0 %v6304, 120
    %v6964 = vpop.permute.xlu0 %6963
    %6965 = vrot.lane.b32.xlu0 %v6306, 120
    %v6966 = vpop.permute.xlu0 %6965
    %6967 = vrot.lane.b32.xlu0 %v6308, 120
    %v6968 = vpop.permute.xlu0 %6967
    %6969 = vrot.lane.b32.xlu0 %v6310, 120
    %v6970 = vpop.permute.xlu0 %6969
    %6971 = vrot.lane.b32.xlu0 %v6312, 120
    %v6972 = vpop.permute.xlu0 %6971
    %6973 = vrot.lane.b32.xlu0 %v6314, 120
    %v6974 = vpop.permute.xlu0 %6973
    %6975 = vrot.lane.b32.xlu0 %v6316, 120
    %v6976 = vpop.permute.xlu0 %6975
    %v6977 = vsel %vm771, %v6302, 0
    %v6979 = vsel %vm771, %v6304, 0
    %v6981 = vsel %vm771, %v6306, 0
    %v6983 = vsel %vm771, %v6308, 0
    %v6985 = vsel %vm771, %v6310, 0
    %v6987 = vsel %vm771, %v6312, 0
    %v6989 = vsel %vm771, %v6314, 0
    %v6991 = vsel %vm771, %v6316, 0
    %v6993 = vsel %vm771, %v6962, 0
    %v6995 = vsel %vm771, %v6964, 0
    %v6997 = vsel %vm771, %v6966, 0
    %v6999 = vsel %vm771, %v6968, 0
    %v7001 = vsel %vm771, %v6970, 0
    %v7003 = vsel %vm771, %v6972, 0
    %v7005 = vsel %vm771, %v6974, 0
    %v7007 = vsel %vm771, %v6976, 0
    %7009 = vmatprep.subr.mxu0 0.0
    %7010 = vmatpush1.xpose.msra.mxu0 %v6993
    %7011 = vmatprep.subr.mxu0 0.0
    %7012 = vmatpush1.xpose.msra.mxu0 %v6995
    %7013 = vmatprep.subr.mxu0 0.0
    %7014 = vmatpush1.xpose.msra.mxu0 %v6997
    %7015 = vmatprep.subr.mxu0 0.0
    %7016 = vmatpush1.xpose.msra.mxu0 %v6999
    %7017 = vmatprep.subr.mxu0 0.0
    %7018 = vmatpush1.xpose.msra.mxu0 %v7001
    %7019 = vmatprep.subr.mxu0 0.0
    %7020 = vmatpush1.xpose.msra.mxu0 %v7003
    %7021 = vmatprep.subr.mxu0 0.0
    %7022 = vmatpush1.xpose.msra.mxu0 %v7005
    %7023 = vmatprep.subr.mxu0 0.0
    %7024 = vmatpush1.xpose.msra.mxu0 %v7007
    %7025 = vmatprep.subr.mxu0 0.0
    %7026 = vmatpush1.xpose.msra.mxu0 0.0
    %7027 = vmatprep.subr.mxu0 0.0
    %7028 = vmatpush1.xpose.msra.mxu0 0.0
    %7029 = vmatprep.subr.mxu0 0.0
    %7030 = vmatpush1.xpose.msra.mxu0 0.0
    %7031 = vmatprep.subr.mxu0 0.0
    %7032 = vmatpush1.xpose.msra.mxu0 0.0
    %7033 = vmatprep.subr.mxu0 0.0
    %7034 = vmatpush1.xpose.msra.mxu0 0.0
    %7035 = vmatprep.subr.mxu0 0.0
    %7036 = vmatpush1.xpose.msra.mxu0 0.0
    %7037 = vmatprep.subr.mxu0 0.0
    %7038 = vmatpush1.xpose.msra.mxu0 0.0
    %7039 = vmatprep.subr.mxu0 0.0
    %7040 = vmatpush1.xpose.msra.mxu0 0.0
    %7041 = vmatprep.subr.mxu0 0.0
    %7042 = vmatpush1.xpose.msra.mxu0 0.0
    %7043 = vmatprep.subr.mxu0 0.0
    %7044 = vmatpush1.xpose.msra.mxu0 0.0
    %7045 = vmatprep.subr.mxu0 0.0
    %7046 = vmatpush1.xpose.msra.mxu0 0.0
    %7047 = vmatprep.subr.mxu0 0.0
    %7048 = vmatpush1.xpose.msra.mxu0 0.0
    %7049 = vmatprep.subr.mxu0 0.0
    %7050 = vmatpush1.xpose.msra.mxu0 0.0
    %7051 = vmatprep.subr.mxu0 0.0
    %7052 = vmatpush1.xpose.msra.mxu0 0.0
    %7053 = vmatprep.subr.mxu0 0.0
    %7054 = vmatpush1.xpose.msra.mxu0 0.0
    %7055 = vmatprep.subr.mxu0 0.0
    %7056 = vmatpush1.xpose.msra.mxu0 0.0
    %7057 = vmatprep.subr.mxu0 0.0
    %7058 = vmatpush1.xpose.msra.mxu0 0.0
    %7059 = vmatprep.subr.mxu0 0.0
    %7060 = vmatpush1.xpose.msra.mxu0 0.0
    %7061 = vmatprep.subr.mxu0 0.0
    %7062 = vmatpush1.xpose.msra.mxu0 0.0
    %7063 = vmatprep.subr.mxu0 0.0
    %7064 = vmatpush1.xpose.msra.mxu0 0.0
    %7065 = vmatprep.subr.mxu0 0.0
    %7066 = vmatpush1.xpose.msra.mxu0 0.0
    %7067 = vmatprep.subr.mxu0 0.0
    %7068 = vmatpush1.xpose.msra.mxu0 0.0
    %7069 = vmatprep.subr.mxu0 0.0
    %7070 = vmatpush1.xpose.msra.mxu0 0.0
    %7071 = vmatprep.subr.mxu0 0.0
    %7072 = vmatpush1.xpose.msra.mxu0 0.0
    %7073 = vmatprep.mubr.f32.mxu0 0.0
    %7074 = vmatmul.mubr.f32.gmra.mrb[0].mxu0 %v6977
    %v7075 = vpop.f32.mrb[0].mxu0
    %v7076 = vadd.f32 %v6462, %v7075
    %v7077 = vpop.f32.mrb[0].mxu0
    %7078 = vmatprep.mubr.f32.mxu0 0.0
    %7079 = vmatmul.mubr.f32.gmra.mrb[0].mxu0 %v6979
    %v7080 = vpop.f32.mrb[0].mxu0
    %v7081 = vadd.f32 %v6463, %v7080
    %v7082 = vpop.f32.mrb[0].mxu0
    %7083 = vmatprep.mubr.f32.mxu0 0.0
    %7084 = vmatmul.mubr.f32.gmra.mrb[0].mxu0 %v6981
    %v7085 = vpop.f32.mrb[0].mxu0
    %v7086 = vadd.f32 %v6464, %v7085
    %v7087 = vpop.f32.mrb[0].mxu0
    %7088 = vmatprep.mubr.f32.mxu0 0.0
    %7089 = vmatmul.mubr.f32.gmra.mrb[0].mxu0 %v6983
    %v7090 = vpop.f32.mrb[0].mxu0
    %v7091 = vadd.f32 %v6465, %v7090
    %v7092 = vpop.f32.mrb[0].mxu0
    %7093 = vmatprep.mubr.f32.mxu0 0.0
    %7094 = vmatmul.mubr.f32.gmra.mrb[0].mxu0 %v6985
    %v7095 = vpop.f32.mrb[0].mxu0
    %v7096 = vadd.f32 %v6466, %v7095
    %v7097 = vpop.f32.mrb[0].mxu0
    %7098 = vmatprep.mubr.f32.mxu0 0.0
    %7099 = vmatmul.mubr.f32.gmra.mrb[0].mxu0 %v6987
    %v7100 = vpop.f32.mrb[0].mxu0
    %v7101 = vadd.f32 %v6467, %v7100
    %v7102 = vpop.f32.mrb[0].mxu0
    %7103 = vmatprep.mubr.f32.mxu0 0.0
    %7104 = vmatmul.mubr.f32.gmra.mrb[0].mxu0 %v6989
    %v7105 = vpop.f32.mrb[0].mxu0
    %v7106 = vadd.f32 %v6468, %v7105
    %v7107 = vpop.f32.mrb[0].mxu0
    %7108 = vmatprep.mubr.f32.mxu0 0.0
    %7109 = vmatmul.mubr.f32.gmra.mrb[0].mxu0 %v6991
    %v7110 = vpop.f32.mrb[0].mxu0
    %v7111 = vadd.f32 %v6469, %v7110
    %v7112 = vpop.f32.mrb[0].mxu0
    %7113 = vdwg.mxu0
    %7114 = vrot.lane.b32.xlu0 %v6223, 120
    %v7115 = vpop.permute.xlu0 %7114
    %7116 = vrot.lane.b32.xlu0 %v6228, 120
    %v7117 = vpop.permute.xlu0 %7116
    %7118 = vrot.lane.b32.xlu0 %v6233, 120
    %v7119 = vpop.permute.xlu0 %7118
    %7120 = vrot.lane.b32.xlu0 %v6238, 120
    %v7121 = vpop.permute.xlu0 %7120
    %7122 = vrot.lane.b32.xlu0 %v6243, 120
    %v7123 = vpop.permute.xlu0 %7122
    %7124 = vrot.lane.b32.xlu0 %v6248, 120
    %v7125 = vpop.permute.xlu0 %7124
    %7126 = vrot.lane.b32.xlu0 %v6253, 120
    %v7127 = vpop.permute.xlu0 %7126
    %7128 = vrot.lane.b32.xlu0 %v6258, 120
    %v7129 = vpop.permute.xlu0 %7128
    %v7130 = vsel %vm771, %v6223, 0
    %v7132 = vsel %vm771, %v6228, 0
    %v7134 = vsel %vm771, %v6233, 0
    %v7136 = vsel %vm771, %v6238, 0
    %v7138 = vsel %vm771, %v6243, 0
    %v7140 = vsel %vm771, %v6248, 0
    %v7142 = vsel %vm771, %v6253, 0
    %v7144 = vsel %vm771, %v6258, 0
    %v7146 = vsel %vm771, %v7115, 0
    %v7148 = vsel %vm771, %v7117, 0
    %v7150 = vsel %vm771, %v7119, 0
    %v7152 = vsel %vm771, %v7121, 0
    %v7154 = vsel %vm771, %v7123, 0
    %v7156 = vsel %vm771, %v7125, 0
    %v7158 = vsel %vm771, %v7127, 0
    %v7160 = vsel %vm771, %v7129, 0
    %7162 = vmatprep.subr.mxu0 0.0
    %7163 = vmatpush1.xpose.msra.mxu0 %v7146
    %7164 = vmatprep.subr.mxu0 0.0
    %7165 = vmatpush1.xpose.msra.mxu0 %v7148
    %7166 = vmatprep.subr.mxu0 0.0
    %7167 = vmatpush1.xpose.msra.mxu0 %v7150
    %7168 = vmatprep.subr.mxu0 0.0
    %7169 = vmatpush1.xpose.msra.mxu0 %v7152
    %7170 = vmatprep.subr.mxu0 0.0
    %7171 = vmatpush1.xpose.msra.mxu0 %v7154
    %7172 = vmatprep.subr.mxu0 0.0
    %7173 = vmatpush1.xpose.msra.mxu0 %v7156
    %7174 = vmatprep.subr.mxu0 0.0
    %7175 = vmatpush1.xpose.msra.mxu0 %v7158
    %7176 = vmatprep.subr.mxu0 0.0
    %7177 = vmatpush1.xpose.msra.mxu0 %v7160
    %7178 = vmatprep.subr.mxu0 0.0
    %7179 = vmatpush1.xpose.msra.mxu0 0.0
    %7180 = vmatprep.subr.mxu0 0.0
    %7181 = vmatpush1.xpose.msra.mxu0 0.0
    %7182 = vmatprep.subr.mxu0 0.0
    %7183 = vmatpush1.xpose.msra.mxu0 0.0
    %7184 = vmatprep.subr.mxu0 0.0
    %7185 = vmatpush1.xpose.msra.mxu0 0.0
    %7186 = vmatprep.subr.mxu0 0.0
    %7187 = vmatpush1.xpose.msra.mxu0 0.0
    %7188 = vmatprep.subr.mxu0 0.0
    %7189 = vmatpush1.xpose.msra.mxu0 0.0
    %7190 = vmatprep.subr.mxu0 0.0
    %7191 = vmatpush1.xpose.msra.mxu0 0.0
    %7192 = vmatprep.subr.mxu0 0.0
    %7193 = vmatpush1.xpose.msra.mxu0 0.0
    %7194 = vmatprep.subr.mxu0 0.0
    %7195 = vmatpush1.xpose.msra.mxu0 0.0
    %7196 = vmatprep.subr.mxu0 0.0
    %7197 = vmatpush1.xpose.msra.mxu0 0.0
    %7198 = vmatprep.subr.mxu0 0.0
    %7199 = vmatpush1.xpose.msra.mxu0 0.0
    %7200 = vmatprep.subr.mxu0 0.0
    %7201 = vmatpush1.xpose.msra.mxu0 0.0
    %7202 = vmatprep.subr.mxu0 0.0
    %7203 = vmatpush1.xpose.msra.mxu0 0.0
    %7204 = vmatprep.subr.mxu0 0.0
    %7205 = vmatpush1.xpose.msra.mxu0 0.0
    %7206 = vmatprep.subr.mxu0 0.0
    %7207 = vmatpush1.xpose.msra.mxu0 0.0
    %7208 = vmatprep.subr.mxu0 0.0
    %7209 = vmatpush1.xpose.msra.mxu0 0.0
    %7210 = vmatprep.subr.mxu0 0.0
    %7211 = vmatpush1.xpose.msra.mxu0 0.0
    %7212 = vmatprep.subr.mxu0 0.0
    %7213 = vmatpush1.xpose.msra.mxu0 0.0
    %7214 = vmatprep.subr.mxu0 0.0
    %7215 = vmatpush1.xpose.msra.mxu0 0.0
    %7216 = vmatprep.subr.mxu0 0.0
    %7217 = vmatpush1.xpose.msra.mxu0 0.0
    %7218 = vmatprep.subr.mxu0 0.0
    %7219 = vmatpush1.xpose.msra.mxu0 0.0
    %7220 = vmatprep.subr.mxu0 0.0
    %7221 = vmatpush1.xpose.msra.mxu0 0.0
    %7222 = vmatprep.subr.mxu0 0.0
    %7223 = vmatpush1.xpose.msra.mxu0 0.0
    %7224 = vmatprep.subr.mxu0 0.0
    %7225 = vmatpush1.xpose.msra.mxu0 0.0
    %7226 = vmatprep.mubr.f32.mxu0 0.0
    %7227 = vmatmul.mubr.f32.gmra.mrb[0].mxu0 %v7130
    %v7228 = vpop.f32.mrb[0].mxu0
    %v7229 = vadd.f32 %v6470, %v7228
    %v7230 = vpop.f32.mrb[0].mxu0
    %7231 = vmatprep.mubr.f32.mxu0 0.0
    %7232 = vmatmul.mubr.f32.gmra.mrb[0].mxu0 %v7132
    %v7233 = vpop.f32.mrb[0].mxu0
    %v7234 = vadd.f32 %v6471, %v7233
    %v7235 = vpop.f32.mrb[0].mxu0
    %7236 = vmatprep.mubr.f32.mxu0 0.0
    %7237 = vmatmul.mubr.f32.gmra.mrb[0].mxu0 %v7134
    %v7238 = vpop.f32.mrb[0].mxu0
    %v7239 = vadd.f32 %v6472, %v7238
    %v7240 = vpop.f32.mrb[0].mxu0
    %7241 = vmatprep.mubr.f32.mxu0 0.0
    %7242 = vmatmul.mubr.f32.gmra.mrb[0].mxu0 %v7136
    %v7243 = vpop.f32.mrb[0].mxu0
    %v7244 = vadd.f32 %v6473, %v7243
    %v7245 = vpop.f32.mrb[0].mxu0
    %7246 = vmatprep.mubr.f32.mxu0 0.0
    %7247 = vmatmul.mubr.f32.gmra.mrb[0].mxu0 %v7138
    %v7248 = vpop.f32.mrb[0].mxu0
    %v7249 = vadd.f32 %v6474, %v7248
    %v7250 = vpop.f32.mrb[0].mxu0
    %7251 = vmatprep.mubr.f32.mxu0 0.0
    %7252 = vmatmul.mubr.f32.gmra.mrb[0].mxu0 %v7140
    %v7253 = vpop.f32.mrb[0].mxu0
    %v7254 = vadd.f32 %v6475, %v7253
    %v7255 = vpop.f32.mrb[0].mxu0
    %7256 = vmatprep.mubr.f32.mxu0 0.0
    %7257 = vmatmul.mubr.f32.gmra.mrb[0].mxu0 %v7142
    %v7258 = vpop.f32.mrb[0].mxu0
    %v7259 = vadd.f32 %v6476, %v7258
    %v7260 = vpop.f32.mrb[0].mxu0
    %7261 = vmatprep.mubr.f32.mxu0 0.0
    %7262 = vmatmul.mubr.f32.gmra.mrb[0].mxu0 %v7144
    %v7263 = vpop.f32.mrb[0].mxu0
    %v7264 = vadd.f32 %v6477, %v7263
    %v7265 = vpop.f32.mrb[0].mxu0
    %7266 = vdwg.mxu0
    %7267 = vrot.lane.b32.xlu0 %v6326, 120
    %v7268 = vpop.permute.xlu0 %7267
    %7269 = vrot.lane.b32.xlu0 %v6328, 120
    %v7270 = vpop.permute.xlu0 %7269
    %7271 = vrot.lane.b32.xlu0 %v6330, 120
    %v7272 = vpop.permute.xlu0 %7271
    %7273 = vrot.lane.b32.xlu0 %v6332, 120
    %v7274 = vpop.permute.xlu0 %7273
    %7275 = vrot.lane.b32.xlu0 %v6334, 120
    %v7276 = vpop.permute.xlu0 %7275
    %7277 = vrot.lane.b32.xlu0 %v6336, 120
    %v7278 = vpop.permute.xlu0 %7277
    %7279 = vrot.lane.b32.xlu0 %v6338, 120
    %v7280 = vpop.permute.xlu0 %7279
    %7281 = vrot.lane.b32.xlu0 %v6340, 120
    %v7282 = vpop.permute.xlu0 %7281
    %v7283 = vsel %vm771, %v6326, 0
    %v7285 = vsel %vm771, %v6328, 0
    %v7287 = vsel %vm771, %v6330, 0
    %v7289 = vsel %vm771, %v6332, 0
    %v7291 = vsel %vm771, %v6334, 0
    %v7293 = vsel %vm771, %v6336, 0
    %v7295 = vsel %vm771, %v6338, 0
    %v7297 = vsel %vm771, %v6340, 0
    %v7299 = vsel %vm771, %v7268, 0
    %v7301 = vsel %vm771, %v7270, 0
    %v7303 = vsel %vm771, %v7272, 0
    %v7305 = vsel %vm771, %v7274, 0
    %v7307 = vsel %vm771, %v7276, 0
    %v7309 = vsel %vm771, %v7278, 0
    %v7311 = vsel %vm771, %v7280, 0
    %v7313 = vsel %vm771, %v7282, 0
    %7315 = vmatprep.subr.mxu0 0.0
    %7316 = vmatpush1.xpose.msra.mxu0 %v7299
    %7317 = vmatprep.subr.mxu0 0.0
    %7318 = vmatpush1.xpose.msra.mxu0 %v7301
    %7319 = vmatprep.subr.mxu0 0.0
    %7320 = vmatpush1.xpose.msra.mxu0 %v7303
    %7321 = vmatprep.subr.mxu0 0.0
    %7322 = vmatpush1.xpose.msra.mxu0 %v7305
    %7323 = vmatprep.subr.mxu0 0.0
    %7324 = vmatpush1.xpose.msra.mxu0 %v7307
    %7325 = vmatprep.subr.mxu0 0.0
    %7326 = vmatpush1.xpose.msra.mxu0 %v7309
    %7327 = vmatprep.subr.mxu0 0.0
    %7328 = vmatpush1.xpose.msra.mxu0 %v7311
    %7329 = vmatprep.subr.mxu0 0.0
    %7330 = vmatpush1.xpose.msra.mxu0 %v7313
    %7331 = vmatprep.subr.mxu0 0.0
    %7332 = vmatpush1.xpose.msra.mxu0 0.0
    %7333 = vmatprep.subr.mxu0 0.0
    %7334 = vmatpush1.xpose.msra.mxu0 0.0
    %7335 = vmatprep.subr.mxu0 0.0
    %7336 = vmatpush1.xpose.msra.mxu0 0.0
    %7337 = vmatprep.subr.mxu0 0.0
    %7338 = vmatpush1.xpose.msra.mxu0 0.0
    %7339 = vmatprep.subr.mxu0 0.0
    %7340 = vmatpush1.xpose.msra.mxu0 0.0
    %7341 = vmatprep.subr.mxu0 0.0
    %7342 = vmatpush1.xpose.msra.mxu0 0.0
    %7343 = vmatprep.subr.mxu0 0.0
    %7344 = vmatpush1.xpose.msra.mxu0 0.0
    %7345 = vmatprep.subr.mxu0 0.0
    %7346 = vmatpush1.xpose.msra.mxu0 0.0
    %7347 = vmatprep.subr.mxu0 0.0
    %7348 = vmatpush1.xpose.msra.mxu0 0.0
    %7349 = vmatprep.subr.mxu0 0.0
    %7350 = vmatpush1.xpose.msra.mxu0 0.0
    %7351 = vmatprep.subr.mxu0 0.0
    %7352 = vmatpush1.xpose.msra.mxu0 0.0
    %7353 = vmatprep.subr.mxu0 0.0
    %7354 = vmatpush1.xpose.msra.mxu0 0.0
    %7355 = vmatprep.subr.mxu0 0.0
    %7356 = vmatpush1.xpose.msra.mxu0 0.0
    %7357 = vmatprep.subr.mxu0 0.0
    %7358 = vmatpush1.xpose.msra.mxu0 0.0
    %7359 = vmatprep.subr.mxu0 0.0
    %7360 = vmatpush1.xpose.msra.mxu0 0.0
    %7361 = vmatprep.subr.mxu0 0.0
    %7362 = vmatpush1.xpose.msra.mxu0 0.0
    %7363 = vmatprep.subr.mxu0 0.0
    %7364 = vmatpush1.xpose.msra.mxu0 0.0
    %7365 = vmatprep.subr.mxu0 0.0
    %7366 = vmatpush1.xpose.msra.mxu0 0.0
    %7367 = vmatprep.subr.mxu0 0.0
    %7368 = vmatpush1.xpose.msra.mxu0 0.0
    %7369 = vmatprep.subr.mxu0 0.0
    %7370 = vmatpush1.xpose.msra.mxu0 0.0
    %7371 = vmatprep.subr.mxu0 0.0
    %7372 = vmatpush1.xpose.msra.mxu0 0.0
    %7373 = vmatprep.subr.mxu0 0.0
    %7374 = vmatpush1.xpose.msra.mxu0 0.0
    %7375 = vmatprep.subr.mxu0 0.0
    %7376 = vmatpush1.xpose.msra.mxu0 0.0
    %7377 = vmatprep.subr.mxu0 0.0
    %7378 = vmatpush1.xpose.msra.mxu0 0.0
    %7379 = vmatprep.mubr.f32.mxu0 0.0
    %7380 = vmatmul.mubr.f32.gmra.mrb[0].mxu0 %v7283
    %v7381 = vpop.f32.mrb[0].mxu0
    %v7382 = vadd.f32 %v6478, %v7381
    %v7383 = vpop.f32.mrb[0].mxu0
    %7384 = vmatprep.mubr.f32.mxu0 0.0
    %7385 = vmatmul.mubr.f32.gmra.mrb[0].mxu0 %v7285
    %v7386 = vpop.f32.mrb[0].mxu0
    %v7387 = vadd.f32 %v6479, %v7386
    %v7388 = vpop.f32.mrb[0].mxu0
    %7389 = vmatprep.mubr.f32.mxu0 0.0
    %7390 = vmatmul.mubr.f32.gmra.mrb[0].mxu0 %v7287
    %v7391 = vpop.f32.mrb[0].mxu0
    %v7392 = vadd.f32 %v6480, %v7391
    %v7393 = vpop.f32.mrb[0].mxu0
    %7394 = vmatprep.mubr.f32.mxu0 0.0
    %7395 = vmatmul.mubr.f32.gmra.mrb[0].mxu0 %v7289
    %v7396 = vpop.f32.mrb[0].mxu0
    %v7397 = vadd.f32 %v6481, %v7396
    %v7398 = vpop.f32.mrb[0].mxu0
    %7399 = vmatprep.mubr.f32.mxu0 0.0
    %7400 = vmatmul.mubr.f32.gmra.mrb[0].mxu0 %v7291
    %v7401 = vpop.f32.mrb[0].mxu0
    %v7402 = vadd.f32 %v6482, %v7401
    %v7403 = vpop.f32.mrb[0].mxu0
    %7404 = vmatprep.mubr.f32.mxu0 0.0
    %7405 = vmatmul.mubr.f32.gmra.mrb[0].mxu0 %v7293
    %v7406 = vpop.f32.mrb[0].mxu0
    %v7407 = vadd.f32 %v6483, %v7406
    %v7408 = vpop.f32.mrb[0].mxu0
    %7409 = vmatprep.mubr.f32.mxu0 0.0
    %7410 = vmatmul.mubr.f32.gmra.mrb[0].mxu0 %v7295
    %v7411 = vpop.f32.mrb[0].mxu0
    %v7412 = vadd.f32 %v6484, %v7411
    %v7413 = vpop.f32.mrb[0].mxu0
    %7414 = vmatprep.mubr.f32.mxu0 0.0
    %7415 = vmatmul.mubr.f32.gmra.mrb[0].mxu0 %v7297
    %v7416 = vpop.f32.mrb[0].mxu0
    %v7417 = vadd.f32 %v6485, %v7416
    %v7418 = vpop.f32.mrb[0].mxu0
    %7419 = vdwg.mxu0
    %7420 = vrot.lane.b32.xlu0 %v6342, 120
    %v7421 = vpop.permute.xlu0 %7420
    %7422 = vrot.lane.b32.xlu0 %v6344, 120
    %v7423 = vpop.permute.xlu0 %7422
    %7424 = vrot.lane.b32.xlu0 %v6346, 120
    %v7425 = vpop.permute.xlu0 %7424
    %7426 = vrot.lane.b32.xlu0 %v6348, 120
    %v7427 = vpop.permute.xlu0 %7426
    %7428 = vrot.lane.b32.xlu0 %v6350, 120
    %v7429 = vpop.permute.xlu0 %7428
    %7430 = vrot.lane.b32.xlu0 %v6352, 120
    %v7431 = vpop.permute.xlu0 %7430
    %7432 = vrot.lane.b32.xlu0 %v6354, 120
    %v7433 = vpop.permute.xlu0 %7432
    %7434 = vrot.lane.b32.xlu0 %v6356, 120
    %v7435 = vpop.permute.xlu0 %7434
    %v7436 = vsel %vm771, %v6342, 0
    %v7438 = vsel %vm771, %v6344, 0
    %v7440 = vsel %vm771, %v6346, 0
    %v7442 = vsel %vm771, %v6348, 0
    %v7444 = vsel %vm771, %v6350, 0
    %v7446 = vsel %vm771, %v6352, 0
    %v7448 = vsel %vm771, %v6354, 0
    %v7450 = vsel %vm771, %v6356, 0
    %v7452 = vsel %vm771, %v7421, 0
    %v7454 = vsel %vm771, %v7423, 0
    %v7456 = vsel %vm771, %v7425, 0
    %v7458 = vsel %vm771, %v7427, 0
    %v7460 = vsel %vm771, %v7429, 0
    %v7462 = vsel %vm771, %v7431, 0
    %v7464 = vsel %vm771, %v7433, 0
    %v7466 = vsel %vm771, %v7435, 0
    %7468 = vmatprep.subr.mxu0 0.0
    %7469 = vmatpush1.xpose.msra.mxu0 %v7452
    %7470 = vmatprep.subr.mxu0 0.0
    %7471 = vmatpush1.xpose.msra.mxu0 %v7454
    %7472 = vmatprep.subr.mxu0 0.0
    %7473 = vmatpush1.xpose.msra.mxu0 %v7456
    %7474 = vmatprep.subr.mxu0 0.0
    %7475 = vmatpush1.xpose.msra.mxu0 %v7458
    %7476 = vmatprep.subr.mxu0 0.0
    %7477 = vmatpush1.xpose.msra.mxu0 %v7460
    %7478 = vmatprep.subr.mxu0 0.0
    %7479 = vmatpush1.xpose.msra.mxu0 %v7462
    %7480 = vmatprep.subr.mxu0 0.0
    %7481 = vmatpush1.xpose.msra.mxu0 %v7464
    %7482 = vmatprep.subr.mxu0 0.0
    %7483 = vmatpush1.xpose.msra.mxu0 %v7466
    %7484 = vmatprep.subr.mxu0 0.0
    %7485 = vmatpush1.xpose.msra.mxu0 0.0
    %7486 = vmatprep.subr.mxu0 0.0
    %7487 = vmatpush1.xpose.msra.mxu0 0.0
    %7488 = vmatprep.subr.mxu0 0.0
    %7489 = vmatpush1.xpose.msra.mxu0 0.0
    %7490 = vmatprep.subr.mxu0 0.0
    %7491 = vmatpush1.xpose.msra.mxu0 0.0
    %7492 = vmatprep.subr.mxu0 0.0
    %7493 = vmatpush1.xpose.msra.mxu0 0.0
    %7494 = vmatprep.subr.mxu0 0.0
    %7495 = vmatpush1.xpose.msra.mxu0 0.0
    %7496 = vmatprep.subr.mxu0 0.0
    %7497 = vmatpush1.xpose.msra.mxu0 0.0
    %7498 = vmatprep.subr.mxu0 0.0
    %7499 = vmatpush1.xpose.msra.mxu0 0.0
    %7500 = vmatprep.subr.mxu0 0.0
    %7501 = vmatpush1.xpose.msra.mxu0 0.0
    %7502 = vmatprep.subr.mxu0 0.0
    %7503 = vmatpush1.xpose.msra.mxu0 0.0
    %7504 = vmatprep.subr.mxu0 0.0
    %7505 = vmatpush1.xpose.msra.mxu0 0.0
    %7506 = vmatprep.subr.mxu0 0.0
    %7507 = vmatpush1.xpose.msra.mxu0 0.0
    %7508 = vmatprep.subr.mxu0 0.0
    %7509 = vmatpush1.xpose.msra.mxu0 0.0
    %7510 = vmatprep.subr.mxu0 0.0
    %7511 = vmatpush1.xpose.msra.mxu0 0.0
    %7512 = vmatprep.subr.mxu0 0.0
    %7513 = vmatpush1.xpose.msra.mxu0 0.0
    %7514 = vmatprep.subr.mxu0 0.0
    %7515 = vmatpush1.xpose.msra.mxu0 0.0
    %7516 = vmatprep.subr.mxu0 0.0
    %7517 = vmatpush1.xpose.msra.mxu0 0.0
    %7518 = vmatprep.subr.mxu0 0.0
    %7519 = vmatpush1.xpose.msra.mxu0 0.0
    %7520 = vmatprep.subr.mxu0 0.0
    %7521 = vmatpush1.xpose.msra.mxu0 0.0
    %7522 = vmatprep.subr.mxu0 0.0
    %7523 = vmatpush1.xpose.msra.mxu0 0.0
    %7524 = vmatprep.subr.mxu0 0.0
    %7525 = vmatpush1.xpose.msra.mxu0 0.0
    %7526 = vmatprep.subr.mxu0 0.0
    %7527 = vmatpush1.xpose.msra.mxu0 0.0
    %7528 = vmatprep.subr.mxu0 0.0
    %7529 = vmatpush1.xpose.msra.mxu0 0.0
    %7530 = vmatprep.subr.mxu0 0.0
    %7531 = vmatpush1.xpose.msra.mxu0 0.0
    %7532 = vmatprep.mubr.f32.mxu0 0.0
    %7533 = vmatmul.mubr.f32.gmra.mrb[0].mxu0 %v7436
    %v7534 = vpop.f32.mrb[0].mxu0
    %v7535 = vadd.f32 %v6486, %v7534
    %v7536 = vpop.f32.mrb[0].mxu0
    %7537 = vmatprep.mubr.f32.mxu0 0.0
    %7538 = vmatmul.mubr.f32.gmra.mrb[0].mxu0 %v7438
    %v7539 = vpop.f32.mrb[0].mxu0
    %v7540 = vadd.f32 %v6487, %v7539
    %v7541 = vpop.f32.mrb[0].mxu0
    %7542 = vmatprep.mubr.f32.mxu0 0.0
    %7543 = vmatmul.mubr.f32.gmra.mrb[0].mxu0 %v7440
    %v7544 = vpop.f32.mrb[0].mxu0
    %v7545 = vadd.f32 %v6488, %v7544
    %v7546 = vpop.f32.mrb[0].mxu0
    %7547 = vmatprep.mubr.f32.mxu0 0.0
    %7548 = vmatmul.mubr.f32.gmra.mrb[0].mxu0 %v7442
    %v7549 = vpop.f32.mrb[0].mxu0
    %v7550 = vadd.f32 %v6489, %v7549
    %v7551 = vpop.f32.mrb[0].mxu0
    %7552 = vmatprep.mubr.f32.mxu0 0.0
    %7553 = vmatmul.mubr.f32.gmra.mrb[0].mxu0 %v7444
    %v7554 = vpop.f32.mrb[0].mxu0
    %v7555 = vadd.f32 %v6490, %v7554
    %v7556 = vpop.f32.mrb[0].mxu0
    %7557 = vmatprep.mubr.f32.mxu0 0.0
    %7558 = vmatmul.mubr.f32.gmra.mrb[0].mxu0 %v7446
    %v7559 = vpop.f32.mrb[0].mxu0
    %v7560 = vadd.f32 %v6491, %v7559
    %v7561 = vpop.f32.mrb[0].mxu0
    %7562 = vmatprep.mubr.f32.mxu0 0.0
    %7563 = vmatmul.mubr.f32.gmra.mrb[0].mxu0 %v7448
    %v7564 = vpop.f32.mrb[0].mxu0
    %v7565 = vadd.f32 %v6492, %v7564
    %v7566 = vpop.f32.mrb[0].mxu0
    %7567 = vmatprep.mubr.f32.mxu0 0.0
    %7568 = vmatmul.mubr.f32.gmra.mrb[0].mxu0 %v7450
    %v7569 = vpop.f32.mrb[0].mxu0
    %v7570 = vadd.f32 %v6493, %v7569
    %v7571 = vpop.f32.mrb[0].mxu0
    %7572 = vdwg.mxu0
    %7573 = vrot.lane.b32.xlu0 %v6358, 120
    %v7574 = vpop.permute.xlu0 %7573
    %7575 = vrot.lane.b32.xlu0 %v6360, 120
    %v7576 = vpop.permute.xlu0 %7575
    %7577 = vrot.lane.b32.xlu0 %v6362, 120
    %v7578 = vpop.permute.xlu0 %7577
    %7579 = vrot.lane.b32.xlu0 %v6364, 120
    %v7580 = vpop.permute.xlu0 %7579
    %7581 = vrot.lane.b32.xlu0 %v6366, 120
    %v7582 = vpop.permute.xlu0 %7581
    %7583 = vrot.lane.b32.xlu0 %v6368, 120
    %v7584 = vpop.permute.xlu0 %7583
    %7585 = vrot.lane.b32.xlu0 %v6370, 120
    %v7586 = vpop.permute.xlu0 %7585
    %7587 = vrot.lane.b32.xlu0 %v6372, 120
    %v7588 = vpop.permute.xlu0 %7587
    %v7589 = vsel %vm771, %v6358, 0
    %v7591 = vsel %vm771, %v6360, 0
    %v7593 = vsel %vm771, %v6362, 0
    %v7595 = vsel %vm771, %v6364, 0
    %v7597 = vsel %vm771, %v6366, 0
    %v7599 = vsel %vm771, %v6368, 0
    %v7601 = vsel %vm771, %v6370, 0
    %v7603 = vsel %vm771, %v6372, 0
    %v7605 = vsel %vm771, %v7574, 0
    %v7607 = vsel %vm771, %v7576, 0
    %v7609 = vsel %vm771, %v7578, 0
    %v7611 = vsel %vm771, %v7580, 0
    %v7613 = vsel %vm771, %v7582, 0
    %v7615 = vsel %vm771, %v7584, 0
    %v7617 = vsel %vm771, %v7586, 0
    %v7619 = vsel %vm771, %v7588, 0
    %7621 = vmatprep.subr.mxu0 0.0
    %7622 = vmatpush1.xpose.msra.mxu0 %v7605
    %7623 = vmatprep.subr.mxu0 0.0
    %7624 = vmatpush1.xpose.msra.mxu0 %v7607
    %7625 = vmatprep.subr.mxu0 0.0
    %7626 = vmatpush1.xpose.msra.mxu0 %v7609
    %7627 = vmatprep.subr.mxu0 0.0
    %7628 = vmatpush1.xpose.msra.mxu0 %v7611
    %7629 = vmatprep.subr.mxu0 0.0
    %7630 = vmatpush1.xpose.msra.mxu0 %v7613
    %7631 = vmatprep.subr.mxu0 0.0
    %7632 = vmatpush1.xpose.msra.mxu0 %v7615
    %7633 = vmatprep.subr.mxu0 0.0
    %7634 = vmatpush1.xpose.msra.mxu0 %v7617
    %7635 = vmatprep.subr.mxu0 0.0
    %7636 = vmatpush1.xpose.msra.mxu0 %v7619
    %7637 = vmatprep.subr.mxu0 0.0
    %7638 = vmatpush1.xpose.msra.mxu0 0.0
    %7639 = vmatprep.subr.mxu0 0.0
    %7640 = vmatpush1.xpose.msra.mxu0 0.0
    %7641 = vmatprep.subr.mxu0 0.0
    %7642 = vmatpush1.xpose.msra.mxu0 0.0
    %7643 = vmatprep.subr.mxu0 0.0
    %7644 = vmatpush1.xpose.msra.mxu0 0.0
    %7645 = vmatprep.subr.mxu0 0.0
    %7646 = vmatpush1.xpose.msra.mxu0 0.0
    %7647 = vmatprep.subr.mxu0 0.0
    %7648 = vmatpush1.xpose.msra.mxu0 0.0
    %7649 = vmatprep.subr.mxu0 0.0
    %7650 = vmatpush1.xpose.msra.mxu0 0.0
    %7651 = vmatprep.subr.mxu0 0.0
    %7652 = vmatpush1.xpose.msra.mxu0 0.0
    %7653 = vmatprep.subr.mxu0 0.0
    %7654 = vmatpush1.xpose.msra.mxu0 0.0
    %7655 = vmatprep.subr.mxu0 0.0
    %7656 = vmatpush1.xpose.msra.mxu0 0.0
    %7657 = vmatprep.subr.mxu0 0.0
    %7658 = vmatpush1.xpose.msra.mxu0 0.0
    %7659 = vmatprep.subr.mxu0 0.0
    %7660 = vmatpush1.xpose.msra.mxu0 0.0
    %7661 = vmatprep.subr.mxu0 0.0
    %7662 = vmatpush1.xpose.msra.mxu0 0.0
    %7663 = vmatprep.subr.mxu0 0.0
    %7664 = vmatpush1.xpose.msra.mxu0 0.0
    %7665 = vmatprep.subr.mxu0 0.0
    %7666 = vmatpush1.xpose.msra.mxu0 0.0
    %7667 = vmatprep.subr.mxu0 0.0
    %7668 = vmatpush1.xpose.msra.mxu0 0.0
    %7669 = vmatprep.subr.mxu0 0.0
    %7670 = vmatpush1.xpose.msra.mxu0 0.0
    %7671 = vmatprep.subr.mxu0 0.0
    %7672 = vmatpush1.xpose.msra.mxu0 0.0
    %7673 = vmatprep.subr.mxu0 0.0
    %7674 = vmatpush1.xpose.msra.mxu0 0.0
    %7675 = vmatprep.subr.mxu0 0.0
    %7676 = vmatpush1.xpose.msra.mxu0 0.0
    %7677 = vmatprep.subr.mxu0 0.0
    %7678 = vmatpush1.xpose.msra.mxu0 0.0
    %7679 = vmatprep.subr.mxu0 0.0
    %7680 = vmatpush1.xpose.msra.mxu0 0.0
    %7681 = vmatprep.subr.mxu0 0.0
    %7682 = vmatpush1.xpose.msra.mxu0 0.0
    %7683 = vmatprep.subr.mxu0 0.0
    %7684 = vmatpush1.xpose.msra.mxu0 0.0
    %7685 = vmatprep.mubr.f32.mxu0 0.0
    %7686 = vmatmul.mubr.f32.gmra.mrb[0].mxu0 %v7589
    %v7687 = vpop.f32.mrb[0].mxu0
    %v7688 = vadd.f32 %v6494, %v7687
    %v7689 = vpop.f32.mrb[0].mxu0
    %7690 = vmatprep.mubr.f32.mxu0 0.0
    %7691 = vmatmul.mubr.f32.gmra.mrb[0].mxu0 %v7591
    %v7692 = vpop.f32.mrb[0].mxu0
    %v7693 = vadd.f32 %v6495, %v7692
    %v7694 = vpop.f32.mrb[0].mxu0
    %7695 = vmatprep.mubr.f32.mxu0 0.0
    %7696 = vmatmul.mubr.f32.gmra.mrb[0].mxu0 %v7593
    %v7697 = vpop.f32.mrb[0].mxu0
    %v7698 = vadd.f32 %v6496, %v7697
    %v7699 = vpop.f32.mrb[0].mxu0
    %7700 = vmatprep.mubr.f32.mxu0 0.0
    %7701 = vmatmul.mubr.f32.gmra.mrb[0].mxu0 %v7595
    %v7702 = vpop.f32.mrb[0].mxu0
    %v7703 = vadd.f32 %v6497, %v7702
    %v7704 = vpop.f32.mrb[0].mxu0
    %7705 = vmatprep.mubr.f32.mxu0 0.0
    %7706 = vmatmul.mubr.f32.gmra.mrb[0].mxu0 %v7597
    %v7707 = vpop.f32.mrb[0].mxu0
    %v7708 = vadd.f32 %v6498, %v7707
    %v7709 = vpop.f32.mrb[0].mxu0
    %7710 = vmatprep.mubr.f32.mxu0 0.0
    %7711 = vmatmul.mubr.f32.gmra.mrb[0].mxu0 %v7599
    %v7712 = vpop.f32.mrb[0].mxu0
    %v7713 = vadd.f32 %v6499, %v7712
    %v7714 = vpop.f32.mrb[0].mxu0
    %7715 = vmatprep.mubr.f32.mxu0 0.0
    %7716 = vmatmul.mubr.f32.gmra.mrb[0].mxu0 %v7601
    %v7717 = vpop.f32.mrb[0].mxu0
    %v7718 = vadd.f32 %v6500, %v7717
    %v7719 = vpop.f32.mrb[0].mxu0
    %7720 = vmatprep.mubr.f32.mxu0 0.0
    %7721 = vmatmul.mubr.f32.gmra.mrb[0].mxu0 %v7603
    %v7722 = vpop.f32.mrb[0].mxu0
    %v7723 = vadd.f32 %v6501, %v7722
    %v7724 = vpop.f32.mrb[0].mxu0
    %7725 = vdwg.mxu0
    %v7726 = vsel %vm1980, %v6617, -inf
    %7727 = vmax.xlane.f32.xlu0 %v7726
    %v7728 = vpop.xlane.xlu0 %7727
    %v7729 = vsel %vm1980, %v6622, -inf
    %7730 = vmax.xlane.f32.xlu0 %v7729
    %v7731 = vpop.xlane.xlu0 %7730
    %v7732 = vsel %vm1980, %v6627, -inf
    %7733 = vmax.xlane.f32.xlu0 %v7732
    %v7734 = vpop.xlane.xlu0 %7733
    %v7735 = vsel %vm1980, %v6632, -inf
    %7736 = vmax.xlane.f32.xlu0 %v7735
    %v7737 = vpop.xlane.xlu0 %7736
    %v7738 = vsel %vm1980, %v6637, -inf
    %7739 = vmax.xlane.f32.xlu0 %v7738
    %v7740 = vpop.xlane.xlu0 %7739
    %v7741 = vsel %vm1980, %v6642, -inf
    %7742 = vmax.xlane.f32.xlu0 %v7741
    %v7743 = vpop.xlane.xlu0 %7742
    %v7744 = vsel %vm1980, %v6647, -inf
    %7745 = vmax.xlane.f32.xlu0 %v7744
    %v7746 = vpop.xlane.xlu0 %7745
    %v7747 = vsel %vm1980, %v6652, -inf
    %7748 = vmax.xlane.f32.xlu0 %v7747
    %v7749 = vpop.xlane.xlu0 %7748
    %v7750 = vsel %vm1980, %v6770, -inf
    %7751 = vmax.xlane.f32.xlu0 %v7750
    %v7752 = vpop.xlane.xlu0 %7751
    %v7753 = vsel %vm1980, %v6775, -inf
    %7754 = vmax.xlane.f32.xlu0 %v7753
    %v7755 = vpop.xlane.xlu0 %7754
    %v7756 = vsel %vm1980, %v6780, -inf
    %7757 = vmax.xlane.f32.xlu0 %v7756
    %v7758 = vpop.xlane.xlu0 %7757
    %v7759 = vsel %vm1980, %v6785, -inf
    %7760 = vmax.xlane.f32.xlu0 %v7759
    %v7761 = vpop.xlane.xlu0 %7760
    %v7762 = vsel %vm1980, %v6790, -inf
    %7763 = vmax.xlane.f32.xlu0 %v7762
    %v7764 = vpop.xlane.xlu0 %7763
    %v7765 = vsel %vm1980, %v6795, -inf
    %7766 = vmax.xlane.f32.xlu0 %v7765
    %v7767 = vpop.xlane.xlu0 %7766
    %v7768 = vsel %vm1980, %v6800, -inf
    %7769 = vmax.xlane.f32.xlu0 %v7768
    %v7770 = vpop.xlane.xlu0 %7769
    %v7771 = vsel %vm1980, %v6805, -inf
    %7772 = vmax.xlane.f32.xlu0 %v7771
    %v7773 = vpop.xlane.xlu0 %7772
    %v7774 = vsel %vm1980, %v6923, -inf
    %7775 = vmax.xlane.f32.xlu0 %v7774
    %v7776 = vpop.xlane.xlu0 %7775
    %v7777 = vsel %vm1980, %v6928, -inf
    %7778 = vmax.xlane.f32.xlu0 %v7777
    %v7779 = vpop.xlane.xlu0 %7778
    %v7780 = vsel %vm1980, %v6933, -inf
    %7781 = vmax.xlane.f32.xlu0 %v7780
    %v7782 = vpop.xlane.xlu0 %7781
    %v7783 = vsel %vm1980, %v6938, -inf
    %7784 = vmax.xlane.f32.xlu0 %v7783
    %v7785 = vpop.xlane.xlu0 %7784
    %v7786 = vsel %vm1980, %v6943, -inf
    %7787 = vmax.xlane.f32.xlu0 %v7786
    %v7788 = vpop.xlane.xlu0 %7787
    %v7789 = vsel %vm1980, %v6948, -inf
    %7790 = vmax.xlane.f32.xlu0 %v7789
    %v7791 = vpop.xlane.xlu0 %7790
    %v7792 = vsel %vm1980, %v6953, -inf
    %7793 = vmax.xlane.f32.xlu0 %v7792
    %v7794 = vpop.xlane.xlu0 %7793
    %v7795 = vsel %vm1980, %v6958, -inf
    %7796 = vmax.xlane.f32.xlu0 %v7795
    %v7797 = vpop.xlane.xlu0 %7796
    %v7798 = vsel %vm1980, %v7076, -inf
    %7799 = vmax.xlane.f32.xlu0 %v7798
    %v7800 = vpop.xlane.xlu0 %7799
    %v7801 = vsel %vm1980, %v7081, -inf
    %7802 = vmax.xlane.f32.xlu0 %v7801
    %v7803 = vpop.xlane.xlu0 %7802
    %v7804 = vsel %vm1980, %v7086, -inf
    %7805 = vmax.xlane.f32.xlu0 %v7804
    %v7806 = vpop.xlane.xlu0 %7805
    %v7807 = vsel %vm1980, %v7091, -inf
    %7808 = vmax.xlane.f32.xlu0 %v7807
    %v7809 = vpop.xlane.xlu0 %7808
    %v7810 = vsel %vm1980, %v7096, -inf
    %7811 = vmax.xlane.f32.xlu0 %v7810
    %v7812 = vpop.xlane.xlu0 %7811
    %v7813 = vsel %vm1980, %v7101, -inf
    %7814 = vmax.xlane.f32.xlu0 %v7813
    %v7815 = vpop.xlane.xlu0 %7814
    %v7816 = vsel %vm1980, %v7106, -inf
    %7817 = vmax.xlane.f32.xlu0 %v7816
    %v7818 = vpop.xlane.xlu0 %7817
    %v7819 = vsel %vm1980, %v7111, -inf
    %7820 = vmax.xlane.f32.xlu0 %v7819
    %v7821 = vpop.xlane.xlu0 %7820
    %v7822 = vsel %vm1980, %v7229, -inf
    %7823 = vmax.xlane.f32.xlu0 %v7822
    %v7824 = vpop.xlane.xlu0 %7823
    %v7825 = vsel %vm1980, %v7234, -inf
    %7826 = vmax.xlane.f32.xlu0 %v7825
    %v7827 = vpop.xlane.xlu0 %7826
    %v7828 = vsel %vm1980, %v7239, -inf
    %7829 = vmax.xlane.f32.xlu0 %v7828
    %v7830 = vpop.xlane.xlu0 %7829
    %v7831 = vsel %vm1980, %v7244, -inf
    %7832 = vmax.xlane.f32.xlu0 %v7831
    %v7833 = vpop.xlane.xlu0 %7832
    %v7834 = vsel %vm1980, %v7249, -inf
    %7835 = vmax.xlane.f32.xlu0 %v7834
    %v7836 = vpop.xlane.xlu0 %7835
    %v7837 = vsel %vm1980, %v7254, -inf
    %7838 = vmax.xlane.f32.xlu0 %v7837
    %v7839 = vpop.xlane.xlu0 %7838
    %v7840 = vsel %vm1980, %v7259, -inf
    %7841 = vmax.xlane.f32.xlu0 %v7840
    %v7842 = vpop.xlane.xlu0 %7841
    %v7843 = vsel %vm1980, %v7264, -inf
    %7844 = vmax.xlane.f32.xlu0 %v7843
    %v7845 = vpop.xlane.xlu0 %7844
    %v7846 = vsel %vm1980, %v7382, -inf
    %7847 = vmax.xlane.f32.xlu0 %v7846
    %v7848 = vpop.xlane.xlu0 %7847
    %v7849 = vsel %vm1980, %v7387, -inf
    %7850 = vmax.xlane.f32.xlu0 %v7849
    %v7851 = vpop.xlane.xlu0 %7850
    %v7852 = vsel %vm1980, %v7392, -inf
    %7853 = vmax.xlane.f32.xlu0 %v7852
    %v7854 = vpop.xlane.xlu0 %7853
    %v7855 = vsel %vm1980, %v7397, -inf
    %7856 = vmax.xlane.f32.xlu0 %v7855
    %v7857 = vpop.xlane.xlu0 %7856
    %v7858 = vsel %vm1980, %v7402, -inf
    %7859 = vmax.xlane.f32.xlu0 %v7858
    %v7860 = vpop.xlane.xlu0 %7859
    %v7861 = vsel %vm1980, %v7407, -inf
    %7862 = vmax.xlane.f32.xlu0 %v7861
    %v7863 = vpop.xlane.xlu0 %7862
    %v7864 = vsel %vm1980, %v7412, -inf
    %7865 = vmax.xlane.f32.xlu0 %v7864
    %v7866 = vpop.xlane.xlu0 %7865
    %v7867 = vsel %vm1980, %v7417, -inf
    %7868 = vmax.xlane.f32.xlu0 %v7867
    %v7869 = vpop.xlane.xlu0 %7868
    %v7870 = vsel %vm1980, %v7535, -inf
    %7871 = vmax.xlane.f32.xlu0 %v7870
    %v7872 = vpop.xlane.xlu0 %7871
    %v7873 = vsel %vm1980, %v7540, -inf
    %7874 = vmax.xlane.f32.xlu0 %v7873
    %v7875 = vpop.xlane.xlu0 %7874
    %v7876 = vsel %vm1980, %v7545, -inf
    %7877 = vmax.xlane.f32.xlu0 %v7876
    %v7878 = vpop.xlane.xlu0 %7877
    %v7879 = vsel %vm1980, %v7550, -inf
    %7880 = vmax.xlane.f32.xlu0 %v7879
    %v7881 = vpop.xlane.xlu0 %7880
    %v7882 = vsel %vm1980, %v7555, -inf
    %7883 = vmax.xlane.f32.xlu0 %v7882
    %v7884 = vpop.xlane.xlu0 %7883
    %v7885 = vsel %vm1980, %v7560, -inf
    %7886 = vmax.xlane.f32.xlu0 %v7885
    %v7887 = vpop.xlane.xlu0 %7886
    %v7888 = vsel %vm1980, %v7565, -inf
    %7889 = vmax.xlane.f32.xlu0 %v7888
    %v7890 = vpop.xlane.xlu0 %7889
    %v7891 = vsel %vm1980, %v7570, -inf
    %7892 = vmax.xlane.f32.xlu0 %v7891
    %v7893 = vpop.xlane.xlu0 %7892
    %v7894 = vsel %vm1980, %v7688, -inf
    %7895 = vmax.xlane.f32.xlu0 %v7894
    %v7896 = vpop.xlane.xlu0 %7895
    %v7897 = vsel %vm1980, %v7693, -inf
    %7898 = vmax.xlane.f32.xlu0 %v7897
    %v7899 = vpop.xlane.xlu0 %7898
    %v7900 = vsel %vm1980, %v7698, -inf
    %7901 = vmax.xlane.f32.xlu0 %v7900
    %v7902 = vpop.xlane.xlu0 %7901
    %v7903 = vsel %vm1980, %v7703, -inf
    %7904 = vmax.xlane.f32.xlu0 %v7903
    %v7905 = vpop.xlane.xlu0 %7904
    %v7906 = vsel %vm1980, %v7708, -inf
    %7907 = vmax.xlane.f32.xlu0 %v7906
    %v7908 = vpop.xlane.xlu0 %7907
    %v7909 = vsel %vm1980, %v7713, -inf
    %7910 = vmax.xlane.f32.xlu0 %v7909
    %v7911 = vpop.xlane.xlu0 %7910
    %v7912 = vsel %vm1980, %v7718, -inf
    %7913 = vmax.xlane.f32.xlu0 %v7912
    %v7914 = vpop.xlane.xlu0 %7913
    %v7915 = vsel %vm1980, %v7723, -inf
    %7916 = vmax.xlane.f32.xlu0 %v7915
    %v7917 = vpop.xlane.xlu0 %7916
    %v7918 = vsub.f32 %v6617, %v7728
    %v7919 = vsub.f32 %v6622, %v7731
    %v7920 = vsub.f32 %v6627, %v7734
    %v7921 = vsub.f32 %v6632, %v7737
    %v7922 = vsub.f32 %v6637, %v7740
    %v7923 = vsub.f32 %v6642, %v7743
    %v7924 = vsub.f32 %v6647, %v7746
    %v7925 = vsub.f32 %v6652, %v7749
    %v7926 = vsub.f32 %v6770, %v7752
    %v7927 = vsub.f32 %v6775, %v7755
    %v7928 = vsub.f32 %v6780, %v7758
    %v7929 = vsub.f32 %v6785, %v7761
    %v7930 = vsub.f32 %v6790, %v7764
    %v7931 = vsub.f32 %v6795, %v7767
    %v7932 = vsub.f32 %v6800, %v7770
    %v7933 = vsub.f32 %v6805, %v7773
    %v7934 = vsub.f32 %v6923, %v7776
    %v7935 = vsub.f32 %v6928, %v7779
    %v7936 = vsub.f32 %v6933, %v7782
    %v7937 = vsub.f32 %v6938, %v7785
    %v7938 = vsub.f32 %v6943, %v7788
    %v7939 = vsub.f32 %v6948, %v7791
    %v7940 = vsub.f32 %v6953, %v7794
    %v7941 = vsub.f32 %v6958, %v7797
    %v7942 = vsub.f32 %v7076, %v7800
    %v7943 = vsub.f32 %v7081, %v7803
    %v7944 = vsub.f32 %v7086, %v7806
    %v7945 = vsub.f32 %v7091, %v7809
    %v7946 = vsub.f32 %v7096, %v7812
    %v7947 = vsub.f32 %v7101, %v7815
    %v7948 = vsub.f32 %v7106, %v7818
    %v7949 = vsub.f32 %v7111, %v7821
    %v7950 = vsub.f32 %v7229, %v7824
    %v7951 = vsub.f32 %v7234, %v7827
    %v7952 = vsub.f32 %v7239, %v7830
    %v7953 = vsub.f32 %v7244, %v7833
    %v7954 = vsub.f32 %v7249, %v7836
    %v7955 = vsub.f32 %v7254, %v7839
    %v7956 = vsub.f32 %v7259, %v7842
    %v7957 = vsub.f32 %v7264, %v7845
    %v7958 = vsub.f32 %v7382, %v7848
    %v7959 = vsub.f32 %v7387, %v7851
    %v7960 = vsub.f32 %v7392, %v7854
    %v7961 = vsub.f32 %v7397, %v7857
    %v7962 = vsub.f32 %v7402, %v7860
    %v7963 = vsub.f32 %v7407, %v7863
    %v7964 = vsub.f32 %v7412, %v7866
    %v7965 = vsub.f32 %v7417, %v7869
    %v7966 = vsub.f32 %v7535, %v7872
    %v7967 = vsub.f32 %v7540, %v7875
    %v7968 = vsub.f32 %v7545, %v7878
    %v7969 = vsub.f32 %v7550, %v7881
    %v7970 = vsub.f32 %v7555, %v7884
    %v7971 = vsub.f32 %v7560, %v7887
    %v7972 = vsub.f32 %v7565, %v7890
    %v7973 = vsub.f32 %v7570, %v7893
    %v7974 = vsub.f32 %v7688, %v7896
    %v7975 = vsub.f32 %v7693, %v7899
    %v7976 = vsub.f32 %v7698, %v7902
    %v7977 = vsub.f32 %v7703, %v7905
    %v7978 = vsub.f32 %v7708, %v7908
    %v7979 = vsub.f32 %v7713, %v7911
    %v7980 = vsub.f32 %v7718, %v7914
    %v7981 = vsub.f32 %v7723, %v7917
    %v7982 = vmul.f32 %v7918, 1.442695
    %v7983 = vpow.pop %v7982
    %v7984 = vmul.f32 %v7919, 1.442695
    %v7985 = vpow.pop %v7984
    %v7986 = vmul.f32 %v7920, 1.442695
    %v7987 = vpow.pop %v7986
    %v7988 = vmul.f32 %v7921, 1.442695
    %v7989 = vpow.pop %v7988
    %v7990 = vmul.f32 %v7922, 1.442695
    %v7991 = vpow.pop %v7990
    %v7992 = vmul.f32 %v7923, 1.442695
    %v7993 = vpow.pop %v7992
    %v7994 = vmul.f32 %v7924, 1.442695
    %v7995 = vpow.pop %v7994
    %v7996 = vmul.f32 %v7925, 1.442695
    %v7997 = vpow.pop %v7996
    %v7998 = vmul.f32 %v7926, 1.442695
    %v7999 = vpow.pop %v7998
    %v8000 = vmul.f32 %v7927, 1.442695
    %v8001 = vpow.pop %v8000
    %v8002 = vmul.f32 %v7928, 1.442695
    %v8003 = vpow.pop %v8002
    %v8004 = vmul.f32 %v7929, 1.442695
    %v8005 = vpow.pop %v8004
    %v8006 = vmul.f32 %v7930, 1.442695
    %v8007 = vpow.pop %v8006
    %v8008 = vmul.f32 %v7931, 1.442695
    %v8009 = vpow.pop %v8008
    %v8010 = vmul.f32 %v7932, 1.442695
    %v8011 = vpow.pop %v8010
    %v8012 = vmul.f32 %v7933, 1.442695
    %v8013 = vpow.pop %v8012
    %v8014 = vmul.f32 %v7934, 1.442695
    %v8015 = vpow.pop %v8014
    %v8016 = vmul.f32 %v7935, 1.442695
    %v8017 = vpow.pop %v8016
    %v8018 = vmul.f32 %v7936, 1.442695
    %v8019 = vpow.pop %v8018
    %v8020 = vmul.f32 %v7937, 1.442695
    %v8021 = vpow.pop %v8020
    %v8022 = vmul.f32 %v7938, 1.442695
    %v8023 = vpow.pop %v8022
    %v8024 = vmul.f32 %v7939, 1.442695
    %v8025 = vpow.pop %v8024
    %v8026 = vmul.f32 %v7940, 1.442695
    %v8027 = vpow.pop %v8026
    %v8028 = vmul.f32 %v7941, 1.442695
    %v8029 = vpow.pop %v8028
    %v8030 = vmul.f32 %v7942, 1.442695
    %v8031 = vpow.pop %v8030
    %v8032 = vmul.f32 %v7943, 1.442695
    %v8033 = vpow.pop %v8032
    %v8034 = vmul.f32 %v7944, 1.442695
    %v8035 = vpow.pop %v8034
    %v8036 = vmul.f32 %v7945, 1.442695
    %v8037 = vpow.pop %v8036
    %v8038 = vmul.f32 %v7946, 1.442695
    %v8039 = vpow.pop %v8038
    %v8040 = vmul.f32 %v7947, 1.442695
    %v8041 = vpow.pop %v8040
    %v8042 = vmul.f32 %v7948, 1.442695
    %v8043 = vpow.pop %v8042
    %v8044 = vmul.f32 %v7949, 1.442695
    %v8045 = vpow.pop %v8044
    %v8046 = vmul.f32 %v7950, 1.442695
    %v8047 = vpow.pop %v8046
    %v8048 = vmul.f32 %v7951, 1.442695
    %v8049 = vpow.pop %v8048
    %v8050 = vmul.f32 %v7952, 1.442695
    %v8051 = vpow.pop %v8050
    %v8052 = vmul.f32 %v7953, 1.442695
    %v8053 = vpow.pop %v8052
    %v8054 = vmul.f32 %v7954, 1.442695
    %v8055 = vpow.pop %v8054
    %v8056 = vmul.f32 %v7955, 1.442695
    %v8057 = vpow.pop %v8056
    %v8058 = vmul.f32 %v7956, 1.442695
    %v8059 = vpow.pop %v8058
    %v8060 = vmul.f32 %v7957, 1.442695
    %v8061 = vpow.pop %v8060
    %v8062 = vmul.f32 %v7958, 1.442695
    %v8063 = vpow.pop %v8062
    %v8064 = vmul.f32 %v7959, 1.442695
    %v8065 = vpow.pop %v8064
    %v8066 = vmul.f32 %v7960, 1.442695
    %v8067 = vpow.pop %v8066
    %v8068 = vmul.f32 %v7961, 1.442695
    %v8069 = vpow.pop %v8068
    %v8070 = vmul.f32 %v7962, 1.442695
    %v8071 = vpow.pop %v8070
    %v8072 = vmul.f32 %v7963, 1.442695
    %v8073 = vpow.pop %v8072
    %v8074 = vmul.f32 %v7964, 1.442695
    %v8075 = vpow.pop %v8074
    %v8076 = vmul.f32 %v7965, 1.442695
    %v8077 = vpow.pop %v8076
    %v8078 = vmul.f32 %v7966, 1.442695
    %v8079 = vpow.pop %v8078
    %v8080 = vmul.f32 %v7967, 1.442695
    %v8081 = vpow.pop %v8080
    %v8082 = vmul.f32 %v7968, 1.442695
    %v8083 = vpow.pop %v8082
    %v8084 = vmul.f32 %v7969, 1.442695
    %v8085 = vpow.pop %v8084
    %v8086 = vmul.f32 %v7970, 1.442695
    %v8087 = vpow.pop %v8086
    %v8088 = vmul.f32 %v7971, 1.442695
    %v8089 = vpow.pop %v8088
    %v8090 = vmul.f32 %v7972, 1.442695
    %v8091 = vpow.pop %v8090
    %v8092 = vmul.f32 %v7973, 1.442695
    %v8093 = vpow.pop %v8092
    %v8094 = vmul.f32 %v7974, 1.442695
    %v8095 = vpow.pop %v8094
    %v8096 = vmul.f32 %v7975, 1.442695
    %v8097 = vpow.pop %v8096
    %v8098 = vmul.f32 %v7976, 1.442695
    %v8099 = vpow.pop %v8098
    %v8100 = vmul.f32 %v7977, 1.442695
    %v8101 = vpow.pop %v8100
    %v8102 = vmul.f32 %v7978, 1.442695
    %v8103 = vpow.pop %v8102
    %v8104 = vmul.f32 %v7979, 1.442695
    %v8105 = vpow.pop %v8104
    %v8106 = vmul.f32 %v7980, 1.442695
    %v8107 = vpow.pop %v8106
    %v8108 = vmul.f32 %v7981, 1.442695
    %v8109 = vpow.pop %v8108
    %v8110 = vsel %vm1980, %v7983, 0.0
    %8111 = vadd.xlane.f32.xlu0 %v8110
    %v8112 = vpop.xlane.xlu0 %8111
    %v8113 = vsel %vm1980, %v7985, 0.0
    %8114 = vadd.xlane.f32.xlu0 %v8113
    %v8115 = vpop.xlane.xlu0 %8114
    %v8116 = vsel %vm1980, %v7987, 0.0
    %8117 = vadd.xlane.f32.xlu0 %v8116
    %v8118 = vpop.xlane.xlu0 %8117
    %v8119 = vsel %vm1980, %v7989, 0.0
    %8120 = vadd.xlane.f32.xlu0 %v8119
    %v8121 = vpop.xlane.xlu0 %8120
    %v8122 = vsel %vm1980, %v7991, 0.0
    %8123 = vadd.xlane.f32.xlu0 %v8122
    %v8124 = vpop.xlane.xlu0 %8123
    %v8125 = vsel %vm1980, %v7993, 0.0
    %8126 = vadd.xlane.f32.xlu0 %v8125
    %v8127 = vpop.xlane.xlu0 %8126
    %v8128 = vsel %vm1980, %v7995, 0.0
    %8129 = vadd.xlane.f32.xlu0 %v8128
    %v8130 = vpop.xlane.xlu0 %8129
    %v8131 = vsel %vm1980, %v7997, 0.0
    %8132 = vadd.xlane.f32.xlu0 %v8131
    %v8133 = vpop.xlane.xlu0 %8132
    %v8134 = vsel %vm1980, %v7999, 0.0
    %8135 = vadd.xlane.f32.xlu0 %v8134
    %v8136 = vpop.xlane.xlu0 %8135
    %v8137 = vsel %vm1980, %v8001, 0.0
    %8138 = vadd.xlane.f32.xlu0 %v8137
    %v8139 = vpop.xlane.xlu0 %8138
    %v8140 = vsel %vm1980, %v8003, 0.0
    %8141 = vadd.xlane.f32.xlu0 %v8140
    %v8142 = vpop.xlane.xlu0 %8141
    %v8143 = vsel %vm1980, %v8005, 0.0
    %8144 = vadd.xlane.f32.xlu0 %v8143
    %v8145 = vpop.xlane.xlu0 %8144
    %v8146 = vsel %vm1980, %v8007, 0.0
    %8147 = vadd.xlane.f32.xlu0 %v8146
    %v8148 = vpop.xlane.xlu0 %8147
    %v8149 = vsel %vm1980, %v8009, 0.0
    %8150 = vadd.xlane.f32.xlu0 %v8149
    %v8151 = vpop.xlane.xlu0 %8150
    %v8152 = vsel %vm1980, %v8011, 0.0
    %8153 = vadd.xlane.f32.xlu0 %v8152
    %v8154 = vpop.xlane.xlu0 %8153
    %v8155 = vsel %vm1980, %v8013, 0.0
    %8156 = vadd.xlane.f32.xlu0 %v8155
    %v8157 = vpop.xlane.xlu0 %8156
    %v8158 = vsel %vm1980, %v8015, 0.0
    %8159 = vadd.xlane.f32.xlu0 %v8158
    %v8160 = vpop.xlane.xlu0 %8159
    %v8161 = vsel %vm1980, %v8017, 0.0
    %8162 = vadd.xlane.f32.xlu0 %v8161
    %v8163 = vpop.xlane.xlu0 %8162
    %v8164 = vsel %vm1980, %v8019, 0.0
    %8165 = vadd.xlane.f32.xlu0 %v8164
    %v8166 = vpop.xlane.xlu0 %8165
    %v8167 = vsel %vm1980, %v8021, 0.0
    %8168 = vadd.xlane.f32.xlu0 %v8167
    %v8169 = vpop.xlane.xlu0 %8168
    %v8170 = vsel %vm1980, %v8023, 0.0
    %8171 = vadd.xlane.f32.xlu0 %v8170
    %v8172 = vpop.xlane.xlu0 %8171
    %v8173 = vsel %vm1980, %v8025, 0.0
    %8174 = vadd.xlane.f32.xlu0 %v8173
    %v8175 = vpop.xlane.xlu0 %8174
    %v8176 = vsel %vm1980, %v8027, 0.0
    %8177 = vadd.xlane.f32.xlu0 %v8176
    %v8178 = vpop.xlane.xlu0 %8177
    %v8179 = vsel %vm1980, %v8029, 0.0
    %8180 = vadd.xlane.f32.xlu0 %v8179
    %v8181 = vpop.xlane.xlu0 %8180
    %v8182 = vsel %vm1980, %v8031, 0.0
    %8183 = vadd.xlane.f32.xlu0 %v8182
    %v8184 = vpop.xlane.xlu0 %8183
    %v8185 = vsel %vm1980, %v8033, 0.0
    %8186 = vadd.xlane.f32.xlu0 %v8185
    %v8187 = vpop.xlane.xlu0 %8186
    %v8188 = vsel %vm1980, %v8035, 0.0
    %8189 = vadd.xlane.f32.xlu0 %v8188
    %v8190 = vpop.xlane.xlu0 %8189
    %v8191 = vsel %vm1980, %v8037, 0.0
    %8192 = vadd.xlane.f32.xlu0 %v8191
    %v8193 = vpop.xlane.xlu0 %8192
    %v8194 = vsel %vm1980, %v8039, 0.0
    %8195 = vadd.xlane.f32.xlu0 %v8194
    %v8196 = vpop.xlane.xlu0 %8195
    %v8197 = vsel %vm1980, %v8041, 0.0
    %8198 = vadd.xlane.f32.xlu0 %v8197
    %v8199 = vpop.xlane.xlu0 %8198
    %v8200 = vsel %vm1980, %v8043, 0.0
    %8201 = vadd.xlane.f32.xlu0 %v8200
    %v8202 = vpop.xlane.xlu0 %8201
    %v8203 = vsel %vm1980, %v8045, 0.0
    %8204 = vadd.xlane.f32.xlu0 %v8203
    %v8205 = vpop.xlane.xlu0 %8204
    %v8206 = vsel %vm1980, %v8047, 0.0
    %8207 = vadd.xlane.f32.xlu0 %v8206
    %v8208 = vpop.xlane.xlu0 %8207
    %v8209 = vsel %vm1980, %v8049, 0.0
    %8210 = vadd.xlane.f32.xlu0 %v8209
    %v8211 = vpop.xlane.xlu0 %8210
    %v8212 = vsel %vm1980, %v8051, 0.0
    %8213 = vadd.xlane.f32.xlu0 %v8212
    %v8214 = vpop.xlane.xlu0 %8213
    %v8215 = vsel %vm1980, %v8053, 0.0
    %8216 = vadd.xlane.f32.xlu0 %v8215
    %v8217 = vpop.xlane.xlu0 %8216
    %v8218 = vsel %vm1980, %v8055, 0.0
    %8219 = vadd.xlane.f32.xlu0 %v8218
    %v8220 = vpop.xlane.xlu0 %8219
    %v8221 = vsel %vm1980, %v8057, 0.0
    %8222 = vadd.xlane.f32.xlu0 %v8221
    %v8223 = vpop.xlane.xlu0 %8222
    %v8224 = vsel %vm1980, %v8059, 0.0
    %8225 = vadd.xlane.f32.xlu0 %v8224
    %v8226 = vpop.xlane.xlu0 %8225
    %v8227 = vsel %vm1980, %v8061, 0.0
    %8228 = vadd.xlane.f32.xlu0 %v8227
    %v8229 = vpop.xlane.xlu0 %8228
    %v8230 = vsel %vm1980, %v8063, 0.0
    %8231 = vadd.xlane.f32.xlu0 %v8230
    %v8232 = vpop.xlane.xlu0 %8231
    %v8233 = vsel %vm1980, %v8065, 0.0
    %8234 = vadd.xlane.f32.xlu0 %v8233
    %v8235 = vpop.xlane.xlu0 %8234
    %v8236 = vsel %vm1980, %v8067, 0.0
    %8237 = vadd.xlane.f32.xlu0 %v8236
    %v8238 = vpop.xlane.xlu0 %8237
    %v8239 = vsel %vm1980, %v8069, 0.0
    %8240 = vadd.xlane.f32.xlu0 %v8239
    %v8241 = vpop.xlane.xlu0 %8240
    %v8242 = vsel %vm1980, %v8071, 0.0
    %8243 = vadd.xlane.f32.xlu0 %v8242
    %v8244 = vpop.xlane.xlu0 %8243
    %v8245 = vsel %vm1980, %v8073, 0.0
    %8246 = vadd.xlane.f32.xlu0 %v8245
    %v8247 = vpop.xlane.xlu0 %8246
    %v8248 = vsel %vm1980, %v8075, 0.0
    %8249 = vadd.xlane.f32.xlu0 %v8248
    %v8250 = vpop.xlane.xlu0 %8249
    %v8251 = vsel %vm1980, %v8077, 0.0
    %8252 = vadd.xlane.f32.xlu0 %v8251
    %v8253 = vpop.xlane.xlu0 %8252
    %v8254 = vsel %vm1980, %v8079, 0.0
    %8255 = vadd.xlane.f32.xlu0 %v8254
    %v8256 = vpop.xlane.xlu0 %8255
    %v8257 = vsel %vm1980, %v8081, 0.0
    %8258 = vadd.xlane.f32.xlu0 %v8257
    %v8259 = vpop.xlane.xlu0 %8258
    %v8260 = vsel %vm1980, %v8083, 0.0
    %8261 = vadd.xlane.f32.xlu0 %v8260
    %v8262 = vpop.xlane.xlu0 %8261
    %v8263 = vsel %vm1980, %v8085, 0.0
    %8264 = vadd.xlane.f32.xlu0 %v8263
    %v8265 = vpop.xlane.xlu0 %8264
    %v8266 = vsel %vm1980, %v8087, 0.0
    %8267 = vadd.xlane.f32.xlu0 %v8266
    %v8268 = vpop.xlane.xlu0 %8267
    %v8269 = vsel %vm1980, %v8089, 0.0
    %8270 = vadd.xlane.f32.xlu0 %v8269
    %v8271 = vpop.xlane.xlu0 %8270
    %v8272 = vsel %vm1980, %v8091, 0.0
    %8273 = vadd.xlane.f32.xlu0 %v8272
    %v8274 = vpop.xlane.xlu0 %8273
    %v8275 = vsel %vm1980, %v8093, 0.0
    %8276 = vadd.xlane.f32.xlu0 %v8275
    %v8277 = vpop.xlane.xlu0 %8276
    %v8278 = vsel %vm1980, %v8095, 0.0
    %8279 = vadd.xlane.f32.xlu0 %v8278
    %v8280 = vpop.xlane.xlu0 %8279
    %v8281 = vsel %vm1980, %v8097, 0.0
    %8282 = vadd.xlane.f32.xlu0 %v8281
    %v8283 = vpop.xlane.xlu0 %8282
    %v8284 = vsel %vm1980, %v8099, 0.0
    %8285 = vadd.xlane.f32.xlu0 %v8284
    %v8286 = vpop.xlane.xlu0 %8285
    %v8287 = vsel %vm1980, %v8101, 0.0
    %8288 = vadd.xlane.f32.xlu0 %v8287
    %v8289 = vpop.xlane.xlu0 %8288
    %v8290 = vsel %vm1980, %v8103, 0.0
    %8291 = vadd.xlane.f32.xlu0 %v8290
    %v8292 = vpop.xlane.xlu0 %8291
    %v8293 = vsel %vm1980, %v8105, 0.0
    %8294 = vadd.xlane.f32.xlu0 %v8293
    %v8295 = vpop.xlane.xlu0 %8294
    %v8296 = vsel %vm1980, %v8107, 0.0
    %8297 = vadd.xlane.f32.xlu0 %v8296
    %v8298 = vpop.xlane.xlu0 %8297
    %v8299 = vsel %vm1980, %v8109, 0.0
    %8300 = vadd.xlane.f32.xlu0 %v8299
    %v8301 = vpop.xlane.xlu0 %8300
    %v8302 = vrcp.pop %v8112
    %v8303 = vmul.f32 %v7983, %v8302
    %v8304 = vrcp.pop %v8115
    %v8305 = vmul.f32 %v7985, %v8304
    %v8306 = vrcp.pop %v8118
    %v8307 = vmul.f32 %v7987, %v8306
    %v8308 = vrcp.pop %v8121
    %v8309 = vmul.f32 %v7989, %v8308
    %v8310 = vrcp.pop %v8124
    %v8311 = vmul.f32 %v7991, %v8310
    %v8312 = vrcp.pop %v8127
    %v8313 = vmul.f32 %v7993, %v8312
    %v8314 = vrcp.pop %v8130
    %v8315 = vmul.f32 %v7995, %v8314
    %v8316 = vrcp.pop %v8133
    %v8317 = vmul.f32 %v7997, %v8316
    %v8318 = vrcp.pop %v8136
    %v8319 = vmul.f32 %v7999, %v8318
    %v8320 = vrcp.pop %v8139
    %v8321 = vmul.f32 %v8001, %v8320
    %v8322 = vrcp.pop %v8142
    %v8323 = vmul.f32 %v8003, %v8322
    %v8324 = vrcp.pop %v8145
    %v8325 = vmul.f32 %v8005, %v8324
    %v8326 = vrcp.pop %v8148
    %v8327 = vmul.f32 %v8007, %v8326
    %v8328 = vrcp.pop %v8151
    %v8329 = vmul.f32 %v8009, %v8328
    %v8330 = vrcp.pop %v8154
    %v8331 = vmul.f32 %v8011, %v8330
    %v8332 = vrcp.pop %v8157
    %v8333 = vmul.f32 %v8013, %v8332
    %v8334 = vrcp.pop %v8160
    %v8335 = vmul.f32 %v8015, %v8334
    %v8336 = vrcp.pop %v8163
    %v8337 = vmul.f32 %v8017, %v8336
    %v8338 = vrcp.pop %v8166
    %v8339 = vmul.f32 %v8019, %v8338
    %v8340 = vrcp.pop %v8169
    %v8341 = vmul.f32 %v8021, %v8340
    %v8342 = vrcp.pop %v8172
    %v8343 = vmul.f32 %v8023, %v8342
    %v8344 = vrcp.pop %v8175
    %v8345 = vmul.f32 %v8025, %v8344
    %v8346 = vrcp.pop %v8178
    %v8347 = vmul.f32 %v8027, %v8346
    %v8348 = vrcp.pop %v8181
    %v8349 = vmul.f32 %v8029, %v8348
    %v8350 = vrcp.pop %v8184
    %v8351 = vmul.f32 %v8031, %v8350
    %v8352 = vrcp.pop %v8187
    %v8353 = vmul.f32 %v8033, %v8352
    %v8354 = vrcp.pop %v8190
    %v8355 = vmul.f32 %v8035, %v8354
    %v8356 = vrcp.pop %v8193
    %v8357 = vmul.f32 %v8037, %v8356
    %v8358 = vrcp.pop %v8196
    %v8359 = vmul.f32 %v8039, %v8358
    %v8360 = vrcp.pop %v8199
    %v8361 = vmul.f32 %v8041, %v8360
    %v8362 = vrcp.pop %v8202
    %v8363 = vmul.f32 %v8043, %v8362
    %v8364 = vrcp.pop %v8205
    %v8365 = vmul.f32 %v8045, %v8364
    %v8366 = vrcp.pop %v8208
    %v8367 = vmul.f32 %v8047, %v8366
    %v8368 = vrcp.pop %v8211
    %v8369 = vmul.f32 %v8049, %v8368
    %v8370 = vrcp.pop %v8214
    %v8371 = vmul.f32 %v8051, %v8370
    %v8372 = vrcp.pop %v8217
    %v8373 = vmul.f32 %v8053, %v8372
    %v8374 = vrcp.pop %v8220
    %v8375 = vmul.f32 %v8055, %v8374
    %v8376 = vrcp.pop %v8223
    %v8377 = vmul.f32 %v8057, %v8376
    %v8378 = vrcp.pop %v8226
    %v8379 = vmul.f32 %v8059, %v8378
    %v8380 = vrcp.pop %v8229
    %v8381 = vmul.f32 %v8061, %v8380
    %v8382 = vrcp.pop %v8232
    %v8383 = vmul.f32 %v8063, %v8382
    %v8384 = vrcp.pop %v8235
    %v8385 = vmul.f32 %v8065, %v8384
    %v8386 = vrcp.pop %v8238
    %v8387 = vmul.f32 %v8067, %v8386
    %v8388 = vrcp.pop %v8241
    %v8389 = vmul.f32 %v8069, %v8388
    %v8390 = vrcp.pop %v8244
    %v8391 = vmul.f32 %v8071, %v8390
    %v8392 = vrcp.pop %v8247
    %v8393 = vmul.f32 %v8073, %v8392
    %v8394 = vrcp.pop %v8250
    %v8395 = vmul.f32 %v8075, %v8394
    %v8396 = vrcp.pop %v8253
    %v8397 = vmul.f32 %v8077, %v8396
    %v8398 = vrcp.pop %v8256
    %v8399 = vmul.f32 %v8079, %v8398
    %v8400 = vrcp.pop %v8259
    %v8401 = vmul.f32 %v8081, %v8400
    %v8402 = vrcp.pop %v8262
    %v8403 = vmul.f32 %v8083, %v8402
    %v8404 = vrcp.pop %v8265
    %v8405 = vmul.f32 %v8085, %v8404
    %v8406 = vrcp.pop %v8268
    %v8407 = vmul.f32 %v8087, %v8406
    %v8408 = vrcp.pop %v8271
    %v8409 = vmul.f32 %v8089, %v8408
    %v8410 = vrcp.pop %v8274
    %v8411 = vmul.f32 %v8091, %v8410
    %v8412 = vrcp.pop %v8277
    %v8413 = vmul.f32 %v8093, %v8412
    %v8414 = vrcp.pop %v8280
    %v8415 = vmul.f32 %v8095, %v8414
    %v8416 = vrcp.pop %v8283
    %v8417 = vmul.f32 %v8097, %v8416
    %v8418 = vrcp.pop %v8286
    %v8419 = vmul.f32 %v8099, %v8418
    %v8420 = vrcp.pop %v8289
    %v8421 = vmul.f32 %v8101, %v8420
    %v8422 = vrcp.pop %v8292
    %v8423 = vmul.f32 %v8103, %v8422
    %v8424 = vrcp.pop %v8295
    %v8425 = vmul.f32 %v8105, %v8424
    %v8426 = vrcp.pop %v8298
    %v8427 = vmul.f32 %v8107, %v8426
    %v8428 = vrcp.pop %v8301
    %v8429 = vmul.f32 %v8109, %v8428
    %8430 = vrot.lane.b32.xlu0 %v6183, 112
    %v8431 = vpop.permute.xlu0 %8430
    %8432 = vrot.lane.b32.xlu0 %v6188, 112
    %v8433 = vpop.permute.xlu0 %8432
    %8434 = vrot.lane.b32.xlu0 %v6193, 112
    %v8435 = vpop.permute.xlu0 %8434
    %8436 = vrot.lane.b32.xlu0 %v6198, 112
    %v8437 = vpop.permute.xlu0 %8436
    %8438 = vrot.lane.b32.xlu0 %v6203, 112
    %v8439 = vpop.permute.xlu0 %8438
    %8440 = vrot.lane.b32.xlu0 %v6208, 112
    %v8441 = vpop.permute.xlu0 %8440
    %8442 = vrot.lane.b32.xlu0 %v6213, 112
    %v8443 = vpop.permute.xlu0 %8442
    %8444 = vrot.lane.b32.xlu0 %v6218, 112
    %v8445 = vpop.permute.xlu0 %8444
    %v8455 = vsel %vm1980, %v8303, 0
    %v8458 = vsel %vm1980, %v8305, 0
    %v8461 = vsel %vm1980, %v8307, 0
    %v8464 = vsel %vm1980, %v8309, 0
    %v8467 = vsel %vm1980, %v8311, 0
    %v8470 = vsel %vm1980, %v8313, 0
    %v8473 = vsel %vm1980, %v8315, 0
    %v8476 = vsel %vm1980, %v8317, 0
    %8478 = vmatprep.subr.mxu0 0.0
    %8479 = vmatpush1.msra.mxu0 %v8431
    %8480 = vmatprep.subr.mxu0 0.0
    %8481 = vmatpush1.msra.mxu0 %v8433
    %8482 = vmatprep.subr.mxu0 0.0
    %8483 = vmatpush1.msra.mxu0 %v8435
    %8484 = vmatprep.subr.mxu0 0.0
    %8485 = vmatpush1.msra.mxu0 %v8437
    %8486 = vmatprep.subr.mxu0 0.0
    %8487 = vmatpush1.msra.mxu0 %v8439
    %8488 = vmatprep.subr.mxu0 0.0
    %8489 = vmatpush1.msra.mxu0 %v8441
    %8490 = vmatprep.subr.mxu0 0.0
    %8491 = vmatpush1.msra.mxu0 %v8443
    %8492 = vmatprep.subr.mxu0 0.0
    %8493 = vmatpush1.msra.mxu0 %v8445
    %8494 = vmatprep.subr.mxu0 0.0
    %8495 = vmatpush1.msra.mxu0 0.0
    %8496 = vmatprep.subr.mxu0 0.0
    %8497 = vmatpush1.msra.mxu0 0.0
    %8498 = vmatprep.subr.mxu0 0.0
    %8499 = vmatpush1.msra.mxu0 0.0
    %8500 = vmatprep.subr.mxu0 0.0
    %8501 = vmatpush1.msra.mxu0 0.0
    %8502 = vmatprep.subr.mxu0 0.0
    %8503 = vmatpush1.msra.mxu0 0.0
    %8504 = vmatprep.subr.mxu0 0.0
    %8505 = vmatpush1.msra.mxu0 0.0
    %8506 = vmatprep.subr.mxu0 0.0
    %8507 = vmatpush1.msra.mxu0 0.0
    %8508 = vmatprep.subr.mxu0 0.0
    %8509 = vmatpush1.msra.mxu0 0.0
    %8510 = vmatprep.subr.mxu0 0.0
    %8511 = vmatpush1.msra.mxu0 0.0
    %8512 = vmatprep.subr.mxu0 0.0
    %8513 = vmatpush1.msra.mxu0 0.0
    %8514 = vmatprep.subr.mxu0 0.0
    %8515 = vmatpush1.msra.mxu0 0.0
    %8516 = vmatprep.subr.mxu0 0.0
    %8517 = vmatpush1.msra.mxu0 0.0
    %8518 = vmatprep.subr.mxu0 0.0
    %8519 = vmatpush1.msra.mxu0 0.0
    %8520 = vmatprep.subr.mxu0 0.0
    %8521 = vmatpush1.msra.mxu0 0.0
    %8522 = vmatprep.subr.mxu0 0.0
    %8523 = vmatpush1.msra.mxu0 0.0
    %8524 = vmatprep.subr.mxu0 0.0
    %8525 = vmatpush1.msra.mxu0 0.0
    %8526 = vmatprep.subr.mxu0 0.0
    %8527 = vmatpush1.msra.mxu0 0.0
    %8528 = vmatprep.subr.mxu0 0.0
    %8529 = vmatpush1.msra.mxu0 0.0
    %8530 = vmatprep.subr.mxu0 0.0
    %8531 = vmatpush1.msra.mxu0 0.0
    %8532 = vmatprep.subr.mxu0 0.0
    %8533 = vmatpush1.msra.mxu0 0.0
    %8534 = vmatprep.subr.mxu0 0.0
    %8535 = vmatpush1.msra.mxu0 0.0
    %8536 = vmatprep.subr.mxu0 0.0
    %8537 = vmatpush1.msra.mxu0 0.0
    %8538 = vmatprep.subr.mxu0 0.0
    %8539 = vmatpush1.msra.mxu0 0.0
    %8540 = vmatprep.subr.mxu0 0.0
    %8541 = vmatpush1.msra.mxu0 0.0
    %8542 = vmatprep.mubr.f32.mxu0 0.0
    %8543 = vmatmul.mubr.f32.gmra.mrb[0].mxu0 %v8455
    %v8544 = vpop.f32.mrb[0].mxu0
    %v8545 = vadd.f32 0.0, %v8544
    %v8546 = vpop.f32.mrb[0].mxu0
    %8547 = vmatprep.mubr.f32.mxu0 0.0
    %8548 = vmatmul.mubr.f32.gmra.mrb[0].mxu0 %v8458
    %v8549 = vpop.f32.mrb[0].mxu0
    %v8550 = vadd.f32 0.0, %v8549
    %v8551 = vpop.f32.mrb[0].mxu0
    %8552 = vmatprep.mubr.f32.mxu0 0.0
    %8553 = vmatmul.mubr.f32.gmra.mrb[0].mxu0 %v8461
    %v8554 = vpop.f32.mrb[0].mxu0
    %v8555 = vadd.f32 0.0, %v8554
    %v8556 = vpop.f32.mrb[0].mxu0
    %8557 = vmatprep.mubr.f32.mxu0 0.0
    %8558 = vmatmul.mubr.f32.gmra.mrb[0].mxu0 %v8464
    %v8559 = vpop.f32.mrb[0].mxu0
    %v8560 = vadd.f32 0.0, %v8559
    %v8561 = vpop.f32.mrb[0].mxu0
    %8562 = vmatprep.mubr.f32.mxu0 0.0
    %8563 = vmatmul.mubr.f32.gmra.mrb[0].mxu0 %v8467
    %v8564 = vpop.f32.mrb[0].mxu0
    %v8565 = vadd.f32 0.0, %v8564
    %v8566 = vpop.f32.mrb[0].mxu0
    %8567 = vmatprep.mubr.f32.mxu0 0.0
    %8568 = vmatmul.mubr.f32.gmra.mrb[0].mxu0 %v8470
    %v8569 = vpop.f32.mrb[0].mxu0
    %v8570 = vadd.f32 0.0, %v8569
    %v8571 = vpop.f32.mrb[0].mxu0
    %8572 = vmatprep.mubr.f32.mxu0 0.0
    %8573 = vmatmul.mubr.f32.gmra.mrb[0].mxu0 %v8473
    %v8574 = vpop.f32.mrb[0].mxu0
    %v8575 = vadd.f32 0.0, %v8574
    %v8576 = vpop.f32.mrb[0].mxu0
    %8577 = vmatprep.mubr.f32.mxu0 0.0
    %8578 = vmatmul.mubr.f32.gmra.mrb[0].mxu0 %v8476
    %v8579 = vpop.f32.mrb[0].mxu0
    %v8580 = vadd.f32 0.0, %v8579
    %v8581 = vpop.f32.mrb[0].mxu0
    %8582 = vdwg.mxu0
    %8583 = vrot.lane.b32.xlu0 %v6270, 112
    %v8584 = vpop.permute.xlu0 %8583
    %8585 = vrot.lane.b32.xlu0 %v6272, 112
    %v8586 = vpop.permute.xlu0 %8585
    %8587 = vrot.lane.b32.xlu0 %v6274, 112
    %v8588 = vpop.permute.xlu0 %8587
    %8589 = vrot.lane.b32.xlu0 %v6276, 112
    %v8590 = vpop.permute.xlu0 %8589
    %8591 = vrot.lane.b32.xlu0 %v6278, 112
    %v8592 = vpop.permute.xlu0 %8591
    %8593 = vrot.lane.b32.xlu0 %v6280, 112
    %v8594 = vpop.permute.xlu0 %8593
    %8595 = vrot.lane.b32.xlu0 %v6282, 112
    %v8596 = vpop.permute.xlu0 %8595
    %8597 = vrot.lane.b32.xlu0 %v6284, 112
    %v8598 = vpop.permute.xlu0 %8597
    %v8608 = vsel %vm1980, %v8319, 0
    %v8611 = vsel %vm1980, %v8321, 0
    %v8614 = vsel %vm1980, %v8323, 0
    %v8617 = vsel %vm1980, %v8325, 0
    %v8620 = vsel %vm1980, %v8327, 0
    %v8623 = vsel %vm1980, %v8329, 0
    %v8626 = vsel %vm1980, %v8331, 0
    %v8629 = vsel %vm1980, %v8333, 0
    %8631 = vmatprep.subr.mxu0 0.0
    %8632 = vmatpush1.msra.mxu0 %v8584
    %8633 = vmatprep.subr.mxu0 0.0
    %8634 = vmatpush1.msra.mxu0 %v8586
    %8635 = vmatprep.subr.mxu0 0.0
    %8636 = vmatpush1.msra.mxu0 %v8588
    %8637 = vmatprep.subr.mxu0 0.0
    %8638 = vmatpush1.msra.mxu0 %v8590
    %8639 = vmatprep.subr.mxu0 0.0
    %8640 = vmatpush1.msra.mxu0 %v8592
    %8641 = vmatprep.subr.mxu0 0.0
    %8642 = vmatpush1.msra.mxu0 %v8594
    %8643 = vmatprep.subr.mxu0 0.0
    %8644 = vmatpush1.msra.mxu0 %v8596
    %8645 = vmatprep.subr.mxu0 0.0
    %8646 = vmatpush1.msra.mxu0 %v8598
    %8647 = vmatprep.subr.mxu0 0.0
    %8648 = vmatpush1.msra.mxu0 0.0
    %8649 = vmatprep.subr.mxu0 0.0
    %8650 = vmatpush1.msra.mxu0 0.0
    %8651 = vmatprep.subr.mxu0 0.0
    %8652 = vmatpush1.msra.mxu0 0.0
    %8653 = vmatprep.subr.mxu0 0.0
    %8654 = vmatpush1.msra.mxu0 0.0
    %8655 = vmatprep.subr.mxu0 0.0
    %8656 = vmatpush1.msra.mxu0 0.0
    %8657 = vmatprep.subr.mxu0 0.0
    %8658 = vmatpush1.msra.mxu0 0.0
    %8659 = vmatprep.subr.mxu0 0.0
    %8660 = vmatpush1.msra.mxu0 0.0
    %8661 = vmatprep.subr.mxu0 0.0
    %8662 = vmatpush1.msra.mxu0 0.0
    %8663 = vmatprep.subr.mxu0 0.0
    %8664 = vmatpush1.msra.mxu0 0.0
    %8665 = vmatprep.subr.mxu0 0.0
    %8666 = vmatpush1.msra.mxu0 0.0
    %8667 = vmatprep.subr.mxu0 0.0
    %8668 = vmatpush1.msra.mxu0 0.0
    %8669 = vmatprep.subr.mxu0 0.0
    %8670 = vmatpush1.msra.mxu0 0.0
    %8671 = vmatprep.subr.mxu0 0.0
    %8672 = vmatpush1.msra.mxu0 0.0
    %8673 = vmatprep.subr.mxu0 0.0
    %8674 = vmatpush1.msra.mxu0 0.0
    %8675 = vmatprep.subr.mxu0 0.0
    %8676 = vmatpush1.msra.mxu0 0.0
    %8677 = vmatprep.subr.mxu0 0.0
    %8678 = vmatpush1.msra.mxu0 0.0
    %8679 = vmatprep.subr.mxu0 0.0
    %8680 = vmatpush1.msra.mxu0 0.0
    %8681 = vmatprep.subr.mxu0 0.0
    %8682 = vmatpush1.msra.mxu0 0.0
    %8683 = vmatprep.subr.mxu0 0.0
    %8684 = vmatpush1.msra.mxu0 0.0
    %8685 = vmatprep.subr.mxu0 0.0
    %8686 = vmatpush1.msra.mxu0 0.0
    %8687 = vmatprep.subr.mxu0 0.0
    %8688 = vmatpush1.msra.mxu0 0.0
    %8689 = vmatprep.subr.mxu0 0.0
    %8690 = vmatpush1.msra.mxu0 0.0
    %8691 = vmatprep.subr.mxu0 0.0
    %8692 = vmatpush1.msra.mxu0 0.0
    %8693 = vmatprep.subr.mxu0 0.0
    %8694 = vmatpush1.msra.mxu0 0.0
    %8695 = vmatprep.mubr.f32.mxu0 0.0
    %8696 = vmatmul.mubr.f32.gmra.mrb[0].mxu0 %v8608
    %v8697 = vpop.f32.mrb[0].mxu0
    %v8698 = vadd.f32 0.0, %v8697
    %v8699 = vpop.f32.mrb[0].mxu0
    %8700 = vmatprep.mubr.f32.mxu0 0.0
    %8701 = vmatmul.mubr.f32.gmra.mrb[0].mxu0 %v8611
    %v8702 = vpop.f32.mrb[0].mxu0
    %v8703 = vadd.f32 0.0, %v8702
    %v8704 = vpop.f32.mrb[0].mxu0
    %8705 = vmatprep.mubr.f32.mxu0 0.0
    %8706 = vmatmul.mubr.f32.gmra.mrb[0].mxu0 %v8614
    %v8707 = vpop.f32.mrb[0].mxu0
    %v8708 = vadd.f32 0.0, %v8707
    %v8709 = vpop.f32.mrb[0].mxu0
    %8710 = vmatprep.mubr.f32.mxu0 0.0
    %8711 = vmatmul.mubr.f32.gmra.mrb[0].mxu0 %v8617
    %v8712 = vpop.f32.mrb[0].mxu0
    %v8713 = vadd.f32 0.0, %v8712
    %v8714 = vpop.f32.mrb[0].mxu0
    %8715 = vmatprep.mubr.f32.mxu0 0.0
    %8716 = vmatmul.mubr.f32.gmra.mrb[0].mxu0 %v8620
    %v8717 = vpop.f32.mrb[0].mxu0
    %v8718 = vadd.f32 0.0, %v8717
    %v8719 = vpop.f32.mrb[0].mxu0
    %8720 = vmatprep.mubr.f32.mxu0 0.0
    %8721 = vmatmul.mubr.f32.gmra.mrb[0].mxu0 %v8623
    %v8722 = vpop.f32.mrb[0].mxu0
    %v8723 = vadd.f32 0.0, %v8722
    %v8724 = vpop.f32.mrb[0].mxu0
    %8725 = vmatprep.mubr.f32.mxu0 0.0
    %8726 = vmatmul.mubr.f32.gmra.mrb[0].mxu0 %v8626
    %v8727 = vpop.f32.mrb[0].mxu0
    %v8728 = vadd.f32 0.0, %v8727
    %v8729 = vpop.f32.mrb[0].mxu0
    %8730 = vmatprep.mubr.f32.mxu0 0.0
    %8731 = vmatmul.mubr.f32.gmra.mrb[0].mxu0 %v8629
    %v8732 = vpop.f32.mrb[0].mxu0
    %v8733 = vadd.f32 0.0, %v8732
    %v8734 = vpop.f32.mrb[0].mxu0
    %8735 = vdwg.mxu0
    %8736 = vrot.lane.b32.xlu0 %v6286, 112
    %v8737 = vpop.permute.xlu0 %8736
    %8738 = vrot.lane.b32.xlu0 %v6288, 112
    %v8739 = vpop.permute.xlu0 %8738
    %8740 = vrot.lane.b32.xlu0 %v6290, 112
    %v8741 = vpop.permute.xlu0 %8740
    %8742 = vrot.lane.b32.xlu0 %v6292, 112
    %v8743 = vpop.permute.xlu0 %8742
    %8744 = vrot.lane.b32.xlu0 %v6294, 112
    %v8745 = vpop.permute.xlu0 %8744
    %8746 = vrot.lane.b32.xlu0 %v6296, 112
    %v8747 = vpop.permute.xlu0 %8746
    %8748 = vrot.lane.b32.xlu0 %v6298, 112
    %v8749 = vpop.permute.xlu0 %8748
    %8750 = vrot.lane.b32.xlu0 %v6300, 112
    %v8751 = vpop.permute.xlu0 %8750
    %v8761 = vsel %vm1980, %v8335, 0
    %v8764 = vsel %vm1980, %v8337, 0
    %v8767 = vsel %vm1980, %v8339, 0
    %v8770 = vsel %vm1980, %v8341, 0
    %v8773 = vsel %vm1980, %v8343, 0
    %v8776 = vsel %vm1980, %v8345, 0
    %v8779 = vsel %vm1980, %v8347, 0
    %v8782 = vsel %vm1980, %v8349, 0
    %8784 = vmatprep.subr.mxu0 0.0
    %8785 = vmatpush1.msra.mxu0 %v8737
    %8786 = vmatprep.subr.mxu0 0.0
    %8787 = vmatpush1.msra.mxu0 %v8739
    %8788 = vmatprep.subr.mxu0 0.0
    %8789 = vmatpush1.msra.mxu0 %v8741
    %8790 = vmatprep.subr.mxu0 0.0
    %8791 = vmatpush1.msra.mxu0 %v8743
    %8792 = vmatprep.subr.mxu0 0.0
    %8793 = vmatpush1.msra.mxu0 %v8745
    %8794 = vmatprep.subr.mxu0 0.0
    %8795 = vmatpush1.msra.mxu0 %v8747
    %8796 = vmatprep.subr.mxu0 0.0
    %8797 = vmatpush1.msra.mxu0 %v8749
    %8798 = vmatprep.subr.mxu0 0.0
    %8799 = vmatpush1.msra.mxu0 %v8751
    %8800 = vmatprep.subr.mxu0 0.0
    %8801 = vmatpush1.msra.mxu0 0.0
    %8802 = vmatprep.subr.mxu0 0.0
    %8803 = vmatpush1.msra.mxu0 0.0
    %8804 = vmatprep.subr.mxu0 0.0
    %8805 = vmatpush1.msra.mxu0 0.0
    %8806 = vmatprep.subr.mxu0 0.0
    %8807 = vmatpush1.msra.mxu0 0.0
    %8808 = vmatprep.subr.mxu0 0.0
    %8809 = vmatpush1.msra.mxu0 0.0
    %8810 = vmatprep.subr.mxu0 0.0
    %8811 = vmatpush1.msra.mxu0 0.0
    %8812 = vmatprep.subr.mxu0 0.0
    %8813 = vmatpush1.msra.mxu0 0.0
    %8814 = vmatprep.subr.mxu0 0.0
    %8815 = vmatpush1.msra.mxu0 0.0
    %8816 = vmatprep.subr.mxu0 0.0
    %8817 = vmatpush1.msra.mxu0 0.0
    %8818 = vmatprep.subr.mxu0 0.0
    %8819 = vmatpush1.msra.mxu0 0.0
    %8820 = vmatprep.subr.mxu0 0.0
    %8821 = vmatpush1.msra.mxu0 0.0
    %8822 = vmatprep.subr.mxu0 0.0
    %8823 = vmatpush1.msra.mxu0 0.0
    %8824 = vmatprep.subr.mxu0 0.0
    %8825 = vmatpush1.msra.mxu0 0.0
    %8826 = vmatprep.subr.mxu0 0.0
    %8827 = vmatpush1.msra.mxu0 0.0
    %8828 = vmatprep.subr.mxu0 0.0
    %8829 = vmatpush1.msra.mxu0 0.0
    %8830 = vmatprep.subr.mxu0 0.0
    %8831 = vmatpush1.msra.mxu0 0.0
    %8832 = vmatprep.subr.mxu0 0.0
    %8833 = vmatpush1.msra.mxu0 0.0
    %8834 = vmatprep.subr.mxu0 0.0
    %8835 = vmatpush1.msra.mxu0 0.0
    %8836 = vmatprep.subr.mxu0 0.0
    %8837 = vmatpush1.msra.mxu0 0.0
    %8838 = vmatprep.subr.mxu0 0.0
    %8839 = vmatpush1.msra.mxu0 0.0
    %8840 = vmatprep.subr.mxu0 0.0
    %8841 = vmatpush1.msra.mxu0 0.0
    %8842 = vmatprep.subr.mxu0 0.0
    %8843 = vmatpush1.msra.mxu0 0.0
    %8844 = vmatprep.subr.mxu0 0.0
    %8845 = vmatpush1.msra.mxu0 0.0
    %8846 = vmatprep.subr.mxu0 0.0
    %8847 = vmatpush1.msra.mxu0 0.0
    %8848 = vmatprep.mubr.f32.mxu0 0.0
    %8849 = vmatmul.mubr.f32.gmra.mrb[0].mxu0 %v8761
    %v8850 = vpop.f32.mrb[0].mxu0
    %v8851 = vadd.f32 0.0, %v8850
    %v8852 = vpop.f32.mrb[0].mxu0
    %8853 = vmatprep.mubr.f32.mxu0 0.0
    %8854 = vmatmul.mubr.f32.gmra.mrb[0].mxu0 %v8764
    %v8855 = vpop.f32.mrb[0].mxu0
    %v8856 = vadd.f32 0.0, %v8855
    %v8857 = vpop.f32.mrb[0].mxu0
    %8858 = vmatprep.mubr.f32.mxu0 0.0
    %8859 = vmatmul.mubr.f32.gmra.mrb[0].mxu0 %v8767
    %v8860 = vpop.f32.mrb[0].mxu0
    %v8861 = vadd.f32 0.0, %v8860
    %v8862 = vpop.f32.mrb[0].mxu0
    %8863 = vmatprep.mubr.f32.mxu0 0.0
    %8864 = vmatmul.mubr.f32.gmra.mrb[0].mxu0 %v8770
    %v8865 = vpop.f32.mrb[0].mxu0
    %v8866 = vadd.f32 0.0, %v8865
    %v8867 = vpop.f32.mrb[0].mxu0
    %8868 = vmatprep.mubr.f32.mxu0 0.0
    %8869 = vmatmul.mubr.f32.gmra.mrb[0].mxu0 %v8773
    %v8870 = vpop.f32.mrb[0].mxu0
    %v8871 = vadd.f32 0.0, %v8870
    %v8872 = vpop.f32.mrb[0].mxu0
    %8873 = vmatprep.mubr.f32.mxu0 0.0
    %8874 = vmatmul.mubr.f32.gmra.mrb[0].mxu0 %v8776
    %v8875 = vpop.f32.mrb[0].mxu0
    %v8876 = vadd.f32 0.0, %v8875
    %v8877 = vpop.f32.mrb[0].mxu0
    %8878 = vmatprep.mubr.f32.mxu0 0.0
    %8879 = vmatmul.mubr.f32.gmra.mrb[0].mxu0 %v8779
    %v8880 = vpop.f32.mrb[0].mxu0
    %v8881 = vadd.f32 0.0, %v8880
    %v8882 = vpop.f32.mrb[0].mxu0
    %8883 = vmatprep.mubr.f32.mxu0 0.0
    %8884 = vmatmul.mubr.f32.gmra.mrb[0].mxu0 %v8782
    %v8885 = vpop.f32.mrb[0].mxu0
    %v8886 = vadd.f32 0.0, %v8885
    %v8887 = vpop.f32.mrb[0].mxu0
    %8888 = vdwg.mxu0
    %8889 = vrot.lane.b32.xlu0 %v6302, 112
    %v8890 = vpop.permute.xlu0 %8889
    %8891 = vrot.lane.b32.xlu0 %v6304, 112
    %v8892 = vpop.permute.xlu0 %8891
    %8893 = vrot.lane.b32.xlu0 %v6306, 112
    %v8894 = vpop.permute.xlu0 %8893
    %8895 = vrot.lane.b32.xlu0 %v6308, 112
    %v8896 = vpop.permute.xlu0 %8895
    %8897 = vrot.lane.b32.xlu0 %v6310, 112
    %v8898 = vpop.permute.xlu0 %8897
    %8899 = vrot.lane.b32.xlu0 %v6312, 112
    %v8900 = vpop.permute.xlu0 %8899
    %8901 = vrot.lane.b32.xlu0 %v6314, 112
    %v8902 = vpop.permute.xlu0 %8901
    %8903 = vrot.lane.b32.xlu0 %v6316, 112
    %v8904 = vpop.permute.xlu0 %8903
    %v8914 = vsel %vm1980, %v8351, 0
    %v8917 = vsel %vm1980, %v8353, 0
    %v8920 = vsel %vm1980, %v8355, 0
    %v8923 = vsel %vm1980, %v8357, 0
    %v8926 = vsel %vm1980, %v8359, 0
    %v8929 = vsel %vm1980, %v8361, 0
    %v8932 = vsel %vm1980, %v8363, 0
    %v8935 = vsel %vm1980, %v8365, 0
    %8937 = vmatprep.subr.mxu0 0.0
    %8938 = vmatpush1.msra.mxu0 %v8890
    %8939 = vmatprep.subr.mxu0 0.0
    %8940 = vmatpush1.msra.mxu0 %v8892
    %8941 = vmatprep.subr.mxu0 0.0
    %8942 = vmatpush1.msra.mxu0 %v8894
    %8943 = vmatprep.subr.mxu0 0.0
    %8944 = vmatpush1.msra.mxu0 %v8896
    %8945 = vmatprep.subr.mxu0 0.0
    %8946 = vmatpush1.msra.mxu0 %v8898
    %8947 = vmatprep.subr.mxu0 0.0
    %8948 = vmatpush1.msra.mxu0 %v8900
    %8949 = vmatprep.subr.mxu0 0.0
    %8950 = vmatpush1.msra.mxu0 %v8902
    %8951 = vmatprep.subr.mxu0 0.0
    %8952 = vmatpush1.msra.mxu0 %v8904
    %8953 = vmatprep.subr.mxu0 0.0
    %8954 = vmatpush1.msra.mxu0 0.0
    %8955 = vmatprep.subr.mxu0 0.0
    %8956 = vmatpush1.msra.mxu0 0.0
    %8957 = vmatprep.subr.mxu0 0.0
    %8958 = vmatpush1.msra.mxu0 0.0
    %8959 = vmatprep.subr.mxu0 0.0
    %8960 = vmatpush1.msra.mxu0 0.0
    %8961 = vmatprep.subr.mxu0 0.0
    %8962 = vmatpush1.msra.mxu0 0.0
    %8963 = vmatprep.subr.mxu0 0.0
    %8964 = vmatpush1.msra.mxu0 0.0
    %8965 = vmatprep.subr.mxu0 0.0
    %8966 = vmatpush1.msra.mxu0 0.0
    %8967 = vmatprep.subr.mxu0 0.0
    %8968 = vmatpush1.msra.mxu0 0.0
    %8969 = vmatprep.subr.mxu0 0.0
    %8970 = vmatpush1.msra.mxu0 0.0
    %8971 = vmatprep.subr.mxu0 0.0
    %8972 = vmatpush1.msra.mxu0 0.0
    %8973 = vmatprep.subr.mxu0 0.0
    %8974 = vmatpush1.msra.mxu0 0.0
    %8975 = vmatprep.subr.mxu0 0.0
    %8976 = vmatpush1.msra.mxu0 0.0
    %8977 = vmatprep.subr.mxu0 0.0
    %8978 = vmatpush1.msra.mxu0 0.0
    %8979 = vmatprep.subr.mxu0 0.0
    %8980 = vmatpush1.msra.mxu0 0.0
    %8981 = vmatprep.subr.mxu0 0.0
    %8982 = vmatpush1.msra.mxu0 0.0
    %8983 = vmatprep.subr.mxu0 0.0
    %8984 = vmatpush1.msra.mxu0 0.0
    %8985 = vmatprep.subr.mxu0 0.0
    %8986 = vmatpush1.msra.mxu0 0.0
    %8987 = vmatprep.subr.mxu0 0.0
    %8988 = vmatpush1.msra.mxu0 0.0
    %8989 = vmatprep.subr.mxu0 0.0
    %8990 = vmatpush1.msra.mxu0 0.0
    %8991 = vmatprep.subr.mxu0 0.0
    %8992 = vmatpush1.msra.mxu0 0.0
    %8993 = vmatprep.subr.mxu0 0.0
    %8994 = vmatpush1.msra.mxu0 0.0
    %8995 = vmatprep.subr.mxu0 0.0
    %8996 = vmatpush1.msra.mxu0 0.0
    %8997 = vmatprep.subr.mxu0 0.0
    %8998 = vmatpush1.msra.mxu0 0.0
    %8999 = vmatprep.subr.mxu0 0.0
    %9000 = vmatpush1.msra.mxu0 0.0
    %9001 = vmatprep.mubr.f32.mxu0 0.0
    %9002 = vmatmul.mubr.f32.gmra.mrb[0].mxu0 %v8914
    %v9003 = vpop.f32.mrb[0].mxu0
    %v9004 = vadd.f32 0.0, %v9003
    %v9005 = vpop.f32.mrb[0].mxu0
    %9006 = vmatprep.mubr.f32.mxu0 0.0
    %9007 = vmatmul.mubr.f32.gmra.mrb[0].mxu0 %v8917
    %v9008 = vpop.f32.mrb[0].mxu0
    %v9009 = vadd.f32 0.0, %v9008
    %v9010 = vpop.f32.mrb[0].mxu0
    %9011 = vmatprep.mubr.f32.mxu0 0.0
    %9012 = vmatmul.mubr.f32.gmra.mrb[0].mxu0 %v8920
    %v9013 = vpop.f32.mrb[0].mxu0
    %v9014 = vadd.f32 0.0, %v9013
    %v9015 = vpop.f32.mrb[0].mxu0
    %9016 = vmatprep.mubr.f32.mxu0 0.0
    %9017 = vmatmul.mubr.f32.gmra.mrb[0].mxu0 %v8923
    %v9018 = vpop.f32.mrb[0].mxu0
    %v9019 = vadd.f32 0.0, %v9018
    %v9020 = vpop.f32.mrb[0].mxu0
    %9021 = vmatprep.mubr.f32.mxu0 0.0
    %9022 = vmatmul.mubr.f32.gmra.mrb[0].mxu0 %v8926
    %v9023 = vpop.f32.mrb[0].mxu0
    %v9024 = vadd.f32 0.0, %v9023
    %v9025 = vpop.f32.mrb[0].mxu0
    %9026 = vmatprep.mubr.f32.mxu0 0.0
    %9027 = vmatmul.mubr.f32.gmra.mrb[0].mxu0 %v8929
    %v9028 = vpop.f32.mrb[0].mxu0
    %v9029 = vadd.f32 0.0, %v9028
    %v9030 = vpop.f32.mrb[0].mxu0
    %9031 = vmatprep.mubr.f32.mxu0 0.0
    %9032 = vmatmul.mubr.f32.gmra.mrb[0].mxu0 %v8932
    %v9033 = vpop.f32.mrb[0].mxu0
    %v9034 = vadd.f32 0.0, %v9033
    %v9035 = vpop.f32.mrb[0].mxu0
    %9036 = vmatprep.mubr.f32.mxu0 0.0
    %9037 = vmatmul.mubr.f32.gmra.mrb[0].mxu0 %v8935
    %v9038 = vpop.f32.mrb[0].mxu0
    %v9039 = vadd.f32 0.0, %v9038
    %v9040 = vpop.f32.mrb[0].mxu0
    %9041 = vdwg.mxu0
    %9042 = vrot.lane.b32.xlu0 %v6223, 112
    %v9043 = vpop.permute.xlu0 %9042
    %9044 = vrot.lane.b32.xlu0 %v6228, 112
    %v9045 = vpop.permute.xlu0 %9044
    %9046 = vrot.lane.b32.xlu0 %v6233, 112
    %v9047 = vpop.permute.xlu0 %9046
    %9048 = vrot.lane.b32.xlu0 %v6238, 112
    %v9049 = vpop.permute.xlu0 %9048
    %9050 = vrot.lane.b32.xlu0 %v6243, 112
    %v9051 = vpop.permute.xlu0 %9050
    %9052 = vrot.lane.b32.xlu0 %v6248, 112
    %v9053 = vpop.permute.xlu0 %9052
    %9054 = vrot.lane.b32.xlu0 %v6253, 112
    %v9055 = vpop.permute.xlu0 %9054
    %9056 = vrot.lane.b32.xlu0 %v6258, 112
    %v9057 = vpop.permute.xlu0 %9056
    %v9067 = vsel %vm1980, %v8367, 0
    %v9070 = vsel %vm1980, %v8369, 0
    %v9073 = vsel %vm1980, %v8371, 0
    %v9076 = vsel %vm1980, %v8373, 0
    %v9079 = vsel %vm1980, %v8375, 0
    %v9082 = vsel %vm1980, %v8377, 0
    %v9085 = vsel %vm1980, %v8379, 0
    %v9088 = vsel %vm1980, %v8381, 0
    %9090 = vmatprep.subr.mxu0 0.0
    %9091 = vmatpush1.msra.mxu0 %v9043
    %9092 = vmatprep.subr.mxu0 0.0
    %9093 = vmatpush1.msra.mxu0 %v9045
    %9094 = vmatprep.subr.mxu0 0.0
    %9095 = vmatpush1.msra.mxu0 %v9047
    %9096 = vmatprep.subr.mxu0 0.0
    %9097 = vmatpush1.msra.mxu0 %v9049
    %9098 = vmatprep.subr.mxu0 0.0
    %9099 = vmatpush1.msra.mxu0 %v9051
    %9100 = vmatprep.subr.mxu0 0.0
    %9101 = vmatpush1.msra.mxu0 %v9053
    %9102 = vmatprep.subr.mxu0 0.0
    %9103 = vmatpush1.msra.mxu0 %v9055
    %9104 = vmatprep.subr.mxu0 0.0
    %9105 = vmatpush1.msra.mxu0 %v9057
    %9106 = vmatprep.subr.mxu0 0.0
    %9107 = vmatpush1.msra.mxu0 0.0
    %9108 = vmatprep.subr.mxu0 0.0
    %9109 = vmatpush1.msra.mxu0 0.0
    %9110 = vmatprep.subr.mxu0 0.0
    %9111 = vmatpush1.msra.mxu0 0.0
    %9112 = vmatprep.subr.mxu0 0.0
    %9113 = vmatpush1.msra.mxu0 0.0
    %9114 = vmatprep.subr.mxu0 0.0
    %9115 = vmatpush1.msra.mxu0 0.0
    %9116 = vmatprep.subr.mxu0 0.0
    %9117 = vmatpush1.msra.mxu0 0.0
    %9118 = vmatprep.subr.mxu0 0.0
    %9119 = vmatpush1.msra.mxu0 0.0
    %9120 = vmatprep.subr.mxu0 0.0
    %9121 = vmatpush1.msra.mxu0 0.0
    %9122 = vmatprep.subr.mxu0 0.0
    %9123 = vmatpush1.msra.mxu0 0.0
    %9124 = vmatprep.subr.mxu0 0.0
    %9125 = vmatpush1.msra.mxu0 0.0
    %9126 = vmatprep.subr.mxu0 0.0
    %9127 = vmatpush1.msra.mxu0 0.0
    %9128 = vmatprep.subr.mxu0 0.0
    %9129 = vmatpush1.msra.mxu0 0.0
    %9130 = vmatprep.subr.mxu0 0.0
    %9131 = vmatpush1.msra.mxu0 0.0
    %9132 = vmatprep.subr.mxu0 0.0
    %9133 = vmatpush1.msra.mxu0 0.0
    %9134 = vmatprep.subr.mxu0 0.0
    %9135 = vmatpush1.msra.mxu0 0.0
    %9136 = vmatprep.subr.mxu0 0.0
    %9137 = vmatpush1.msra.mxu0 0.0
    %9138 = vmatprep.subr.mxu0 0.0
    %9139 = vmatpush1.msra.mxu0 0.0
    %9140 = vmatprep.subr.mxu0 0.0
    %9141 = vmatpush1.msra.mxu0 0.0
    %9142 = vmatprep.subr.mxu0 0.0
    %9143 = vmatpush1.msra.mxu0 0.0
    %9144 = vmatprep.subr.mxu0 0.0
    %9145 = vmatpush1.msra.mxu0 0.0
    %9146 = vmatprep.subr.mxu0 0.0
    %9147 = vmatpush1.msra.mxu0 0.0
    %9148 = vmatprep.subr.mxu0 0.0
    %9149 = vmatpush1.msra.mxu0 0.0
    %9150 = vmatprep.subr.mxu0 0.0
    %9151 = vmatpush1.msra.mxu0 0.0
    %9152 = vmatprep.subr.mxu0 0.0
    %9153 = vmatpush1.msra.mxu0 0.0
    %9154 = vmatprep.mubr.f32.mxu0 0.0
    %9155 = vmatmul.mubr.f32.gmra.mrb[0].mxu0 %v9067
    %v9156 = vpop.f32.mrb[0].mxu0
    %v9157 = vadd.f32 0.0, %v9156
    %v9158 = vpop.f32.mrb[0].mxu0
    %9159 = vmatprep.mubr.f32.mxu0 0.0
    %9160 = vmatmul.mubr.f32.gmra.mrb[0].mxu0 %v9070
    %v9161 = vpop.f32.mrb[0].mxu0
    %v9162 = vadd.f32 0.0, %v9161
    %v9163 = vpop.f32.mrb[0].mxu0
    %9164 = vmatprep.mubr.f32.mxu0 0.0
    %9165 = vmatmul.mubr.f32.gmra.mrb[0].mxu0 %v9073
    %v9166 = vpop.f32.mrb[0].mxu0
    %v9167 = vadd.f32 0.0, %v9166
    %v9168 = vpop.f32.mrb[0].mxu0
    %9169 = vmatprep.mubr.f32.mxu0 0.0
    %9170 = vmatmul.mubr.f32.gmra.mrb[0].mxu0 %v9076
    %v9171 = vpop.f32.mrb[0].mxu0
    %v9172 = vadd.f32 0.0, %v9171
    %v9173 = vpop.f32.mrb[0].mxu0
    %9174 = vmatprep.mubr.f32.mxu0 0.0
    %9175 = vmatmul.mubr.f32.gmra.mrb[0].mxu0 %v9079
    %v9176 = vpop.f32.mrb[0].mxu0
    %v9177 = vadd.f32 0.0, %v9176
    %v9178 = vpop.f32.mrb[0].mxu0
    %9179 = vmatprep.mubr.f32.mxu0 0.0
    %9180 = vmatmul.mubr.f32.gmra.mrb[0].mxu0 %v9082
    %v9181 = vpop.f32.mrb[0].mxu0
    %v9182 = vadd.f32 0.0, %v9181
    %v9183 = vpop.f32.mrb[0].mxu0
    %9184 = vmatprep.mubr.f32.mxu0 0.0
    %9185 = vmatmul.mubr.f32.gmra.mrb[0].mxu0 %v9085
    %v9186 = vpop.f32.mrb[0].mxu0
    %v9187 = vadd.f32 0.0, %v9186
    %v9188 = vpop.f32.mrb[0].mxu0
    %9189 = vmatprep.mubr.f32.mxu0 0.0
    %9190 = vmatmul.mubr.f32.gmra.mrb[0].mxu0 %v9088
    %v9191 = vpop.f32.mrb[0].mxu0
    %v9192 = vadd.f32 0.0, %v9191
    %v9193 = vpop.f32.mrb[0].mxu0
    %9194 = vdwg.mxu0
    %9195 = vrot.lane.b32.xlu0 %v6326, 112
    %v9196 = vpop.permute.xlu0 %9195
    %9197 = vrot.lane.b32.xlu0 %v6328, 112
    %v9198 = vpop.permute.xlu0 %9197
    %9199 = vrot.lane.b32.xlu0 %v6330, 112
    %v9200 = vpop.permute.xlu0 %9199
    %9201 = vrot.lane.b32.xlu0 %v6332, 112
    %v9202 = vpop.permute.xlu0 %9201
    %9203 = vrot.lane.b32.xlu0 %v6334, 112
    %v9204 = vpop.permute.xlu0 %9203
    %9205 = vrot.lane.b32.xlu0 %v6336, 112
    %v9206 = vpop.permute.xlu0 %9205
    %9207 = vrot.lane.b32.xlu0 %v6338, 112
    %v9208 = vpop.permute.xlu0 %9207
    %9209 = vrot.lane.b32.xlu0 %v6340, 112
    %v9210 = vpop.permute.xlu0 %9209
    %v9220 = vsel %vm1980, %v8383, 0
    %v9223 = vsel %vm1980, %v8385, 0
    %v9226 = vsel %vm1980, %v8387, 0
    %v9229 = vsel %vm1980, %v8389, 0
    %v9232 = vsel %vm1980, %v8391, 0
    %v9235 = vsel %vm1980, %v8393, 0
    %v9238 = vsel %vm1980, %v8395, 0
    %v9241 = vsel %vm1980, %v8397, 0
    %9243 = vmatprep.subr.mxu0 0.0
    %9244 = vmatpush1.msra.mxu0 %v9196
    %9245 = vmatprep.subr.mxu0 0.0
    %9246 = vmatpush1.msra.mxu0 %v9198
    %9247 = vmatprep.subr.mxu0 0.0
    %9248 = vmatpush1.msra.mxu0 %v9200
    %9249 = vmatprep.subr.mxu0 0.0
    %9250 = vmatpush1.msra.mxu0 %v9202
    %9251 = vmatprep.subr.mxu0 0.0
    %9252 = vmatpush1.msra.mxu0 %v9204
    %9253 = vmatprep.subr.mxu0 0.0
    %9254 = vmatpush1.msra.mxu0 %v9206
    %9255 = vmatprep.subr.mxu0 0.0
    %9256 = vmatpush1.msra.mxu0 %v9208
    %9257 = vmatprep.subr.mxu0 0.0
    %9258 = vmatpush1.msra.mxu0 %v9210
    %9259 = vmatprep.subr.mxu0 0.0
    %9260 = vmatpush1.msra.mxu0 0.0
    %9261 = vmatprep.subr.mxu0 0.0
    %9262 = vmatpush1.msra.mxu0 0.0
    %9263 = vmatprep.subr.mxu0 0.0
    %9264 = vmatpush1.msra.mxu0 0.0
    %9265 = vmatprep.subr.mxu0 0.0
    %9266 = vmatpush1.msra.mxu0 0.0
    %9267 = vmatprep.subr.mxu0 0.0
    %9268 = vmatpush1.msra.mxu0 0.0
    %9269 = vmatprep.subr.mxu0 0.0
    %9270 = vmatpush1.msra.mxu0 0.0
    %9271 = vmatprep.subr.mxu0 0.0
    %9272 = vmatpush1.msra.mxu0 0.0
    %9273 = vmatprep.subr.mxu0 0.0
    %9274 = vmatpush1.msra.mxu0 0.0
    %9275 = vmatprep.subr.mxu0 0.0
    %9276 = vmatpush1.msra.mxu0 0.0
    %9277 = vmatprep.subr.mxu0 0.0
    %9278 = vmatpush1.msra.mxu0 0.0
    %9279 = vmatprep.subr.mxu0 0.0
    %9280 = vmatpush1.msra.mxu0 0.0
    %9281 = vmatprep.subr.mxu0 0.0
    %9282 = vmatpush1.msra.mxu0 0.0
    %9283 = vmatprep.subr.mxu0 0.0
    %9284 = vmatpush1.msra.mxu0 0.0
    %9285 = vmatprep.subr.mxu0 0.0
    %9286 = vmatpush1.msra.mxu0 0.0
    %9287 = vmatprep.subr.mxu0 0.0
    %9288 = vmatpush1.msra.mxu0 0.0
    %9289 = vmatprep.subr.mxu0 0.0
    %9290 = vmatpush1.msra.mxu0 0.0
    %9291 = vmatprep.subr.mxu0 0.0
    %9292 = vmatpush1.msra.mxu0 0.0
    %9293 = vmatprep.subr.mxu0 0.0
    %9294 = vmatpush1.msra.mxu0 0.0
    %9295 = vmatprep.subr.mxu0 0.0
    %9296 = vmatpush1.msra.mxu0 0.0
    %9297 = vmatprep.subr.mxu0 0.0
    %9298 = vmatpush1.msra.mxu0 0.0
    %9299 = vmatprep.subr.mxu0 0.0
    %9300 = vmatpush1.msra.mxu0 0.0
    %9301 = vmatprep.subr.mxu0 0.0
    %9302 = vmatpush1.msra.mxu0 0.0
    %9303 = vmatprep.subr.mxu0 0.0
    %9304 = vmatpush1.msra.mxu0 0.0
    %9305 = vmatprep.subr.mxu0 0.0
    %9306 = vmatpush1.msra.mxu0 0.0
    %9307 = vmatprep.mubr.f32.mxu0 0.0
    %9308 = vmatmul.mubr.f32.gmra.mrb[0].mxu0 %v9220
    %v9309 = vpop.f32.mrb[0].mxu0
    %v9310 = vadd.f32 0.0, %v9309
    %v9311 = vpop.f32.mrb[0].mxu0
    %9312 = vmatprep.mubr.f32.mxu0 0.0
    %9313 = vmatmul.mubr.f32.gmra.mrb[0].mxu0 %v9223
    %v9314 = vpop.f32.mrb[0].mxu0
    %v9315 = vadd.f32 0.0, %v9314
    %v9316 = vpop.f32.mrb[0].mxu0
    %9317 = vmatprep.mubr.f32.mxu0 0.0
    %9318 = vmatmul.mubr.f32.gmra.mrb[0].mxu0 %v9226
    %v9319 = vpop.f32.mrb[0].mxu0
    %v9320 = vadd.f32 0.0, %v9319
    %v9321 = vpop.f32.mrb[0].mxu0
    %9322 = vmatprep.mubr.f32.mxu0 0.0
    %9323 = vmatmul.mubr.f32.gmra.mrb[0].mxu0 %v9229
    %v9324 = vpop.f32.mrb[0].mxu0
    %v9325 = vadd.f32 0.0, %v9324
    %v9326 = vpop.f32.mrb[0].mxu0
    %9327 = vmatprep.mubr.f32.mxu0 0.0
    %9328 = vmatmul.mubr.f32.gmra.mrb[0].mxu0 %v9232
    %v9329 = vpop.f32.mrb[0].mxu0
    %v9330 = vadd.f32 0.0, %v9329
    %v9331 = vpop.f32.mrb[0].mxu0
    %9332 = vmatprep.mubr.f32.mxu0 0.0
    %9333 = vmatmul.mubr.f32.gmra.mrb[0].mxu0 %v9235
    %v9334 = vpop.f32.mrb[0].mxu0
    %v9335 = vadd.f32 0.0, %v9334
    %v9336 = vpop.f32.mrb[0].mxu0
    %9337 = vmatprep.mubr.f32.mxu0 0.0
    %9338 = vmatmul.mubr.f32.gmra.mrb[0].mxu0 %v9238
    %v9339 = vpop.f32.mrb[0].mxu0
    %v9340 = vadd.f32 0.0, %v9339
    %v9341 = vpop.f32.mrb[0].mxu0
    %9342 = vmatprep.mubr.f32.mxu0 0.0
    %9343 = vmatmul.mubr.f32.gmra.mrb[0].mxu0 %v9241
    %v9344 = vpop.f32.mrb[0].mxu0
    %v9345 = vadd.f32 0.0, %v9344
    %v9346 = vpop.f32.mrb[0].mxu0
    %9347 = vdwg.mxu0
    %9348 = vrot.lane.b32.xlu0 %v6342, 112
    %v9349 = vpop.permute.xlu0 %9348
    %9350 = vrot.lane.b32.xlu0 %v6344, 112
    %v9351 = vpop.permute.xlu0 %9350
    %9352 = vrot.lane.b32.xlu0 %v6346, 112
    %v9353 = vpop.permute.xlu0 %9352
    %9354 = vrot.lane.b32.xlu0 %v6348, 112
    %v9355 = vpop.permute.xlu0 %9354
    %9356 = vrot.lane.b32.xlu0 %v6350, 112
    %v9357 = vpop.permute.xlu0 %9356
    %9358 = vrot.lane.b32.xlu0 %v6352, 112
    %v9359 = vpop.permute.xlu0 %9358
    %9360 = vrot.lane.b32.xlu0 %v6354, 112
    %v9361 = vpop.permute.xlu0 %9360
    %9362 = vrot.lane.b32.xlu0 %v6356, 112
    %v9363 = vpop.permute.xlu0 %9362
    %v9373 = vsel %vm1980, %v8399, 0
    %v9376 = vsel %vm1980, %v8401, 0
    %v9379 = vsel %vm1980, %v8403, 0
    %v9382 = vsel %vm1980, %v8405, 0
    %v9385 = vsel %vm1980, %v8407, 0
    %v9388 = vsel %vm1980, %v8409, 0
    %v9391 = vsel %vm1980, %v8411, 0
    %v9394 = vsel %vm1980, %v8413, 0
    %9396 = vmatprep.subr.mxu0 0.0
    %9397 = vmatpush1.msra.mxu0 %v9349
    %9398 = vmatprep.subr.mxu0 0.0
    %9399 = vmatpush1.msra.mxu0 %v9351
    %9400 = vmatprep.subr.mxu0 0.0
    %9401 = vmatpush1.msra.mxu0 %v9353
    %9402 = vmatprep.subr.mxu0 0.0
    %9403 = vmatpush1.msra.mxu0 %v9355
    %9404 = vmatprep.subr.mxu0 0.0
    %9405 = vmatpush1.msra.mxu0 %v9357
    %9406 = vmatprep.subr.mxu0 0.0
    %9407 = vmatpush1.msra.mxu0 %v9359
    %9408 = vmatprep.subr.mxu0 0.0
    %9409 = vmatpush1.msra.mxu0 %v9361
    %9410 = vmatprep.subr.mxu0 0.0
    %9411 = vmatpush1.msra.mxu0 %v9363
    %9412 = vmatprep.subr.mxu0 0.0
    %9413 = vmatpush1.msra.mxu0 0.0
    %9414 = vmatprep.subr.mxu0 0.0
    %9415 = vmatpush1.msra.mxu0 0.0
    %9416 = vmatprep.subr.mxu0 0.0
    %9417 = vmatpush1.msra.mxu0 0.0
    %9418 = vmatprep.subr.mxu0 0.0
    %9419 = vmatpush1.msra.mxu0 0.0
    %9420 = vmatprep.subr.mxu0 0.0
    %9421 = vmatpush1.msra.mxu0 0.0
    %9422 = vmatprep.subr.mxu0 0.0
    %9423 = vmatpush1.msra.mxu0 0.0
    %9424 = vmatprep.subr.mxu0 0.0
    %9425 = vmatpush1.msra.mxu0 0.0
    %9426 = vmatprep.subr.mxu0 0.0
    %9427 = vmatpush1.msra.mxu0 0.0
    %9428 = vmatprep.subr.mxu0 0.0
    %9429 = vmatpush1.msra.mxu0 0.0
    %9430 = vmatprep.subr.mxu0 0.0
    %9431 = vmatpush1.msra.mxu0 0.0
    %9432 = vmatprep.subr.mxu0 0.0
    %9433 = vmatpush1.msra.mxu0 0.0
    %9434 = vmatprep.subr.mxu0 0.0
    %9435 = vmatpush1.msra.mxu0 0.0
    %9436 = vmatprep.subr.mxu0 0.0
    %9437 = vmatpush1.msra.mxu0 0.0
    %9438 = vmatprep.subr.mxu0 0.0
    %9439 = vmatpush1.msra.mxu0 0.0
    %9440 = vmatprep.subr.mxu0 0.0
    %9441 = vmatpush1.msra.mxu0 0.0
    %9442 = vmatprep.subr.mxu0 0.0
    %9443 = vmatpush1.msra.mxu0 0.0
    %9444 = vmatprep.subr.mxu0 0.0
    %9445 = vmatpush1.msra.mxu0 0.0
    %9446 = vmatprep.subr.mxu0 0.0
    %9447 = vmatpush1.msra.mxu0 0.0
    %9448 = vmatprep.subr.mxu0 0.0
    %9449 = vmatpush1.msra.mxu0 0.0
    %9450 = vmatprep.subr.mxu0 0.0
    %9451 = vmatpush1.msra.mxu0 0.0
    %9452 = vmatprep.subr.mxu0 0.0
    %9453 = vmatpush1.msra.mxu0 0.0
    %9454 = vmatprep.subr.mxu0 0.0
    %9455 = vmatpush1.msra.mxu0 0.0
    %9456 = vmatprep.subr.mxu0 0.0
    %9457 = vmatpush1.msra.mxu0 0.0
    %9458 = vmatprep.subr.mxu0 0.0
    %9459 = vmatpush1.msra.mxu0 0.0
    %9460 = vmatprep.mubr.f32.mxu0 0.0
    %9461 = vmatmul.mubr.f32.gmra.mrb[0].mxu0 %v9373
    %v9462 = vpop.f32.mrb[0].mxu0
    %v9463 = vadd.f32 0.0, %v9462
    %v9464 = vpop.f32.mrb[0].mxu0
    %9465 = vmatprep.mubr.f32.mxu0 0.0
    %9466 = vmatmul.mubr.f32.gmra.mrb[0].mxu0 %v9376
    %v9467 = vpop.f32.mrb[0].mxu0
    %v9468 = vadd.f32 0.0, %v9467
    %v9469 = vpop.f32.mrb[0].mxu0
    %9470 = vmatprep.mubr.f32.mxu0 0.0
    %9471 = vmatmul.mubr.f32.gmra.mrb[0].mxu0 %v9379
    %v9472 = vpop.f32.mrb[0].mxu0
    %v9473 = vadd.f32 0.0, %v9472
    %v9474 = vpop.f32.mrb[0].mxu0
    %9475 = vmatprep.mubr.f32.mxu0 0.0
    %9476 = vmatmul.mubr.f32.gmra.mrb[0].mxu0 %v9382
    %v9477 = vpop.f32.mrb[0].mxu0
    %v9478 = vadd.f32 0.0, %v9477
    %v9479 = vpop.f32.mrb[0].mxu0
    %9480 = vmatprep.mubr.f32.mxu0 0.0
    %9481 = vmatmul.mubr.f32.gmra.mrb[0].mxu0 %v9385
    %v9482 = vpop.f32.mrb[0].mxu0
    %v9483 = vadd.f32 0.0, %v9482
    %v9484 = vpop.f32.mrb[0].mxu0
    %9485 = vmatprep.mubr.f32.mxu0 0.0
    %9486 = vmatmul.mubr.f32.gmra.mrb[0].mxu0 %v9388
    %v9487 = vpop.f32.mrb[0].mxu0
    %v9488 = vadd.f32 0.0, %v9487
    %v9489 = vpop.f32.mrb[0].mxu0
    %9490 = vmatprep.mubr.f32.mxu0 0.0
    %9491 = vmatmul.mubr.f32.gmra.mrb[0].mxu0 %v9391
    %v9492 = vpop.f32.mrb[0].mxu0
    %v9493 = vadd.f32 0.0, %v9492
    %v9494 = vpop.f32.mrb[0].mxu0
    %9495 = vmatprep.mubr.f32.mxu0 0.0
    %9496 = vmatmul.mubr.f32.gmra.mrb[0].mxu0 %v9394
    %v9497 = vpop.f32.mrb[0].mxu0
    %v9498 = vadd.f32 0.0, %v9497
    %v9499 = vpop.f32.mrb[0].mxu0
    %9500 = vdwg.mxu0
    %9501 = vrot.lane.b32.xlu0 %v6358, 112
    %v9502 = vpop.permute.xlu0 %9501
    %9503 = vrot.lane.b32.xlu0 %v6360, 112
    %v9504 = vpop.permute.xlu0 %9503
    %9505 = vrot.lane.b32.xlu0 %v6362, 112
    %v9506 = vpop.permute.xlu0 %9505
    %9507 = vrot.lane.b32.xlu0 %v6364, 112
    %v9508 = vpop.permute.xlu0 %9507
    %9509 = vrot.lane.b32.xlu0 %v6366, 112
    %v9510 = vpop.permute.xlu0 %9509
    %9511 = vrot.lane.b32.xlu0 %v6368, 112
    %v9512 = vpop.permute.xlu0 %9511
    %9513 = vrot.lane.b32.xlu0 %v6370, 112
    %v9514 = vpop.permute.xlu0 %9513
    %9515 = vrot.lane.b32.xlu0 %v6372, 112
    %v9516 = vpop.permute.xlu0 %9515
    %v9526 = vsel %vm1980, %v8415, 0
    %v9529 = vsel %vm1980, %v8417, 0
    %v9532 = vsel %vm1980, %v8419, 0
    %v9535 = vsel %vm1980, %v8421, 0
    %v9538 = vsel %vm1980, %v8423, 0
    %v9541 = vsel %vm1980, %v8425, 0
    %v9544 = vsel %vm1980, %v8427, 0
    %v9547 = vsel %vm1980, %v8429, 0
    %9549 = vmatprep.subr.mxu0 0.0
    %9550 = vmatpush1.msra.mxu0 %v9502
    %9551 = vmatprep.subr.mxu0 0.0
    %9552 = vmatpush1.msra.mxu0 %v9504
    %9553 = vmatprep.subr.mxu0 0.0
    %9554 = vmatpush1.msra.mxu0 %v9506
    %9555 = vmatprep.subr.mxu0 0.0
    %9556 = vmatpush1.msra.mxu0 %v9508
    %9557 = vmatprep.subr.mxu0 0.0
    %9558 = vmatpush1.msra.mxu0 %v9510
    %9559 = vmatprep.subr.mxu0 0.0
    %9560 = vmatpush1.msra.mxu0 %v9512
    %9561 = vmatprep.subr.mxu0 0.0
    %9562 = vmatpush1.msra.mxu0 %v9514
    %9563 = vmatprep.subr.mxu0 0.0
    %9564 = vmatpush1.msra.mxu0 %v9516
    %9565 = vmatprep.subr.mxu0 0.0
    %9566 = vmatpush1.msra.mxu0 0.0
    %9567 = vmatprep.subr.mxu0 0.0
    %9568 = vmatpush1.msra.mxu0 0.0
    %9569 = vmatprep.subr.mxu0 0.0
    %9570 = vmatpush1.msra.mxu0 0.0
    %9571 = vmatprep.subr.mxu0 0.0
    %9572 = vmatpush1.msra.mxu0 0.0
    %9573 = vmatprep.subr.mxu0 0.0
    %9574 = vmatpush1.msra.mxu0 0.0
    %9575 = vmatprep.subr.mxu0 0.0
    %9576 = vmatpush1.msra.mxu0 0.0
    %9577 = vmatprep.subr.mxu0 0.0
    %9578 = vmatpush1.msra.mxu0 0.0
    %9579 = vmatprep.subr.mxu0 0.0
    %9580 = vmatpush1.msra.mxu0 0.0
    %9581 = vmatprep.subr.mxu0 0.0
    %9582 = vmatpush1.msra.mxu0 0.0
    %9583 = vmatprep.subr.mxu0 0.0
    %9584 = vmatpush1.msra.mxu0 0.0
    %9585 = vmatprep.subr.mxu0 0.0
    %9586 = vmatpush1.msra.mxu0 0.0
    %9587 = vmatprep.subr.mxu0 0.0
    %9588 = vmatpush1.msra.mxu0 0.0
    %9589 = vmatprep.subr.mxu0 0.0
    %9590 = vmatpush1.msra.mxu0 0.0
    %9591 = vmatprep.subr.mxu0 0.0
    %9592 = vmatpush1.msra.mxu0 0.0
    %9593 = vmatprep.subr.mxu0 0.0
    %9594 = vmatpush1.msra.mxu0 0.0
    %9595 = vmatprep.subr.mxu0 0.0
    %9596 = vmatpush1.msra.mxu0 0.0
    %9597 = vmatprep.subr.mxu0 0.0
    %9598 = vmatpush1.msra.mxu0 0.0
    %9599 = vmatprep.subr.mxu0 0.0
    %9600 = vmatpush1.msra.mxu0 0.0
    %9601 = vmatprep.subr.mxu0 0.0
    %9602 = vmatpush1.msra.mxu0 0.0
    %9603 = vmatprep.subr.mxu0 0.0
    %9604 = vmatpush1.msra.mxu0 0.0
    %9605 = vmatprep.subr.mxu0 0.0
    %9606 = vmatpush1.msra.mxu0 0.0
    %9607 = vmatprep.subr.mxu0 0.0
    %9608 = vmatpush1.msra.mxu0 0.0
    %9609 = vmatprep.subr.mxu0 0.0
    %9610 = vmatpush1.msra.mxu0 0.0
    %9611 = vmatprep.subr.mxu0 0.0
    %9612 = vmatpush1.msra.mxu0 0.0
    %9613 = vmatprep.mubr.f32.mxu0 0.0
    %9614 = vmatmul.mubr.f32.gmra.mrb[0].mxu0 %v9526
    %v9615 = vpop.f32.mrb[0].mxu0
    %v9616 = vadd.f32 0.0, %v9615
    %v9617 = vpop.f32.mrb[0].mxu0
    %9618 = vmatprep.mubr.f32.mxu0 0.0
    %9619 = vmatmul.mubr.f32.gmra.mrb[0].mxu0 %v9529
    %v9620 = vpop.f32.mrb[0].mxu0
    %v9621 = vadd.f32 0.0, %v9620
    %v9622 = vpop.f32.mrb[0].mxu0
    %9623 = vmatprep.mubr.f32.mxu0 0.0
    %9624 = vmatmul.mubr.f32.gmra.mrb[0].mxu0 %v9532
    %v9625 = vpop.f32.mrb[0].mxu0
    %v9626 = vadd.f32 0.0, %v9625
    %v9627 = vpop.f32.mrb[0].mxu0
    %9628 = vmatprep.mubr.f32.mxu0 0.0
    %9629 = vmatmul.mubr.f32.gmra.mrb[0].mxu0 %v9535
    %v9630 = vpop.f32.mrb[0].mxu0
    %v9631 = vadd.f32 0.0, %v9630
    %v9632 = vpop.f32.mrb[0].mxu0
    %9633 = vmatprep.mubr.f32.mxu0 0.0
    %9634 = vmatmul.mubr.f32.gmra.mrb[0].mxu0 %v9538
    %v9635 = vpop.f32.mrb[0].mxu0
    %v9636 = vadd.f32 0.0, %v9635
    %v9637 = vpop.f32.mrb[0].mxu0
    %9638 = vmatprep.mubr.f32.mxu0 0.0
    %9639 = vmatmul.mubr.f32.gmra.mrb[0].mxu0 %v9541
    %v9640 = vpop.f32.mrb[0].mxu0
    %v9641 = vadd.f32 0.0, %v9640
    %v9642 = vpop.f32.mrb[0].mxu0
    %9643 = vmatprep.mubr.f32.mxu0 0.0
    %9644 = vmatmul.mubr.f32.gmra.mrb[0].mxu0 %v9544
    %v9645 = vpop.f32.mrb[0].mxu0
    %v9646 = vadd.f32 0.0, %v9645
    %v9647 = vpop.f32.mrb[0].mxu0
    %9648 = vmatprep.mubr.f32.mxu0 0.0
    %9649 = vmatmul.mubr.f32.gmra.mrb[0].mxu0 %v9547
    %v9650 = vpop.f32.mrb[0].mxu0
    %v9651 = vadd.f32 0.0, %v9650
    %v9652 = vpop.f32.mrb[0].mxu0
    %9653 = vdwg.mxu0
    %s9654 = scalar_lea.vmem %s3, 32
    %v9655 = vld [vmem:[%s9654] sm:$0xff]
    %v9656 = vld [vmem:[%s9654 + $0x8] sm:$0xff]
    %v9657 = vld [vmem:[%s9654 + $0x10] sm:$0xff]
    %v9658 = vld [vmem:[%s9654 + $0x18] sm:$0xff]
    %v9660 = vsel %vm771, %v8545, 0
    %v9663 = vsel %vm771, %v8550, 0
    %v9666 = vsel %vm771, %v8555, 0
    %v9669 = vsel %vm771, %v8560, 0
    %v9672 = vsel %vm771, %v8565, 0
    %v9675 = vsel %vm771, %v8570, 0
    %v9678 = vsel %vm771, %v8575, 0
    %v9681 = vsel %vm771, %v8580, 0
    %9683 = vmatprep.subr.mxu0 0.0
    %9684 = vmatpush1.msra.mxu0 %v9655
    %9685 = vmatprep.subr.mxu0 0.0
    %9686 = vmatpush1.msra.mxu0 0.0
    %9687 = vmatprep.subr.mxu0 0.0
    %9688 = vmatpush1.msra.mxu0 0.0
    %9689 = vmatprep.subr.mxu0 0.0
    %9690 = vmatpush1.msra.mxu0 0.0
    %9691 = vmatprep.subr.mxu0 0.0
    %9692 = vmatpush1.msra.mxu0 0.0
    %9693 = vmatprep.subr.mxu0 0.0
    %9694 = vmatpush1.msra.mxu0 0.0
    %9695 = vmatprep.subr.mxu0 0.0
    %9696 = vmatpush1.msra.mxu0 0.0
    %9697 = vmatprep.subr.mxu0 0.0
    %9698 = vmatpush1.msra.mxu0 0.0
    %9699 = vmatprep.subr.mxu0 0.0
    %9700 = vmatpush1.msra.mxu0 0.0
    %9701 = vmatprep.subr.mxu0 0.0
    %9702 = vmatpush1.msra.mxu0 0.0
    %9703 = vmatprep.subr.mxu0 0.0
    %9704 = vmatpush1.msra.mxu0 0.0
    %9705 = vmatprep.subr.mxu0 0.0
    %9706 = vmatpush1.msra.mxu0 0.0
    %9707 = vmatprep.subr.mxu0 0.0
    %9708 = vmatpush1.msra.mxu0 0.0
    %9709 = vmatprep.subr.mxu0 0.0
    %9710 = vmatpush1.msra.mxu0 0.0
    %9711 = vmatprep.subr.mxu0 0.0
    %9712 = vmatpush1.msra.mxu0 0.0
    %9713 = vmatprep.subr.mxu0 0.0
    %9714 = vmatpush1.msra.mxu0 0.0
    %9715 = vmatprep.subr.mxu0 0.0
    %9716 = vmatpush1.msra.mxu0 0.0
    %9717 = vmatprep.subr.mxu0 0.0
    %9718 = vmatpush1.msra.mxu0 0.0
    %9719 = vmatprep.subr.mxu0 0.0
    %9720 = vmatpush1.msra.mxu0 0.0
    %9721 = vmatprep.subr.mxu0 0.0
    %9722 = vmatpush1.msra.mxu0 0.0
    %9723 = vmatprep.subr.mxu0 0.0
    %9724 = vmatpush1.msra.mxu0 0.0
    %9725 = vmatprep.subr.mxu0 0.0
    %9726 = vmatpush1.msra.mxu0 0.0
    %9727 = vmatprep.subr.mxu0 0.0
    %9728 = vmatpush1.msra.mxu0 0.0
    %9729 = vmatprep.subr.mxu0 0.0
    %9730 = vmatpush1.msra.mxu0 0.0
    %9731 = vmatprep.subr.mxu0 0.0
    %9732 = vmatpush1.msra.mxu0 0.0
    %9733 = vmatprep.subr.mxu0 0.0
    %9734 = vmatpush1.msra.mxu0 0.0
    %9735 = vmatprep.subr.mxu0 0.0
    %9736 = vmatpush1.msra.mxu0 0.0
    %9737 = vmatprep.subr.mxu0 0.0
    %9738 = vmatpush1.msra.mxu0 0.0
    %9739 = vmatprep.subr.mxu0 0.0
    %9740 = vmatpush1.msra.mxu0 0.0
    %9741 = vmatprep.subr.mxu0 0.0
    %9742 = vmatpush1.msra.mxu0 0.0
    %9743 = vmatprep.subr.mxu0 0.0
    %9744 = vmatpush1.msra.mxu0 0.0
    %9745 = vmatprep.subr.mxu0 0.0
    %9746 = vmatpush1.msra.mxu0 0.0
    %9747 = vmatprep.mubr.f32.mxu0 0.0
    %9748 = vmatmul.mubr.f32.gmra.mrb[0].mxu0 %v9660
    %v9749 = vpop.f32.mrb[0].mxu0
    %v9750 = vadd.f32 0.0, %v9749
    %v9751 = vpop.f32.mrb[0].mxu0
    %9752 = vmatprep.mubr.f32.mxu0 0.0
    %9753 = vmatmul.mubr.f32.gmra.mrb[0].mxu0 %v9663
    %v9754 = vpop.f32.mrb[0].mxu0
    %v9755 = vadd.f32 0.0, %v9754
    %v9756 = vpop.f32.mrb[0].mxu0
    %9757 = vmatprep.mubr.f32.mxu0 0.0
    %9758 = vmatmul.mubr.f32.gmra.mrb[0].mxu0 %v9666
    %v9759 = vpop.f32.mrb[0].mxu0
    %v9760 = vadd.f32 0.0, %v9759
    %v9761 = vpop.f32.mrb[0].mxu0
    %9762 = vmatprep.mubr.f32.mxu0 0.0
    %9763 = vmatmul.mubr.f32.gmra.mrb[0].mxu0 %v9669
    %v9764 = vpop.f32.mrb[0].mxu0
    %v9765 = vadd.f32 0.0, %v9764
    %v9766 = vpop.f32.mrb[0].mxu0
    %9767 = vmatprep.mubr.f32.mxu0 0.0
    %9768 = vmatmul.mubr.f32.gmra.mrb[0].mxu0 %v9672
    %v9769 = vpop.f32.mrb[0].mxu0
    %v9770 = vadd.f32 0.0, %v9769
    %v9771 = vpop.f32.mrb[0].mxu0
    %9772 = vmatprep.mubr.f32.mxu0 0.0
    %9773 = vmatmul.mubr.f32.gmra.mrb[0].mxu0 %v9675
    %v9774 = vpop.f32.mrb[0].mxu0
    %v9775 = vadd.f32 0.0, %v9774
    %v9776 = vpop.f32.mrb[0].mxu0
    %9777 = vmatprep.mubr.f32.mxu0 0.0
    %9778 = vmatmul.mubr.f32.gmra.mrb[0].mxu0 %v9678
    %v9779 = vpop.f32.mrb[0].mxu0
    %v9780 = vadd.f32 0.0, %v9779
    %v9781 = vpop.f32.mrb[0].mxu0
    %9782 = vmatprep.mubr.f32.mxu0 0.0
    %9783 = vmatmul.mubr.f32.gmra.mrb[0].mxu0 %v9681
    %v9784 = vpop.f32.mrb[0].mxu0
    %v9785 = vadd.f32 0.0, %v9784
    %v9786 = vpop.f32.mrb[0].mxu0
    %9787 = vdwg.mxu0
    %v9789 = vsel %vm771, %v8698, 0
    %v9792 = vsel %vm771, %v8703, 0
    %v9795 = vsel %vm771, %v8708, 0
    %v9798 = vsel %vm771, %v8713, 0
    %v9801 = vsel %vm771, %v8718, 0
    %v9804 = vsel %vm771, %v8723, 0
    %v9807 = vsel %vm771, %v8728, 0
    %v9810 = vsel %vm771, %v8733, 0
    %9812 = vmatprep.subr.mxu0 0.0
    %9813 = vmatpush1.msra.mxu0 %v9656
    %9814 = vmatprep.subr.mxu0 0.0
    %9815 = vmatpush1.msra.mxu0 0.0
    %9816 = vmatprep.subr.mxu0 0.0
    %9817 = vmatpush1.msra.mxu0 0.0
    %9818 = vmatprep.subr.mxu0 0.0
    %9819 = vmatpush1.msra.mxu0 0.0
    %9820 = vmatprep.subr.mxu0 0.0
    %9821 = vmatpush1.msra.mxu0 0.0
    %9822 = vmatprep.subr.mxu0 0.0
    %9823 = vmatpush1.msra.mxu0 0.0
    %9824 = vmatprep.subr.mxu0 0.0
    %9825 = vmatpush1.msra.mxu0 0.0
    %9826 = vmatprep.subr.mxu0 0.0
    %9827 = vmatpush1.msra.mxu0 0.0
    %9828 = vmatprep.subr.mxu0 0.0
    %9829 = vmatpush1.msra.mxu0 0.0
    %9830 = vmatprep.subr.mxu0 0.0
    %9831 = vmatpush1.msra.mxu0 0.0
    %9832 = vmatprep.subr.mxu0 0.0
    %9833 = vmatpush1.msra.mxu0 0.0
    %9834 = vmatprep.subr.mxu0 0.0
    %9835 = vmatpush1.msra.mxu0 0.0
    %9836 = vmatprep.subr.mxu0 0.0
    %9837 = vmatpush1.msra.mxu0 0.0
    %9838 = vmatprep.subr.mxu0 0.0
    %9839 = vmatpush1.msra.mxu0 0.0
    %9840 = vmatprep.subr.mxu0 0.0
    %9841 = vmatpush1.msra.mxu0 0.0
    %9842 = vmatprep.subr.mxu0 0.0
    %9843 = vmatpush1.msra.mxu0 0.0
    %9844 = vmatprep.subr.mxu0 0.0
    %9845 = vmatpush1.msra.mxu0 0.0
    %9846 = vmatprep.subr.mxu0 0.0
    %9847 = vmatpush1.msra.mxu0 0.0
    %9848 = vmatprep.subr.mxu0 0.0
    %9849 = vmatpush1.msra.mxu0 0.0
    %9850 = vmatprep.subr.mxu0 0.0
    %9851 = vmatpush1.msra.mxu0 0.0
    %9852 = vmatprep.subr.mxu0 0.0
    %9853 = vmatpush1.msra.mxu0 0.0
    %9854 = vmatprep.subr.mxu0 0.0
    %9855 = vmatpush1.msra.mxu0 0.0
    %9856 = vmatprep.subr.mxu0 0.0
    %9857 = vmatpush1.msra.mxu0 0.0
    %9858 = vmatprep.subr.mxu0 0.0
    %9859 = vmatpush1.msra.mxu0 0.0
    %9860 = vmatprep.subr.mxu0 0.0
    %9861 = vmatpush1.msra.mxu0 0.0
    %9862 = vmatprep.subr.mxu0 0.0
    %9863 = vmatpush1.msra.mxu0 0.0
    %9864 = vmatprep.subr.mxu0 0.0
    %9865 = vmatpush1.msra.mxu0 0.0
    %9866 = vmatprep.subr.mxu0 0.0
    %9867 = vmatpush1.msra.mxu0 0.0
    %9868 = vmatprep.subr.mxu0 0.0
    %9869 = vmatpush1.msra.mxu0 0.0
    %9870 = vmatprep.subr.mxu0 0.0
    %9871 = vmatpush1.msra.mxu0 0.0
    %9872 = vmatprep.subr.mxu0 0.0
    %9873 = vmatpush1.msra.mxu0 0.0
    %9874 = vmatprep.subr.mxu0 0.0
    %9875 = vmatpush1.msra.mxu0 0.0
    %9876 = vmatprep.mubr.f32.mxu0 0.0
    %9877 = vmatmul.mubr.f32.gmra.mrb[0].mxu0 %v9789
    %v9878 = vpop.f32.mrb[0].mxu0
    %v9879 = vadd.f32 0.0, %v9878
    %v9880 = vpop.f32.mrb[0].mxu0
    %9881 = vmatprep.mubr.f32.mxu0 0.0
    %9882 = vmatmul.mubr.f32.gmra.mrb[0].mxu0 %v9792
    %v9883 = vpop.f32.mrb[0].mxu0
    %v9884 = vadd.f32 0.0, %v9883
    %v9885 = vpop.f32.mrb[0].mxu0
    %9886 = vmatprep.mubr.f32.mxu0 0.0
    %9887 = vmatmul.mubr.f32.gmra.mrb[0].mxu0 %v9795
    %v9888 = vpop.f32.mrb[0].mxu0
    %v9889 = vadd.f32 0.0, %v9888
    %v9890 = vpop.f32.mrb[0].mxu0
    %9891 = vmatprep.mubr.f32.mxu0 0.0
    %9892 = vmatmul.mubr.f32.gmra.mrb[0].mxu0 %v9798
    %v9893 = vpop.f32.mrb[0].mxu0
    %v9894 = vadd.f32 0.0, %v9893
    %v9895 = vpop.f32.mrb[0].mxu0
    %9896 = vmatprep.mubr.f32.mxu0 0.0
    %9897 = vmatmul.mubr.f32.gmra.mrb[0].mxu0 %v9801
    %v9898 = vpop.f32.mrb[0].mxu0
    %v9899 = vadd.f32 0.0, %v9898
    %v9900 = vpop.f32.mrb[0].mxu0
    %9901 = vmatprep.mubr.f32.mxu0 0.0
    %9902 = vmatmul.mubr.f32.gmra.mrb[0].mxu0 %v9804
    %v9903 = vpop.f32.mrb[0].mxu0
    %v9904 = vadd.f32 0.0, %v9903
    %v9905 = vpop.f32.mrb[0].mxu0
    %9906 = vmatprep.mubr.f32.mxu0 0.0
    %9907 = vmatmul.mubr.f32.gmra.mrb[0].mxu0 %v9807
    %v9908 = vpop.f32.mrb[0].mxu0
    %v9909 = vadd.f32 0.0, %v9908
    %v9910 = vpop.f32.mrb[0].mxu0
    %9911 = vmatprep.mubr.f32.mxu0 0.0
    %9912 = vmatmul.mubr.f32.gmra.mrb[0].mxu0 %v9810
    %v9913 = vpop.f32.mrb[0].mxu0
    %v9914 = vadd.f32 0.0, %v9913
    %v9915 = vpop.f32.mrb[0].mxu0
    %9916 = vdwg.mxu0
    %v9918 = vsel %vm771, %v8851, 0
    %v9921 = vsel %vm771, %v8856, 0
    %v9924 = vsel %vm771, %v8861, 0
    %v9927 = vsel %vm771, %v8866, 0
    %v9930 = vsel %vm771, %v8871, 0
    %v9933 = vsel %vm771, %v8876, 0
    %v9936 = vsel %vm771, %v8881, 0
    %v9939 = vsel %vm771, %v8886, 0
    %9941 = vmatprep.subr.mxu0 0.0
    %9942 = vmatpush1.msra.mxu0 %v9657
    %9943 = vmatprep.subr.mxu0 0.0
    %9944 = vmatpush1.msra.mxu0 0.0
    %9945 = vmatprep.subr.mxu0 0.0
    %9946 = vmatpush1.msra.mxu0 0.0
    %9947 = vmatprep.subr.mxu0 0.0
    %9948 = vmatpush1.msra.mxu0 0.0
    %9949 = vmatprep.subr.mxu0 0.0
    %9950 = vmatpush1.msra.mxu0 0.0
    %9951 = vmatprep.subr.mxu0 0.0
    %9952 = vmatpush1.msra.mxu0 0.0
    %9953 = vmatprep.subr.mxu0 0.0
    %9954 = vmatpush1.msra.mxu0 0.0
    %9955 = vmatprep.subr.mxu0 0.0
    %9956 = vmatpush1.msra.mxu0 0.0
    %9957 = vmatprep.subr.mxu0 0.0
    %9958 = vmatpush1.msra.mxu0 0.0
    %9959 = vmatprep.subr.mxu0 0.0
    %9960 = vmatpush1.msra.mxu0 0.0
    %9961 = vmatprep.subr.mxu0 0.0
    %9962 = vmatpush1.msra.mxu0 0.0
    %9963 = vmatprep.subr.mxu0 0.0
    %9964 = vmatpush1.msra.mxu0 0.0
    %9965 = vmatprep.subr.mxu0 0.0
    %9966 = vmatpush1.msra.mxu0 0.0
    %9967 = vmatprep.subr.mxu0 0.0
    %9968 = vmatpush1.msra.mxu0 0.0
    %9969 = vmatprep.subr.mxu0 0.0
    %9970 = vmatpush1.msra.mxu0 0.0
    %9971 = vmatprep.subr.mxu0 0.0
    %9972 = vmatpush1.msra.mxu0 0.0
    %9973 = vmatprep.subr.mxu0 0.0
    %9974 = vmatpush1.msra.mxu0 0.0
    %9975 = vmatprep.subr.mxu0 0.0
    %9976 = vmatpush1.msra.mxu0 0.0
    %9977 = vmatprep.subr.mxu0 0.0
    %9978 = vmatpush1.msra.mxu0 0.0
    %9979 = vmatprep.subr.mxu0 0.0
    %9980 = vmatpush1.msra.mxu0 0.0
    %9981 = vmatprep.subr.mxu0 0.0
    %9982 = vmatpush1.msra.mxu0 0.0
    %9983 = vmatprep.subr.mxu0 0.0
    %9984 = vmatpush1.msra.mxu0 0.0
    %9985 = vmatprep.subr.mxu0 0.0
    %9986 = vmatpush1.msra.mxu0 0.0
    %9987 = vmatprep.subr.mxu0 0.0
    %9988 = vmatpush1.msra.mxu0 0.0
    %9989 = vmatprep.subr.mxu0 0.0
    %9990 = vmatpush1.msra.mxu0 0.0
    %9991 = vmatprep.subr.mxu0 0.0
    %9992 = vmatpush1.msra.mxu0 0.0
    %9993 = vmatprep.subr.mxu0 0.0
    %9994 = vmatpush1.msra.mxu0 0.0
    %9995 = vmatprep.subr.mxu0 0.0
    %9996 = vmatpush1.msra.mxu0 0.0
    %9997 = vmatprep.subr.mxu0 0.0
    %9998 = vmatpush1.msra.mxu0 0.0
    %9999 = vmatprep.subr.mxu0 0.0
    %10000 = vmatpush1.msra.mxu0 0.0
    %10001 = vmatprep.subr.mxu0 0.0
    %10002 = vmatpush1.msra.mxu0 0.0
    %10003 = vmatprep.subr.mxu0 0.0
    %10004 = vmatpush1.msra.mxu0 0.0
    %10005 = vmatprep.mubr.f32.mxu0 0.0
    %10006 = vmatmul.mubr.f32.gmra.mrb[0].mxu0 %v9918
    %v10007 = vpop.f32.mrb[0].mxu0
    %v10008 = vadd.f32 0.0, %v10007
    %v10009 = vpop.f32.mrb[0].mxu0
    %10010 = vmatprep.mubr.f32.mxu0 0.0
    %10011 = vmatmul.mubr.f32.gmra.mrb[0].mxu0 %v9921
    %v10012 = vpop.f32.mrb[0].mxu0
    %v10013 = vadd.f32 0.0, %v10012
    %v10014 = vpop.f32.mrb[0].mxu0
    %10015 = vmatprep.mubr.f32.mxu0 0.0
    %10016 = vmatmul.mubr.f32.gmra.mrb[0].mxu0 %v9924
    %v10017 = vpop.f32.mrb[0].mxu0
    %v10018 = vadd.f32 0.0, %v10017
    %v10019 = vpop.f32.mrb[0].mxu0
    %10020 = vmatprep.mubr.f32.mxu0 0.0
    %10021 = vmatmul.mubr.f32.gmra.mrb[0].mxu0 %v9927
    %v10022 = vpop.f32.mrb[0].mxu0
    %v10023 = vadd.f32 0.0, %v10022
    %v10024 = vpop.f32.mrb[0].mxu0
    %10025 = vmatprep.mubr.f32.mxu0 0.0
    %10026 = vmatmul.mubr.f32.gmra.mrb[0].mxu0 %v9930
    %v10027 = vpop.f32.mrb[0].mxu0
    %v10028 = vadd.f32 0.0, %v10027
    %v10029 = vpop.f32.mrb[0].mxu0
    %10030 = vmatprep.mubr.f32.mxu0 0.0
    %10031 = vmatmul.mubr.f32.gmra.mrb[0].mxu0 %v9933
    %v10032 = vpop.f32.mrb[0].mxu0
    %v10033 = vadd.f32 0.0, %v10032
    %v10034 = vpop.f32.mrb[0].mxu0
    %10035 = vmatprep.mubr.f32.mxu0 0.0
    %10036 = vmatmul.mubr.f32.gmra.mrb[0].mxu0 %v9936
    %v10037 = vpop.f32.mrb[0].mxu0
    %v10038 = vadd.f32 0.0, %v10037
    %v10039 = vpop.f32.mrb[0].mxu0
    %10040 = vmatprep.mubr.f32.mxu0 0.0
    %10041 = vmatmul.mubr.f32.gmra.mrb[0].mxu0 %v9939
    %v10042 = vpop.f32.mrb[0].mxu0
    %v10043 = vadd.f32 0.0, %v10042
    %v10044 = vpop.f32.mrb[0].mxu0
    %10045 = vdwg.mxu0
    %v10047 = vsel %vm771, %v9004, 0
    %v10050 = vsel %vm771, %v9009, 0
    %v10053 = vsel %vm771, %v9014, 0
    %v10056 = vsel %vm771, %v9019, 0
    %v10059 = vsel %vm771, %v9024, 0
    %v10062 = vsel %vm771, %v9029, 0
    %v10065 = vsel %vm771, %v9034, 0
    %v10068 = vsel %vm771, %v9039, 0
    %10070 = vmatprep.subr.mxu0 0.0
    %10071 = vmatpush1.msra.mxu0 %v9658
    %10072 = vmatprep.subr.mxu0 0.0
    %10073 = vmatpush1.msra.mxu0 0.0
    %10074 = vmatprep.subr.mxu0 0.0
    %10075 = vmatpush1.msra.mxu0 0.0
    %10076 = vmatprep.subr.mxu0 0.0
    %10077 = vmatpush1.msra.mxu0 0.0
    %10078 = vmatprep.subr.mxu0 0.0
    %10079 = vmatpush1.msra.mxu0 0.0
    %10080 = vmatprep.subr.mxu0 0.0
    %10081 = vmatpush1.msra.mxu0 0.0
    %10082 = vmatprep.subr.mxu0 0.0
    %10083 = vmatpush1.msra.mxu0 0.0
    %10084 = vmatprep.subr.mxu0 0.0
    %10085 = vmatpush1.msra.mxu0 0.0
    %10086 = vmatprep.subr.mxu0 0.0
    %10087 = vmatpush1.msra.mxu0 0.0
    %10088 = vmatprep.subr.mxu0 0.0
    %10089 = vmatpush1.msra.mxu0 0.0
    %10090 = vmatprep.subr.mxu0 0.0
    %10091 = vmatpush1.msra.mxu0 0.0
    %10092 = vmatprep.subr.mxu0 0.0
    %10093 = vmatpush1.msra.mxu0 0.0
    %10094 = vmatprep.subr.mxu0 0.0
    %10095 = vmatpush1.msra.mxu0 0.0
    %10096 = vmatprep.subr.mxu0 0.0
    %10097 = vmatpush1.msra.mxu0 0.0
    %10098 = vmatprep.subr.mxu0 0.0
    %10099 = vmatpush1.msra.mxu0 0.0
    %10100 = vmatprep.subr.mxu0 0.0
    %10101 = vmatpush1.msra.mxu0 0.0
    %10102 = vmatprep.subr.mxu0 0.0
    %10103 = vmatpush1.msra.mxu0 0.0
    %10104 = vmatprep.subr.mxu0 0.0
    %10105 = vmatpush1.msra.mxu0 0.0
    %10106 = vmatprep.subr.mxu0 0.0
    %10107 = vmatpush1.msra.mxu0 0.0
    %10108 = vmatprep.subr.mxu0 0.0
    %10109 = vmatpush1.msra.mxu0 0.0
    %10110 = vmatprep.subr.mxu0 0.0
    %10111 = vmatpush1.msra.mxu0 0.0
    %10112 = vmatprep.subr.mxu0 0.0
    %10113 = vmatpush1.msra.mxu0 0.0
    %10114 = vmatprep.subr.mxu0 0.0
    %10115 = vmatpush1.msra.mxu0 0.0
    %10116 = vmatprep.subr.mxu0 0.0
    %10117 = vmatpush1.msra.mxu0 0.0
    %10118 = vmatprep.subr.mxu0 0.0
    %10119 = vmatpush1.msra.mxu0 0.0
    %10120 = vmatprep.subr.mxu0 0.0
    %10121 = vmatpush1.msra.mxu0 0.0
    %10122 = vmatprep.subr.mxu0 0.0
    %10123 = vmatpush1.msra.mxu0 0.0
    %10124 = vmatprep.subr.mxu0 0.0
    %10125 = vmatpush1.msra.mxu0 0.0
    %10126 = vmatprep.subr.mxu0 0.0
    %10127 = vmatpush1.msra.mxu0 0.0
    %10128 = vmatprep.subr.mxu0 0.0
    %10129 = vmatpush1.msra.mxu0 0.0
    %10130 = vmatprep.subr.mxu0 0.0
    %10131 = vmatpush1.msra.mxu0 0.0
    %10132 = vmatprep.subr.mxu0 0.0
    %10133 = vmatpush1.msra.mxu0 0.0
    %10134 = vmatprep.mubr.f32.mxu0 0.0
    %10135 = vmatmul.mubr.f32.gmra.mrb[0].mxu0 %v10047
    %v10136 = vpop.f32.mrb[0].mxu0
    %v10137 = vadd.f32 0.0, %v10136
    %v10138 = vpop.f32.mrb[0].mxu0
    %10139 = vmatprep.mubr.f32.mxu0 0.0
    %10140 = vmatmul.mubr.f32.gmra.mrb[0].mxu0 %v10050
    %v10141 = vpop.f32.mrb[0].mxu0
    %v10142 = vadd.f32 0.0, %v10141
    %v10143 = vpop.f32.mrb[0].mxu0
    %10144 = vmatprep.mubr.f32.mxu0 0.0
    %10145 = vmatmul.mubr.f32.gmra.mrb[0].mxu0 %v10053
    %v10146 = vpop.f32.mrb[0].mxu0
    %v10147 = vadd.f32 0.0, %v10146
    %v10148 = vpop.f32.mrb[0].mxu0
    %10149 = vmatprep.mubr.f32.mxu0 0.0
    %10150 = vmatmul.mubr.f32.gmra.mrb[0].mxu0 %v10056
    %v10151 = vpop.f32.mrb[0].mxu0
    %v10152 = vadd.f32 0.0, %v10151
    %v10153 = vpop.f32.mrb[0].mxu0
    %10154 = vmatprep.mubr.f32.mxu0 0.0
    %10155 = vmatmul.mubr.f32.gmra.mrb[0].mxu0 %v10059
    %v10156 = vpop.f32.mrb[0].mxu0
    %v10157 = vadd.f32 0.0, %v10156
    %v10158 = vpop.f32.mrb[0].mxu0
    %10159 = vmatprep.mubr.f32.mxu0 0.0
    %10160 = vmatmul.mubr.f32.gmra.mrb[0].mxu0 %v10062
    %v10161 = vpop.f32.mrb[0].mxu0
    %v10162 = vadd.f32 0.0, %v10161
    %v10163 = vpop.f32.mrb[0].mxu0
    %10164 = vmatprep.mubr.f32.mxu0 0.0
    %10165 = vmatmul.mubr.f32.gmra.mrb[0].mxu0 %v10065
    %v10166 = vpop.f32.mrb[0].mxu0
    %v10167 = vadd.f32 0.0, %v10166
    %v10168 = vpop.f32.mrb[0].mxu0
    %10169 = vmatprep.mubr.f32.mxu0 0.0
    %10170 = vmatmul.mubr.f32.gmra.mrb[0].mxu0 %v10068
    %v10171 = vpop.f32.mrb[0].mxu0
    %v10172 = vadd.f32 0.0, %v10171
    %v10173 = vpop.f32.mrb[0].mxu0
    %10174 = vdwg.mxu0
    %v10175 = vsel %vm64, %v9750, 0.0
    %v10176 = vsel %vm64, %v9879, 0.0
    %v10177 = vadd.f32 %v10175, %v10176
    %v10178 = vsel %vm64, %v10008, 0.0
    %v10179 = vadd.f32 %v10177, %v10178
    %v10180 = vsel %vm64, %v10137, 0.0
    %v10181 = vadd.f32 %v10179, %v10180
    %v10182 = vsel %vm64, %v9755, 0.0
    %v10183 = vsel %vm64, %v9884, 0.0
    %v10184 = vadd.f32 %v10182, %v10183
    %v10185 = vsel %vm64, %v10013, 0.0
    %v10186 = vadd.f32 %v10184, %v10185
    %v10187 = vsel %vm64, %v10142, 0.0
    %v10188 = vadd.f32 %v10186, %v10187
    %v10189 = vsel %vm64, %v9760, 0.0
    %v10190 = vsel %vm64, %v9889, 0.0
    %v10191 = vadd.f32 %v10189, %v10190
    %v10192 = vsel %vm64, %v10018, 0.0
    %v10193 = vadd.f32 %v10191, %v10192
    %v10194 = vsel %vm64, %v10147, 0.0
    %v10195 = vadd.f32 %v10193, %v10194
    %v10196 = vsel %vm64, %v9765, 0.0
    %v10197 = vsel %vm64, %v9894, 0.0
    %v10198 = vadd.f32 %v10196, %v10197
    %v10199 = vsel %vm64, %v10023, 0.0
    %v10200 = vadd.f32 %v10198, %v10199
    %v10201 = vsel %vm64, %v10152, 0.0
    %v10202 = vadd.f32 %v10200, %v10201
    %v10203 = vsel %vm64, %v9770, 0.0
    %v10204 = vsel %vm64, %v9899, 0.0
    %v10205 = vadd.f32 %v10203, %v10204
    %v10206 = vsel %vm64, %v10028, 0.0
    %v10207 = vadd.f32 %v10205, %v10206
    %v10208 = vsel %vm64, %v10157, 0.0
    %v10209 = vadd.f32 %v10207, %v10208
    %v10210 = vsel %vm64, %v9775, 0.0
    %v10211 = vsel %vm64, %v9904, 0.0
    %v10212 = vadd.f32 %v10210, %v10211
    %v10213 = vsel %vm64, %v10033, 0.0
    %v10214 = vadd.f32 %v10212, %v10213
    %v10215 = vsel %vm64, %v10162, 0.0
    %v10216 = vadd.f32 %v10214, %v10215
    %v10217 = vsel %vm64, %v9780, 0.0
    %v10218 = vsel %vm64, %v9909, 0.0
    %v10219 = vadd.f32 %v10217, %v10218
    %v10220 = vsel %vm64, %v10038, 0.0
    %v10221 = vadd.f32 %v10219, %v10220
    %v10222 = vsel %vm64, %v10167, 0.0
    %v10223 = vadd.f32 %v10221, %v10222
    %v10224 = vsel %vm64, %v9785, 0.0
    %v10225 = vsel %vm64, %v9914, 0.0
    %v10226 = vadd.f32 %v10224, %v10225
    %v10227 = vsel %vm64, %v10043, 0.0
    %v10228 = vadd.f32 %v10226, %v10227
    %v10229 = vsel %vm64, %v10172, 0.0
    %v10230 = vadd.f32 %v10228, %v10229
    %v10232 = vsel %vm771, %v9157, 0
    %v10235 = vsel %vm771, %v9162, 0
    %v10238 = vsel %vm771, %v9167, 0
    %v10241 = vsel %vm771, %v9172, 0
    %v10244 = vsel %vm771, %v9177, 0
    %v10247 = vsel %vm771, %v9182, 0
    %v10250 = vsel %vm771, %v9187, 0
    %v10253 = vsel %vm771, %v9192, 0
    %10255 = vmatprep.subr.mxu0 0.0
    %10256 = vmatpush1.msra.mxu0 %v9655
    %10257 = vmatprep.subr.mxu0 0.0
    %10258 = vmatpush1.msra.mxu0 0.0
    %10259 = vmatprep.subr.mxu0 0.0
    %10260 = vmatpush1.msra.mxu0 0.0
    %10261 = vmatprep.subr.mxu0 0.0
    %10262 = vmatpush1.msra.mxu0 0.0
    %10263 = vmatprep.subr.mxu0 0.0
    %10264 = vmatpush1.msra.mxu0 0.0
    %10265 = vmatprep.subr.mxu0 0.0
    %10266 = vmatpush1.msra.mxu0 0.0
    %10267 = vmatprep.subr.mxu0 0.0
    %10268 = vmatpush1.msra.mxu0 0.0
    %10269 = vmatprep.subr.mxu0 0.0
    %10270 = vmatpush1.msra.mxu0 0.0
    %10271 = vmatprep.subr.mxu0 0.0
    %10272 = vmatpush1.msra.mxu0 0.0
    %10273 = vmatprep.subr.mxu0 0.0
    %10274 = vmatpush1.msra.mxu0 0.0
    %10275 = vmatprep.subr.mxu0 0.0
    %10276 = vmatpush1.msra.mxu0 0.0
    %10277 = vmatprep.subr.mxu0 0.0
    %10278 = vmatpush1.msra.mxu0 0.0
    %10279 = vmatprep.subr.mxu0 0.0
    %10280 = vmatpush1.msra.mxu0 0.0
    %10281 = vmatprep.subr.mxu0 0.0
    %10282 = vmatpush1.msra.mxu0 0.0
    %10283 = vmatprep.subr.mxu0 0.0
    %10284 = vmatpush1.msra.mxu0 0.0
    %10285 = vmatprep.subr.mxu0 0.0
    %10286 = vmatpush1.msra.mxu0 0.0
    %10287 = vmatprep.subr.mxu0 0.0
    %10288 = vmatpush1.msra.mxu0 0.0
    %10289 = vmatprep.subr.mxu0 0.0
    %10290 = vmatpush1.msra.mxu0 0.0
    %10291 = vmatprep.subr.mxu0 0.0
    %10292 = vmatpush1.msra.mxu0 0.0
    %10293 = vmatprep.subr.mxu0 0.0
    %10294 = vmatpush1.msra.mxu0 0.0
    %10295 = vmatprep.subr.mxu0 0.0
    %10296 = vmatpush1.msra.mxu0 0.0
    %10297 = vmatprep.subr.mxu0 0.0
    %10298 = vmatpush1.msra.mxu0 0.0
    %10299 = vmatprep.subr.mxu0 0.0
    %10300 = vmatpush1.msra.mxu0 0.0
    %10301 = vmatprep.subr.mxu0 0.0
    %10302 = vmatpush1.msra.mxu0 0.0
    %10303 = vmatprep.subr.mxu0 0.0
    %10304 = vmatpush1.msra.mxu0 0.0
    %10305 = vmatprep.subr.mxu0 0.0
    %10306 = vmatpush1.msra.mxu0 0.0
    %10307 = vmatprep.subr.mxu0 0.0
    %10308 = vmatpush1.msra.mxu0 0.0
    %10309 = vmatprep.subr.mxu0 0.0
    %10310 = vmatpush1.msra.mxu0 0.0
    %10311 = vmatprep.subr.mxu0 0.0
    %10312 = vmatpush1.msra.mxu0 0.0
    %10313 = vmatprep.subr.mxu0 0.0
    %10314 = vmatpush1.msra.mxu0 0.0
    %10315 = vmatprep.subr.mxu0 0.0
    %10316 = vmatpush1.msra.mxu0 0.0
    %10317 = vmatprep.subr.mxu0 0.0
    %10318 = vmatpush1.msra.mxu0 0.0
    %10319 = vmatprep.mubr.f32.mxu0 0.0
    %10320 = vmatmul.mubr.f32.gmra.mrb[0].mxu0 %v10232
    %v10321 = vpop.f32.mrb[0].mxu0
    %v10322 = vadd.f32 0.0, %v10321
    %v10323 = vpop.f32.mrb[0].mxu0
    %10324 = vmatprep.mubr.f32.mxu0 0.0
    %10325 = vmatmul.mubr.f32.gmra.mrb[0].mxu0 %v10235
    %v10326 = vpop.f32.mrb[0].mxu0
    %v10327 = vadd.f32 0.0, %v10326
    %v10328 = vpop.f32.mrb[0].mxu0
    %10329 = vmatprep.mubr.f32.mxu0 0.0
    %10330 = vmatmul.mubr.f32.gmra.mrb[0].mxu0 %v10238
    %v10331 = vpop.f32.mrb[0].mxu0
    %v10332 = vadd.f32 0.0, %v10331
    %v10333 = vpop.f32.mrb[0].mxu0
    %10334 = vmatprep.mubr.f32.mxu0 0.0
    %10335 = vmatmul.mubr.f32.gmra.mrb[0].mxu0 %v10241
    %v10336 = vpop.f32.mrb[0].mxu0
    %v10337 = vadd.f32 0.0, %v10336
    %v10338 = vpop.f32.mrb[0].mxu0
    %10339 = vmatprep.mubr.f32.mxu0 0.0
    %10340 = vmatmul.mubr.f32.gmra.mrb[0].mxu0 %v10244
    %v10341 = vpop.f32.mrb[0].mxu0
    %v10342 = vadd.f32 0.0, %v10341
    %v10343 = vpop.f32.mrb[0].mxu0
    %10344 = vmatprep.mubr.f32.mxu0 0.0
    %10345 = vmatmul.mubr.f32.gmra.mrb[0].mxu0 %v10247
    %v10346 = vpop.f32.mrb[0].mxu0
    %v10347 = vadd.f32 0.0, %v10346
    %v10348 = vpop.f32.mrb[0].mxu0
    %10349 = vmatprep.mubr.f32.mxu0 0.0
    %10350 = vmatmul.mubr.f32.gmra.mrb[0].mxu0 %v10250
    %v10351 = vpop.f32.mrb[0].mxu0
    %v10352 = vadd.f32 0.0, %v10351
    %v10353 = vpop.f32.mrb[0].mxu0
    %10354 = vmatprep.mubr.f32.mxu0 0.0
    %10355 = vmatmul.mubr.f32.gmra.mrb[0].mxu0 %v10253
    %v10356 = vpop.f32.mrb[0].mxu0
    %v10357 = vadd.f32 0.0, %v10356
    %v10358 = vpop.f32.mrb[0].mxu0
    %10359 = vdwg.mxu0
    %v10361 = vsel %vm771, %v9310, 0
    %v10364 = vsel %vm771, %v9315, 0
    %v10367 = vsel %vm771, %v9320, 0
    %v10370 = vsel %vm771, %v9325, 0
    %v10373 = vsel %vm771, %v9330, 0
    %v10376 = vsel %vm771, %v9335, 0
    %v10379 = vsel %vm771, %v9340, 0
    %v10382 = vsel %vm771, %v9345, 0
    %10384 = vmatprep.subr.mxu0 0.0
    %10385 = vmatpush1.msra.mxu0 %v9656
    %10386 = vmatprep.subr.mxu0 0.0
    %10387 = vmatpush1.msra.mxu0 0.0
    %10388 = vmatprep.subr.mxu0 0.0
    %10389 = vmatpush1.msra.mxu0 0.0
    %10390 = vmatprep.subr.mxu0 0.0
    %10391 = vmatpush1.msra.mxu0 0.0
    %10392 = vmatprep.subr.mxu0 0.0
    %10393 = vmatpush1.msra.mxu0 0.0
    %10394 = vmatprep.subr.mxu0 0.0
    %10395 = vmatpush1.msra.mxu0 0.0
    %10396 = vmatprep.subr.mxu0 0.0
    %10397 = vmatpush1.msra.mxu0 0.0
    %10398 = vmatprep.subr.mxu0 0.0
    %10399 = vmatpush1.msra.mxu0 0.0
    %10400 = vmatprep.subr.mxu0 0.0
    %10401 = vmatpush1.msra.mxu0 0.0
    %10402 = vmatprep.subr.mxu0 0.0
    %10403 = vmatpush1.msra.mxu0 0.0
    %10404 = vmatprep.subr.mxu0 0.0
    %10405 = vmatpush1.msra.mxu0 0.0
    %10406 = vmatprep.subr.mxu0 0.0
    %10407 = vmatpush1.msra.mxu0 0.0
    %10408 = vmatprep.subr.mxu0 0.0
    %10409 = vmatpush1.msra.mxu0 0.0
    %10410 = vmatprep.subr.mxu0 0.0
    %10411 = vmatpush1.msra.mxu0 0.0
    %10412 = vmatprep.subr.mxu0 0.0
    %10413 = vmatpush1.msra.mxu0 0.0
    %10414 = vmatprep.subr.mxu0 0.0
    %10415 = vmatpush1.msra.mxu0 0.0
    %10416 = vmatprep.subr.mxu0 0.0
    %10417 = vmatpush1.msra.mxu0 0.0
    %10418 = vmatprep.subr.mxu0 0.0
    %10419 = vmatpush1.msra.mxu0 0.0
    %10420 = vmatprep.subr.mxu0 0.0
    %10421 = vmatpush1.msra.mxu0 0.0
    %10422 = vmatprep.subr.mxu0 0.0
    %10423 = vmatpush1.msra.mxu0 0.0
    %10424 = vmatprep.subr.mxu0 0.0
    %10425 = vmatpush1.msra.mxu0 0.0
    %10426 = vmatprep.subr.mxu0 0.0
    %10427 = vmatpush1.msra.mxu0 0.0
    %10428 = vmatprep.subr.mxu0 0.0
    %10429 = vmatpush1.msra.mxu0 0.0
    %10430 = vmatprep.subr.mxu0 0.0
    %10431 = vmatpush1.msra.mxu0 0.0
    %10432 = vmatprep.subr.mxu0 0.0
    %10433 = vmatpush1.msra.mxu0 0.0
    %10434 = vmatprep.subr.mxu0 0.0
    %10435 = vmatpush1.msra.mxu0 0.0
    %10436 = vmatprep.subr.mxu0 0.0
    %10437 = vmatpush1.msra.mxu0 0.0
    %10438 = vmatprep.subr.mxu0 0.0
    %10439 = vmatpush1.msra.mxu0 0.0
    %10440 = vmatprep.subr.mxu0 0.0
    %10441 = vmatpush1.msra.mxu0 0.0
    %10442 = vmatprep.subr.mxu0 0.0
    %10443 = vmatpush1.msra.mxu0 0.0
    %10444 = vmatprep.subr.mxu0 0.0
    %10445 = vmatpush1.msra.mxu0 0.0
    %10446 = vmatprep.subr.mxu0 0.0
    %10447 = vmatpush1.msra.mxu0 0.0
    %10448 = vmatprep.mubr.f32.mxu0 0.0
    %10449 = vmatmul.mubr.f32.gmra.mrb[0].mxu0 %v10361
    %v10450 = vpop.f32.mrb[0].mxu0
    %v10451 = vadd.f32 0.0, %v10450
    %v10452 = vpop.f32.mrb[0].mxu0
    %10453 = vmatprep.mubr.f32.mxu0 0.0
    %10454 = vmatmul.mubr.f32.gmra.mrb[0].mxu0 %v10364
    %v10455 = vpop.f32.mrb[0].mxu0
    %v10456 = vadd.f32 0.0, %v10455
    %v10457 = vpop.f32.mrb[0].mxu0
    %10458 = vmatprep.mubr.f32.mxu0 0.0
    %10459 = vmatmul.mubr.f32.gmra.mrb[0].mxu0 %v10367
    %v10460 = vpop.f32.mrb[0].mxu0
    %v10461 = vadd.f32 0.0, %v10460
    %v10462 = vpop.f32.mrb[0].mxu0
    %10463 = vmatprep.mubr.f32.mxu0 0.0
    %10464 = vmatmul.mubr.f32.gmra.mrb[0].mxu0 %v10370
    %v10465 = vpop.f32.mrb[0].mxu0
    %v10466 = vadd.f32 0.0, %v10465
    %v10467 = vpop.f32.mrb[0].mxu0
    %10468 = vmatprep.mubr.f32.mxu0 0.0
    %10469 = vmatmul.mubr.f32.gmra.mrb[0].mxu0 %v10373
    %v10470 = vpop.f32.mrb[0].mxu0
    %v10471 = vadd.f32 0.0, %v10470
    %v10472 = vpop.f32.mrb[0].mxu0
    %10473 = vmatprep.mubr.f32.mxu0 0.0
    %10474 = vmatmul.mubr.f32.gmra.mrb[0].mxu0 %v10376
    %v10475 = vpop.f32.mrb[0].mxu0
    %v10476 = vadd.f32 0.0, %v10475
    %v10477 = vpop.f32.mrb[0].mxu0
    %10478 = vmatprep.mubr.f32.mxu0 0.0
    %10479 = vmatmul.mubr.f32.gmra.mrb[0].mxu0 %v10379
    %v10480 = vpop.f32.mrb[0].mxu0
    %v10481 = vadd.f32 0.0, %v10480
    %v10482 = vpop.f32.mrb[0].mxu0
    %10483 = vmatprep.mubr.f32.mxu0 0.0
    %10484 = vmatmul.mubr.f32.gmra.mrb[0].mxu0 %v10382
    %v10485 = vpop.f32.mrb[0].mxu0
    %v10486 = vadd.f32 0.0, %v10485
    %v10487 = vpop.f32.mrb[0].mxu0
    %10488 = vdwg.mxu0
    %v10490 = vsel %vm771, %v9463, 0
    %v10493 = vsel %vm771, %v9468, 0
    %v10496 = vsel %vm771, %v9473, 0
    %v10499 = vsel %vm771, %v9478, 0
    %v10502 = vsel %vm771, %v9483, 0
    %v10505 = vsel %vm771, %v9488, 0
    %v10508 = vsel %vm771, %v9493, 0
    %v10511 = vsel %vm771, %v9498, 0
    %10513 = vmatprep.subr.mxu0 0.0
    %10514 = vmatpush1.msra.mxu0 %v9657
    %10515 = vmatprep.subr.mxu0 0.0
    %10516 = vmatpush1.msra.mxu0 0.0
    %10517 = vmatprep.subr.mxu0 0.0
    %10518 = vmatpush1.msra.mxu0 0.0
    %10519 = vmatprep.subr.mxu0 0.0
    %10520 = vmatpush1.msra.mxu0 0.0
    %10521 = vmatprep.subr.mxu0 0.0
    %10522 = vmatpush1.msra.mxu0 0.0
    %10523 = vmatprep.subr.mxu0 0.0
    %10524 = vmatpush1.msra.mxu0 0.0
    %10525 = vmatprep.subr.mxu0 0.0
    %10526 = vmatpush1.msra.mxu0 0.0
    %10527 = vmatprep.subr.mxu0 0.0
    %10528 = vmatpush1.msra.mxu0 0.0
    %10529 = vmatprep.subr.mxu0 0.0
    %10530 = vmatpush1.msra.mxu0 0.0
    %10531 = vmatprep.subr.mxu0 0.0
    %10532 = vmatpush1.msra.mxu0 0.0
    %10533 = vmatprep.subr.mxu0 0.0
    %10534 = vmatpush1.msra.mxu0 0.0
    %10535 = vmatprep.subr.mxu0 0.0
    %10536 = vmatpush1.msra.mxu0 0.0
    %10537 = vmatprep.subr.mxu0 0.0
    %10538 = vmatpush1.msra.mxu0 0.0
    %10539 = vmatprep.subr.mxu0 0.0
    %10540 = vmatpush1.msra.mxu0 0.0
    %10541 = vmatprep.subr.mxu0 0.0
    %10542 = vmatpush1.msra.mxu0 0.0
    %10543 = vmatprep.subr.mxu0 0.0
    %10544 = vmatpush1.msra.mxu0 0.0
    %10545 = vmatprep.subr.mxu0 0.0
    %10546 = vmatpush1.msra.mxu0 0.0
    %10547 = vmatprep.subr.mxu0 0.0
    %10548 = vmatpush1.msra.mxu0 0.0
    %10549 = vmatprep.subr.mxu0 0.0
    %10550 = vmatpush1.msra.mxu0 0.0
    %10551 = vmatprep.subr.mxu0 0.0
    %10552 = vmatpush1.msra.mxu0 0.0
    %10553 = vmatprep.subr.mxu0 0.0
    %10554 = vmatpush1.msra.mxu0 0.0
    %10555 = vmatprep.subr.mxu0 0.0
    %10556 = vmatpush1.msra.mxu0 0.0
    %10557 = vmatprep.subr.mxu0 0.0
    %10558 = vmatpush1.msra.mxu0 0.0
    %10559 = vmatprep.subr.mxu0 0.0
    %10560 = vmatpush1.msra.mxu0 0.0
    %10561 = vmatprep.subr.mxu0 0.0
    %10562 = vmatpush1.msra.mxu0 0.0
    %10563 = vmatprep.subr.mxu0 0.0
    %10564 = vmatpush1.msra.mxu0 0.0
    %10565 = vmatprep.subr.mxu0 0.0
    %10566 = vmatpush1.msra.mxu0 0.0
    %10567 = vmatprep.subr.mxu0 0.0
    %10568 = vmatpush1.msra.mxu0 0.0
    %10569 = vmatprep.subr.mxu0 0.0
    %10570 = vmatpush1.msra.mxu0 0.0
    %10571 = vmatprep.subr.mxu0 0.0
    %10572 = vmatpush1.msra.mxu0 0.0
    %10573 = vmatprep.subr.mxu0 0.0
    %10574 = vmatpush1.msra.mxu0 0.0
    %10575 = vmatprep.subr.mxu0 0.0
    %10576 = vmatpush1.msra.mxu0 0.0
    %10577 = vmatprep.mubr.f32.mxu0 0.0
    %10578 = vmatmul.mubr.f32.gmra.mrb[0].mxu0 %v10490
    %v10579 = vpop.f32.mrb[0].mxu0
    %v10580 = vadd.f32 0.0, %v10579
    %v10581 = vpop.f32.mrb[0].mxu0
    %10582 = vmatprep.mubr.f32.mxu0 0.0
    %10583 = vmatmul.mubr.f32.gmra.mrb[0].mxu0 %v10493
    %v10584 = vpop.f32.mrb[0].mxu0
    %v10585 = vadd.f32 0.0, %v10584
    %v10586 = vpop.f32.mrb[0].mxu0
    %10587 = vmatprep.mubr.f32.mxu0 0.0
    %10588 = vmatmul.mubr.f32.gmra.mrb[0].mxu0 %v10496
    %v10589 = vpop.f32.mrb[0].mxu0
    %v10590 = vadd.f32 0.0, %v10589
    %v10591 = vpop.f32.mrb[0].mxu0
    %10592 = vmatprep.mubr.f32.mxu0 0.0
    %10593 = vmatmul.mubr.f32.gmra.mrb[0].mxu0 %v10499
    %v10594 = vpop.f32.mrb[0].mxu0
    %v10595 = vadd.f32 0.0, %v10594
    %v10596 = vpop.f32.mrb[0].mxu0
    %10597 = vmatprep.mubr.f32.mxu0 0.0
    %10598 = vmatmul.mubr.f32.gmra.mrb[0].mxu0 %v10502
    %v10599 = vpop.f32.mrb[0].mxu0
    %v10600 = vadd.f32 0.0, %v10599
    %v10601 = vpop.f32.mrb[0].mxu0
    %10602 = vmatprep.mubr.f32.mxu0 0.0
    %10603 = vmatmul.mubr.f32.gmra.mrb[0].mxu0 %v10505
    %v10604 = vpop.f32.mrb[0].mxu0
    %v10605 = vadd.f32 0.0, %v10604
    %v10606 = vpop.f32.mrb[0].mxu0
    %10607 = vmatprep.mubr.f32.mxu0 0.0
    %10608 = vmatmul.mubr.f32.gmra.mrb[0].mxu0 %v10508
    %v10609 = vpop.f32.mrb[0].mxu0
    %v10610 = vadd.f32 0.0, %v10609
    %v10611 = vpop.f32.mrb[0].mxu0
    %10612 = vmatprep.mubr.f32.mxu0 0.0
    %10613 = vmatmul.mubr.f32.gmra.mrb[0].mxu0 %v10511
    %v10614 = vpop.f32.mrb[0].mxu0
    %v10615 = vadd.f32 0.0, %v10614
    %v10616 = vpop.f32.mrb[0].mxu0
    %10617 = vdwg.mxu0
    %v10619 = vsel %vm771, %v9616, 0
    %v10622 = vsel %vm771, %v9621, 0
    %v10625 = vsel %vm771, %v9626, 0
    %v10628 = vsel %vm771, %v9631, 0
    %v10631 = vsel %vm771, %v9636, 0
    %v10634 = vsel %vm771, %v9641, 0
    %v10637 = vsel %vm771, %v9646, 0
    %v10640 = vsel %vm771, %v9651, 0
    %10642 = vmatprep.subr.mxu0 0.0
    %10643 = vmatpush1.msra.mxu0 %v9658
    %10644 = vmatprep.subr.mxu0 0.0
    %10645 = vmatpush1.msra.mxu0 0.0
    %10646 = vmatprep.subr.mxu0 0.0
    %10647 = vmatpush1.msra.mxu0 0.0
    %10648 = vmatprep.subr.mxu0 0.0
    %10649 = vmatpush1.msra.mxu0 0.0
    %10650 = vmatprep.subr.mxu0 0.0
    %10651 = vmatpush1.msra.mxu0 0.0
    %10652 = vmatprep.subr.mxu0 0.0
    %10653 = vmatpush1.msra.mxu0 0.0
    %10654 = vmatprep.subr.mxu0 0.0
    %10655 = vmatpush1.msra.mxu0 0.0
    %10656 = vmatprep.subr.mxu0 0.0
    %10657 = vmatpush1.msra.mxu0 0.0
    %10658 = vmatprep.subr.mxu0 0.0
    %10659 = vmatpush1.msra.mxu0 0.0
    %10660 = vmatprep.subr.mxu0 0.0
    %10661 = vmatpush1.msra.mxu0 0.0
    %10662 = vmatprep.subr.mxu0 0.0
    %10663 = vmatpush1.msra.mxu0 0.0
    %10664 = vmatprep.subr.mxu0 0.0
    %10665 = vmatpush1.msra.mxu0 0.0
    %10666 = vmatprep.subr.mxu0 0.0
    %10667 = vmatpush1.msra.mxu0 0.0
    %10668 = vmatprep.subr.mxu0 0.0
    %10669 = vmatpush1.msra.mxu0 0.0
    %10670 = vmatprep.subr.mxu0 0.0
    %10671 = vmatpush1.msra.mxu0 0.0
    %10672 = vmatprep.subr.mxu0 0.0
    %10673 = vmatpush1.msra.mxu0 0.0
    %10674 = vmatprep.subr.mxu0 0.0
    %10675 = vmatpush1.msra.mxu0 0.0
    %10676 = vmatprep.subr.mxu0 0.0
    %10677 = vmatpush1.msra.mxu0 0.0
    %10678 = vmatprep.subr.mxu0 0.0
    %10679 = vmatpush1.msra.mxu0 0.0
    %10680 = vmatprep.subr.mxu0 0.0
    %10681 = vmatpush1.msra.mxu0 0.0
    %10682 = vmatprep.subr.mxu0 0.0
    %10683 = vmatpush1.msra.mxu0 0.0
    %10684 = vmatprep.subr.mxu0 0.0
    %10685 = vmatpush1.msra.mxu0 0.0
    %10686 = vmatprep.subr.mxu0 0.0
    %10687 = vmatpush1.msra.mxu0 0.0
    %10688 = vmatprep.subr.mxu0 0.0
    %10689 = vmatpush1.msra.mxu0 0.0
    %10690 = vmatprep.subr.mxu0 0.0
    %10691 = vmatpush1.msra.mxu0 0.0
    %10692 = vmatprep.subr.mxu0 0.0
    %10693 = vmatpush1.msra.mxu0 0.0
    %10694 = vmatprep.subr.mxu0 0.0
    %10695 = vmatpush1.msra.mxu0 0.0
    %10696 = vmatprep.subr.mxu0 0.0
    %10697 = vmatpush1.msra.mxu0 0.0
    %10698 = vmatprep.subr.mxu0 0.0
    %10699 = vmatpush1.msra.mxu0 0.0
    %10700 = vmatprep.subr.mxu0 0.0
    %10701 = vmatpush1.msra.mxu0 0.0
    %10702 = vmatprep.subr.mxu0 0.0
    %10703 = vmatpush1.msra.mxu0 0.0
    %10704 = vmatprep.subr.mxu0 0.0
    %10705 = vmatpush1.msra.mxu0 0.0
    %10706 = vmatprep.mubr.f32.mxu0 0.0
    %10707 = vmatmul.mubr.f32.gmra.mrb[0].mxu0 %v10619
    %v10708 = vpop.f32.mrb[0].mxu0
    %v10709 = vadd.f32 0.0, %v10708
    %v10710 = vpop.f32.mrb[0].mxu0
    %10711 = vmatprep.mubr.f32.mxu0 0.0
    %10712 = vmatmul.mubr.f32.gmra.mrb[0].mxu0 %v10622
    %v10713 = vpop.f32.mrb[0].mxu0
    %v10714 = vadd.f32 0.0, %v10713
    %v10715 = vpop.f32.mrb[0].mxu0
    %10716 = vmatprep.mubr.f32.mxu0 0.0
    %10717 = vmatmul.mubr.f32.gmra.mrb[0].mxu0 %v10625
    %v10718 = vpop.f32.mrb[0].mxu0
    %v10719 = vadd.f32 0.0, %v10718
    %v10720 = vpop.f32.mrb[0].mxu0
    %10721 = vmatprep.mubr.f32.mxu0 0.0
    %10722 = vmatmul.mubr.f32.gmra.mrb[0].mxu0 %v10628
    %v10723 = vpop.f32.mrb[0].mxu0
    %v10724 = vadd.f32 0.0, %v10723
    %v10725 = vpop.f32.mrb[0].mxu0
    %10726 = vmatprep.mubr.f32.mxu0 0.0
    %10727 = vmatmul.mubr.f32.gmra.mrb[0].mxu0 %v10631
    %v10728 = vpop.f32.mrb[0].mxu0
    %v10729 = vadd.f32 0.0, %v10728
    %v10730 = vpop.f32.mrb[0].mxu0
    %10731 = vmatprep.mubr.f32.mxu0 0.0
    %10732 = vmatmul.mubr.f32.gmra.mrb[0].mxu0 %v10634
    %v10733 = vpop.f32.mrb[0].mxu0
    %v10734 = vadd.f32 0.0, %v10733
    %v10735 = vpop.f32.mrb[0].mxu0
    %10736 = vmatprep.mubr.f32.mxu0 0.0
    %10737 = vmatmul.mubr.f32.gmra.mrb[0].mxu0 %v10637
    %v10738 = vpop.f32.mrb[0].mxu0
    %v10739 = vadd.f32 0.0, %v10738
    %v10740 = vpop.f32.mrb[0].mxu0
    %10741 = vmatprep.mubr.f32.mxu0 0.0
    %10742 = vmatmul.mubr.f32.gmra.mrb[0].mxu0 %v10640
    %v10743 = vpop.f32.mrb[0].mxu0
    %v10744 = vadd.f32 0.0, %v10743
    %v10745 = vpop.f32.mrb[0].mxu0
    %10746 = vdwg.mxu0
    %v10747 = vsel %vm64, %v10322, 0.0
    %v10748 = vsel %vm64, %v10451, 0.0
    %v10749 = vadd.f32 %v10747, %v10748
    %v10750 = vsel %vm64, %v10580, 0.0
    %v10751 = vadd.f32 %v10749, %v10750
    %v10752 = vsel %vm64, %v10709, 0.0
    %v10753 = vadd.f32 %v10751, %v10752
    %v10754 = vsel %vm64, %v10327, 0.0
    %v10755 = vsel %vm64, %v10456, 0.0
    %v10756 = vadd.f32 %v10754, %v10755
    %v10757 = vsel %vm64, %v10585, 0.0
    %v10758 = vadd.f32 %v10756, %v10757
    %v10759 = vsel %vm64, %v10714, 0.0
    %v10760 = vadd.f32 %v10758, %v10759
    %v10761 = vsel %vm64, %v10332, 0.0
    %v10762 = vsel %vm64, %v10461, 0.0
    %v10763 = vadd.f32 %v10761, %v10762
    %v10764 = vsel %vm64, %v10590, 0.0
    %v10765 = vadd.f32 %v10763, %v10764
    %v10766 = vsel %vm64, %v10719, 0.0
    %v10767 = vadd.f32 %v10765, %v10766
    %v10768 = vsel %vm64, %v10337, 0.0
    %v10769 = vsel %vm64, %v10466, 0.0
    %v10770 = vadd.f32 %v10768, %v10769
    %v10771 = vsel %vm64, %v10595, 0.0
    %v10772 = vadd.f32 %v10770, %v10771
    %v10773 = vsel %vm64, %v10724, 0.0
    %v10774 = vadd.f32 %v10772, %v10773
    %v10775 = vsel %vm64, %v10342, 0.0
    %v10776 = vsel %vm64, %v10471, 0.0
    %v10777 = vadd.f32 %v10775, %v10776
    %v10778 = vsel %vm64, %v10600, 0.0
    %v10779 = vadd.f32 %v10777, %v10778
    %v10780 = vsel %vm64, %v10729, 0.0
    %v10781 = vadd.f32 %v10779, %v10780
    %v10782 = vsel %vm64, %v10347, 0.0
    %v10783 = vsel %vm64, %v10476, 0.0
    %v10784 = vadd.f32 %v10782, %v10783
    %v10785 = vsel %vm64, %v10605, 0.0
    %v10786 = vadd.f32 %v10784, %v10785
    %v10787 = vsel %vm64, %v10734, 0.0
    %v10788 = vadd.f32 %v10786, %v10787
    %v10789 = vsel %vm64, %v10352, 0.0
    %v10790 = vsel %vm64, %v10481, 0.0
    %v10791 = vadd.f32 %v10789, %v10790
    %v10792 = vsel %vm64, %v10610, 0.0
    %v10793 = vadd.f32 %v10791, %v10792
    %v10794 = vsel %vm64, %v10739, 0.0
    %v10795 = vadd.f32 %v10793, %v10794
    %v10796 = vsel %vm64, %v10357, 0.0
    %v10797 = vsel %vm64, %v10486, 0.0
    %v10798 = vadd.f32 %v10796, %v10797
    %v10799 = vsel %vm64, %v10615, 0.0
    %v10800 = vadd.f32 %v10798, %v10799
    %v10801 = vsel %vm64, %v10744, 0.0
    %v10802 = vadd.f32 %v10800, %v10801
    %v10803 = vlaneseq
    %v10804 = vshrl.u32 %v10803, 7
    %v10805 = vsub.s32 0, %v10804
    %v10806 = vrot.slane %v5808, %v10805
    %v10807 = vadd.f32 %v10181, %v10806
    %v10808 = vadd.f32 %v10188, %v10806
    %v10809 = vadd.f32 %v10195, %v10806
    %v10810 = vadd.f32 %v10202, %v10806
    %v10811 = vadd.f32 %v10209, %v10806
    %v10812 = vadd.f32 %v10216, %v10806
    %v10813 = vadd.f32 %v10223, %v10806
    %v10814 = vadd.f32 %v10230, %v10806
    %v10815 = vadd.f32 %v10753, %v10806
    %v10816 = vadd.f32 %v10760, %v10806
    %v10817 = vadd.f32 %v10767, %v10806
    %v10818 = vadd.f32 %v10774, %v10806
    %v10819 = vadd.f32 %v10781, %v10806
    %v10820 = vadd.f32 %v10788, %v10806
    %v10821 = vadd.f32 %v10795, %v10806
    %v10822 = vadd.f32 %v10802, %v10806
    %v10823 = vadd.f32 %v5787, %v10807
    %v10824 = vadd.f32 %v5788, %v10808
    %v10825 = vadd.f32 %v5789, %v10809
    %v10826 = vadd.f32 %v5790, %v10810
    %v10827 = vadd.f32 %v5791, %v10811
    %v10828 = vadd.f32 %v5792, %v10812
    %v10829 = vadd.f32 %v5793, %v10813
    %v10830 = vadd.f32 %v5794, %v10814
    %v10831 = vadd.f32 %v5795, %v10815
    %v10832 = vadd.f32 %v5796, %v10816
    %v10833 = vadd.f32 %v5797, %v10817
    %v10834 = vadd.f32 %v5798, %v10818
    %v10835 = vadd.f32 %v5799, %v10819
    %v10836 = vadd.f32 %v5800, %v10820
    %v10837 = vadd.f32 %v5801, %v10821
    %v10838 = vadd.f32 %v5802, %v10822
    %v10839 = vsel %vm64, %v10823, 0.0
    %10840 = vadd.xlane.f32.xlu0 %v10839
    %v10841 = vpop.xlane.xlu0 %10840
    %v10842 = vsel %vm64, %v10824, 0.0
    %10843 = vadd.xlane.f32.xlu0 %v10842
    %v10844 = vpop.xlane.xlu0 %10843
    %v10845 = vsel %vm64, %v10825, 0.0
    %10846 = vadd.xlane.f32.xlu0 %v10845
    %v10847 = vpop.xlane.xlu0 %10846
    %v10848 = vsel %vm64, %v10826, 0.0
    %10849 = vadd.xlane.f32.xlu0 %v10848
    %v10850 = vpop.xlane.xlu0 %10849
    %v10851 = vsel %vm64, %v10827, 0.0
    %10852 = vadd.xlane.f32.xlu0 %v10851
    %v10853 = vpop.xlane.xlu0 %10852
    %v10854 = vsel %vm64, %v10828, 0.0
    %10855 = vadd.xlane.f32.xlu0 %v10854
    %v10856 = vpop.xlane.xlu0 %10855
    %v10857 = vsel %vm64, %v10829, 0.0
    %10858 = vadd.xlane.f32.xlu0 %v10857
    %v10859 = vpop.xlane.xlu0 %10858
    %v10860 = vsel %vm64, %v10830, 0.0
    %10861 = vadd.xlane.f32.xlu0 %v10860
    %v10862 = vpop.xlane.xlu0 %10861
    %v10863 = vsel %vm64, %v10831, 0.0
    %10864 = vadd.xlane.f32.xlu0 %v10863
    %v10865 = vpop.xlane.xlu0 %10864
    %v10866 = vsel %vm64, %v10832, 0.0
    %10867 = vadd.xlane.f32.xlu0 %v10866
    %v10868 = vpop.xlane.xlu0 %10867
    %v10869 = vsel %vm64, %v10833, 0.0
    %10870 = vadd.xlane.f32.xlu0 %v10869
    %v10871 = vpop.xlane.xlu0 %10870
    %v10872 = vsel %vm64, %v10834, 0.0
    %10873 = vadd.xlane.f32.xlu0 %v10872
    %v10874 = vpop.xlane.xlu0 %10873
    %v10875 = vsel %vm64, %v10835, 0.0
    %10876 = vadd.xlane.f32.xlu0 %v10875
    %v10877 = vpop.xlane.xlu0 %10876
    %v10878 = vsel %vm64, %v10836, 0.0
    %10879 = vadd.xlane.f32.xlu0 %v10878
    %v10880 = vpop.xlane.xlu0 %10879
    %v10881 = vsel %vm64, %v10837, 0.0
    %10882 = vadd.xlane.f32.xlu0 %v10881
    %v10883 = vpop.xlane.xlu0 %10882
    %v10884 = vsel %vm64, %v10838, 0.0
    %10885 = vadd.xlane.f32.xlu0 %v10884
    %v10886 = vpop.xlane.xlu0 %10885
    %v10887 = vmul.f32 %v10841, %v113
    %v10888 = vmul.f32 %v10844, %v113
    %v10889 = vmul.f32 %v10847, %v113
    %v10890 = vmul.f32 %v10850, %v113
    %v10891 = vmul.f32 %v10853, %v113
    %v10892 = vmul.f32 %v10856, %v113
    %v10893 = vmul.f32 %v10859, %v113
    %v10894 = vmul.f32 %v10862, %v113
    %v10895 = vmul.f32 %v10865, %v113
    %v10896 = vmul.f32 %v10868, %v113
    %v10897 = vmul.f32 %v10871, %v113
    %v10898 = vmul.f32 %v10874, %v113
    %v10899 = vmul.f32 %v10877, %v113
    %v10900 = vmul.f32 %v10880, %v113
    %v10901 = vmul.f32 %v10883, %v113
    %v10902 = vmul.f32 %v10886, %v113
    %v10903 = vsub.f32 %v10823, %v10887
    %v10904 = vsub.f32 %v10824, %v10888
    %v10905 = vsub.f32 %v10825, %v10889
    %v10906 = vsub.f32 %v10826, %v10890
    %v10907 = vsub.f32 %v10827, %v10891
    %v10908 = vsub.f32 %v10828, %v10892
    %v10909 = vsub.f32 %v10829, %v10893
    %v10910 = vsub.f32 %v10830, %v10894
    %v10911 = vsub.f32 %v10831, %v10895
    %v10912 = vsub.f32 %v10832, %v10896
    %v10913 = vsub.f32 %v10833, %v10897
    %v10914 = vsub.f32 %v10834, %v10898
    %v10915 = vsub.f32 %v10835, %v10899
    %v10916 = vsub.f32 %v10836, %v10900
    %v10917 = vsub.f32 %v10837, %v10901
    %v10918 = vsub.f32 %v10838, %v10902
    %v10919 = vmul.f32 %v10903, %v10903
    %v10920 = vmul.f32 %v10904, %v10904
    %v10921 = vmul.f32 %v10905, %v10905
    %v10922 = vmul.f32 %v10906, %v10906
    %v10923 = vmul.f32 %v10907, %v10907
    %v10924 = vmul.f32 %v10908, %v10908
    %v10925 = vmul.f32 %v10909, %v10909
    %v10926 = vmul.f32 %v10910, %v10910
    %v10927 = vmul.f32 %v10911, %v10911
    %v10928 = vmul.f32 %v10912, %v10912
    %v10929 = vmul.f32 %v10913, %v10913
    %v10930 = vmul.f32 %v10914, %v10914
    %v10931 = vmul.f32 %v10915, %v10915
    %v10932 = vmul.f32 %v10916, %v10916
    %v10933 = vmul.f32 %v10917, %v10917
    %v10934 = vmul.f32 %v10918, %v10918
    %v10935 = vsel %vm64, %v10919, 0.0
    %10936 = vadd.xlane.f32.xlu0 %v10935
    %v10937 = vpop.xlane.xlu0 %10936
    %v10938 = vsel %vm64, %v10920, 0.0
    %10939 = vadd.xlane.f32.xlu0 %v10938
    %v10940 = vpop.xlane.xlu0 %10939
    %v10941 = vsel %vm64, %v10921, 0.0
    %10942 = vadd.xlane.f32.xlu0 %v10941
    %v10943 = vpop.xlane.xlu0 %10942
    %v10944 = vsel %vm64, %v10922, 0.0
    %10945 = vadd.xlane.f32.xlu0 %v10944
    %v10946 = vpop.xlane.xlu0 %10945
    %v10947 = vsel %vm64, %v10923, 0.0
    %10948 = vadd.xlane.f32.xlu0 %v10947
    %v10949 = vpop.xlane.xlu0 %10948
    %v10950 = vsel %vm64, %v10924, 0.0
    %10951 = vadd.xlane.f32.xlu0 %v10950
    %v10952 = vpop.xlane.xlu0 %10951
    %v10953 = vsel %vm64, %v10925, 0.0
    %10954 = vadd.xlane.f32.xlu0 %v10953
    %v10955 = vpop.xlane.xlu0 %10954
    %v10956 = vsel %vm64, %v10926, 0.0
    %10957 = vadd.xlane.f32.xlu0 %v10956
    %v10958 = vpop.xlane.xlu0 %10957
    %v10959 = vsel %vm64, %v10927, 0.0
    %10960 = vadd.xlane.f32.xlu0 %v10959
    %v10961 = vpop.xlane.xlu0 %10960
    %v10962 = vsel %vm64, %v10928, 0.0
    %10963 = vadd.xlane.f32.xlu0 %v10962
    %v10964 = vpop.xlane.xlu0 %10963
    %v10965 = vsel %vm64, %v10929, 0.0
    %10966 = vadd.xlane.f32.xlu0 %v10965
    %v10967 = vpop.xlane.xlu0 %10966
    %v10968 = vsel %vm64, %v10930, 0.0
    %10969 = vadd.xlane.f32.xlu0 %v10968
    %v10970 = vpop.xlane.xlu0 %10969
    %v10971 = vsel %vm64, %v10931, 0.0
    %10972 = vadd.xlane.f32.xlu0 %v10971
    %v10973 = vpop.xlane.xlu0 %10972
    %v10974 = vsel %vm64, %v10932, 0.0
    %10975 = vadd.xlane.f32.xlu0 %v10974
    %v10976 = vpop.xlane.xlu0 %10975
    %v10977 = vsel %vm64, %v10933, 0.0
    %10978 = vadd.xlane.f32.xlu0 %v10977
    %v10979 = vpop.xlane.xlu0 %10978
    %v10980 = vsel %vm64, %v10934, 0.0
    %10981 = vadd.xlane.f32.xlu0 %v10980
    %v10982 = vpop.xlane.xlu0 %10981
    %v10983 = vmul.f32 %v10937, %v113
    %v10984 = vmul.f32 %v10940, %v113
    %v10985 = vmul.f32 %v10943, %v113
    %v10986 = vmul.f32 %v10946, %v113
    %v10987 = vmul.f32 %v10949, %v113
    %v10988 = vmul.f32 %v10952, %v113
    %v10989 = vmul.f32 %v10955, %v113
    %v10990 = vmul.f32 %v10958, %v113
    %v10991 = vmul.f32 %v10961, %v113
    %v10992 = vmul.f32 %v10964, %v113
    %v10993 = vmul.f32 %v10967, %v113
    %v10994 = vmul.f32 %v10970, %v113
    %v10995 = vmul.f32 %v10973, %v113
    %v10996 = vmul.f32 %v10976, %v113
    %v10997 = vmul.f32 %v10979, %v113
    %v10998 = vmul.f32 %v10982, %v113
    %v10999 = vadd.f32 %v10983, 1e-05
    %v11000 = vadd.f32 %v10984, 1e-05
    %v11001 = vadd.f32 %v10985, 1e-05
    %v11002 = vadd.f32 %v10986, 1e-05
    %v11003 = vadd.f32 %v10987, 1e-05
    %v11004 = vadd.f32 %v10988, 1e-05
    %v11005 = vadd.f32 %v10989, 1e-05
    %v11006 = vadd.f32 %v10990, 1e-05
    %v11007 = vadd.f32 %v10991, 1e-05
    %v11008 = vadd.f32 %v10992, 1e-05
    %v11009 = vadd.f32 %v10993, 1e-05
    %v11010 = vadd.f32 %v10994, 1e-05
    %v11011 = vadd.f32 %v10995, 1e-05
    %v11012 = vadd.f32 %v10996, 1e-05
    %v11013 = vadd.f32 %v10997, 1e-05
    %v11014 = vadd.f32 %v10998, 1e-05
    %v11015 = vrsqrt.pop %v10999
    %v11016 = vrsqrt.pop %v11000
    %v11017 = vrsqrt.pop %v11001
    %v11018 = vrsqrt.pop %v11002
    %v11019 = vrsqrt.pop %v11003
    %v11020 = vrsqrt.pop %v11004
    %v11021 = vrsqrt.pop %v11005
    %v11022 = vrsqrt.pop %v11006
    %v11023 = vrsqrt.pop %v11007
    %v11024 = vrsqrt.pop %v11008
    %v11025 = vrsqrt.pop %v11009
    %v11026 = vrsqrt.pop %v11010
    %v11027 = vrsqrt.pop %v11011
    %v11028 = vrsqrt.pop %v11012
    %v11029 = vrsqrt.pop %v11013
    %v11030 = vrsqrt.pop %v11014
    %v11031 = vmul.f32 %v10903, %v11015
    %v11032 = vmul.f32 %v10904, %v11016
    %v11033 = vmul.f32 %v10905, %v11017
    %v11034 = vmul.f32 %v10906, %v11018
    %v11035 = vmul.f32 %v10907, %v11019
    %v11036 = vmul.f32 %v10908, %v11020
    %v11037 = vmul.f32 %v10909, %v11021
    %v11038 = vmul.f32 %v10910, %v11022
    %v11039 = vmul.f32 %v10911, %v11023
    %v11040 = vmul.f32 %v10912, %v11024
    %v11041 = vmul.f32 %v10913, %v11025
    %v11042 = vmul.f32 %v10914, %v11026
    %v11043 = vmul.f32 %v10915, %v11027
    %v11044 = vmul.f32 %v10916, %v11028
    %v11045 = vmul.f32 %v10917, %v11029
    %v11046 = vmul.f32 %v10918, %v11030
    %v11047 = vlaneseq
    %v11048 = vshrl.u32 %v11047, 7
    %v11049 = vsub.s32 0, %v11048
    %v11050 = vrot.slane %v5805, %v11049
    %v11051 = vmul.f32 %v11031, %v11050
    %v11052 = vmul.f32 %v11032, %v11050
    %v11053 = vmul.f32 %v11033, %v11050
    %v11054 = vmul.f32 %v11034, %v11050
    %v11055 = vmul.f32 %v11035, %v11050
    %v11056 = vmul.f32 %v11036, %v11050
    %v11057 = vmul.f32 %v11037, %v11050
    %v11058 = vmul.f32 %v11038, %v11050
    %v11059 = vmul.f32 %v11039, %v11050
    %v11060 = vmul.f32 %v11040, %v11050
    %v11061 = vmul.f32 %v11041, %v11050
    %v11062 = vmul.f32 %v11042, %v11050
    %v11063 = vmul.f32 %v11043, %v11050
    %v11064 = vmul.f32 %v11044, %v11050
    %v11065 = vmul.f32 %v11045, %v11050
    %v11066 = vmul.f32 %v11046, %v11050
    %v11067 = vlaneseq
    %v11068 = vshrl.u32 %v11067, 7
    %v11069 = vsub.s32 0, %v11068
    %v11070 = vrot.slane %v5806, %v11069
    %v11071 = vadd.f32 %v11051, %v11070
    %v11072 = vadd.f32 %v11052, %v11070
    %v11073 = vadd.f32 %v11053, %v11070
    %v11074 = vadd.f32 %v11054, %v11070
    %v11075 = vadd.f32 %v11055, %v11070
    %v11076 = vadd.f32 %v11056, %v11070
    %v11077 = vadd.f32 %v11057, %v11070
    %v11078 = vadd.f32 %v11058, %v11070
    %v11079 = vadd.f32 %v11059, %v11070
    %v11080 = vadd.f32 %v11060, %v11070
    %v11081 = vadd.f32 %v11061, %v11070
    %v11082 = vadd.f32 %v11062, %v11070
    %v11083 = vadd.f32 %v11063, %v11070
    %v11084 = vadd.f32 %v11064, %v11070
    %v11085 = vadd.f32 %v11065, %v11070
    %v11086 = vadd.f32 %v11066, %v11070
    %s11087 = scalar_lea.vmem %s5, 32
    %v11088 = vld [vmem:[%s11087] sm:$0xff]
    %v11089 = vld [vmem:[%s11087 + $0x8] sm:$0xff]
    %v11090 = vld [vmem:[%s11087 + $0x10] sm:$0xff]
    %v11091 = vld [vmem:[%s11087 + $0x18] sm:$0xff]
    %v11092 = vlaneseq
    %v11093 = vshrl.u32 %v11092, 7
    %v11094 = vsub.s32 0, %v11093
    %v11095 = vrot.slane %v5809, %v11094
    %v11097 = vsel %vm64, %v11071, 0
    %v11100 = vsel %vm64, %v11072, 0
    %v11103 = vsel %vm64, %v11073, 0
    %v11106 = vsel %vm64, %v11074, 0
    %v11109 = vsel %vm64, %v11075, 0
    %v11112 = vsel %vm64, %v11076, 0
    %v11115 = vsel %vm64, %v11077, 0
    %v11118 = vsel %vm64, %v11078, 0
    %v11121 = vsel %vm64, %v11079, 0
    %v11124 = vsel %vm64, %v11080, 0
    %v11127 = vsel %vm64, %v11081, 0
    %v11130 = vsel %vm64, %v11082, 0
    %v11133 = vsel %vm64, %v11083, 0
    %v11136 = vsel %vm64, %v11084, 0
    %v11139 = vsel %vm64, %v11085, 0
    %v11142 = vsel %vm64, %v11086, 0
    %11144 = vmatprep.subr.mxu0 0.0
    %11145 = vmatpush1.msra.mxu0 %v11088
    %11146 = vmatprep.subr.mxu0 0.0
    %11147 = vmatpush1.msra.mxu0 %v11089
    %11148 = vmatprep.subr.mxu0 0.0
    %11149 = vmatpush1.msra.mxu0 %v11090
    %11150 = vmatprep.subr.mxu0 0.0
    %11151 = vmatpush1.msra.mxu0 %v11091
    %11152 = vmatprep.subr.mxu0 0.0
    %11153 = vmatpush1.msra.mxu0 0.0
    %11154 = vmatprep.subr.mxu0 0.0
    %11155 = vmatpush1.msra.mxu0 0.0
    %11156 = vmatprep.subr.mxu0 0.0
    %11157 = vmatpush1.msra.mxu0 0.0
    %11158 = vmatprep.subr.mxu0 0.0
    %11159 = vmatpush1.msra.mxu0 0.0
    %11160 = vmatprep.subr.mxu0 0.0
    %11161 = vmatpush1.msra.mxu0 0.0
    %11162 = vmatprep.subr.mxu0 0.0
    %11163 = vmatpush1.msra.mxu0 0.0
    %11164 = vmatprep.subr.mxu0 0.0
    %11165 = vmatpush1.msra.mxu0 0.0
    %11166 = vmatprep.subr.mxu0 0.0
    %11167 = vmatpush1.msra.mxu0 0.0
    %11168 = vmatprep.subr.mxu0 0.0
    %11169 = vmatpush1.msra.mxu0 0.0
    %11170 = vmatprep.subr.mxu0 0.0
    %11171 = vmatpush1.msra.mxu0 0.0
    %11172 = vmatprep.subr.mxu0 0.0
    %11173 = vmatpush1.msra.mxu0 0.0
    %11174 = vmatprep.subr.mxu0 0.0
    %11175 = vmatpush1.msra.mxu0 0.0
    %11176 = vmatprep.subr.mxu0 0.0
    %11177 = vmatpush1.msra.mxu0 0.0
    %11178 = vmatprep.subr.mxu0 0.0
    %11179 = vmatpush1.msra.mxu0 0.0
    %11180 = vmatprep.subr.mxu0 0.0
    %11181 = vmatpush1.msra.mxu0 0.0
    %11182 = vmatprep.subr.mxu0 0.0
    %11183 = vmatpush1.msra.mxu0 0.0
    %11184 = vmatprep.subr.mxu0 0.0
    %11185 = vmatpush1.msra.mxu0 0.0
    %11186 = vmatprep.subr.mxu0 0.0
    %11187 = vmatpush1.msra.mxu0 0.0
    %11188 = vmatprep.subr.mxu0 0.0
    %11189 = vmatpush1.msra.mxu0 0.0
    %11190 = vmatprep.subr.mxu0 0.0
    %11191 = vmatpush1.msra.mxu0 0.0
    %11192 = vmatprep.subr.mxu0 0.0
    %11193 = vmatpush1.msra.mxu0 0.0
    %11194 = vmatprep.subr.mxu0 0.0
    %11195 = vmatpush1.msra.mxu0 0.0
    %11196 = vmatprep.subr.mxu0 0.0
    %11197 = vmatpush1.msra.mxu0 0.0
    %11198 = vmatprep.subr.mxu0 0.0
    %11199 = vmatpush1.msra.mxu0 0.0
    %11200 = vmatprep.subr.mxu0 0.0
    %11201 = vmatpush1.msra.mxu0 0.0
    %11202 = vmatprep.subr.mxu0 0.0
    %11203 = vmatpush1.msra.mxu0 0.0
    %11204 = vmatprep.subr.mxu0 0.0
    %11205 = vmatpush1.msra.mxu0 0.0
    %11206 = vmatprep.subr.mxu0 0.0
    %11207 = vmatpush1.msra.mxu0 0.0
    %11208 = vmatprep.mubr.f32.mxu0 0.0
    %11209 = vmatmul.mubr.f32.gmra.mrb[0].mxu0 %v11097
    %v11210 = vpop.f32.mrb[0].mxu0
    %v11211 = vadd.f32 %v11095, %v11210
    %v11212 = vpop.f32.mrb[0].mxu0
    %11213 = vmatprep.mubr.f32.mxu0 0.0
    %11214 = vmatmul.mubr.f32.gmra.mrb[0].mxu0 %v11100
    %v11215 = vpop.f32.mrb[0].mxu0
    %v11216 = vadd.f32 %v11095, %v11215
    %v11217 = vpop.f32.mrb[0].mxu0
    %11218 = vmatprep.mubr.f32.mxu0 0.0
    %11219 = vmatmul.mubr.f32.gmra.mrb[0].mxu0 %v11103
    %v11220 = vpop.f32.mrb[0].mxu0
    %v11221 = vadd.f32 %v11095, %v11220
    %v11222 = vpop.f32.mrb[0].mxu0
    %11223 = vmatprep.mubr.f32.mxu0 0.0
    %11224 = vmatmul.mubr.f32.gmra.mrb[0].mxu0 %v11106
    %v11225 = vpop.f32.mrb[0].mxu0
    %v11226 = vadd.f32 %v11095, %v11225
    %v11227 = vpop.f32.mrb[0].mxu0
    %11228 = vmatprep.mubr.f32.mxu0 0.0
    %11229 = vmatmul.mubr.f32.gmra.mrb[0].mxu0 %v11109
    %v11230 = vpop.f32.mrb[0].mxu0
    %v11231 = vadd.f32 %v11095, %v11230
    %v11232 = vpop.f32.mrb[0].mxu0
    %11233 = vmatprep.mubr.f32.mxu0 0.0
    %11234 = vmatmul.mubr.f32.gmra.mrb[0].mxu0 %v11112
    %v11235 = vpop.f32.mrb[0].mxu0
    %v11236 = vadd.f32 %v11095, %v11235
    %v11237 = vpop.f32.mrb[0].mxu0
    %11238 = vmatprep.mubr.f32.mxu0 0.0
    %11239 = vmatmul.mubr.f32.gmra.mrb[0].mxu0 %v11115
    %v11240 = vpop.f32.mrb[0].mxu0
    %v11241 = vadd.f32 %v11095, %v11240
    %v11242 = vpop.f32.mrb[0].mxu0
    %11243 = vmatprep.mubr.f32.mxu0 0.0
    %11244 = vmatmul.mubr.f32.gmra.mrb[0].mxu0 %v11118
    %v11245 = vpop.f32.mrb[0].mxu0
    %v11246 = vadd.f32 %v11095, %v11245
    %v11247 = vpop.f32.mrb[0].mxu0
    %11248 = vmatprep.mubr.f32.mxu0 0.0
    %11249 = vmatmul.mubr.f32.gmra.mrb[0].mxu0 %v11121
    %v11250 = vpop.f32.mrb[0].mxu0
    %v11251 = vadd.f32 %v11095, %v11250
    %v11252 = vpop.f32.mrb[0].mxu0
    %11253 = vmatprep.mubr.f32.mxu0 0.0
    %11254 = vmatmul.mubr.f32.gmra.mrb[0].mxu0 %v11124
    %v11255 = vpop.f32.mrb[0].mxu0
    %v11256 = vadd.f32 %v11095, %v11255
    %v11257 = vpop.f32.mrb[0].mxu0
    %11258 = vmatprep.mubr.f32.mxu0 0.0
    %11259 = vmatmul.mubr.f32.gmra.mrb[0].mxu0 %v11127
    %v11260 = vpop.f32.mrb[0].mxu0
    %v11261 = vadd.f32 %v11095, %v11260
    %v11262 = vpop.f32.mrb[0].mxu0
    %11263 = vmatprep.mubr.f32.mxu0 0.0
    %11264 = vmatmul.mubr.f32.gmra.mrb[0].mxu0 %v11130
    %v11265 = vpop.f32.mrb[0].mxu0
    %v11266 = vadd.f32 %v11095, %v11265
    %v11267 = vpop.f32.mrb[0].mxu0
    %11268 = vmatprep.mubr.f32.mxu0 0.0
    %11269 = vmatmul.mubr.f32.gmra.mrb[0].mxu0 %v11133
    %v11270 = vpop.f32.mrb[0].mxu0
    %v11271 = vadd.f32 %v11095, %v11270
    %v11272 = vpop.f32.mrb[0].mxu0
    %11273 = vmatprep.mubr.f32.mxu0 0.0
    %11274 = vmatmul.mubr.f32.gmra.mrb[0].mxu0 %v11136
    %v11275 = vpop.f32.mrb[0].mxu0
    %v11276 = vadd.f32 %v11095, %v11275
    %v11277 = vpop.f32.mrb[0].mxu0
    %11278 = vmatprep.mubr.f32.mxu0 0.0
    %11279 = vmatmul.mubr.f32.gmra.mrb[0].mxu0 %v11139
    %v11280 = vpop.f32.mrb[0].mxu0
    %v11281 = vadd.f32 %v11095, %v11280
    %v11282 = vpop.f32.mrb[0].mxu0
    %11283 = vmatprep.mubr.f32.mxu0 0.0
    %11284 = vmatmul.mubr.f32.gmra.mrb[0].mxu0 %v11142
    %v11285 = vpop.f32.mrb[0].mxu0
    %v11286 = vadd.f32 %v11095, %v11285
    %v11287 = vpop.f32.mrb[0].mxu0
    %11288 = vdwg.mxu0
    %v11289 = vmul.f32 %v11211, 0.5
    %v11290 = vmul.f32 %v11216, 0.5
    %v11291 = vmul.f32 %v11221, 0.5
    %v11292 = vmul.f32 %v11226, 0.5
    %v11293 = vmul.f32 %v11231, 0.5
    %v11294 = vmul.f32 %v11236, 0.5
    %v11295 = vmul.f32 %v11241, 0.5
    %v11296 = vmul.f32 %v11246, 0.5
    %v11297 = vmul.f32 %v11251, 0.5
    %v11298 = vmul.f32 %v11256, 0.5
    %v11299 = vmul.f32 %v11261, 0.5
    %v11300 = vmul.f32 %v11266, 0.5
    %v11301 = vmul.f32 %v11271, 0.5
    %v11302 = vmul.f32 %v11276, 0.5
    %v11303 = vmul.f32 %v11281, 0.5
    %v11304 = vmul.f32 %v11286, 0.5
    %v11305 = vmul.f32 %v11211, 0.70710677
    %v11306 = vmul.f32 %v11216, 0.70710677
    %v11307 = vmul.f32 %v11221, 0.70710677
    %v11308 = vmul.f32 %v11226, 0.70710677
    %v11309 = vmul.f32 %v11231, 0.70710677
    %v11310 = vmul.f32 %v11236, 0.70710677
    %v11311 = vmul.f32 %v11241, 0.70710677
    %v11312 = vmul.f32 %v11246, 0.70710677
    %v11313 = vmul.f32 %v11251, 0.70710677
    %v11314 = vmul.f32 %v11256, 0.70710677
    %v11315 = vmul.f32 %v11261, 0.70710677
    %v11316 = vmul.f32 %v11266, 0.70710677
    %v11317 = vmul.f32 %v11271, 0.70710677
    %v11318 = vmul.f32 %v11276, 0.70710677
    %v11319 = vmul.f32 %v11281, 0.70710677
    %v11320 = vmul.f32 %v11286, 0.70710677
    %v11321 = verf.f32.pop %v11305
    %v11322 = verf.f32.pop %v11306
    %v11323 = verf.f32.pop %v11307
    %v11324 = verf.f32.pop %v11308
    %v11325 = verf.f32.pop %v11309
    %v11326 = verf.f32.pop %v11310
    %v11327 = verf.f32.pop %v11311
    %v11328 = verf.f32.pop %v11312
    %v11329 = verf.f32.pop %v11313
    %v11330 = verf.f32.pop %v11314
    %v11331 = verf.f32.pop %v11315
    %v11332 = verf.f32.pop %v11316
    %v11333 = verf.f32.pop %v11317
    %v11334 = verf.f32.pop %v11318
    %v11335 = verf.f32.pop %v11319
    %v11336 = verf.f32.pop %v11320
    %v11337 = vadd.f32 %v11321, 1.0
    %v11338 = vadd.f32 %v11322, 1.0
    %v11339 = vadd.f32 %v11323, 1.0
    %v11340 = vadd.f32 %v11324, 1.0
    %v11341 = vadd.f32 %v11325, 1.0
    %v11342 = vadd.f32 %v11326, 1.0
    %v11343 = vadd.f32 %v11327, 1.0
    %v11344 = vadd.f32 %v11328, 1.0
    %v11345 = vadd.f32 %v11329, 1.0
    %v11346 = vadd.f32 %v11330, 1.0
    %v11347 = vadd.f32 %v11331, 1.0
    %v11348 = vadd.f32 %v11332, 1.0
    %v11349 = vadd.f32 %v11333, 1.0
    %v11350 = vadd.f32 %v11334, 1.0
    %v11351 = vadd.f32 %v11335, 1.0
    %v11352 = vadd.f32 %v11336, 1.0
    %v11353 = vmul.f32 %v11289, %v11337
    %v11354 = vmul.f32 %v11290, %v11338
    %v11355 = vmul.f32 %v11291, %v11339
    %v11356 = vmul.f32 %v11292, %v11340
    %v11357 = vmul.f32 %v11293, %v11341
    %v11358 = vmul.f32 %v11294, %v11342
    %v11359 = vmul.f32 %v11295, %v11343
    %v11360 = vmul.f32 %v11296, %v11344
    %v11361 = vmul.f32 %v11297, %v11345
    %v11362 = vmul.f32 %v11298, %v11346
    %v11363 = vmul.f32 %v11299, %v11347
    %v11364 = vmul.f32 %v11300, %v11348
    %v11365 = vmul.f32 %v11301, %v11349
    %v11366 = vmul.f32 %v11302, %v11350
    %v11367 = vmul.f32 %v11303, %v11351
    %v11368 = vmul.f32 %v11304, %v11352
    %s11369 = scalar_lea.vmem %s6, 128
    %v11370 = vld [vmem:[%s11369] sm:$0xff]
    %v11371 = vld [vmem:[%s11369 + $0x8] sm:$0xff]
    %v11372 = vld [vmem:[%s11369 + $0x10] sm:$0xff]
    %v11373 = vld [vmem:[%s11369 + $0x18] sm:$0xff]
    %v11374 = vld [vmem:[%s11369 + $0x20] sm:$0xff]
    %v11375 = vld [vmem:[%s11369 + $0x28] sm:$0xff]
    %v11376 = vld [vmem:[%s11369 + $0x30] sm:$0xff]
    %v11377 = vld [vmem:[%s11369 + $0x38] sm:$0xff]
    %v11378 = vld [vmem:[%s11369 + $0x40] sm:$0xff]
    %v11379 = vld [vmem:[%s11369 + $0x48] sm:$0xff]
    %v11380 = vld [vmem:[%s11369 + $0x50] sm:$0xff]
    %v11381 = vld [vmem:[%s11369 + $0x58] sm:$0xff]
    %v11382 = vld [vmem:[%s11369 + $0x60] sm:$0xff]
    %v11383 = vld [vmem:[%s11369 + $0x68] sm:$0xff]
    %v11384 = vld [vmem:[%s11369 + $0x70] sm:$0xff]
    %v11385 = vld [vmem:[%s11369 + $0x78] sm:$0xff]
    %v11386 = vlaneseq
    %v11387 = vshrl.u32 %v11386, 7
    %v11388 = vsub.s32 0, %v11387
    %v11389 = vrot.slane %v5810, %v11388
    %11390 = vmatprep.subr.mxu0 0.0
    %11391 = vmatpush1.msra.mxu0 %v11370
    %11392 = vmatprep.subr.mxu0 0.0
    %11393 = vmatpush1.msra.mxu0 %v11371
    %11394 = vmatprep.subr.mxu0 0.0
    %11395 = vmatpush1.msra.mxu0 %v11372
    %11396 = vmatprep.subr.mxu0 0.0
    %11397 = vmatpush1.msra.mxu0 %v11373
    %11398 = vmatprep.subr.mxu0 0.0
    %11399 = vmatpush1.msra.mxu0 %v11374
    %11400 = vmatprep.subr.mxu0 0.0
    %11401 = vmatpush1.msra.mxu0 %v11375
    %11402 = vmatprep.subr.mxu0 0.0
    %11403 = vmatpush1.msra.mxu0 %v11376
    %11404 = vmatprep.subr.mxu0 0.0
    %11405 = vmatpush1.msra.mxu0 %v11377
    %11406 = vmatprep.subr.mxu0 0.0
    %11407 = vmatpush1.msra.mxu0 %v11378
    %11408 = vmatprep.subr.mxu0 0.0
    %11409 = vmatpush1.msra.mxu0 %v11379
    %11410 = vmatprep.subr.mxu0 0.0
    %11411 = vmatpush1.msra.mxu0 %v11380
    %11412 = vmatprep.subr.mxu0 0.0
    %11413 = vmatpush1.msra.mxu0 %v11381
    %11414 = vmatprep.subr.mxu0 0.0
    %11415 = vmatpush1.msra.mxu0 %v11382
    %11416 = vmatprep.subr.mxu0 0.0
    %11417 = vmatpush1.msra.mxu0 %v11383
    %11418 = vmatprep.subr.mxu0 0.0
    %11419 = vmatpush1.msra.mxu0 %v11384
    %11420 = vmatprep.subr.mxu0 0.0
    %11421 = vmatpush1.msra.mxu0 %v11385
    %11422 = vmatprep.subr.mxu0 0.0
    %11423 = vmatpush1.msra.mxu0 0.0
    %11424 = vmatprep.subr.mxu0 0.0
    %11425 = vmatpush1.msra.mxu0 0.0
    %11426 = vmatprep.subr.mxu0 0.0
    %11427 = vmatpush1.msra.mxu0 0.0
    %11428 = vmatprep.subr.mxu0 0.0
    %11429 = vmatpush1.msra.mxu0 0.0
    %11430 = vmatprep.subr.mxu0 0.0
    %11431 = vmatpush1.msra.mxu0 0.0
    %11432 = vmatprep.subr.mxu0 0.0
    %11433 = vmatpush1.msra.mxu0 0.0
    %11434 = vmatprep.subr.mxu0 0.0
    %11435 = vmatpush1.msra.mxu0 0.0
    %11436 = vmatprep.subr.mxu0 0.0
    %11437 = vmatpush1.msra.mxu0 0.0
    %11438 = vmatprep.subr.mxu0 0.0
    %11439 = vmatpush1.msra.mxu0 0.0
    %11440 = vmatprep.subr.mxu0 0.0
    %11441 = vmatpush1.msra.mxu0 0.0
    %11442 = vmatprep.subr.mxu0 0.0
    %11443 = vmatpush1.msra.mxu0 0.0
    %11444 = vmatprep.subr.mxu0 0.0
    %11445 = vmatpush1.msra.mxu0 0.0
    %11446 = vmatprep.subr.mxu0 0.0
    %11447 = vmatpush1.msra.mxu0 0.0
    %11448 = vmatprep.subr.mxu0 0.0
    %11449 = vmatpush1.msra.mxu0 0.0
    %11450 = vmatprep.subr.mxu0 0.0
    %11451 = vmatpush1.msra.mxu0 0.0
    %11452 = vmatprep.subr.mxu0 0.0
    %11453 = vmatpush1.msra.mxu0 0.0
    %11454 = vmatprep.mubr.f32.mxu0 0.0
    %11455 = vmatmul.mubr.f32.gmra.mrb[0].mxu0 %v11353
    %v11456 = vpop.f32.mrb[0].mxu0
    %v11457 = vadd.f32 %v11389, %v11456
    %v11458 = vpop.f32.mrb[0].mxu0
    %11459 = vmatprep.mubr.f32.mxu0 0.0
    %11460 = vmatmul.mubr.f32.gmra.mrb[0].mxu0 %v11354
    %v11461 = vpop.f32.mrb[0].mxu0
    %v11462 = vadd.f32 %v11389, %v11461
    %v11463 = vpop.f32.mrb[0].mxu0
    %11464 = vmatprep.mubr.f32.mxu0 0.0
    %11465 = vmatmul.mubr.f32.gmra.mrb[0].mxu0 %v11355
    %v11466 = vpop.f32.mrb[0].mxu0
    %v11467 = vadd.f32 %v11389, %v11466
    %v11468 = vpop.f32.mrb[0].mxu0
    %11469 = vmatprep.mubr.f32.mxu0 0.0
    %11470 = vmatmul.mubr.f32.gmra.mrb[0].mxu0 %v11356
    %v11471 = vpop.f32.mrb[0].mxu0
    %v11472 = vadd.f32 %v11389, %v11471
    %v11473 = vpop.f32.mrb[0].mxu0
    %11474 = vmatprep.mubr.f32.mxu0 0.0
    %11475 = vmatmul.mubr.f32.gmra.mrb[0].mxu0 %v11357
    %v11476 = vpop.f32.mrb[0].mxu0
    %v11477 = vadd.f32 %v11389, %v11476
    %v11478 = vpop.f32.mrb[0].mxu0
    %11479 = vmatprep.mubr.f32.mxu0 0.0
    %11480 = vmatmul.mubr.f32.gmra.mrb[0].mxu0 %v11358
    %v11481 = vpop.f32.mrb[0].mxu0
    %v11482 = vadd.f32 %v11389, %v11481
    %v11483 = vpop.f32.mrb[0].mxu0
    %11484 = vmatprep.mubr.f32.mxu0 0.0
    %11485 = vmatmul.mubr.f32.gmra.mrb[0].mxu0 %v11359
    %v11486 = vpop.f32.mrb[0].mxu0
    %v11487 = vadd.f32 %v11389, %v11486
    %v11488 = vpop.f32.mrb[0].mxu0
    %11489 = vmatprep.mubr.f32.mxu0 0.0
    %11490 = vmatmul.mubr.f32.gmra.mrb[0].mxu0 %v11360
    %v11491 = vpop.f32.mrb[0].mxu0
    %v11492 = vadd.f32 %v11389, %v11491
    %v11493 = vpop.f32.mrb[0].mxu0
    %11494 = vmatprep.mubr.f32.mxu0 0.0
    %11495 = vmatmul.mubr.f32.gmra.mrb[0].mxu0 %v11361
    %v11496 = vpop.f32.mrb[0].mxu0
    %v11497 = vadd.f32 %v11389, %v11496
    %v11498 = vpop.f32.mrb[0].mxu0
    %11499 = vmatprep.mubr.f32.mxu0 0.0
    %11500 = vmatmul.mubr.f32.gmra.mrb[0].mxu0 %v11362
    %v11501 = vpop.f32.mrb[0].mxu0
    %v11502 = vadd.f32 %v11389, %v11501
    %v11503 = vpop.f32.mrb[0].mxu0
    %11504 = vmatprep.mubr.f32.mxu0 0.0
    %11505 = vmatmul.mubr.f32.gmra.mrb[0].mxu0 %v11363
    %v11506 = vpop.f32.mrb[0].mxu0
    %v11507 = vadd.f32 %v11389, %v11506
    %v11508 = vpop.f32.mrb[0].mxu0
    %11509 = vmatprep.mubr.f32.mxu0 0.0
    %11510 = vmatmul.mubr.f32.gmra.mrb[0].mxu0 %v11364
    %v11511 = vpop.f32.mrb[0].mxu0
    %v11512 = vadd.f32 %v11389, %v11511
    %v11513 = vpop.f32.mrb[0].mxu0
    %11514 = vmatprep.mubr.f32.mxu0 0.0
    %11515 = vmatmul.mubr.f32.gmra.mrb[0].mxu0 %v11365
    %v11516 = vpop.f32.mrb[0].mxu0
    %v11517 = vadd.f32 %v11389, %v11516
    %v11518 = vpop.f32.mrb[0].mxu0
    %11519 = vmatprep.mubr.f32.mxu0 0.0
    %11520 = vmatmul.mubr.f32.gmra.mrb[0].mxu0 %v11366
    %v11521 = vpop.f32.mrb[0].mxu0
    %v11522 = vadd.f32 %v11389, %v11521
    %v11523 = vpop.f32.mrb[0].mxu0
    %11524 = vmatprep.mubr.f32.mxu0 0.0
    %11525 = vmatmul.mubr.f32.gmra.mrb[0].mxu0 %v11367
    %v11526 = vpop.f32.mrb[0].mxu0
    %v11527 = vadd.f32 %v11389, %v11526
    %v11528 = vpop.f32.mrb[0].mxu0
    %11529 = vmatprep.mubr.f32.mxu0 0.0
    %11530 = vmatmul.mubr.f32.gmra.mrb[0].mxu0 %v11368
    %v11531 = vpop.f32.mrb[0].mxu0
    %v11532 = vadd.f32 %v11389, %v11531
    %v11533 = vpop.f32.mrb[0].mxu0
    %11534 = vdwg.mxu0
    %v11535 = vadd.f32 %v10823, %v11457
    %v11536 = vadd.f32 %v10824, %v11462
    %v11537 = vadd.f32 %v10825, %v11467
    %v11538 = vadd.f32 %v10826, %v11472
    %v11539 = vadd.f32 %v10827, %v11477
    %v11540 = vadd.f32 %v10828, %v11482
    %v11541 = vadd.f32 %v10829, %v11487
    %v11542 = vadd.f32 %v10830, %v11492
    %v11543 = vadd.f32 %v10831, %v11497
    %v11544 = vadd.f32 %v10832, %v11502
    %v11545 = vadd.f32 %v10833, %v11507
    %v11546 = vadd.f32 %v10834, %v11512
    %v11547 = vadd.f32 %v10835, %v11517
    %v11548 = vadd.f32 %v10836, %v11522
    %v11549 = vadd.f32 %v10837, %v11527
    %v11550 = vadd.f32 %v10838, %v11532
    %11551 = vst.msk [vmem:[%s7] sm:$0xff] %vm64, %v11535
    %11552 = vst.msk [vmem:[%s7 + $0x8] sm:$0xff] %vm64, %v11536
    %11553 = vst.msk [vmem:[%s7 + $0x10] sm:$0xff] %vm64, %v11537
    %11554 = vst.msk [vmem:[%s7 + $0x18] sm:$0xff] %vm64, %v11538
    %11555 = vst.msk [vmem:[%s7 + $0x20] sm:$0xff] %vm64, %v11539
    %11556 = vst.msk [vmem:[%s7 + $0x28] sm:$0xff] %vm64, %v11540
    %11557 = vst.msk [vmem:[%s7 + $0x30] sm:$0xff] %vm64, %v11541
    %11558 = vst.msk [vmem:[%s7 + $0x38] sm:$0xff] %vm64, %v11542
    %11559 = vst.msk [vmem:[%s7 + $0x40] sm:$0xff] %vm64, %v11543
    %11560 = vst.msk [vmem:[%s7 + $0x48] sm:$0xff] %vm64, %v11544
    %11561 = vst.msk [vmem:[%s7 + $0x50] sm:$0xff] %vm64, %v11545
    %11562 = vst.msk [vmem:[%s7 + $0x58] sm:$0xff] %vm64, %v11546
    %11563 = vst.msk [vmem:[%s7 + $0x60] sm:$0xff] %vm64, %v11547
    %11564 = vst.msk [vmem:[%s7 + $0x68] sm:$0xff] %vm64, %v11548
    %11565 = vst.msk [vmem:[%s7 + $0x70] sm:$0xff] %vm64, %v11549
    %11566 = vst.msk [vmem:[%s7 + $0x78] sm:$0xff] %vm64, %v11550
    // Predicated region
    $region34: #{tpu_custom_call.1} parent=1 // pred_check
      _
    $region35: #{tpu_custom_call.1} parent=1 // pred_check_branch
      %11568 = sbr.rel (0) target = $region37
    $region36: #{tpu_custom_call.1} parent=1 // pred_region
      _
    $region37: #{tpu_custom_call.1} parent=1 // pred_fallthru
      _
    // Predicated region
    $region38: #{tpu_custom_call.1} parent=1 // pred_check
      _
    $region39: #{tpu_custom_call.1} parent=1 // pred_check_branch
      %11570 = sbr.rel (0) target = $region41
    $region40: #{tpu_custom_call.1} parent=1 // pred_region
      _
    $region41: #{tpu_custom_call.1} parent=1 // pred_fallthru
      _
    %11571 = vsyncpa [#allocation3], 1

</llo_original>
